<compile_context>
chip_gen: v7x
topology: tpu7x:2x2x1
jax: 0.10.0
libtpu: 0.0.40
codegen_flags: <defaults>
</compile_context>

<pallas_src>
import numpy as np
import jax
import jax.numpy as jnp
from jax.experimental import pallas as pl
from jax.experimental.pallas import tpu as pltpu


def _sigmoid(v):
    # One EUP op (tanh) instead of exp + divide through the single EUP port.
    return 0.5 * (jnp.tanh(0.5 * v) + 1.0)


def _shift_up(v, k, axis):
    """result[..., i, ...] = v[..., i + k, ...] (wrapped tail rows/cols are never consumed)."""
    if k == 0:
        return v
    n = v.shape[axis]
    return pltpu.roll(v, (n - k) % n, axis=axis)


def lenet_kernel(x_ref, t1_ref, t2_ref, selp_ref, w1f_ref, fw2_ref, fw3_ref,
                 bias_ref, out_ref):
    dot = lambda a, b: jnp.dot(a, b, preferred_element_type=jnp.float32)

    # Whole block of images as one 2-D slab: (B*32 rows, 32 cols), 32-row pitch/image.
    x = x_ref[...]

    # ---- conv1 (1->6, 5x5, pad=2 applied in wrapper) + sigmoid : (B*32, 6*28) ----
    # s1[b*32 + r, oc*28 + j] = conv1 activation (valid for r <= 27).
    acc1 = dot(x, t1_ref[0])
    for kh in range(1, 5):
        acc1 = acc1 + dot(_shift_up(x, kh, 0), t1_ref[kh])
    s1 = _sigmoid(acc1 + bias_ref[0:1, :])

    # ---- maxpool1 2x2 (row & col shifted max; even-col decimation folded into t2) ----
    rm1 = jnp.maximum(s1, _shift_up(s1, 1, 0))
    cm1 = jnp.maximum(rm1, _shift_up(rm1, 1, 1))
    # cm1[b*32 + 2p, ic*28 + 2i] = pooled1[ic, p, i]

    # ---- conv2 (6->16, 5x5, valid) + sigmoid : (B*32, 16*10) ----
    # pooled rows sit at stride 2, hence the 2*kh row shift.
    acc2 = dot(cm1, t2_ref[0])
    for kh in range(1, 5):
        acc2 = acc2 + dot(_shift_up(cm1, 2 * kh, 0), t2_ref[kh])
    s2 = _sigmoid(acc2 + bias_ref[1:2, 0:160])
    # s2[b*32 + 2q, oc*10 + j] = conv2 activation (valid for q <= 9).

    # ---- maxpool2 2x2 ----
    rm2 = jnp.maximum(s2, _shift_up(s2, 2, 0))
    cm2 = jnp.maximum(rm2, _shift_up(rm2, 1, 1))
    # cm2[b*32 + 4p, oc*10 + 2v] = pooled2[oc, p, v]

    # ---- fc1 (400 -> 120): gather the 5 pooled rows of every image with one-hot
    #      selection matmuls, then apply the (even-col folded) fc1 weight banks ----
    h1 = dot(dot(selp_ref[0], cm2), w1f_ref[0])                  # (B, 120)
    for p in range(1, 5):
        h1 = h1 + dot(dot(selp_ref[p], cm2), w1f_ref[p])
    h1 = _sigmoid(h1 + bias_ref[2:3, 0:120])

    # ---- fc2 (120 -> 84), fc3 (84 -> 10) ----
    h2 = _sigmoid(dot(h1, fw2_ref[...]) + bias_ref[3:4, 0:84])
    out_ref[...] = _sigmoid(dot(h2, fw3_ref[...]) + bias_ref[4:5, 0:10])


def build_operands(params, block_b=32):
    """Parameter setup (glue): Toeplitz banks with the pooling column selections
    folded in, per-row one-hot gather matrices, packed bias rows, transposes."""
    (w1, b1, w2, b2, fw1, fb1, fw2, fb2, fw3, fb3) = [
        np.asarray(p, np.float32) for p in params]
    B = int(block_b)
    assert B % 8 == 0, "block_b must be a multiple of 8 (sublane tiling)"

    # conv1 Toeplitz bank: t1[kh, j+kw, oc*28+j] = w1[oc, 0, kh, kw]
    t1 = np.zeros((5, 32, 6 * 28), np.float32)
    j28 = np.arange(28)
    for oc in range(6):
        for kh in range(5):
            for kw in range(5):
                t1[kh, j28 + kw, oc * 28 + j28] = w1[oc, 0, kh, kw]

    # conv2 Toeplitz bank with pool1's even-column selection folded in:
    # input columns are the un-decimated cm1 columns ic*28 + 2*i.
    t2 = np.zeros((5, 6 * 28, 16 * 10), np.float32)
    j10 = np.arange(10)
    for oc in range(16):
        for ic in range(6):
            for kh in range(5):
                for kw in range(5):
                    t2[kh, ic * 28 + 2 * (j10 + kw), oc * 10 + j10] = w2[oc, ic, kh, kw]

    # fc1 weight banks with pool2's even-column selection folded in:
    # w1f[p, c*10 + 2v, :] = fw1[:, c*25 + p*5 + v]  (matches PyTorch (c,h,w) flatten)
    w1f = np.zeros((5, 16 * 10, 120), np.float32)
    for p in range(5):
        for c in range(16):
            for v in range(5):
                w1f[p, c * 10 + 2 * v, :] = fw1[:, c * 25 + p * 5 + v]

    # One-hot row gathers: selp[p, b, b*32 + 4p] = 1 picks pooled row p of image b.
    selp = np.zeros((5, B, B * 32), np.float32)
    bb = np.arange(B)
    for p in range(5):
        selp[p, bb, bb * 32 + 4 * p] = 1.0

    # Packed bias rows (read back with cheap lane-prefix slices inside the kernel).
    bias = np.zeros((8, 6 * 28), np.float32)
    bias[0, :168] = np.repeat(b1, 28)
    bias[1, :160] = np.repeat(b2, 10)
    bias[2, :120] = fb1
    bias[3, :84] = fb2
    bias[4, :10] = fb3

    ops = (t1, t2, selp, w1f,
           np.ascontiguousarray(fw2.T), np.ascontiguousarray(fw3.T), bias)
    return tuple(jnp.asarray(o) for o in ops)


@jax.jit
def lenet_forward(x, operands):
    """x: (N, 1, 28, 28) NCHW float32.  Returns (N, 10)."""
    selp = operands[2]
    B = selp.shape[1]                       # images per grid step (static)
    n = x.shape[0]
    npad = pl.cdiv(n, B) * B

    # conv1 padding (pad=2) + batch padding, then stack images along the row axis.
    xp = jnp.pad(x[:, 0], ((0, npad - n), (2, 2), (2, 2)))     # (npad, 32, 32)
    xflat = xp.reshape(npad * 32, 32)

    def const_spec(a):
        nd = a.ndim
        return pl.BlockSpec(a.shape, lambda i, _nd=nd: (0,) * _nd)

    out = pl.pallas_call(
        lenet_kernel,
        out_shape=jax.ShapeDtypeStruct((npad, 10), jnp.float32),
        grid=(npad // B,),
        in_specs=[pl.BlockSpec((B * 32, 32), lambda i: (i, 0))]
                 + [const_spec(a) for a in operands],
        out_specs=pl.BlockSpec((B, 10), lambda i: (i, 0)),
        compiler_params=pltpu.CompilerParams(
            dimension_semantics=("parallel",)),     # lets v7x split batch over 2 TCs
    )(xflat, *operands)
    return out[:n]


def lenet_reference(x, params):
    """Pure-JAX reference matching the PyTorch module (incl. final Sigmoid)."""
    (w1, b1, w2, b2, fw1, fb1, fw2, fb2, fw3, fb3) = params
    dn = ('NCHW', 'OIHW', 'NCHW')
    y = jax.lax.conv_general_dilated(x, w1, (1, 1), ((2, 2), (2, 2)),
                                     dimension_numbers=dn)
    y = jax.nn.sigmoid(y + b1[None, :, None, None])
    y = jax.lax.reduce_window(y, -jnp.inf, jax.lax.max,
                              (1, 1, 2, 2), (1, 1, 2, 2), 'VALID')
    y = jax.lax.conv_general_dilated(y, w2, (1, 1), 'VALID',
                                     dimension_numbers=dn)
    y = jax.nn.sigmoid(y + b2[None, :, None, None])
    y = jax.lax.reduce_window(y, -jnp.inf, jax.lax.max,
                              (1, 1, 2, 2), (1, 1, 2, 2), 'VALID')
    f = y.reshape(y.shape[0], -1)
    h = jax.nn.sigmoid(f @ fw1.T + fb1)
    h = jax.nn.sigmoid(h @ fw2.T + fb2)
    return jax.nn.sigmoid(h @ fw3.T + fb3)


def init_params(key):
    keys = jax.random.split(key, 10)

    def uni(k, shape, fan_in):
        bound = 1.0 / np.sqrt(fan_in)
        return jax.random.uniform(k, shape, jnp.float32, -bound, bound)

    w1 = uni(keys[0], (6, 1, 5, 5), 25);    b1 = uni(keys[1], (6,), 25)
    w2 = uni(keys[2], (16, 6, 5, 5), 150);  b2 = uni(keys[3], (16,), 150)
    fw1 = uni(keys[4], (120, 400), 400);    fb1 = uni(keys[5], (120,), 400)
    fw2 = uni(keys[6], (84, 120), 120);     fb2 = uni(keys[7], (84,), 120)
    fw3 = uni(keys[8], (10, 84), 84);       fb3 = uni(keys[9], (10,), 84)
    return (w1, b1, w2, b2, fw1, fb1, fw2, fb2, fw3, fb3)


if __name__ == "__main__":
    key = jax.random.PRNGKey(0)
    kx, kp = jax.random.split(key)
    # LeNet's fc stack requires 16*5*5 = 400 features, i.e. 28x28 inputs.
    x = jax.random.normal(kx, (16, 1, 28, 28), jnp.float32)   # small demo batch, NCHW
    params = init_params(kp)
    # block_b = images per grid step.  8 keeps the demo small; use 32 in production
    # so B*32 = 1024 rows fill the MXU M dim (still only a few MiB of VMEM on v7x).
    operands = build_operands(params, block_b=8)

    out = jax.block_until_ready(lenet_forward(x, operands))
    assert out.shape == (16, 10) and out.dtype == jnp.float32

    ref = lenet_reference(x, params)
    np.testing.assert_allclose(np.asarray(out), np.asarray(ref),
                               rtol=1e-3, atol=1e-3)

    # Also exercise the batch-padding path (N not a multiple of the block).
    out_small = jax.block_until_ready(lenet_forward(x[:3], operands))
    np.testing.assert_allclose(np.asarray(out_small), np.asarray(ref[:3]),
                               rtol=1e-3, atol=1e-3)

    print("KERNEL_OK")
</pallas_src>

<mosaic_0001>
module attributes {stable_mosaic.version = 11 : i64} {
  func.func @lenet_kernel(%arg0: i32, %arg1: memref<256x32xf32, #tpu.memory_space<vmem>>, %arg2: memref<5x32x168xf32, #tpu.memory_space<vmem>>, %arg3: memref<5x168x160xf32, #tpu.memory_space<vmem>>, %arg4: memref<5x8x256xf32, #tpu.memory_space<vmem>>, %arg5: memref<5x160x120xf32, #tpu.memory_space<vmem>>, %arg6: memref<120x84xf32, #tpu.memory_space<vmem>>, %arg7: memref<84x10xf32, #tpu.memory_space<vmem>>, %arg8: memref<8x168xf32, #tpu.memory_space<vmem>>, %arg9: memref<8x10xf32, #tpu.memory_space<vmem>>) attributes {dimension_semantics = [#tpu.dimension_semantics<parallel>], iteration_bounds = array<i64: 2>, scalar_prefetch = 0 : i64, scratch_operands = 0 : i64, tpu.core_type = #tpu.core_type<tc>, window_params = [{transform_indices = @transform_0, window_bounds = array<i64: 256, 32>}, {pipeline_mode = #tpu.pipeline_mode<synchronous>, transform_indices = @transform_1, window_bounds = array<i64: 5, 32, 168>}, {pipeline_mode = #tpu.pipeline_mode<synchronous>, transform_indices = @transform_2, window_bounds = array<i64: 5, 168, 160>}, {pipeline_mode = #tpu.pipeline_mode<synchronous>, transform_indices = @transform_3, window_bounds = array<i64: 5, 8, 256>}, {pipeline_mode = #tpu.pipeline_mode<synchronous>, transform_indices = @transform_4, window_bounds = array<i64: 5, 160, 120>}, {pipeline_mode = #tpu.pipeline_mode<synchronous>, transform_indices = @transform_5, window_bounds = array<i64: 120, 84>}, {pipeline_mode = #tpu.pipeline_mode<synchronous>, transform_indices = @transform_6, window_bounds = array<i64: 84, 10>}, {pipeline_mode = #tpu.pipeline_mode<synchronous>, transform_indices = @transform_7, window_bounds = array<i64: 8, 168>}, {transform_indices = @transform_8, window_bounds = array<i64: 8, 10>}]} {
    %c0 = arith.constant 0 : index
    %c0_0 = arith.constant 0 : index
    %0 = vector.load %arg1[%c0, %c0_0] : memref<256x32xf32, #tpu.memory_space<vmem>>, vector<256x32xf32>
    %c0_1 = arith.constant 0 : index
    %c0_2 = arith.constant 0 : index
    %c0_3 = arith.constant 0 : index
    %1 = vector.load %arg2[%c0_1, %c0_2, %c0_3] : memref<5x32x168xf32, #tpu.memory_space<vmem>>, vector<1x32x168xf32>
    %2 = vector.shape_cast %1 : vector<1x32x168xf32> to vector<32x168xf32>
    %cst = arith.constant dense<0.000000e+00> : vector<256x168xf32>
    %3 = tpu.matmul %0, %2, %cst {dimension_numbers = #tpu.dot_dimension_numbers<[1], [0], [0], [1], [0, 0, 1, 1], [], []>} : vector<256x32xf32>, vector<32x168xf32>, vector<256x168xf32> -> vector<256x168xf32>
    %c255_i32 = arith.constant 255 : i32
    %4 = tpu.dynamic_rotate %0 by %c255_i32 dim 0 : vector<256x32xf32>, i32 -> vector<256x32xf32>
    %c1 = arith.constant 1 : index
    %c0_4 = arith.constant 0 : index
    %c0_5 = arith.constant 0 : index
    %5 = vector.load %arg2[%c1, %c0_4, %c0_5] : memref<5x32x168xf32, #tpu.memory_space<vmem>>, vector<1x32x168xf32>
    %6 = vector.shape_cast %5 : vector<1x32x168xf32> to vector<32x168xf32>
    %cst_6 = arith.constant dense<0.000000e+00> : vector<256x168xf32>
    %7 = tpu.matmul %4, %6, %cst_6 {dimension_numbers = #tpu.dot_dimension_numbers<[1], [0], [0], [1], [0, 0, 1, 1], [], []>} : vector<256x32xf32>, vector<32x168xf32>, vector<256x168xf32> -> vector<256x168xf32>
    %8 = arith.addf %3, %7 : vector<256x168xf32>
    %c254_i32 = arith.constant 254 : i32
    %9 = tpu.dynamic_rotate %0 by %c254_i32 dim 0 : vector<256x32xf32>, i32 -> vector<256x32xf32>
    %c2 = arith.constant 2 : index
    %c0_7 = arith.constant 0 : index
    %c0_8 = arith.constant 0 : index
    %10 = vector.load %arg2[%c2, %c0_7, %c0_8] : memref<5x32x168xf32, #tpu.memory_space<vmem>>, vector<1x32x168xf32>
    %11 = vector.shape_cast %10 : vector<1x32x168xf32> to vector<32x168xf32>
    %cst_9 = arith.constant dense<0.000000e+00> : vector<256x168xf32>
    %12 = tpu.matmul %9, %11, %cst_9 {dimension_numbers = #tpu.dot_dimension_numbers<[1], [0], [0], [1], [0, 0, 1, 1], [], []>} : vector<256x32xf32>, vector<32x168xf32>, vector<256x168xf32> -> vector<256x168xf32>
    %13 = arith.addf %8, %12 : vector<256x168xf32>
    %c253_i32 = arith.constant 253 : i32
    %14 = tpu.dynamic_rotate %0 by %c253_i32 dim 0 : vector<256x32xf32>, i32 -> vector<256x32xf32>
    %c3 = arith.constant 3 : index
    %c0_10 = arith.constant 0 : index
    %c0_11 = arith.constant 0 : index
    %15 = vector.load %arg2[%c3, %c0_10, %c0_11] : memref<5x32x168xf32, #tpu.memory_space<vmem>>, vector<1x32x168xf32>
    %16 = vector.shape_cast %15 : vector<1x32x168xf32> to vector<32x168xf32>
    %cst_12 = arith.constant dense<0.000000e+00> : vector<256x168xf32>
    %17 = tpu.matmul %14, %16, %cst_12 {dimension_numbers = #tpu.dot_dimension_numbers<[1], [0], [0], [1], [0, 0, 1, 1], [], []>} : vector<256x32xf32>, vector<32x168xf32>, vector<256x168xf32> -> vector<256x168xf32>
    %18 = arith.addf %13, %17 : vector<256x168xf32>
    %c252_i32 = arith.constant 252 : i32
    %19 = tpu.dynamic_rotate %0 by %c252_i32 dim 0 : vector<256x32xf32>, i32 -> vector<256x32xf32>
    %c4 = arith.constant 4 : index
    %c0_13 = arith.constant 0 : index
    %c0_14 = arith.constant 0 : index
    %20 = vector.load %arg2[%c4, %c0_13, %c0_14] : memref<5x32x168xf32, #tpu.memory_space<vmem>>, vector<1x32x168xf32>
    %21 = vector.shape_cast %20 : vector<1x32x168xf32> to vector<32x168xf32>
    %cst_15 = arith.constant dense<0.000000e+00> : vector<256x168xf32>
    %22 = tpu.matmul %19, %21, %cst_15 {dimension_numbers = #tpu.dot_dimension_numbers<[1], [0], [0], [1], [0, 0, 1, 1], [], []>} : vector<256x32xf32>, vector<32x168xf32>, vector<256x168xf32> -> vector<256x168xf32>
    %23 = arith.addf %18, %22 : vector<256x168xf32>
    %c0_16 = arith.constant 0 : index
    %c0_17 = arith.constant 0 : index
    %24 = vector.load %arg8[%c0_16, %c0_17] : memref<8x168xf32, #tpu.memory_space<vmem>>, vector<1x168xf32>
    %25 = vector.broadcast %24 : vector<1x168xf32> to vector<256x168xf32>
    %26 = arith.addf %23, %25 : vector<256x168xf32>
    %cst_18 = arith.constant 5.000000e-01 : f32
    %27 = vector.broadcast %cst_18 : f32 to vector<256x168xf32>
    %28 = arith.mulf %27, %26 : vector<256x168xf32>
    %29 = math.tanh %28 : vector<256x168xf32>
    %cst_19 = arith.constant 1.000000e+00 : f32
    %30 = vector.broadcast %cst_19 : f32 to vector<256x168xf32>
    %31 = arith.addf %29, %30 : vector<256x168xf32>
    %cst_20 = arith.constant 5.000000e-01 : f32
    %32 = vector.broadcast %cst_20 : f32 to vector<256x168xf32>
    %33 = arith.mulf %32, %31 : vector<256x168xf32>
    %c255_i32_21 = arith.constant 255 : i32
    %34 = tpu.dynamic_rotate %33 by %c255_i32_21 dim 0 : vector<256x168xf32>, i32 -> vector<256x168xf32>
    %35 = arith.maximumf %33, %34 : vector<256x168xf32>
    %c167_i32 = arith.constant 167 : i32
    %36 = tpu.dynamic_rotate %35 by %c167_i32 dim 1 : vector<256x168xf32>, i32 -> vector<256x168xf32>
    %37 = arith.maximumf %35, %36 : vector<256x168xf32>
    %c0_22 = arith.constant 0 : index
    %c0_23 = arith.constant 0 : index
    %c0_24 = arith.constant 0 : index
    %38 = vector.load %arg3[%c0_22, %c0_23, %c0_24] : memref<5x168x160xf32, #tpu.memory_space<vmem>>, vector<1x168x160xf32>
    %39 = vector.shape_cast %38 : vector<1x168x160xf32> to vector<168x160xf32>
    %cst_25 = arith.constant dense<0.000000e+00> : vector<256x160xf32>
    %40 = tpu.matmul %37, %39, %cst_25 {dimension_numbers = #tpu.dot_dimension_numbers<[1], [0], [0], [1], [0, 0, 1, 1], [], []>} : vector<256x168xf32>, vector<168x160xf32>, vector<256x160xf32> -> vector<256x160xf32>
    %c254_i32_26 = arith.constant 254 : i32
    %41 = tpu.dynamic_rotate %37 by %c254_i32_26 dim 0 : vector<256x168xf32>, i32 -> vector<256x168xf32>
    %c1_27 = arith.constant 1 : index
    %c0_28 = arith.constant 0 : index
    %c0_29 = arith.constant 0 : index
    %42 = vector.load %arg3[%c1_27, %c0_28, %c0_29] : memref<5x168x160xf32, #tpu.memory_space<vmem>>, vector<1x168x160xf32>
    %43 = vector.shape_cast %42 : vector<1x168x160xf32> to vector<168x160xf32>
    %cst_30 = arith.constant dense<0.000000e+00> : vector<256x160xf32>
    %44 = tpu.matmul %41, %43, %cst_30 {dimension_numbers = #tpu.dot_dimension_numbers<[1], [0], [0], [1], [0, 0, 1, 1], [], []>} : vector<256x168xf32>, vector<168x160xf32>, vector<256x160xf32> -> vector<256x160xf32>
    %45 = arith.addf %40, %44 : vector<256x160xf32>
    %c252_i32_31 = arith.constant 252 : i32
    %46 = tpu.dynamic_rotate %37 by %c252_i32_31 dim 0 : vector<256x168xf32>, i32 -> vector<256x168xf32>
    %c2_32 = arith.constant 2 : index
    %c0_33 = arith.constant 0 : index
    %c0_34 = arith.constant 0 : index
    %47 = vector.load %arg3[%c2_32, %c0_33, %c0_34] : memref<5x168x160xf32, #tpu.memory_space<vmem>>, vector<1x168x160xf32>
    %48 = vector.shape_cast %47 : vector<1x168x160xf32> to vector<168x160xf32>
    %cst_35 = arith.constant dense<0.000000e+00> : vector<256x160xf32>
    %49 = tpu.matmul %46, %48, %cst_35 {dimension_numbers = #tpu.dot_dimension_numbers<[1], [0], [0], [1], [0, 0, 1, 1], [], []>} : vector<256x168xf32>, vector<168x160xf32>, vector<256x160xf32> -> vector<256x160xf32>
    %50 = arith.addf %45, %49 : vector<256x160xf32>
    %c250_i32 = arith.constant 250 : i32
    %51 = tpu.dynamic_rotate %37 by %c250_i32 dim 0 : vector<256x168xf32>, i32 -> vector<256x168xf32>
    %c3_36 = arith.constant 3 : index
    %c0_37 = arith.constant 0 : index
    %c0_38 = arith.constant 0 : index
    %52 = vector.load %arg3[%c3_36, %c0_37, %c0_38] : memref<5x168x160xf32, #tpu.memory_space<vmem>>, vector<1x168x160xf32>
    %53 = vector.shape_cast %52 : vector<1x168x160xf32> to vector<168x160xf32>
    %cst_39 = arith.constant dense<0.000000e+00> : vector<256x160xf32>
    %54 = tpu.matmul %51, %53, %cst_39 {dimension_numbers = #tpu.dot_dimension_numbers<[1], [0], [0], [1], [0, 0, 1, 1], [], []>} : vector<256x168xf32>, vector<168x160xf32>, vector<256x160xf32> -> vector<256x160xf32>
    %55 = arith.addf %50, %54 : vector<256x160xf32>
    %c248_i32 = arith.constant 248 : i32
    %56 = tpu.dynamic_rotate %37 by %c248_i32 dim 0 : vector<256x168xf32>, i32 -> vector<256x168xf32>
    %c4_40 = arith.constant 4 : index
    %c0_41 = arith.constant 0 : index
    %c0_42 = arith.constant 0 : index
    %57 = vector.load %arg3[%c4_40, %c0_41, %c0_42] : memref<5x168x160xf32, #tpu.memory_space<vmem>>, vector<1x168x160xf32>
    %58 = vector.shape_cast %57 : vector<1x168x160xf32> to vector<168x160xf32>
    %cst_43 = arith.constant dense<0.000000e+00> : vector<256x160xf32>
    %59 = tpu.matmul %56, %58, %cst_43 {dimension_numbers = #tpu.dot_dimension_numbers<[1], [0], [0], [1], [0, 0, 1, 1], [], []>} : vector<256x168xf32>, vector<168x160xf32>, vector<256x160xf32> -> vector<256x160xf32>
    %60 = arith.addf %55, %59 : vector<256x160xf32>
    %c1_44 = arith.constant 1 : index
    %c0_45 = arith.constant 0 : index
    %61 = vector.load %arg8[%c1_44, %c0_45] : memref<8x168xf32, #tpu.memory_space<vmem>>, vector<1x160xf32>
    %62 = vector.broadcast %61 : vector<1x160xf32> to vector<256x160xf32>
    %63 = arith.addf %60, %62 : vector<256x160xf32>
    %cst_46 = arith.constant 5.000000e-01 : f32
    %64 = vector.broadcast %cst_46 : f32 to vector<256x160xf32>
    %65 = arith.mulf %64, %63 : vector<256x160xf32>
    %66 = math.tanh %65 : vector<256x160xf32>
    %cst_47 = arith.constant 1.000000e+00 : f32
    %67 = vector.broadcast %cst_47 : f32 to vector<256x160xf32>
    %68 = arith.addf %66, %67 : vector<256x160xf32>
    %cst_48 = arith.constant 5.000000e-01 : f32
    %69 = vector.broadcast %cst_48 : f32 to vector<256x160xf32>
    %70 = arith.mulf %69, %68 : vector<256x160xf32>
    %c254_i32_49 = arith.constant 254 : i32
    %71 = tpu.dynamic_rotate %70 by %c254_i32_49 dim 0 : vector<256x160xf32>, i32 -> vector<256x160xf32>
    %72 = arith.maximumf %70, %71 : vector<256x160xf32>
    %c159_i32 = arith.constant 159 : i32
    %73 = tpu.dynamic_rotate %72 by %c159_i32 dim 1 : vector<256x160xf32>, i32 -> vector<256x160xf32>
    %74 = arith.maximumf %72, %73 : vector<256x160xf32>
    %c0_50 = arith.constant 0 : index
    %c0_51 = arith.constant 0 : index
    %c0_52 = arith.constant 0 : index
    %75 = vector.load %arg4[%c0_50, %c0_51, %c0_52] : memref<5x8x256xf32, #tpu.memory_space<vmem>>, vector<1x8x256xf32>
    %76 = vector.shape_cast %75 : vector<1x8x256xf32> to vector<8x256xf32>
    %cst_53 = arith.constant dense<0.000000e+00> : vector<8x160xf32>
    %77 = tpu.matmul %76, %74, %cst_53 {dimension_numbers = #tpu.dot_dimension_numbers<[1], [0], [0], [1], [0, 0, 1, 1], [], []>} : vector<8x256xf32>, vector<256x160xf32>, vector<8x160xf32> -> vector<8x160xf32>
    %c0_54 = arith.constant 0 : index
    %c0_55 = arith.constant 0 : index
    %c0_56 = arith.constant 0 : index
    %78 = vector.load %arg5[%c0_54, %c0_55, %c0_56] : memref<5x160x120xf32, #tpu.memory_space<vmem>>, vector<1x160x120xf32>
    %79 = vector.shape_cast %78 : vector<1x160x120xf32> to vector<160x120xf32>
    %cst_57 = arith.constant dense<0.000000e+00> : vector<8x120xf32>
    %80 = tpu.matmul %77, %79, %cst_57 {dimension_numbers = #tpu.dot_dimension_numbers<[1], [0], [0], [1], [0, 0, 1, 1], [], []>} : vector<8x160xf32>, vector<160x120xf32>, vector<8x120xf32> -> vector<8x120xf32>
    %c1_58 = arith.constant 1 : index
    %c0_59 = arith.constant 0 : index
    %c0_60 = arith.constant 0 : index
    %81 = vector.load %arg4[%c1_58, %c0_59, %c0_60] : memref<5x8x256xf32, #tpu.memory_space<vmem>>, vector<1x8x256xf32>
    %82 = vector.shape_cast %81 : vector<1x8x256xf32> to vector<8x256xf32>
    %cst_61 = arith.constant dense<0.000000e+00> : vector<8x160xf32>
    %83 = tpu.matmul %82, %74, %cst_61 {dimension_numbers = #tpu.dot_dimension_numbers<[1], [0], [0], [1], [0, 0, 1, 1], [], []>} : vector<8x256xf32>, vector<256x160xf32>, vector<8x160xf32> -> vector<8x160xf32>
    %c1_62 = arith.constant 1 : index
    %c0_63 = arith.constant 0 : index
    %c0_64 = arith.constant 0 : index
    %84 = vector.load %arg5[%c1_62, %c0_63, %c0_64] : memref<5x160x120xf32, #tpu.memory_space<vmem>>, vector<1x160x120xf32>
    %85 = vector.shape_cast %84 : vector<1x160x120xf32> to vector<160x120xf32>
    %cst_65 = arith.constant dense<0.000000e+00> : vector<8x120xf32>
    %86 = tpu.matmul %83, %85, %cst_65 {dimension_numbers = #tpu.dot_dimension_numbers<[1], [0], [0], [1], [0, 0, 1, 1], [], []>} : vector<8x160xf32>, vector<160x120xf32>, vector<8x120xf32> -> vector<8x120xf32>
    %87 = arith.addf %80, %86 : vector<8x120xf32>
    %c2_66 = arith.constant 2 : index
    %c0_67 = arith.constant 0 : index
    %c0_68 = arith.constant 0 : index
    %88 = vector.load %arg4[%c2_66, %c0_67, %c0_68] : memref<5x8x256xf32, #tpu.memory_space<vmem>>, vector<1x8x256xf32>
    %89 = vector.shape_cast %88 : vector<1x8x256xf32> to vector<8x256xf32>
    %cst_69 = arith.constant dense<0.000000e+00> : vector<8x160xf32>
    %90 = tpu.matmul %89, %74, %cst_69 {dimension_numbers = #tpu.dot_dimension_numbers<[1], [0], [0], [1], [0, 0, 1, 1], [], []>} : vector<8x256xf32>, vector<256x160xf32>, vector<8x160xf32> -> vector<8x160xf32>
    %c2_70 = arith.constant 2 : index
    %c0_71 = arith.constant 0 : index
    %c0_72 = arith.constant 0 : index
    %91 = vector.load %arg5[%c2_70, %c0_71, %c0_72] : memref<5x160x120xf32, #tpu.memory_space<vmem>>, vector<1x160x120xf32>
    %92 = vector.shape_cast %91 : vector<1x160x120xf32> to vector<160x120xf32>
    %cst_73 = arith.constant dense<0.000000e+00> : vector<8x120xf32>
    %93 = tpu.matmul %90, %92, %cst_73 {dimension_numbers = #tpu.dot_dimension_numbers<[1], [0], [0], [1], [0, 0, 1, 1], [], []>} : vector<8x160xf32>, vector<160x120xf32>, vector<8x120xf32> -> vector<8x120xf32>
    %94 = arith.addf %87, %93 : vector<8x120xf32>
    %c3_74 = arith.constant 3 : index
    %c0_75 = arith.constant 0 : index
    %c0_76 = arith.constant 0 : index
    %95 = vector.load %arg4[%c3_74, %c0_75, %c0_76] : memref<5x8x256xf32, #tpu.memory_space<vmem>>, vector<1x8x256xf32>
    %96 = vector.shape_cast %95 : vector<1x8x256xf32> to vector<8x256xf32>
    %cst_77 = arith.constant dense<0.000000e+00> : vector<8x160xf32>
    %97 = tpu.matmul %96, %74, %cst_77 {dimension_numbers = #tpu.dot_dimension_numbers<[1], [0], [0], [1], [0, 0, 1, 1], [], []>} : vector<8x256xf32>, vector<256x160xf32>, vector<8x160xf32> -> vector<8x160xf32>
    %c3_78 = arith.constant 3 : index
    %c0_79 = arith.constant 0 : index
    %c0_80 = arith.constant 0 : index
    %98 = vector.load %arg5[%c3_78, %c0_79, %c0_80] : memref<5x160x120xf32, #tpu.memory_space<vmem>>, vector<1x160x120xf32>
    %99 = vector.shape_cast %98 : vector<1x160x120xf32> to vector<160x120xf32>
    %cst_81 = arith.constant dense<0.000000e+00> : vector<8x120xf32>
    %100 = tpu.matmul %97, %99, %cst_81 {dimension_numbers = #tpu.dot_dimension_numbers<[1], [0], [0], [1], [0, 0, 1, 1], [], []>} : vector<8x160xf32>, vector<160x120xf32>, vector<8x120xf32> -> vector<8x120xf32>
    %101 = arith.addf %94, %100 : vector<8x120xf32>
    %c4_82 = arith.constant 4 : index
    %c0_83 = arith.constant 0 : index
    %c0_84 = arith.constant 0 : index
    %102 = vector.load %arg4[%c4_82, %c0_83, %c0_84] : memref<5x8x256xf32, #tpu.memory_space<vmem>>, vector<1x8x256xf32>
    %103 = vector.shape_cast %102 : vector<1x8x256xf32> to vector<8x256xf32>
    %cst_85 = arith.constant dense<0.000000e+00> : vector<8x160xf32>
    %104 = tpu.matmul %103, %74, %cst_85 {dimension_numbers = #tpu.dot_dimension_numbers<[1], [0], [0], [1], [0, 0, 1, 1], [], []>} : vector<8x256xf32>, vector<256x160xf32>, vector<8x160xf32> -> vector<8x160xf32>
    %c4_86 = arith.constant 4 : index
    %c0_87 = arith.constant 0 : index
    %c0_88 = arith.constant 0 : index
    %105 = vector.load %arg5[%c4_86, %c0_87, %c0_88] : memref<5x160x120xf32, #tpu.memory_space<vmem>>, vector<1x160x120xf32>
    %106 = vector.shape_cast %105 : vector<1x160x120xf32> to vector<160x120xf32>
    %cst_89 = arith.constant dense<0.000000e+00> : vector<8x120xf32>
    %107 = tpu.matmul %104, %106, %cst_89 {dimension_numbers = #tpu.dot_dimension_numbers<[1], [0], [0], [1], [0, 0, 1, 1], [], []>} : vector<8x160xf32>, vector<160x120xf32>, vector<8x120xf32> -> vector<8x120xf32>
    %108 = arith.addf %101, %107 : vector<8x120xf32>
    %c2_90 = arith.constant 2 : index
    %c0_91 = arith.constant 0 : index
    %109 = vector.load %arg8[%c2_90, %c0_91] : memref<8x168xf32, #tpu.memory_space<vmem>>, vector<1x120xf32>
    %110 = vector.broadcast %109 : vector<1x120xf32> to vector<8x120xf32>
    %111 = arith.addf %108, %110 : vector<8x120xf32>
    %cst_92 = arith.constant 5.000000e-01 : f32
    %112 = vector.broadcast %cst_92 : f32 to vector<8x120xf32>
    %113 = arith.mulf %112, %111 : vector<8x120xf32>
    %114 = math.tanh %113 : vector<8x120xf32>
    %cst_93 = arith.constant 1.000000e+00 : f32
    %115 = vector.broadcast %cst_93 : f32 to vector<8x120xf32>
    %116 = arith.addf %114, %115 : vector<8x120xf32>
    %cst_94 = arith.constant 5.000000e-01 : f32
    %117 = vector.broadcast %cst_94 : f32 to vector<8x120xf32>
    %118 = arith.mulf %117, %116 : vector<8x120xf32>
    %c0_95 = arith.constant 0 : index
    %c0_96 = arith.constant 0 : index
    %119 = vector.load %arg6[%c0_95, %c0_96] : memref<120x84xf32, #tpu.memory_space<vmem>>, vector<120x84xf32>
    %cst_97 = arith.constant dense<0.000000e+00> : vector<8x84xf32>
    %120 = tpu.matmul %118, %119, %cst_97 {dimension_numbers = #tpu.dot_dimension_numbers<[1], [0], [0], [1], [0, 0, 1, 1], [], []>} : vector<8x120xf32>, vector<120x84xf32>, vector<8x84xf32> -> vector<8x84xf32>
    %c3_98 = arith.constant 3 : index
    %c0_99 = arith.constant 0 : index
    %121 = vector.load %arg8[%c3_98, %c0_99] : memref<8x168xf32, #tpu.memory_space<vmem>>, vector<1x84xf32>
    %122 = vector.broadcast %121 : vector<1x84xf32> to vector<8x84xf32>
    %123 = arith.addf %120, %122 : vector<8x84xf32>
    %cst_100 = arith.constant 5.000000e-01 : f32
    %124 = vector.broadcast %cst_100 : f32 to vector<8x84xf32>
    %125 = arith.mulf %124, %123 : vector<8x84xf32>
    %126 = math.tanh %125 : vector<8x84xf32>
    %cst_101 = arith.constant 1.000000e+00 : f32
    %127 = vector.broadcast %cst_101 : f32 to vector<8x84xf32>
    %128 = arith.addf %126, %127 : vector<8x84xf32>
    %cst_102 = arith.constant 5.000000e-01 : f32
    %129 = vector.broadcast %cst_102 : f32 to vector<8x84xf32>
    %130 = arith.mulf %129, %128 : vector<8x84xf32>
    %c0_103 = arith.constant 0 : index
    %c0_104 = arith.constant 0 : index
    %131 = vector.load %arg7[%c0_103, %c0_104] : memref<84x10xf32, #tpu.memory_space<vmem>>, vector<84x10xf32>
    %cst_105 = arith.constant dense<0.000000e+00> : vector<8x10xf32>
    %132 = tpu.matmul %130, %131, %cst_105 {dimension_numbers = #tpu.dot_dimension_numbers<[1], [0], [0], [1], [0, 0, 1, 1], [], []>} : vector<8x84xf32>, vector<84x10xf32>, vector<8x10xf32> -> vector<8x10xf32>
    %c4_106 = arith.constant 4 : index
    %c0_107 = arith.constant 0 : index
    %133 = vector.load %arg8[%c4_106, %c0_107] : memref<8x168xf32, #tpu.memory_space<vmem>>, vector<1x10xf32>
    %134 = vector.broadcast %133 : vector<1x10xf32> to vector<8x10xf32>
    %135 = arith.addf %132, %134 : vector<8x10xf32>
    %cst_108 = arith.constant 5.000000e-01 : f32
    %136 = vector.broadcast %cst_108 : f32 to vector<8x10xf32>
    %137 = arith.mulf %136, %135 : vector<8x10xf32>
    %138 = math.tanh %137 : vector<8x10xf32>
    %cst_109 = arith.constant 1.000000e+00 : f32
    %139 = vector.broadcast %cst_109 : f32 to vector<8x10xf32>
    %140 = arith.addf %138, %139 : vector<8x10xf32>
    %cst_110 = arith.constant 5.000000e-01 : f32
    %141 = vector.broadcast %cst_110 : f32 to vector<8x10xf32>
    %142 = arith.mulf %141, %140 : vector<8x10xf32>
    %c0_111 = arith.constant 0 : index
    %c0_112 = arith.constant 0 : index
    %143 = vector.load %arg9[%c0_111, %c0_112] : memref<8x10xf32, #tpu.memory_space<vmem>>, vector<8x10xf32>
    tpu.vector_store %arg9[%c0_111, %c0_112], %142 {strides = array<i32>} : memref<8x10xf32, #tpu.memory_space<vmem>>, vector<8x10xf32>,
    return
  }
  func.func @transform_0(%arg0: i32) -> (i32, i32) {
    %c0_i32 = arith.constant 0 : i32
    %c0_i32_0 = arith.constant 0 : i32
    return %arg0, %c0_i32 : i32, i32
  }
  func.func @transform_1(%arg0: i32) -> (i32, i32, i32) {
    %c0_i32 = arith.constant 0 : i32
    %c0_i32_0 = arith.constant 0 : i32
    %c0_i32_1 = arith.constant 0 : i32
    %c0_i32_2 = arith.constant 0 : i32
    return %c0_i32, %c0_i32_0, %c0_i32_1 : i32, i32, i32
  }
  func.func @transform_2(%arg0: i32) -> (i32, i32, i32) {
    %c0_i32 = arith.constant 0 : i32
    %c0_i32_0 = arith.constant 0 : i32
    %c0_i32_1 = arith.constant 0 : i32
    %c0_i32_2 = arith.constant 0 : i32
    return %c0_i32, %c0_i32_0, %c0_i32_1 : i32, i32, i32
  }
  func.func @transform_3(%arg0: i32) -> (i32, i32, i32) {
    %c0_i32 = arith.constant 0 : i32
    %c0_i32_0 = arith.constant 0 : i32
    %c0_i32_1 = arith.constant 0 : i32
    %c0_i32_2 = arith.constant 0 : i32
    return %c0_i32, %c0_i32_0, %c0_i32_1 : i32, i32, i32
  }
  func.func @transform_4(%arg0: i32) -> (i32, i32, i32) {
    %c0_i32 = arith.constant 0 : i32
    %c0_i32_0 = arith.constant 0 : i32
    %c0_i32_1 = arith.constant 0 : i32
    %c0_i32_2 = arith.constant 0 : i32
    return %c0_i32, %c0_i32_0, %c0_i32_1 : i32, i32, i32
  }
  func.func @transform_5(%arg0: i32) -> (i32, i32) {
    %c0_i32 = arith.constant 0 : i32
    %c0_i32_0 = arith.constant 0 : i32
    %c0_i32_1 = arith.constant 0 : i32
    return %c0_i32, %c0_i32_0 : i32, i32
  }
  func.func @transform_6(%arg0: i32) -> (i32, i32) {
    %c0_i32 = arith.constant 0 : i32
    %c0_i32_0 = arith.constant 0 : i32
    %c0_i32_1 = arith.constant 0 : i32
    return %c0_i32, %c0_i32_0 : i32, i32
  }
  func.func @transform_7(%arg0: i32) -> (i32, i32) {
    %c0_i32 = arith.constant 0 : i32
    %c0_i32_0 = arith.constant 0 : i32
    %c0_i32_1 = arith.constant 0 : i32
    return %c0_i32, %c0_i32_0 : i32, i32
  }
  func.func @transform_8(%arg0: i32) -> (i32, i32) {
    %c0_i32 = arith.constant 0 : i32
    %c0_i32_0 = arith.constant 0 : i32
    return %arg0, %c0_i32 : i32, i32
  }
}

</mosaic_0001>

<llo_original>
// kernel: lenet_forward.1
$region0: #{lenet_forward.1}
  #allocation0 [shape = 'u32[]', space=smem, size = 0x4, offset = 0x4, fixed_abs, tag = 'smem constant byte address 0x4 - core index']
  #allocation1 [shape = 'u32[144,128]{1,0:T(1,128)}', space=vmem, size = 0x12000, scoped, tag = 'internal scratch']
  %s0 = inlined_call_operand.vmem [shape: f32[512,32], index: 0, kind: input, shape index: {}]
  %s1 = inlined_call_operand.vmem [shape: f32[5,32,168], index: 1, kind: input, shape index: {}]
  %s2 = inlined_call_operand.vmem [shape: f32[5,168,160], index: 2, kind: input, shape index: {}]
  %s3 = inlined_call_operand.vmem [shape: f32[5,8,256], index: 3, kind: input, shape index: {}]
  %s4 = inlined_call_operand.vmem [shape: f32[5,160,120], index: 4, kind: input, shape index: {}]
  %s5 = inlined_call_operand.vmem [shape: f32[120,84], index: 5, kind: input, shape index: {}]
  %s6 = inlined_call_operand.vmem [shape: f32[84,10], index: 6, kind: input, shape index: {}]
  %s7 = inlined_call_operand.vmem [shape: f32[8,168], index: 7, kind: input, shape index: {}]
  %s8 = inlined_call_operand.hbm [shape: f32[16,10], index: 8, kind: output, shape index: {}]
  %s9 = sld [smem:[#allocation0]]
  $region65: #{lenet_forward.1} parent=0
    _
  %s11 = ssub.s32 1, %s9
  %s12 = scalar_select 0, %s11, %s9
  $region1: #{lenet_forward.1} parent=0
    #allocation2 [shape = 'u8[8192]{0}', space=vmem, size = 0x2000, scoped, tag = 'output window, operand 0']
    #allocation3 [shape = 's32[2]{0}', space=sflag, size = 0x8, scoped, tag = 'scoped memory for lenet_forward.1']
    %13 = vsyncpa [#allocation3], 0
    %s14 = scalar_lea.sflag [#allocation3], 1
    %15 = vsyncpa %s14, 0
    loop: start=0, step=1, limit=4
    $region2: #{lenet_forward.1} parent=1 // loop_pre_header
      _
    $region3: #{lenet_forward.1} parent=1 // loop_header
      %s17 = sphi 0, %s21
      %p18 = scmp.ge.s32.totalorder %s17, 4
      %s27 = sphi 0, %s29
      %s30 = sphi 0, %s27
      %s31 = sphi 0, %s30
      %s47 = sphi 0, %s31
      %s51 = sphi 0, %s51
      %s53 = sphi 0, %s51
      %s54 = sphi 0, %s53
      %s68 = sphi 0, %s54
      %s72 = sphi 0, %s72
      %s74 = sphi 0, %s72
      %s75 = sphi 0, %s74
      %s89 = sphi 0, %s75
      %s93 = sphi 0, %s93
      %s95 = sphi 0, %s93
      %s96 = sphi 0, %s95
      %s110 = sphi 0, %s96
      %s114 = sphi 0, %s114
      %s116 = sphi 0, %s114
      %s117 = sphi 0, %s116
      %s131 = sphi 0, %s117
      %s135 = sphi 0, %s135
      %s137 = sphi 0, %s135
      %s138 = sphi 0, %s137
      %s152 = sphi 0, %s138
      %s156 = sphi 0, %s156
      %s158 = sphi 0, %s156
      %s159 = sphi 0, %s158
      %s173 = sphi 0, %s159
      %s177 = sphi 0, %s177
      %s179 = sphi 0, %s177
      %s180 = sphi 0, %s179
      %s194 = sphi 0, %s180
      %s200 = sphi 0, %s202
      %s203 = sphi 0, %s200
      %s204 = sphi 0, %s203
      %s220 = sphi 0, %s204
    $region4: #{lenet_forward.1} parent=1 // loop_header_branch
      %20 = sbr.rel (%p18) target = $region8
    $region5: #{lenet_forward.1} parent=1 // loop_body
      %s22 = ssub.s32 %s17, 1
      %s23 = ssub.s32 %s17, 2
      %s24 = sadd.s32 %s17, 1
      %s25 = ssub.s32 %s17, %s24
      %p26 = scmp.eq.s32.totalorder %s25, 0
      %s28 = sadd.s32 %s27, 1
      %s29 = scalar_select %p26, %s27, %s28
      %p32 = pneg %p26
      %p33 = scmp.eq.s32.totalorder %s17, 1
      %p34 = por %p32, %p33
      %p35 = scmp.ne.s32.totalorder %s27, %s30
      %p36 = scmp.eq.s32.totalorder %s17, 0
      %p37 = por %p35, %p36
      %p38 = scmp.ne.s32.totalorder %s27, %s30
      %p39 = scmp.eq.s32.totalorder %s22, 1
      %p40 = por %p38, %p39
      %p41 = scmp.ne.s32.totalorder %s30, %s31
      %p42 = scmp.eq.s32.totalorder %s22, 0
      %p43 = por %p41, %p42
      %p44 = scmp.ne.s32.totalorder %s30, %s31
      %p45 = scmp.eq.s32.totalorder %s23, 1
      %p46 = por %p44, %p45
      %p48 = scmp.ne.s32.totalorder %s31, %s47
      %p49 = scmp.eq.s32.totalorder %s23, 0
      %p50 = por %p48, %p49
      %s52 = sadd.s32 %s51, 1
      %p55 = scmp.eq.s32.totalorder %s17, 1
      %p56 = scmp.ne.s32.totalorder %s51, %s53
      %p57 = scmp.eq.s32.totalorder %s17, 0
      %p58 = por %p56, %p57
      %p59 = scmp.ne.s32.totalorder %s51, %s53
      %p60 = scmp.eq.s32.totalorder %s22, 1
      %p61 = por %p59, %p60
      %p62 = scmp.ne.s32.totalorder %s53, %s54
      %p63 = scmp.eq.s32.totalorder %s22, 0
      %p64 = por %p62, %p63
      %p65 = scmp.ne.s32.totalorder %s53, %s54
      %p66 = scmp.eq.s32.totalorder %s23, 1
      %p67 = por %p65, %p66
      %p69 = scmp.ne.s32.totalorder %s54, %s68
      %p70 = scmp.eq.s32.totalorder %s23, 0
      %p71 = por %p69, %p70
      %s73 = sadd.s32 %s72, 1
      %p76 = scmp.eq.s32.totalorder %s17, 1
      %p77 = scmp.ne.s32.totalorder %s72, %s74
      %p78 = scmp.eq.s32.totalorder %s17, 0
      %p79 = por %p77, %p78
      %p80 = scmp.ne.s32.totalorder %s72, %s74
      %p81 = scmp.eq.s32.totalorder %s22, 1
      %p82 = por %p80, %p81
      %p83 = scmp.ne.s32.totalorder %s74, %s75
      %p84 = scmp.eq.s32.totalorder %s22, 0
      %p85 = por %p83, %p84
      %p86 = scmp.ne.s32.totalorder %s74, %s75
      %p87 = scmp.eq.s32.totalorder %s23, 1
      %p88 = por %p86, %p87
      %p90 = scmp.ne.s32.totalorder %s75, %s89
      %p91 = scmp.eq.s32.totalorder %s23, 0
      %p92 = por %p90, %p91
      %s94 = sadd.s32 %s93, 1
      %p97 = scmp.eq.s32.totalorder %s17, 1
      %p98 = scmp.ne.s32.totalorder %s93, %s95
      %p99 = scmp.eq.s32.totalorder %s17, 0
      %p100 = por %p98, %p99
      %p101 = scmp.ne.s32.totalorder %s93, %s95
      %p102 = scmp.eq.s32.totalorder %s22, 1
      %p103 = por %p101, %p102
      %p104 = scmp.ne.s32.totalorder %s95, %s96
      %p105 = scmp.eq.s32.totalorder %s22, 0
      %p106 = por %p104, %p105
      %p107 = scmp.ne.s32.totalorder %s95, %s96
      %p108 = scmp.eq.s32.totalorder %s23, 1
      %p109 = por %p107, %p108
      %p111 = scmp.ne.s32.totalorder %s96, %s110
      %p112 = scmp.eq.s32.totalorder %s23, 0
      %p113 = por %p111, %p112
      %s115 = sadd.s32 %s114, 1
      %p118 = scmp.eq.s32.totalorder %s17, 1
      %p119 = scmp.ne.s32.totalorder %s114, %s116
      %p120 = scmp.eq.s32.totalorder %s17, 0
      %p121 = por %p119, %p120
      %p122 = scmp.ne.s32.totalorder %s114, %s116
      %p123 = scmp.eq.s32.totalorder %s22, 1
      %p124 = por %p122, %p123
      %p125 = scmp.ne.s32.totalorder %s116, %s117
      %p126 = scmp.eq.s32.totalorder %s22, 0
      %p127 = por %p125, %p126
      %p128 = scmp.ne.s32.totalorder %s116, %s117
      %p129 = scmp.eq.s32.totalorder %s23, 1
      %p130 = por %p128, %p129
      %p132 = scmp.ne.s32.totalorder %s117, %s131
      %p133 = scmp.eq.s32.totalorder %s23, 0
      %p134 = por %p132, %p133
      %s136 = sadd.s32 %s135, 1
      %p139 = scmp.eq.s32.totalorder %s17, 1
      %p140 = scmp.ne.s32.totalorder %s135, %s137
      %p141 = scmp.eq.s32.totalorder %s17, 0
      %p142 = por %p140, %p141
      %p143 = scmp.ne.s32.totalorder %s135, %s137
      %p144 = scmp.eq.s32.totalorder %s22, 1
      %p145 = por %p143, %p144
      %p146 = scmp.ne.s32.totalorder %s137, %s138
      %p147 = scmp.eq.s32.totalorder %s22, 0
      %p148 = por %p146, %p147
      %p149 = scmp.ne.s32.totalorder %s137, %s138
      %p150 = scmp.eq.s32.totalorder %s23, 1
      %p151 = por %p149, %p150
      %p153 = scmp.ne.s32.totalorder %s138, %s152
      %p154 = scmp.eq.s32.totalorder %s23, 0
      %p155 = por %p153, %p154
      %s157 = sadd.s32 %s156, 1
      %p160 = scmp.eq.s32.totalorder %s17, 1
      %p161 = scmp.ne.s32.totalorder %s156, %s158
      %p162 = scmp.eq.s32.totalorder %s17, 0
      %p163 = por %p161, %p162
      %p164 = scmp.ne.s32.totalorder %s156, %s158
      %p165 = scmp.eq.s32.totalorder %s22, 1
      %p166 = por %p164, %p165
      %p167 = scmp.ne.s32.totalorder %s158, %s159
      %p168 = scmp.eq.s32.totalorder %s22, 0
      %p169 = por %p167, %p168
      %p170 = scmp.ne.s32.totalorder %s158, %s159
      %p171 = scmp.eq.s32.totalorder %s23, 1
      %p172 = por %p170, %p171
      %p174 = scmp.ne.s32.totalorder %s159, %s173
      %p175 = scmp.eq.s32.totalorder %s23, 0
      %p176 = por %p174, %p175
      %s178 = sadd.s32 %s177, 1
      %p181 = scmp.eq.s32.totalorder %s17, 1
      %p182 = scmp.ne.s32.totalorder %s177, %s179
      %p183 = scmp.eq.s32.totalorder %s17, 0
      %p184 = por %p182, %p183
      %p185 = scmp.ne.s32.totalorder %s177, %s179
      %p186 = scmp.eq.s32.totalorder %s22, 1
      %p187 = por %p185, %p186
      %p188 = scmp.ne.s32.totalorder %s179, %s180
      %p189 = scmp.eq.s32.totalorder %s22, 0
      %p190 = por %p188, %p189
      %p191 = scmp.ne.s32.totalorder %s179, %s180
      %p192 = scmp.eq.s32.totalorder %s23, 1
      %p193 = por %p191, %p192
      %p195 = scmp.ne.s32.totalorder %s180, %s194
      %p196 = scmp.eq.s32.totalorder %s23, 0
      %p197 = por %p195, %p196
      %s198 = ssub.s32 %s17, %s24
      %p199 = scmp.eq.s32.totalorder %s198, 0
      %s201 = sadd.s32 %s200, 1
      %s202 = scalar_select %p199, %s200, %s201
      %p205 = pneg %p199
      %p206 = scmp.eq.s32.totalorder %s17, 1
      %p207 = por %p205, %p206
      %p208 = scmp.ne.s32.totalorder %s200, %s203
      %p209 = scmp.eq.s32.totalorder %s17, 0
      %p210 = por %p208, %p209
      %p211 = scmp.ne.s32.totalorder %s200, %s203
      %p212 = scmp.eq.s32.totalorder %s22, 1
      %p213 = por %p211, %p212
      %p214 = scmp.ne.s32.totalorder %s203, %s204
      %p215 = scmp.eq.s32.totalorder %s22, 0
      %p216 = por %p214, %p215
      %p217 = scmp.ne.s32.totalorder %s203, %s204
      %p218 = scmp.eq.s32.totalorder %s23, 1
      %p219 = por %p217, %p218
      %p221 = scmp.ne.s32.totalorder %s204, %s220
      %p222 = scmp.eq.s32.totalorder %s23, 0
      %p223 = por %p221, %p222
      %p224 = scmp.le.s32.totalorder 1, %s17
      %p225 = scmp.lt.s32.totalorder %s17, 3
      %p226 = pnand %p224, %p225
      %p227 = pneg %p226
      // Predicated region
      $region9: #{lenet_forward.1} parent=5 // pred_check
        _
      $region10: #{lenet_forward.1} parent=5 // pred_check_branch
        %229 = sbr.rel (%p226) target = $region12
      $region11: #{lenet_forward.1} parent=5 // pred_region
        %s230 = ssub.s32 %s17, 1
        // Predicated region
        $region13: #{lenet_forward.1} parent=11 // pred_check
          %p231 = pneg %p64
        $region14: #{lenet_forward.1} parent=11 // pred_check_branch
          %233 = sbr.rel (%p231) target = $region16
        $region15: #{lenet_forward.1} parent=11 // pred_region
          _
        $region16: #{lenet_forward.1} parent=11 // pred_fallthru
          _
        // Predicated region
        $region17: #{lenet_forward.1} parent=11 // pred_check
          %p234 = pneg %p85
        $region18: #{lenet_forward.1} parent=11 // pred_check_branch
          %236 = sbr.rel (%p234) target = $region20
        $region19: #{lenet_forward.1} parent=11 // pred_region
          _
        $region20: #{lenet_forward.1} parent=11 // pred_fallthru
          _
        // Predicated region
        $region21: #{lenet_forward.1} parent=11 // pred_check
          %p237 = pneg %p106
        $region22: #{lenet_forward.1} parent=11 // pred_check_branch
          %239 = sbr.rel (%p237) target = $region24
        $region23: #{lenet_forward.1} parent=11 // pred_region
          _
        $region24: #{lenet_forward.1} parent=11 // pred_fallthru
          _
        // Predicated region
        $region25: #{lenet_forward.1} parent=11 // pred_check
          %p240 = pneg %p127
        $region26: #{lenet_forward.1} parent=11 // pred_check_branch
          %242 = sbr.rel (%p240) target = $region28
        $region27: #{lenet_forward.1} parent=11 // pred_region
          _
        $region28: #{lenet_forward.1} parent=11 // pred_fallthru
          _
        // Predicated region
        $region29: #{lenet_forward.1} parent=11 // pred_check
          %p243 = pneg %p148
        $region30: #{lenet_forward.1} parent=11 // pred_check_branch
          %245 = sbr.rel (%p243) target = $region32
        $region31: #{lenet_forward.1} parent=11 // pred_region
          _
        $region32: #{lenet_forward.1} parent=11 // pred_fallthru
          _
        // Predicated region
        $region33: #{lenet_forward.1} parent=11 // pred_check
          %p246 = pneg %p169
        $region34: #{lenet_forward.1} parent=11 // pred_check_branch
          %248 = sbr.rel (%p246) target = $region36
        $region35: #{lenet_forward.1} parent=11 // pred_region
          _
        $region36: #{lenet_forward.1} parent=11 // pred_fallthru
          _
        // Predicated region
        $region37: #{lenet_forward.1} parent=11 // pred_check
          %p249 = pneg %p190
        $region38: #{lenet_forward.1} parent=11 // pred_check_branch
          %251 = sbr.rel (%p249) target = $region40
        $region39: #{lenet_forward.1} parent=11 // pred_region
          _
        $region40: #{lenet_forward.1} parent=11 // pred_fallthru
          _
      $region12: #{lenet_forward.1} parent=5 // pred_fallthru
        _
      %p252 = scmp.lt.s32.totalorder %s17, 2
      // Predicated region
      $region41: #{lenet_forward.1} parent=5 // pred_check
        %p253 = pneg %p252
      $region42: #{lenet_forward.1} parent=5 // pred_check_branch
        %255 = sbr.rel (%p253) target = $region44
      $region43: #{lenet_forward.1} parent=5 // pred_region
        // Predicated region
        $region45: #{lenet_forward.1} parent=43 // pred_check
          %p256 = pneg %p37
        $region46: #{lenet_forward.1} parent=43 // pred_check_branch
          %258 = sbr.rel (%p256) target = $region48
        $region47: #{lenet_forward.1} parent=43 // pred_region
          %s259 = smul.u32 32, %s17
          %p260 = scmp.lt.s32.totalorder %s259, 63
          %s261 = scalar_select %p260, %s259, 63
          %s262 = smul.addr %s261, 8
          %s263 = scalar_lea.vmem %s0, %s262
          %s264 = smul.u32 32, %s17
        $region48: #{lenet_forward.1} parent=43 // pred_fallthru
          _
      $region44: #{lenet_forward.1} parent=5 // pred_fallthru
        _
      %p265 = scmp.le.s32.totalorder 1, %s17
      %p266 = scmp.lt.s32.totalorder %s17, 3
      %p267 = pnand %p265, %p266
      %p268 = pneg %p267
      // Predicated region
      $region49: #{lenet_forward.1} parent=5 // pred_check
        _
      $region50: #{lenet_forward.1} parent=5 // pred_check_branch
        %270 = sbr.rel (%p267) target = $region52
      $region51: #{lenet_forward.1} parent=5 // pred_region
        %s271 = ssub.s32 %s17, 1
        %s272 = smul.u32 32, %s22
        %p273 = scmp.lt.s32.totalorder %s272, 63
        %s274 = scalar_select %p273, %s272, 63
        %s275 = smul.addr %s274, 8
        %s276 = scalar_lea.vmem %s0, %s275
        %p277 = pneg %p43
        %p278 = pneg %p40
        %p279 = pneg %p64
        %p280 = pneg %p61
        %p281 = pneg %p85
        %p282 = pneg %p82
        %p283 = pneg %p106
        %p284 = pneg %p103
        %p285 = pneg %p127
        %p286 = pneg %p124
        %p287 = pneg %p148
        %p288 = pneg %p145
        %p289 = pneg %p169
        %p290 = pneg %p166
        %p291 = pneg %p190
        %p292 = pneg %p187
        %p293 = pneg %p216
        %p294 = pneg %p213
        %s295 = sand.u32 %s203, 1
        %s296 = scalar_lea.sflag [#allocation3], %s295
        %s297 = sand.u32 %s203, 1
        %s298 = smul.addr %s297, 8
        %s299 = scalar_lea.vmem [#allocation2], %s298
        %s300 = smul.u32 32, %s22
        %p301 = scmp.lt.s32.totalorder %s300, 63
        %s302 = scalar_select %p301, %s300, 63
        %s303 = smul.addr %s302, 8
        %s304 = scalar_lea.vmem %s0, %s303
        %s305 = smul.u32 32, %s22
        %v306 = vld [vmem:[%s304] sm:$0xff]
        %v307 = vld [vmem:[%s304 + $0x8] sm:$0xff]
        %v308 = vld [vmem:[%s304 + $0x10] sm:$0xff]
        %v309 = vld [vmem:[%s304 + $0x18] sm:$0xff]
        %v310 = vld [vmem:[%s304 + $0x20] sm:$0xff]
        %v311 = vld [vmem:[%s304 + $0x28] sm:$0xff]
        %v312 = vld [vmem:[%s304 + $0x30] sm:$0xff]
        %v313 = vld [vmem:[%s304 + $0x38] sm:$0xff]
        %v314 = vld [vmem:[%s304 + $0x40] sm:$0xff]
        %v315 = vld [vmem:[%s304 + $0x48] sm:$0xff]
        %v316 = vld [vmem:[%s304 + $0x50] sm:$0xff]
        %v317 = vld [vmem:[%s304 + $0x58] sm:$0xff]
        %v318 = vld [vmem:[%s304 + $0x60] sm:$0xff]
        %v319 = vld [vmem:[%s304 + $0x68] sm:$0xff]
        %v320 = vld [vmem:[%s304 + $0x70] sm:$0xff]
        %v321 = vld [vmem:[%s304 + $0x78] sm:$0xff]
        %v322 = vld [vmem:[%s304 + $0x80] sm:$0xff]
        %v323 = vld [vmem:[%s304 + $0x88] sm:$0xff]
        %v324 = vld [vmem:[%s304 + $0x90] sm:$0xff]
        %v325 = vld [vmem:[%s304 + $0x98] sm:$0xff]
        %v326 = vld [vmem:[%s304 + $0xa0] sm:$0xff]
        %v327 = vld [vmem:[%s304 + $0xa8] sm:$0xff]
        %v328 = vld [vmem:[%s304 + $0xb0] sm:$0xff]
        %v329 = vld [vmem:[%s304 + $0xb8] sm:$0xff]
        %v330 = vld [vmem:[%s304 + $0xc0] sm:$0xff]
        %v331 = vld [vmem:[%s304 + $0xc8] sm:$0xff]
        %v332 = vld [vmem:[%s304 + $0xd0] sm:$0xff]
        %v333 = vld [vmem:[%s304 + $0xd8] sm:$0xff]
        %v334 = vld [vmem:[%s304 + $0xe0] sm:$0xff]
        %v335 = vld [vmem:[%s304 + $0xe8] sm:$0xff]
        %v336 = vld [vmem:[%s304 + $0xf0] sm:$0xff]
        %v337 = vld [vmem:[%s304 + $0xf8] sm:$0xff]
        %v338 = vld [vmem:[%s1] sm:$0xff]
        %v339 = vld [vmem:[%s1 + $0x8] sm:$0xff]
        %v340 = vld [vmem:[%s1 + $0x10] sm:$0xff]
        %v341 = vld [vmem:[%s1 + $0x18] sm:$0xff]
        %v342 = vld [vmem:[%s1 + $0x20] sm:$0xff]
        %v343 = vld [vmem:[%s1 + $0x28] sm:$0xff]
        %v344 = vld [vmem:[%s1 + $0x30] sm:$0xff]
        %v345 = vld [vmem:[%s1 + $0x38] sm:$0xff]
        %v346 = vrot.slane %v306, 1
        %v347 = vrot.slane %v307, 1
        %v348 = vrot.slane %v308, 1
        %v349 = vrot.slane %v309, 1
        %v350 = vrot.slane %v310, 1
        %v351 = vrot.slane %v311, 1
        %v352 = vrot.slane %v312, 1
        %v353 = vrot.slane %v313, 1
        %v354 = vrot.slane %v314, 1
        %v355 = vrot.slane %v315, 1
        %v356 = vrot.slane %v316, 1
        %v357 = vrot.slane %v317, 1
        %v358 = vrot.slane %v318, 1
        %v359 = vrot.slane %v319, 1
        %v360 = vrot.slane %v320, 1
        %v361 = vrot.slane %v321, 1
        %v362 = vrot.slane %v322, 1
        %v363 = vrot.slane %v323, 1
        %v364 = vrot.slane %v324, 1
        %v365 = vrot.slane %v325, 1
        %v366 = vrot.slane %v326, 1
        %v367 = vrot.slane %v327, 1
        %v368 = vrot.slane %v328, 1
        %v369 = vrot.slane %v329, 1
        %v370 = vrot.slane %v330, 1
        %v371 = vrot.slane %v331, 1
        %v372 = vrot.slane %v332, 1
        %v373 = vrot.slane %v333, 1
        %v374 = vrot.slane %v334, 1
        %v375 = vrot.slane %v335, 1
        %v376 = vrot.slane %v336, 1
        %v377 = vrot.slane %v337, 1
        %v378 = vlaneseq
        %v379 = vshrl.u32 %v378, 7
        %vm380 = vcmp.lt.s32.totalorder %v379, 7
        %v381 = vsel %vm380, %v376, %v377
        %v382 = vsel %vm380, %v375, %v376
        %v383 = vsel %vm380, %v374, %v375
        %v384 = vsel %vm380, %v373, %v374
        %v385 = vsel %vm380, %v372, %v373
        %v386 = vsel %vm380, %v371, %v372
        %v387 = vsel %vm380, %v370, %v371
        %v388 = vsel %vm380, %v369, %v370
        %v389 = vsel %vm380, %v368, %v369
        %v390 = vsel %vm380, %v367, %v368
        %v391 = vsel %vm380, %v366, %v367
        %v392 = vsel %vm380, %v365, %v366
        %v393 = vsel %vm380, %v364, %v365
        %v394 = vsel %vm380, %v363, %v364
        %v395 = vsel %vm380, %v362, %v363
        %v396 = vsel %vm380, %v361, %v362
        %v397 = vsel %vm380, %v360, %v361
        %v398 = vsel %vm380, %v359, %v360
        %v399 = vsel %vm380, %v358, %v359
        %v400 = vsel %vm380, %v357, %v358
        %v401 = vsel %vm380, %v356, %v357
        %v402 = vsel %vm380, %v355, %v356
        %v403 = vsel %vm380, %v354, %v355
        %v404 = vsel %vm380, %v353, %v354
        %v405 = vsel %vm380, %v352, %v353
        %v406 = vsel %vm380, %v351, %v352
        %v407 = vsel %vm380, %v350, %v351
        %v408 = vsel %vm380, %v349, %v350
        %v409 = vsel %vm380, %v348, %v349
        %v410 = vsel %vm380, %v347, %v348
        %v411 = vsel %vm380, %v346, %v347
        %v412 = vsel %vm380, %v377, %v346
        %s413 = scalar_lea.vmem %s1, 64
        %v414 = vld [vmem:[%s413] sm:$0xff]
        %v415 = vld [vmem:[%s413 + $0x8] sm:$0xff]
        %v416 = vld [vmem:[%s413 + $0x10] sm:$0xff]
        %v417 = vld [vmem:[%s413 + $0x18] sm:$0xff]
        %v418 = vld [vmem:[%s413 + $0x20] sm:$0xff]
        %v419 = vld [vmem:[%s413 + $0x28] sm:$0xff]
        %v420 = vld [vmem:[%s413 + $0x30] sm:$0xff]
        %v421 = vld [vmem:[%s413 + $0x38] sm:$0xff]
        %vm422 = vcmask 261120
        %v424 = vsel %vm422, %v411, 0
        %v427 = vsel %vm422, %v410, 0
        %v430 = vsel %vm422, %v409, 0
        %v433 = vsel %vm422, %v408, 0
        %v436 = vsel %vm422, %v407, 0
        %v439 = vsel %vm422, %v406, 0
        %v442 = vsel %vm422, %v405, 0
        %v445 = vsel %vm422, %v404, 0
        %v448 = vsel %vm422, %v403, 0
        %v451 = vsel %vm422, %v402, 0
        %v454 = vsel %vm422, %v401, 0
        %v457 = vsel %vm422, %v400, 0
        %v460 = vsel %vm422, %v399, 0
        %v463 = vsel %vm422, %v398, 0
        %v466 = vsel %vm422, %v397, 0
        %v469 = vsel %vm422, %v396, 0
        %v472 = vsel %vm422, %v395, 0
        %v475 = vsel %vm422, %v394, 0
        %v478 = vsel %vm422, %v393, 0
        %v481 = vsel %vm422, %v392, 0
        %v484 = vsel %vm422, %v391, 0
        %v487 = vsel %vm422, %v390, 0
        %v490 = vsel %vm422, %v389, 0
        %v493 = vsel %vm422, %v388, 0
        %v496 = vsel %vm422, %v387, 0
        %v499 = vsel %vm422, %v386, 0
        %v502 = vsel %vm422, %v385, 0
        %v505 = vsel %vm422, %v384, 0
        %v508 = vsel %vm422, %v383, 0
        %v511 = vsel %vm422, %v382, 0
        %v514 = vsel %vm422, %v381, 0
        %v517 = vsel %vm422, %v412, 0
        %519 = vmatprep.subr.mxu0 %v415
        %520 = vmatpush1.msra.mxu0 %v414
        %521 = vmatprep.subr.mxu0 %v417
        %522 = vmatpush1.msra.mxu0 %v416
        %523 = vmatprep.subr.mxu0 %v419
        %524 = vmatpush1.msra.mxu0 %v418
        %525 = vmatprep.subr.mxu0 %v421
        %526 = vmatpush1.msra.mxu0 %v420
        %527 = vmatprep.subr.mxu0 0.0
        %528 = vmatpush1.msra.mxu0 0.0
        %529 = vmatprep.subr.mxu0 0.0
        %530 = vmatpush1.msra.mxu0 0.0
        %531 = vmatprep.subr.mxu0 0.0
        %532 = vmatpush1.msra.mxu0 0.0
        %533 = vmatprep.subr.mxu0 0.0
        %534 = vmatpush1.msra.mxu0 0.0
        %535 = vmatprep.subr.mxu0 0.0
        %536 = vmatpush1.msra.mxu0 0.0
        %537 = vmatprep.subr.mxu0 0.0
        %538 = vmatpush1.msra.mxu0 0.0
        %539 = vmatprep.subr.mxu0 0.0
        %540 = vmatpush1.msra.mxu0 0.0
        %541 = vmatprep.subr.mxu0 0.0
        %542 = vmatpush1.msra.mxu0 0.0
        %543 = vmatprep.subr.mxu0 0.0
        %544 = vmatpush1.msra.mxu0 0.0
        %545 = vmatprep.subr.mxu0 0.0
        %546 = vmatpush1.msra.mxu0 0.0
        %547 = vmatprep.subr.mxu0 0.0
        %548 = vmatpush1.msra.mxu0 0.0
        %549 = vmatprep.subr.mxu0 0.0
        %550 = vmatpush1.msra.mxu0 0.0
        %551 = vmatprep.subr.mxu0 0.0
        %552 = vmatpush1.msra.mxu0 0.0
        %553 = vmatprep.subr.mxu0 0.0
        %554 = vmatpush1.msra.mxu0 0.0
        %555 = vmatprep.subr.mxu0 0.0
        %556 = vmatpush1.msra.mxu0 0.0
        %557 = vmatprep.subr.mxu0 0.0
        %558 = vmatpush1.msra.mxu0 0.0
        %559 = vmatprep.subr.mxu0 0.0
        %560 = vmatpush1.msra.mxu0 0.0
        %561 = vmatprep.subr.mxu0 0.0
        %562 = vmatpush1.msra.mxu0 0.0
        %563 = vmatprep.subr.mxu0 0.0
        %564 = vmatpush1.msra.mxu0 0.0
        %565 = vmatprep.subr.mxu0 0.0
        %566 = vmatpush1.msra.mxu0 0.0
        %567 = vmatprep.subr.mxu0 0.0
        %568 = vmatpush1.msra.mxu0 0.0
        %569 = vmatprep.subr.mxu0 0.0
        %570 = vmatpush1.msra.mxu0 0.0
        %571 = vmatprep.subr.mxu0 0.0
        %572 = vmatpush1.msra.mxu0 0.0
        %573 = vmatprep.subr.mxu0 0.0
        %574 = vmatpush1.msra.mxu0 0.0
        %575 = vmatprep.subr.mxu0 0.0
        %576 = vmatpush1.msra.mxu0 0.0
        %577 = vmatprep.subr.mxu0 0.0
        %578 = vmatpush1.msra.mxu0 0.0
        %579 = vmatprep.subr.mxu0 0.0
        %580 = vmatpush1.msra.mxu0 0.0
        %581 = vmatprep.subr.mxu0 0.0
        %582 = vmatpush1.msra.mxu0 0.0
        %583 = vmatprep.mubr.f32.mxu0 0.0
        %584 = vmatmul.mubr.f32.gmra.mrb[0].mxu0 %v424
        %v585 = vpop.f32.mrb[0].mxu0
        %v586 = vadd.f32 0.0, %v585
        %v587 = vpop.f32.mrb[0].mxu0
        %v588 = vadd.f32 0.0, %v587
        %589 = vmatprep.mubr.f32.mxu0 0.0
        %590 = vmatmul.mubr.f32.gmra.mrb[0].mxu0 %v427
        %v591 = vpop.f32.mrb[0].mxu0
        %v592 = vadd.f32 0.0, %v591
        %v593 = vpop.f32.mrb[0].mxu0
        %v594 = vadd.f32 0.0, %v593
        %595 = vmatprep.mubr.f32.mxu0 0.0
        %596 = vmatmul.mubr.f32.gmra.mrb[0].mxu0 %v430
        %v597 = vpop.f32.mrb[0].mxu0
        %v598 = vadd.f32 0.0, %v597
        %v599 = vpop.f32.mrb[0].mxu0
        %v600 = vadd.f32 0.0, %v599
        %601 = vmatprep.mubr.f32.mxu0 0.0
        %602 = vmatmul.mubr.f32.gmra.mrb[0].mxu0 %v433
        %v603 = vpop.f32.mrb[0].mxu0
        %v604 = vadd.f32 0.0, %v603
        %v605 = vpop.f32.mrb[0].mxu0
        %v606 = vadd.f32 0.0, %v605
        %607 = vmatprep.mubr.f32.mxu0 0.0
        %608 = vmatmul.mubr.f32.gmra.mrb[0].mxu0 %v436
        %v609 = vpop.f32.mrb[0].mxu0
        %v610 = vadd.f32 0.0, %v609
        %v611 = vpop.f32.mrb[0].mxu0
        %v612 = vadd.f32 0.0, %v611
        %613 = vmatprep.mubr.f32.mxu0 0.0
        %614 = vmatmul.mubr.f32.gmra.mrb[0].mxu0 %v439
        %v615 = vpop.f32.mrb[0].mxu0
        %v616 = vadd.f32 0.0, %v615
        %v617 = vpop.f32.mrb[0].mxu0
        %v618 = vadd.f32 0.0, %v617
        %619 = vmatprep.mubr.f32.mxu0 0.0
        %620 = vmatmul.mubr.f32.gmra.mrb[0].mxu0 %v442
        %v621 = vpop.f32.mrb[0].mxu0
        %v622 = vadd.f32 0.0, %v621
        %v623 = vpop.f32.mrb[0].mxu0
        %v624 = vadd.f32 0.0, %v623
        %625 = vmatprep.mubr.f32.mxu0 0.0
        %626 = vmatmul.mubr.f32.gmra.mrb[0].mxu0 %v445
        %v627 = vpop.f32.mrb[0].mxu0
        %v628 = vadd.f32 0.0, %v627
        %v629 = vpop.f32.mrb[0].mxu0
        %v630 = vadd.f32 0.0, %v629
        %631 = vmatprep.mubr.f32.mxu0 0.0
        %632 = vmatmul.mubr.f32.gmra.mrb[0].mxu0 %v448
        %v633 = vpop.f32.mrb[0].mxu0
        %v634 = vadd.f32 0.0, %v633
        %v635 = vpop.f32.mrb[0].mxu0
        %v636 = vadd.f32 0.0, %v635
        %637 = vmatprep.mubr.f32.mxu0 0.0
        %638 = vmatmul.mubr.f32.gmra.mrb[0].mxu0 %v451
        %v639 = vpop.f32.mrb[0].mxu0
        %v640 = vadd.f32 0.0, %v639
        %v641 = vpop.f32.mrb[0].mxu0
        %v642 = vadd.f32 0.0, %v641
        %643 = vmatprep.mubr.f32.mxu0 0.0
        %644 = vmatmul.mubr.f32.gmra.mrb[0].mxu0 %v454
        %v645 = vpop.f32.mrb[0].mxu0
        %v646 = vadd.f32 0.0, %v645
        %v647 = vpop.f32.mrb[0].mxu0
        %v648 = vadd.f32 0.0, %v647
        %649 = vmatprep.mubr.f32.mxu0 0.0
        %650 = vmatmul.mubr.f32.gmra.mrb[0].mxu0 %v457
        %v651 = vpop.f32.mrb[0].mxu0
        %v652 = vadd.f32 0.0, %v651
        %v653 = vpop.f32.mrb[0].mxu0
        %v654 = vadd.f32 0.0, %v653
        %655 = vmatprep.mubr.f32.mxu0 0.0
        %656 = vmatmul.mubr.f32.gmra.mrb[0].mxu0 %v460
        %v657 = vpop.f32.mrb[0].mxu0
        %v658 = vadd.f32 0.0, %v657
        %v659 = vpop.f32.mrb[0].mxu0
        %v660 = vadd.f32 0.0, %v659
        %661 = vmatprep.mubr.f32.mxu0 0.0
        %662 = vmatmul.mubr.f32.gmra.mrb[0].mxu0 %v463
        %v663 = vpop.f32.mrb[0].mxu0
        %v664 = vadd.f32 0.0, %v663
        %v665 = vpop.f32.mrb[0].mxu0
        %v666 = vadd.f32 0.0, %v665
        %667 = vmatprep.mubr.f32.mxu0 0.0
        %668 = vmatmul.mubr.f32.gmra.mrb[0].mxu0 %v466
        %v669 = vpop.f32.mrb[0].mxu0
        %v670 = vadd.f32 0.0, %v669
        %v671 = vpop.f32.mrb[0].mxu0
        %v672 = vadd.f32 0.0, %v671
        %673 = vmatprep.mubr.f32.mxu0 0.0
        %674 = vmatmul.mubr.f32.gmra.mrb[0].mxu0 %v469
        %v675 = vpop.f32.mrb[0].mxu0
        %v676 = vadd.f32 0.0, %v675
        %v677 = vpop.f32.mrb[0].mxu0
        %v678 = vadd.f32 0.0, %v677
        %679 = vmatprep.mubr.f32.mxu0 0.0
        %680 = vmatmul.mubr.f32.gmra.mrb[0].mxu0 %v472
        %v681 = vpop.f32.mrb[0].mxu0
        %v682 = vadd.f32 0.0, %v681
        %v683 = vpop.f32.mrb[0].mxu0
        %v684 = vadd.f32 0.0, %v683
        %685 = vmatprep.mubr.f32.mxu0 0.0
        %686 = vmatmul.mubr.f32.gmra.mrb[0].mxu0 %v475
        %v687 = vpop.f32.mrb[0].mxu0
        %v688 = vadd.f32 0.0, %v687
        %v689 = vpop.f32.mrb[0].mxu0
        %v690 = vadd.f32 0.0, %v689
        %691 = vmatprep.mubr.f32.mxu0 0.0
        %692 = vmatmul.mubr.f32.gmra.mrb[0].mxu0 %v478
        %v693 = vpop.f32.mrb[0].mxu0
        %v694 = vadd.f32 0.0, %v693
        %v695 = vpop.f32.mrb[0].mxu0
        %v696 = vadd.f32 0.0, %v695
        %697 = vmatprep.mubr.f32.mxu0 0.0
        %698 = vmatmul.mubr.f32.gmra.mrb[0].mxu0 %v481
        %v699 = vpop.f32.mrb[0].mxu0
        %v700 = vadd.f32 0.0, %v699
        %v701 = vpop.f32.mrb[0].mxu0
        %v702 = vadd.f32 0.0, %v701
        %703 = vmatprep.mubr.f32.mxu0 0.0
        %704 = vmatmul.mubr.f32.gmra.mrb[0].mxu0 %v484
        %v705 = vpop.f32.mrb[0].mxu0
        %v706 = vadd.f32 0.0, %v705
        %v707 = vpop.f32.mrb[0].mxu0
        %v708 = vadd.f32 0.0, %v707
        %709 = vmatprep.mubr.f32.mxu0 0.0
        %710 = vmatmul.mubr.f32.gmra.mrb[0].mxu0 %v487
        %v711 = vpop.f32.mrb[0].mxu0
        %v712 = vadd.f32 0.0, %v711
        %v713 = vpop.f32.mrb[0].mxu0
        %v714 = vadd.f32 0.0, %v713
        %715 = vmatprep.mubr.f32.mxu0 0.0
        %716 = vmatmul.mubr.f32.gmra.mrb[0].mxu0 %v490
        %v717 = vpop.f32.mrb[0].mxu0
        %v718 = vadd.f32 0.0, %v717
        %v719 = vpop.f32.mrb[0].mxu0
        %v720 = vadd.f32 0.0, %v719
        %721 = vmatprep.mubr.f32.mxu0 0.0
        %722 = vmatmul.mubr.f32.gmra.mrb[0].mxu0 %v493
        %v723 = vpop.f32.mrb[0].mxu0
        %v724 = vadd.f32 0.0, %v723
        %v725 = vpop.f32.mrb[0].mxu0
        %v726 = vadd.f32 0.0, %v725
        %727 = vmatprep.mubr.f32.mxu0 0.0
        %728 = vmatmul.mubr.f32.gmra.mrb[0].mxu0 %v496
        %v729 = vpop.f32.mrb[0].mxu0
        %v730 = vadd.f32 0.0, %v729
        %v731 = vpop.f32.mrb[0].mxu0
        %v732 = vadd.f32 0.0, %v731
        %733 = vmatprep.mubr.f32.mxu0 0.0
        %734 = vmatmul.mubr.f32.gmra.mrb[0].mxu0 %v499
        %v735 = vpop.f32.mrb[0].mxu0
        %v736 = vadd.f32 0.0, %v735
        %v737 = vpop.f32.mrb[0].mxu0
        %v738 = vadd.f32 0.0, %v737
        %739 = vmatprep.mubr.f32.mxu0 0.0
        %740 = vmatmul.mubr.f32.gmra.mrb[0].mxu0 %v502
        %v741 = vpop.f32.mrb[0].mxu0
        %v742 = vadd.f32 0.0, %v741
        %v743 = vpop.f32.mrb[0].mxu0
        %v744 = vadd.f32 0.0, %v743
        %745 = vmatprep.mubr.f32.mxu0 0.0
        %746 = vmatmul.mubr.f32.gmra.mrb[0].mxu0 %v505
        %v747 = vpop.f32.mrb[0].mxu0
        %v748 = vadd.f32 0.0, %v747
        %v749 = vpop.f32.mrb[0].mxu0
        %v750 = vadd.f32 0.0, %v749
        %751 = vmatprep.mubr.f32.mxu0 0.0
        %752 = vmatmul.mubr.f32.gmra.mrb[0].mxu0 %v508
        %v753 = vpop.f32.mrb[0].mxu0
        %v754 = vadd.f32 0.0, %v753
        %v755 = vpop.f32.mrb[0].mxu0
        %v756 = vadd.f32 0.0, %v755
        %757 = vmatprep.mubr.f32.mxu0 0.0
        %758 = vmatmul.mubr.f32.gmra.mrb[0].mxu0 %v511
        %v759 = vpop.f32.mrb[0].mxu0
        %v760 = vadd.f32 0.0, %v759
        %v761 = vpop.f32.mrb[0].mxu0
        %v762 = vadd.f32 0.0, %v761
        %763 = vmatprep.mubr.f32.mxu0 0.0
        %764 = vmatmul.mubr.f32.gmra.mrb[0].mxu0 %v514
        %v765 = vpop.f32.mrb[0].mxu0
        %v766 = vadd.f32 0.0, %v765
        %v767 = vpop.f32.mrb[0].mxu0
        %v768 = vadd.f32 0.0, %v767
        %769 = vmatprep.mubr.f32.mxu0 0.0
        %770 = vmatmul.mubr.f32.gmra.mrb[0].mxu0 %v517
        %v771 = vpop.f32.mrb[0].mxu0
        %v772 = vadd.f32 0.0, %v771
        %v773 = vpop.f32.mrb[0].mxu0
        %v774 = vadd.f32 0.0, %v773
        %775 = vdwg.mxu0
        %v777 = vsel %vm422, %v306, 0
        %v780 = vsel %vm422, %v307, 0
        %v783 = vsel %vm422, %v308, 0
        %v786 = vsel %vm422, %v309, 0
        %v789 = vsel %vm422, %v310, 0
        %v792 = vsel %vm422, %v311, 0
        %v795 = vsel %vm422, %v312, 0
        %v798 = vsel %vm422, %v313, 0
        %v801 = vsel %vm422, %v314, 0
        %v804 = vsel %vm422, %v315, 0
        %v807 = vsel %vm422, %v316, 0
        %v810 = vsel %vm422, %v317, 0
        %v813 = vsel %vm422, %v318, 0
        %v816 = vsel %vm422, %v319, 0
        %v819 = vsel %vm422, %v320, 0
        %v822 = vsel %vm422, %v321, 0
        %v825 = vsel %vm422, %v322, 0
        %v828 = vsel %vm422, %v323, 0
        %v831 = vsel %vm422, %v324, 0
        %v834 = vsel %vm422, %v325, 0
        %v837 = vsel %vm422, %v326, 0
        %v840 = vsel %vm422, %v327, 0
        %v843 = vsel %vm422, %v328, 0
        %v846 = vsel %vm422, %v329, 0
        %v849 = vsel %vm422, %v330, 0
        %v852 = vsel %vm422, %v331, 0
        %v855 = vsel %vm422, %v332, 0
        %v858 = vsel %vm422, %v333, 0
        %v861 = vsel %vm422, %v334, 0
        %v864 = vsel %vm422, %v335, 0
        %v867 = vsel %vm422, %v336, 0
        %v870 = vsel %vm422, %v337, 0
        %872 = vmatprep.subr.mxu0 %v339
        %873 = vmatpush1.msra.mxu0 %v338
        %874 = vmatprep.subr.mxu0 %v341
        %875 = vmatpush1.msra.mxu0 %v340
        %876 = vmatprep.subr.mxu0 %v343
        %877 = vmatpush1.msra.mxu0 %v342
        %878 = vmatprep.subr.mxu0 %v345
        %879 = vmatpush1.msra.mxu0 %v344
        %880 = vmatprep.subr.mxu0 0.0
        %881 = vmatpush1.msra.mxu0 0.0
        %882 = vmatprep.subr.mxu0 0.0
        %883 = vmatpush1.msra.mxu0 0.0
        %884 = vmatprep.subr.mxu0 0.0
        %885 = vmatpush1.msra.mxu0 0.0
        %886 = vmatprep.subr.mxu0 0.0
        %887 = vmatpush1.msra.mxu0 0.0
        %888 = vmatprep.subr.mxu0 0.0
        %889 = vmatpush1.msra.mxu0 0.0
        %890 = vmatprep.subr.mxu0 0.0
        %891 = vmatpush1.msra.mxu0 0.0
        %892 = vmatprep.subr.mxu0 0.0
        %893 = vmatpush1.msra.mxu0 0.0
        %894 = vmatprep.subr.mxu0 0.0
        %895 = vmatpush1.msra.mxu0 0.0
        %896 = vmatprep.subr.mxu0 0.0
        %897 = vmatpush1.msra.mxu0 0.0
        %898 = vmatprep.subr.mxu0 0.0
        %899 = vmatpush1.msra.mxu0 0.0
        %900 = vmatprep.subr.mxu0 0.0
        %901 = vmatpush1.msra.mxu0 0.0
        %902 = vmatprep.subr.mxu0 0.0
        %903 = vmatpush1.msra.mxu0 0.0
        %904 = vmatprep.subr.mxu0 0.0
        %905 = vmatpush1.msra.mxu0 0.0
        %906 = vmatprep.subr.mxu0 0.0
        %907 = vmatpush1.msra.mxu0 0.0
        %908 = vmatprep.subr.mxu0 0.0
        %909 = vmatpush1.msra.mxu0 0.0
        %910 = vmatprep.subr.mxu0 0.0
        %911 = vmatpush1.msra.mxu0 0.0
        %912 = vmatprep.subr.mxu0 0.0
        %913 = vmatpush1.msra.mxu0 0.0
        %914 = vmatprep.subr.mxu0 0.0
        %915 = vmatpush1.msra.mxu0 0.0
        %916 = vmatprep.subr.mxu0 0.0
        %917 = vmatpush1.msra.mxu0 0.0
        %918 = vmatprep.subr.mxu0 0.0
        %919 = vmatpush1.msra.mxu0 0.0
        %920 = vmatprep.subr.mxu0 0.0
        %921 = vmatpush1.msra.mxu0 0.0
        %922 = vmatprep.subr.mxu0 0.0
        %923 = vmatpush1.msra.mxu0 0.0
        %924 = vmatprep.subr.mxu0 0.0
        %925 = vmatpush1.msra.mxu0 0.0
        %926 = vmatprep.subr.mxu0 0.0
        %927 = vmatpush1.msra.mxu0 0.0
        %928 = vmatprep.subr.mxu0 0.0
        %929 = vmatpush1.msra.mxu0 0.0
        %930 = vmatprep.subr.mxu0 0.0
        %931 = vmatpush1.msra.mxu0 0.0
        %932 = vmatprep.subr.mxu0 0.0
        %933 = vmatpush1.msra.mxu0 0.0
        %934 = vmatprep.subr.mxu0 0.0
        %935 = vmatpush1.msra.mxu0 0.0
        %936 = vmatprep.mubr.f32.mxu0 0.0
        %937 = vmatmul.mubr.f32.gmra.mrb[0].mxu0 %v777
        %v938 = vpop.f32.mrb[0].mxu0
        %v939 = vadd.f32 %v586, %v938
        %v940 = vpop.f32.mrb[0].mxu0
        %v941 = vadd.f32 %v588, %v940
        %942 = vmatprep.mubr.f32.mxu0 0.0
        %943 = vmatmul.mubr.f32.gmra.mrb[0].mxu0 %v780
        %v944 = vpop.f32.mrb[0].mxu0
        %v945 = vadd.f32 %v592, %v944
        %v946 = vpop.f32.mrb[0].mxu0
        %v947 = vadd.f32 %v594, %v946
        %948 = vmatprep.mubr.f32.mxu0 0.0
        %949 = vmatmul.mubr.f32.gmra.mrb[0].mxu0 %v783
        %v950 = vpop.f32.mrb[0].mxu0
        %v951 = vadd.f32 %v598, %v950
        %v952 = vpop.f32.mrb[0].mxu0
        %v953 = vadd.f32 %v600, %v952
        %954 = vmatprep.mubr.f32.mxu0 0.0
        %955 = vmatmul.mubr.f32.gmra.mrb[0].mxu0 %v786
        %v956 = vpop.f32.mrb[0].mxu0
        %v957 = vadd.f32 %v604, %v956
        %v958 = vpop.f32.mrb[0].mxu0
        %v959 = vadd.f32 %v606, %v958
        %960 = vmatprep.mubr.f32.mxu0 0.0
        %961 = vmatmul.mubr.f32.gmra.mrb[0].mxu0 %v789
        %v962 = vpop.f32.mrb[0].mxu0
        %v963 = vadd.f32 %v610, %v962
        %v964 = vpop.f32.mrb[0].mxu0
        %v965 = vadd.f32 %v612, %v964
        %966 = vmatprep.mubr.f32.mxu0 0.0
        %967 = vmatmul.mubr.f32.gmra.mrb[0].mxu0 %v792
        %v968 = vpop.f32.mrb[0].mxu0
        %v969 = vadd.f32 %v616, %v968
        %v970 = vpop.f32.mrb[0].mxu0
        %v971 = vadd.f32 %v618, %v970
        %972 = vmatprep.mubr.f32.mxu0 0.0
        %973 = vmatmul.mubr.f32.gmra.mrb[0].mxu0 %v795
        %v974 = vpop.f32.mrb[0].mxu0
        %v975 = vadd.f32 %v622, %v974
        %v976 = vpop.f32.mrb[0].mxu0
        %v977 = vadd.f32 %v624, %v976
        %978 = vmatprep.mubr.f32.mxu0 0.0
        %979 = vmatmul.mubr.f32.gmra.mrb[0].mxu0 %v798
        %v980 = vpop.f32.mrb[0].mxu0
        %v981 = vadd.f32 %v628, %v980
        %v982 = vpop.f32.mrb[0].mxu0
        %v983 = vadd.f32 %v630, %v982
        %984 = vmatprep.mubr.f32.mxu0 0.0
        %985 = vmatmul.mubr.f32.gmra.mrb[0].mxu0 %v801
        %v986 = vpop.f32.mrb[0].mxu0
        %v987 = vadd.f32 %v634, %v986
        %v988 = vpop.f32.mrb[0].mxu0
        %v989 = vadd.f32 %v636, %v988
        %990 = vmatprep.mubr.f32.mxu0 0.0
        %991 = vmatmul.mubr.f32.gmra.mrb[0].mxu0 %v804
        %v992 = vpop.f32.mrb[0].mxu0
        %v993 = vadd.f32 %v640, %v992
        %v994 = vpop.f32.mrb[0].mxu0
        %v995 = vadd.f32 %v642, %v994
        %996 = vmatprep.mubr.f32.mxu0 0.0
        %997 = vmatmul.mubr.f32.gmra.mrb[0].mxu0 %v807
        %v998 = vpop.f32.mrb[0].mxu0
        %v999 = vadd.f32 %v646, %v998
        %v1000 = vpop.f32.mrb[0].mxu0
        %v1001 = vadd.f32 %v648, %v1000
        %1002 = vmatprep.mubr.f32.mxu0 0.0
        %1003 = vmatmul.mubr.f32.gmra.mrb[0].mxu0 %v810
        %v1004 = vpop.f32.mrb[0].mxu0
        %v1005 = vadd.f32 %v652, %v1004
        %v1006 = vpop.f32.mrb[0].mxu0
        %v1007 = vadd.f32 %v654, %v1006
        %1008 = vmatprep.mubr.f32.mxu0 0.0
        %1009 = vmatmul.mubr.f32.gmra.mrb[0].mxu0 %v813
        %v1010 = vpop.f32.mrb[0].mxu0
        %v1011 = vadd.f32 %v658, %v1010
        %v1012 = vpop.f32.mrb[0].mxu0
        %v1013 = vadd.f32 %v660, %v1012
        %1014 = vmatprep.mubr.f32.mxu0 0.0
        %1015 = vmatmul.mubr.f32.gmra.mrb[0].mxu0 %v816
        %v1016 = vpop.f32.mrb[0].mxu0
        %v1017 = vadd.f32 %v664, %v1016
        %v1018 = vpop.f32.mrb[0].mxu0
        %v1019 = vadd.f32 %v666, %v1018
        %1020 = vmatprep.mubr.f32.mxu0 0.0
        %1021 = vmatmul.mubr.f32.gmra.mrb[0].mxu0 %v819
        %v1022 = vpop.f32.mrb[0].mxu0
        %v1023 = vadd.f32 %v670, %v1022
        %v1024 = vpop.f32.mrb[0].mxu0
        %v1025 = vadd.f32 %v672, %v1024
        %1026 = vmatprep.mubr.f32.mxu0 0.0
        %1027 = vmatmul.mubr.f32.gmra.mrb[0].mxu0 %v822
        %v1028 = vpop.f32.mrb[0].mxu0
        %v1029 = vadd.f32 %v676, %v1028
        %v1030 = vpop.f32.mrb[0].mxu0
        %v1031 = vadd.f32 %v678, %v1030
        %1032 = vmatprep.mubr.f32.mxu0 0.0
        %1033 = vmatmul.mubr.f32.gmra.mrb[0].mxu0 %v825
        %v1034 = vpop.f32.mrb[0].mxu0
        %v1035 = vadd.f32 %v682, %v1034
        %v1036 = vpop.f32.mrb[0].mxu0
        %v1037 = vadd.f32 %v684, %v1036
        %1038 = vmatprep.mubr.f32.mxu0 0.0
        %1039 = vmatmul.mubr.f32.gmra.mrb[0].mxu0 %v828
        %v1040 = vpop.f32.mrb[0].mxu0
        %v1041 = vadd.f32 %v688, %v1040
        %v1042 = vpop.f32.mrb[0].mxu0
        %v1043 = vadd.f32 %v690, %v1042
        %1044 = vmatprep.mubr.f32.mxu0 0.0
        %1045 = vmatmul.mubr.f32.gmra.mrb[0].mxu0 %v831
        %v1046 = vpop.f32.mrb[0].mxu0
        %v1047 = vadd.f32 %v694, %v1046
        %v1048 = vpop.f32.mrb[0].mxu0
        %v1049 = vadd.f32 %v696, %v1048
        %1050 = vmatprep.mubr.f32.mxu0 0.0
        %1051 = vmatmul.mubr.f32.gmra.mrb[0].mxu0 %v834
        %v1052 = vpop.f32.mrb[0].mxu0
        %v1053 = vadd.f32 %v700, %v1052
        %v1054 = vpop.f32.mrb[0].mxu0
        %v1055 = vadd.f32 %v702, %v1054
        %1056 = vmatprep.mubr.f32.mxu0 0.0
        %1057 = vmatmul.mubr.f32.gmra.mrb[0].mxu0 %v837
        %v1058 = vpop.f32.mrb[0].mxu0
        %v1059 = vadd.f32 %v706, %v1058
        %v1060 = vpop.f32.mrb[0].mxu0
        %v1061 = vadd.f32 %v708, %v1060
        %1062 = vmatprep.mubr.f32.mxu0 0.0
        %1063 = vmatmul.mubr.f32.gmra.mrb[0].mxu0 %v840
        %v1064 = vpop.f32.mrb[0].mxu0
        %v1065 = vadd.f32 %v712, %v1064
        %v1066 = vpop.f32.mrb[0].mxu0
        %v1067 = vadd.f32 %v714, %v1066
        %1068 = vmatprep.mubr.f32.mxu0 0.0
        %1069 = vmatmul.mubr.f32.gmra.mrb[0].mxu0 %v843
        %v1070 = vpop.f32.mrb[0].mxu0
        %v1071 = vadd.f32 %v718, %v1070
        %v1072 = vpop.f32.mrb[0].mxu0
        %v1073 = vadd.f32 %v720, %v1072
        %1074 = vmatprep.mubr.f32.mxu0 0.0
        %1075 = vmatmul.mubr.f32.gmra.mrb[0].mxu0 %v846
        %v1076 = vpop.f32.mrb[0].mxu0
        %v1077 = vadd.f32 %v724, %v1076
        %v1078 = vpop.f32.mrb[0].mxu0
        %v1079 = vadd.f32 %v726, %v1078
        %1080 = vmatprep.mubr.f32.mxu0 0.0
        %1081 = vmatmul.mubr.f32.gmra.mrb[0].mxu0 %v849
        %v1082 = vpop.f32.mrb[0].mxu0
        %v1083 = vadd.f32 %v730, %v1082
        %v1084 = vpop.f32.mrb[0].mxu0
        %v1085 = vadd.f32 %v732, %v1084
        %1086 = vmatprep.mubr.f32.mxu0 0.0
        %1087 = vmatmul.mubr.f32.gmra.mrb[0].mxu0 %v852
        %v1088 = vpop.f32.mrb[0].mxu0
        %v1089 = vadd.f32 %v736, %v1088
        %v1090 = vpop.f32.mrb[0].mxu0
        %v1091 = vadd.f32 %v738, %v1090
        %1092 = vmatprep.mubr.f32.mxu0 0.0
        %1093 = vmatmul.mubr.f32.gmra.mrb[0].mxu0 %v855
        %v1094 = vpop.f32.mrb[0].mxu0
        %v1095 = vadd.f32 %v742, %v1094
        %v1096 = vpop.f32.mrb[0].mxu0
        %v1097 = vadd.f32 %v744, %v1096
        %1098 = vmatprep.mubr.f32.mxu0 0.0
        %1099 = vmatmul.mubr.f32.gmra.mrb[0].mxu0 %v858
        %v1100 = vpop.f32.mrb[0].mxu0
        %v1101 = vadd.f32 %v748, %v1100
        %v1102 = vpop.f32.mrb[0].mxu0
        %v1103 = vadd.f32 %v750, %v1102
        %1104 = vmatprep.mubr.f32.mxu0 0.0
        %1105 = vmatmul.mubr.f32.gmra.mrb[0].mxu0 %v861
        %v1106 = vpop.f32.mrb[0].mxu0
        %v1107 = vadd.f32 %v754, %v1106
        %v1108 = vpop.f32.mrb[0].mxu0
        %v1109 = vadd.f32 %v756, %v1108
        %1110 = vmatprep.mubr.f32.mxu0 0.0
        %1111 = vmatmul.mubr.f32.gmra.mrb[0].mxu0 %v864
        %v1112 = vpop.f32.mrb[0].mxu0
        %v1113 = vadd.f32 %v760, %v1112
        %v1114 = vpop.f32.mrb[0].mxu0
        %v1115 = vadd.f32 %v762, %v1114
        %1116 = vmatprep.mubr.f32.mxu0 0.0
        %1117 = vmatmul.mubr.f32.gmra.mrb[0].mxu0 %v867
        %v1118 = vpop.f32.mrb[0].mxu0
        %v1119 = vadd.f32 %v766, %v1118
        %v1120 = vpop.f32.mrb[0].mxu0
        %v1121 = vadd.f32 %v768, %v1120
        %1122 = vmatprep.mubr.f32.mxu0 0.0
        %1123 = vmatmul.mubr.f32.gmra.mrb[0].mxu0 %v870
        %v1124 = vpop.f32.mrb[0].mxu0
        %v1125 = vadd.f32 %v772, %v1124
        %v1126 = vpop.f32.mrb[0].mxu0
        %v1127 = vadd.f32 %v774, %v1126
        %1128 = vdwg.mxu0
        %v1129 = vrot.slane %v306, 2
        %v1130 = vrot.slane %v307, 2
        %v1131 = vrot.slane %v308, 2
        %v1132 = vrot.slane %v309, 2
        %v1133 = vrot.slane %v310, 2
        %v1134 = vrot.slane %v311, 2
        %v1135 = vrot.slane %v312, 2
        %v1136 = vrot.slane %v313, 2
        %v1137 = vrot.slane %v314, 2
        %v1138 = vrot.slane %v315, 2
        %v1139 = vrot.slane %v316, 2
        %v1140 = vrot.slane %v317, 2
        %v1141 = vrot.slane %v318, 2
        %v1142 = vrot.slane %v319, 2
        %v1143 = vrot.slane %v320, 2
        %v1144 = vrot.slane %v321, 2
        %v1145 = vrot.slane %v322, 2
        %v1146 = vrot.slane %v323, 2
        %v1147 = vrot.slane %v324, 2
        %v1148 = vrot.slane %v325, 2
        %v1149 = vrot.slane %v326, 2
        %v1150 = vrot.slane %v327, 2
        %v1151 = vrot.slane %v328, 2
        %v1152 = vrot.slane %v329, 2
        %v1153 = vrot.slane %v330, 2
        %v1154 = vrot.slane %v331, 2
        %v1155 = vrot.slane %v332, 2
        %v1156 = vrot.slane %v333, 2
        %v1157 = vrot.slane %v334, 2
        %v1158 = vrot.slane %v335, 2
        %v1159 = vrot.slane %v336, 2
        %v1160 = vrot.slane %v337, 2
        %vm1161 = vcmp.lt.s32.totalorder %v379, 6
        %v1162 = vsel %vm1161, %v1159, %v1160
        %v1163 = vsel %vm1161, %v1158, %v1159
        %v1164 = vsel %vm1161, %v1157, %v1158
        %v1165 = vsel %vm1161, %v1156, %v1157
        %v1166 = vsel %vm1161, %v1155, %v1156
        %v1167 = vsel %vm1161, %v1154, %v1155
        %v1168 = vsel %vm1161, %v1153, %v1154
        %v1169 = vsel %vm1161, %v1152, %v1153
        %v1170 = vsel %vm1161, %v1151, %v1152
        %v1171 = vsel %vm1161, %v1150, %v1151
        %v1172 = vsel %vm1161, %v1149, %v1150
        %v1173 = vsel %vm1161, %v1148, %v1149
        %v1174 = vsel %vm1161, %v1147, %v1148
        %v1175 = vsel %vm1161, %v1146, %v1147
        %v1176 = vsel %vm1161, %v1145, %v1146
        %v1177 = vsel %vm1161, %v1144, %v1145
        %v1178 = vsel %vm1161, %v1143, %v1144
        %v1179 = vsel %vm1161, %v1142, %v1143
        %v1180 = vsel %vm1161, %v1141, %v1142
        %v1181 = vsel %vm1161, %v1140, %v1141
        %v1182 = vsel %vm1161, %v1139, %v1140
        %v1183 = vsel %vm1161, %v1138, %v1139
        %v1184 = vsel %vm1161, %v1137, %v1138
        %v1185 = vsel %vm1161, %v1136, %v1137
        %v1186 = vsel %vm1161, %v1135, %v1136
        %v1187 = vsel %vm1161, %v1134, %v1135
        %v1188 = vsel %vm1161, %v1133, %v1134
        %v1189 = vsel %vm1161, %v1132, %v1133
        %v1190 = vsel %vm1161, %v1131, %v1132
        %v1191 = vsel %vm1161, %v1130, %v1131
        %v1192 = vsel %vm1161, %v1129, %v1130
        %v1193 = vsel %vm1161, %v1160, %v1129
        %s1194 = scalar_lea.vmem %s1, 128
        %v1195 = vld [vmem:[%s1194] sm:$0xff]
        %v1196 = vld [vmem:[%s1194 + $0x8] sm:$0xff]
        %v1197 = vld [vmem:[%s1194 + $0x10] sm:$0xff]
        %v1198 = vld [vmem:[%s1194 + $0x18] sm:$0xff]
        %v1199 = vld [vmem:[%s1194 + $0x20] sm:$0xff]
        %v1200 = vld [vmem:[%s1194 + $0x28] sm:$0xff]
        %v1201 = vld [vmem:[%s1194 + $0x30] sm:$0xff]
        %v1202 = vld [vmem:[%s1194 + $0x38] sm:$0xff]
        %v1204 = vsel %vm422, %v1192, 0
        %v1207 = vsel %vm422, %v1191, 0
        %v1210 = vsel %vm422, %v1190, 0
        %v1213 = vsel %vm422, %v1189, 0
        %v1216 = vsel %vm422, %v1188, 0
        %v1219 = vsel %vm422, %v1187, 0
        %v1222 = vsel %vm422, %v1186, 0
        %v1225 = vsel %vm422, %v1185, 0
        %v1228 = vsel %vm422, %v1184, 0
        %v1231 = vsel %vm422, %v1183, 0
        %v1234 = vsel %vm422, %v1182, 0
        %v1237 = vsel %vm422, %v1181, 0
        %v1240 = vsel %vm422, %v1180, 0
        %v1243 = vsel %vm422, %v1179, 0
        %v1246 = vsel %vm422, %v1178, 0
        %v1249 = vsel %vm422, %v1177, 0
        %v1252 = vsel %vm422, %v1176, 0
        %v1255 = vsel %vm422, %v1175, 0
        %v1258 = vsel %vm422, %v1174, 0
        %v1261 = vsel %vm422, %v1173, 0
        %v1264 = vsel %vm422, %v1172, 0
        %v1267 = vsel %vm422, %v1171, 0
        %v1270 = vsel %vm422, %v1170, 0
        %v1273 = vsel %vm422, %v1169, 0
        %v1276 = vsel %vm422, %v1168, 0
        %v1279 = vsel %vm422, %v1167, 0
        %v1282 = vsel %vm422, %v1166, 0
        %v1285 = vsel %vm422, %v1165, 0
        %v1288 = vsel %vm422, %v1164, 0
        %v1291 = vsel %vm422, %v1163, 0
        %v1294 = vsel %vm422, %v1162, 0
        %v1297 = vsel %vm422, %v1193, 0
        %1299 = vmatprep.subr.mxu0 %v1196
        %1300 = vmatpush1.msra.mxu0 %v1195
        %1301 = vmatprep.subr.mxu0 %v1198
        %1302 = vmatpush1.msra.mxu0 %v1197
        %1303 = vmatprep.subr.mxu0 %v1200
        %1304 = vmatpush1.msra.mxu0 %v1199
        %1305 = vmatprep.subr.mxu0 %v1202
        %1306 = vmatpush1.msra.mxu0 %v1201
        %1307 = vmatprep.subr.mxu0 0.0
        %1308 = vmatpush1.msra.mxu0 0.0
        %1309 = vmatprep.subr.mxu0 0.0
        %1310 = vmatpush1.msra.mxu0 0.0
        %1311 = vmatprep.subr.mxu0 0.0
        %1312 = vmatpush1.msra.mxu0 0.0
        %1313 = vmatprep.subr.mxu0 0.0
        %1314 = vmatpush1.msra.mxu0 0.0
        %1315 = vmatprep.subr.mxu0 0.0
        %1316 = vmatpush1.msra.mxu0 0.0
        %1317 = vmatprep.subr.mxu0 0.0
        %1318 = vmatpush1.msra.mxu0 0.0
        %1319 = vmatprep.subr.mxu0 0.0
        %1320 = vmatpush1.msra.mxu0 0.0
        %1321 = vmatprep.subr.mxu0 0.0
        %1322 = vmatpush1.msra.mxu0 0.0
        %1323 = vmatprep.subr.mxu0 0.0
        %1324 = vmatpush1.msra.mxu0 0.0
        %1325 = vmatprep.subr.mxu0 0.0
        %1326 = vmatpush1.msra.mxu0 0.0
        %1327 = vmatprep.subr.mxu0 0.0
        %1328 = vmatpush1.msra.mxu0 0.0
        %1329 = vmatprep.subr.mxu0 0.0
        %1330 = vmatpush1.msra.mxu0 0.0
        %1331 = vmatprep.subr.mxu0 0.0
        %1332 = vmatpush1.msra.mxu0 0.0
        %1333 = vmatprep.subr.mxu0 0.0
        %1334 = vmatpush1.msra.mxu0 0.0
        %1335 = vmatprep.subr.mxu0 0.0
        %1336 = vmatpush1.msra.mxu0 0.0
        %1337 = vmatprep.subr.mxu0 0.0
        %1338 = vmatpush1.msra.mxu0 0.0
        %1339 = vmatprep.subr.mxu0 0.0
        %1340 = vmatpush1.msra.mxu0 0.0
        %1341 = vmatprep.subr.mxu0 0.0
        %1342 = vmatpush1.msra.mxu0 0.0
        %1343 = vmatprep.subr.mxu0 0.0
        %1344 = vmatpush1.msra.mxu0 0.0
        %1345 = vmatprep.subr.mxu0 0.0
        %1346 = vmatpush1.msra.mxu0 0.0
        %1347 = vmatprep.subr.mxu0 0.0
        %1348 = vmatpush1.msra.mxu0 0.0
        %1349 = vmatprep.subr.mxu0 0.0
        %1350 = vmatpush1.msra.mxu0 0.0
        %1351 = vmatprep.subr.mxu0 0.0
        %1352 = vmatpush1.msra.mxu0 0.0
        %1353 = vmatprep.subr.mxu0 0.0
        %1354 = vmatpush1.msra.mxu0 0.0
        %1355 = vmatprep.subr.mxu0 0.0
        %1356 = vmatpush1.msra.mxu0 0.0
        %1357 = vmatprep.subr.mxu0 0.0
        %1358 = vmatpush1.msra.mxu0 0.0
        %1359 = vmatprep.subr.mxu0 0.0
        %1360 = vmatpush1.msra.mxu0 0.0
        %1361 = vmatprep.subr.mxu0 0.0
        %1362 = vmatpush1.msra.mxu0 0.0
        %1363 = vmatprep.mubr.f32.mxu0 0.0
        %1364 = vmatmul.mubr.f32.gmra.mrb[0].mxu0 %v1204
        %v1365 = vpop.f32.mrb[0].mxu0
        %v1366 = vadd.f32 0.0, %v1365
        %v1367 = vpop.f32.mrb[0].mxu0
        %v1368 = vadd.f32 0.0, %v1367
        %1369 = vmatprep.mubr.f32.mxu0 0.0
        %1370 = vmatmul.mubr.f32.gmra.mrb[0].mxu0 %v1207
        %v1371 = vpop.f32.mrb[0].mxu0
        %v1372 = vadd.f32 0.0, %v1371
        %v1373 = vpop.f32.mrb[0].mxu0
        %v1374 = vadd.f32 0.0, %v1373
        %1375 = vmatprep.mubr.f32.mxu0 0.0
        %1376 = vmatmul.mubr.f32.gmra.mrb[0].mxu0 %v1210
        %v1377 = vpop.f32.mrb[0].mxu0
        %v1378 = vadd.f32 0.0, %v1377
        %v1379 = vpop.f32.mrb[0].mxu0
        %v1380 = vadd.f32 0.0, %v1379
        %1381 = vmatprep.mubr.f32.mxu0 0.0
        %1382 = vmatmul.mubr.f32.gmra.mrb[0].mxu0 %v1213
        %v1383 = vpop.f32.mrb[0].mxu0
        %v1384 = vadd.f32 0.0, %v1383
        %v1385 = vpop.f32.mrb[0].mxu0
        %v1386 = vadd.f32 0.0, %v1385
        %1387 = vmatprep.mubr.f32.mxu0 0.0
        %1388 = vmatmul.mubr.f32.gmra.mrb[0].mxu0 %v1216
        %v1389 = vpop.f32.mrb[0].mxu0
        %v1390 = vadd.f32 0.0, %v1389
        %v1391 = vpop.f32.mrb[0].mxu0
        %v1392 = vadd.f32 0.0, %v1391
        %1393 = vmatprep.mubr.f32.mxu0 0.0
        %1394 = vmatmul.mubr.f32.gmra.mrb[0].mxu0 %v1219
        %v1395 = vpop.f32.mrb[0].mxu0
        %v1396 = vadd.f32 0.0, %v1395
        %v1397 = vpop.f32.mrb[0].mxu0
        %v1398 = vadd.f32 0.0, %v1397
        %1399 = vmatprep.mubr.f32.mxu0 0.0
        %1400 = vmatmul.mubr.f32.gmra.mrb[0].mxu0 %v1222
        %v1401 = vpop.f32.mrb[0].mxu0
        %v1402 = vadd.f32 0.0, %v1401
        %v1403 = vpop.f32.mrb[0].mxu0
        %v1404 = vadd.f32 0.0, %v1403
        %1405 = vmatprep.mubr.f32.mxu0 0.0
        %1406 = vmatmul.mubr.f32.gmra.mrb[0].mxu0 %v1225
        %v1407 = vpop.f32.mrb[0].mxu0
        %v1408 = vadd.f32 0.0, %v1407
        %v1409 = vpop.f32.mrb[0].mxu0
        %v1410 = vadd.f32 0.0, %v1409
        %1411 = vmatprep.mubr.f32.mxu0 0.0
        %1412 = vmatmul.mubr.f32.gmra.mrb[0].mxu0 %v1228
        %v1413 = vpop.f32.mrb[0].mxu0
        %v1414 = vadd.f32 0.0, %v1413
        %v1415 = vpop.f32.mrb[0].mxu0
        %v1416 = vadd.f32 0.0, %v1415
        %1417 = vmatprep.mubr.f32.mxu0 0.0
        %1418 = vmatmul.mubr.f32.gmra.mrb[0].mxu0 %v1231
        %v1419 = vpop.f32.mrb[0].mxu0
        %v1420 = vadd.f32 0.0, %v1419
        %v1421 = vpop.f32.mrb[0].mxu0
        %v1422 = vadd.f32 0.0, %v1421
        %1423 = vmatprep.mubr.f32.mxu0 0.0
        %1424 = vmatmul.mubr.f32.gmra.mrb[0].mxu0 %v1234
        %v1425 = vpop.f32.mrb[0].mxu0
        %v1426 = vadd.f32 0.0, %v1425
        %v1427 = vpop.f32.mrb[0].mxu0
        %v1428 = vadd.f32 0.0, %v1427
        %1429 = vmatprep.mubr.f32.mxu0 0.0
        %1430 = vmatmul.mubr.f32.gmra.mrb[0].mxu0 %v1237
        %v1431 = vpop.f32.mrb[0].mxu0
        %v1432 = vadd.f32 0.0, %v1431
        %v1433 = vpop.f32.mrb[0].mxu0
        %v1434 = vadd.f32 0.0, %v1433
        %1435 = vmatprep.mubr.f32.mxu0 0.0
        %1436 = vmatmul.mubr.f32.gmra.mrb[0].mxu0 %v1240
        %v1437 = vpop.f32.mrb[0].mxu0
        %v1438 = vadd.f32 0.0, %v1437
        %v1439 = vpop.f32.mrb[0].mxu0
        %v1440 = vadd.f32 0.0, %v1439
        %1441 = vmatprep.mubr.f32.mxu0 0.0
        %1442 = vmatmul.mubr.f32.gmra.mrb[0].mxu0 %v1243
        %v1443 = vpop.f32.mrb[0].mxu0
        %v1444 = vadd.f32 0.0, %v1443
        %v1445 = vpop.f32.mrb[0].mxu0
        %v1446 = vadd.f32 0.0, %v1445
        %1447 = vmatprep.mubr.f32.mxu0 0.0
        %1448 = vmatmul.mubr.f32.gmra.mrb[0].mxu0 %v1246
        %v1449 = vpop.f32.mrb[0].mxu0
        %v1450 = vadd.f32 0.0, %v1449
        %v1451 = vpop.f32.mrb[0].mxu0
        %v1452 = vadd.f32 0.0, %v1451
        %1453 = vmatprep.mubr.f32.mxu0 0.0
        %1454 = vmatmul.mubr.f32.gmra.mrb[0].mxu0 %v1249
        %v1455 = vpop.f32.mrb[0].mxu0
        %v1456 = vadd.f32 0.0, %v1455
        %v1457 = vpop.f32.mrb[0].mxu0
        %v1458 = vadd.f32 0.0, %v1457
        %1459 = vmatprep.mubr.f32.mxu0 0.0
        %1460 = vmatmul.mubr.f32.gmra.mrb[0].mxu0 %v1252
        %v1461 = vpop.f32.mrb[0].mxu0
        %v1462 = vadd.f32 0.0, %v1461
        %v1463 = vpop.f32.mrb[0].mxu0
        %v1464 = vadd.f32 0.0, %v1463
        %1465 = vmatprep.mubr.f32.mxu0 0.0
        %1466 = vmatmul.mubr.f32.gmra.mrb[0].mxu0 %v1255
        %v1467 = vpop.f32.mrb[0].mxu0
        %v1468 = vadd.f32 0.0, %v1467
        %v1469 = vpop.f32.mrb[0].mxu0
        %v1470 = vadd.f32 0.0, %v1469
        %1471 = vmatprep.mubr.f32.mxu0 0.0
        %1472 = vmatmul.mubr.f32.gmra.mrb[0].mxu0 %v1258
        %v1473 = vpop.f32.mrb[0].mxu0
        %v1474 = vadd.f32 0.0, %v1473
        %v1475 = vpop.f32.mrb[0].mxu0
        %v1476 = vadd.f32 0.0, %v1475
        %1477 = vmatprep.mubr.f32.mxu0 0.0
        %1478 = vmatmul.mubr.f32.gmra.mrb[0].mxu0 %v1261
        %v1479 = vpop.f32.mrb[0].mxu0
        %v1480 = vadd.f32 0.0, %v1479
        %v1481 = vpop.f32.mrb[0].mxu0
        %v1482 = vadd.f32 0.0, %v1481
        %1483 = vmatprep.mubr.f32.mxu0 0.0
        %1484 = vmatmul.mubr.f32.gmra.mrb[0].mxu0 %v1264
        %v1485 = vpop.f32.mrb[0].mxu0
        %v1486 = vadd.f32 0.0, %v1485
        %v1487 = vpop.f32.mrb[0].mxu0
        %v1488 = vadd.f32 0.0, %v1487
        %1489 = vmatprep.mubr.f32.mxu0 0.0
        %1490 = vmatmul.mubr.f32.gmra.mrb[0].mxu0 %v1267
        %v1491 = vpop.f32.mrb[0].mxu0
        %v1492 = vadd.f32 0.0, %v1491
        %v1493 = vpop.f32.mrb[0].mxu0
        %v1494 = vadd.f32 0.0, %v1493
        %1495 = vmatprep.mubr.f32.mxu0 0.0
        %1496 = vmatmul.mubr.f32.gmra.mrb[0].mxu0 %v1270
        %v1497 = vpop.f32.mrb[0].mxu0
        %v1498 = vadd.f32 0.0, %v1497
        %v1499 = vpop.f32.mrb[0].mxu0
        %v1500 = vadd.f32 0.0, %v1499
        %1501 = vmatprep.mubr.f32.mxu0 0.0
        %1502 = vmatmul.mubr.f32.gmra.mrb[0].mxu0 %v1273
        %v1503 = vpop.f32.mrb[0].mxu0
        %v1504 = vadd.f32 0.0, %v1503
        %v1505 = vpop.f32.mrb[0].mxu0
        %v1506 = vadd.f32 0.0, %v1505
        %1507 = vmatprep.mubr.f32.mxu0 0.0
        %1508 = vmatmul.mubr.f32.gmra.mrb[0].mxu0 %v1276
        %v1509 = vpop.f32.mrb[0].mxu0
        %v1510 = vadd.f32 0.0, %v1509
        %v1511 = vpop.f32.mrb[0].mxu0
        %v1512 = vadd.f32 0.0, %v1511
        %1513 = vmatprep.mubr.f32.mxu0 0.0
        %1514 = vmatmul.mubr.f32.gmra.mrb[0].mxu0 %v1279
        %v1515 = vpop.f32.mrb[0].mxu0
        %v1516 = vadd.f32 0.0, %v1515
        %v1517 = vpop.f32.mrb[0].mxu0
        %v1518 = vadd.f32 0.0, %v1517
        %1519 = vmatprep.mubr.f32.mxu0 0.0
        %1520 = vmatmul.mubr.f32.gmra.mrb[0].mxu0 %v1282
        %v1521 = vpop.f32.mrb[0].mxu0
        %v1522 = vadd.f32 0.0, %v1521
        %v1523 = vpop.f32.mrb[0].mxu0
        %v1524 = vadd.f32 0.0, %v1523
        %1525 = vmatprep.mubr.f32.mxu0 0.0
        %1526 = vmatmul.mubr.f32.gmra.mrb[0].mxu0 %v1285
        %v1527 = vpop.f32.mrb[0].mxu0
        %v1528 = vadd.f32 0.0, %v1527
        %v1529 = vpop.f32.mrb[0].mxu0
        %v1530 = vadd.f32 0.0, %v1529
        %1531 = vmatprep.mubr.f32.mxu0 0.0
        %1532 = vmatmul.mubr.f32.gmra.mrb[0].mxu0 %v1288
        %v1533 = vpop.f32.mrb[0].mxu0
        %v1534 = vadd.f32 0.0, %v1533
        %v1535 = vpop.f32.mrb[0].mxu0
        %v1536 = vadd.f32 0.0, %v1535
        %1537 = vmatprep.mubr.f32.mxu0 0.0
        %1538 = vmatmul.mubr.f32.gmra.mrb[0].mxu0 %v1291
        %v1539 = vpop.f32.mrb[0].mxu0
        %v1540 = vadd.f32 0.0, %v1539
        %v1541 = vpop.f32.mrb[0].mxu0
        %v1542 = vadd.f32 0.0, %v1541
        %1543 = vmatprep.mubr.f32.mxu0 0.0
        %1544 = vmatmul.mubr.f32.gmra.mrb[0].mxu0 %v1294
        %v1545 = vpop.f32.mrb[0].mxu0
        %v1546 = vadd.f32 0.0, %v1545
        %v1547 = vpop.f32.mrb[0].mxu0
        %v1548 = vadd.f32 0.0, %v1547
        %1549 = vmatprep.mubr.f32.mxu0 0.0
        %1550 = vmatmul.mubr.f32.gmra.mrb[0].mxu0 %v1297
        %v1551 = vpop.f32.mrb[0].mxu0
        %v1552 = vadd.f32 0.0, %v1551
        %v1553 = vpop.f32.mrb[0].mxu0
        %v1554 = vadd.f32 0.0, %v1553
        %1555 = vdwg.mxu0
        %v1556 = vadd.f32 %v939, %v1366
        %v1557 = vadd.f32 %v941, %v1368
        %v1558 = vadd.f32 %v945, %v1372
        %v1559 = vadd.f32 %v947, %v1374
        %v1560 = vadd.f32 %v951, %v1378
        %v1561 = vadd.f32 %v953, %v1380
        %v1562 = vadd.f32 %v957, %v1384
        %v1563 = vadd.f32 %v959, %v1386
        %v1564 = vadd.f32 %v963, %v1390
        %v1565 = vadd.f32 %v965, %v1392
        %v1566 = vadd.f32 %v969, %v1396
        %v1567 = vadd.f32 %v971, %v1398
        %v1568 = vadd.f32 %v975, %v1402
        %v1569 = vadd.f32 %v977, %v1404
        %v1570 = vadd.f32 %v981, %v1408
        %v1571 = vadd.f32 %v983, %v1410
        %v1572 = vadd.f32 %v987, %v1414
        %v1573 = vadd.f32 %v989, %v1416
        %v1574 = vadd.f32 %v993, %v1420
        %v1575 = vadd.f32 %v995, %v1422
        %v1576 = vadd.f32 %v999, %v1426
        %v1577 = vadd.f32 %v1001, %v1428
        %v1578 = vadd.f32 %v1005, %v1432
        %v1579 = vadd.f32 %v1007, %v1434
        %v1580 = vadd.f32 %v1011, %v1438
        %v1581 = vadd.f32 %v1013, %v1440
        %v1582 = vadd.f32 %v1017, %v1444
        %v1583 = vadd.f32 %v1019, %v1446
        %v1584 = vadd.f32 %v1023, %v1450
        %v1585 = vadd.f32 %v1025, %v1452
        %v1586 = vadd.f32 %v1029, %v1456
        %v1587 = vadd.f32 %v1031, %v1458
        %v1588 = vadd.f32 %v1035, %v1462
        %v1589 = vadd.f32 %v1037, %v1464
        %v1590 = vadd.f32 %v1041, %v1468
        %v1591 = vadd.f32 %v1043, %v1470
        %v1592 = vadd.f32 %v1047, %v1474
        %v1593 = vadd.f32 %v1049, %v1476
        %v1594 = vadd.f32 %v1053, %v1480
        %v1595 = vadd.f32 %v1055, %v1482
        %v1596 = vadd.f32 %v1059, %v1486
        %v1597 = vadd.f32 %v1061, %v1488
        %v1598 = vadd.f32 %v1065, %v1492
        %v1599 = vadd.f32 %v1067, %v1494
        %v1600 = vadd.f32 %v1071, %v1498
        %v1601 = vadd.f32 %v1073, %v1500
        %v1602 = vadd.f32 %v1077, %v1504
        %v1603 = vadd.f32 %v1079, %v1506
        %v1604 = vadd.f32 %v1083, %v1510
        %v1605 = vadd.f32 %v1085, %v1512
        %v1606 = vadd.f32 %v1089, %v1516
        %v1607 = vadd.f32 %v1091, %v1518
        %v1608 = vadd.f32 %v1095, %v1522
        %v1609 = vadd.f32 %v1097, %v1524
        %v1610 = vadd.f32 %v1101, %v1528
        %v1611 = vadd.f32 %v1103, %v1530
        %v1612 = vadd.f32 %v1107, %v1534
        %v1613 = vadd.f32 %v1109, %v1536
        %v1614 = vadd.f32 %v1113, %v1540
        %v1615 = vadd.f32 %v1115, %v1542
        %v1616 = vadd.f32 %v1119, %v1546
        %v1617 = vadd.f32 %v1121, %v1548
        %v1618 = vadd.f32 %v1125, %v1552
        %v1619 = vadd.f32 %v1127, %v1554
        %v1620 = vrot.slane %v306, 3
        %v1621 = vrot.slane %v307, 3
        %v1622 = vrot.slane %v308, 3
        %v1623 = vrot.slane %v309, 3
        %v1624 = vrot.slane %v310, 3
        %v1625 = vrot.slane %v311, 3
        %v1626 = vrot.slane %v312, 3
        %v1627 = vrot.slane %v313, 3
        %v1628 = vrot.slane %v314, 3
        %v1629 = vrot.slane %v315, 3
        %v1630 = vrot.slane %v316, 3
        %v1631 = vrot.slane %v317, 3
        %v1632 = vrot.slane %v318, 3
        %v1633 = vrot.slane %v319, 3
        %v1634 = vrot.slane %v320, 3
        %v1635 = vrot.slane %v321, 3
        %v1636 = vrot.slane %v322, 3
        %v1637 = vrot.slane %v323, 3
        %v1638 = vrot.slane %v324, 3
        %v1639 = vrot.slane %v325, 3
        %v1640 = vrot.slane %v326, 3
        %v1641 = vrot.slane %v327, 3
        %v1642 = vrot.slane %v328, 3
        %v1643 = vrot.slane %v329, 3
        %v1644 = vrot.slane %v330, 3
        %v1645 = vrot.slane %v331, 3
        %v1646 = vrot.slane %v332, 3
        %v1647 = vrot.slane %v333, 3
        %v1648 = vrot.slane %v334, 3
        %v1649 = vrot.slane %v335, 3
        %v1650 = vrot.slane %v336, 3
        %v1651 = vrot.slane %v337, 3
        %vm1652 = vcmp.lt.s32.totalorder %v379, 5
        %v1653 = vsel %vm1652, %v1650, %v1651
        %v1654 = vsel %vm1652, %v1649, %v1650
        %v1655 = vsel %vm1652, %v1648, %v1649
        %v1656 = vsel %vm1652, %v1647, %v1648
        %v1657 = vsel %vm1652, %v1646, %v1647
        %v1658 = vsel %vm1652, %v1645, %v1646
        %v1659 = vsel %vm1652, %v1644, %v1645
        %v1660 = vsel %vm1652, %v1643, %v1644
        %v1661 = vsel %vm1652, %v1642, %v1643
        %v1662 = vsel %vm1652, %v1641, %v1642
        %v1663 = vsel %vm1652, %v1640, %v1641
        %v1664 = vsel %vm1652, %v1639, %v1640
        %v1665 = vsel %vm1652, %v1638, %v1639
        %v1666 = vsel %vm1652, %v1637, %v1638
        %v1667 = vsel %vm1652, %v1636, %v1637
        %v1668 = vsel %vm1652, %v1635, %v1636
        %v1669 = vsel %vm1652, %v1634, %v1635
        %v1670 = vsel %vm1652, %v1633, %v1634
        %v1671 = vsel %vm1652, %v1632, %v1633
        %v1672 = vsel %vm1652, %v1631, %v1632
        %v1673 = vsel %vm1652, %v1630, %v1631
        %v1674 = vsel %vm1652, %v1629, %v1630
        %v1675 = vsel %vm1652, %v1628, %v1629
        %v1676 = vsel %vm1652, %v1627, %v1628
        %v1677 = vsel %vm1652, %v1626, %v1627
        %v1678 = vsel %vm1652, %v1625, %v1626
        %v1679 = vsel %vm1652, %v1624, %v1625
        %v1680 = vsel %vm1652, %v1623, %v1624
        %v1681 = vsel %vm1652, %v1622, %v1623
        %v1682 = vsel %vm1652, %v1621, %v1622
        %v1683 = vsel %vm1652, %v1620, %v1621
        %v1684 = vsel %vm1652, %v1651, %v1620
        %s1685 = scalar_lea.vmem %s1, 192
        %v1686 = vld [vmem:[%s1685] sm:$0xff]
        %v1687 = vld [vmem:[%s1685 + $0x8] sm:$0xff]
        %v1688 = vld [vmem:[%s1685 + $0x10] sm:$0xff]
        %v1689 = vld [vmem:[%s1685 + $0x18] sm:$0xff]
        %v1690 = vld [vmem:[%s1685 + $0x20] sm:$0xff]
        %v1691 = vld [vmem:[%s1685 + $0x28] sm:$0xff]
        %v1692 = vld [vmem:[%s1685 + $0x30] sm:$0xff]
        %v1693 = vld [vmem:[%s1685 + $0x38] sm:$0xff]
        %v1695 = vsel %vm422, %v1683, 0
        %v1698 = vsel %vm422, %v1682, 0
        %v1701 = vsel %vm422, %v1681, 0
        %v1704 = vsel %vm422, %v1680, 0
        %v1707 = vsel %vm422, %v1679, 0
        %v1710 = vsel %vm422, %v1678, 0
        %v1713 = vsel %vm422, %v1677, 0
        %v1716 = vsel %vm422, %v1676, 0
        %v1719 = vsel %vm422, %v1675, 0
        %v1722 = vsel %vm422, %v1674, 0
        %v1725 = vsel %vm422, %v1673, 0
        %v1728 = vsel %vm422, %v1672, 0
        %v1731 = vsel %vm422, %v1671, 0
        %v1734 = vsel %vm422, %v1670, 0
        %v1737 = vsel %vm422, %v1669, 0
        %v1740 = vsel %vm422, %v1668, 0
        %v1743 = vsel %vm422, %v1667, 0
        %v1746 = vsel %vm422, %v1666, 0
        %v1749 = vsel %vm422, %v1665, 0
        %v1752 = vsel %vm422, %v1664, 0
        %v1755 = vsel %vm422, %v1663, 0
        %v1758 = vsel %vm422, %v1662, 0
        %v1761 = vsel %vm422, %v1661, 0
        %v1764 = vsel %vm422, %v1660, 0
        %v1767 = vsel %vm422, %v1659, 0
        %v1770 = vsel %vm422, %v1658, 0
        %v1773 = vsel %vm422, %v1657, 0
        %v1776 = vsel %vm422, %v1656, 0
        %v1779 = vsel %vm422, %v1655, 0
        %v1782 = vsel %vm422, %v1654, 0
        %v1785 = vsel %vm422, %v1653, 0
        %v1788 = vsel %vm422, %v1684, 0
        %1790 = vmatprep.subr.mxu0 %v1687
        %1791 = vmatpush1.msra.mxu0 %v1686
        %1792 = vmatprep.subr.mxu0 %v1689
        %1793 = vmatpush1.msra.mxu0 %v1688
        %1794 = vmatprep.subr.mxu0 %v1691
        %1795 = vmatpush1.msra.mxu0 %v1690
        %1796 = vmatprep.subr.mxu0 %v1693
        %1797 = vmatpush1.msra.mxu0 %v1692
        %1798 = vmatprep.subr.mxu0 0.0
        %1799 = vmatpush1.msra.mxu0 0.0
        %1800 = vmatprep.subr.mxu0 0.0
        %1801 = vmatpush1.msra.mxu0 0.0
        %1802 = vmatprep.subr.mxu0 0.0
        %1803 = vmatpush1.msra.mxu0 0.0
        %1804 = vmatprep.subr.mxu0 0.0
        %1805 = vmatpush1.msra.mxu0 0.0
        %1806 = vmatprep.subr.mxu0 0.0
        %1807 = vmatpush1.msra.mxu0 0.0
        %1808 = vmatprep.subr.mxu0 0.0
        %1809 = vmatpush1.msra.mxu0 0.0
        %1810 = vmatprep.subr.mxu0 0.0
        %1811 = vmatpush1.msra.mxu0 0.0
        %1812 = vmatprep.subr.mxu0 0.0
        %1813 = vmatpush1.msra.mxu0 0.0
        %1814 = vmatprep.subr.mxu0 0.0
        %1815 = vmatpush1.msra.mxu0 0.0
        %1816 = vmatprep.subr.mxu0 0.0
        %1817 = vmatpush1.msra.mxu0 0.0
        %1818 = vmatprep.subr.mxu0 0.0
        %1819 = vmatpush1.msra.mxu0 0.0
        %1820 = vmatprep.subr.mxu0 0.0
        %1821 = vmatpush1.msra.mxu0 0.0
        %1822 = vmatprep.subr.mxu0 0.0
        %1823 = vmatpush1.msra.mxu0 0.0
        %1824 = vmatprep.subr.mxu0 0.0
        %1825 = vmatpush1.msra.mxu0 0.0
        %1826 = vmatprep.subr.mxu0 0.0
        %1827 = vmatpush1.msra.mxu0 0.0
        %1828 = vmatprep.subr.mxu0 0.0
        %1829 = vmatpush1.msra.mxu0 0.0
        %1830 = vmatprep.subr.mxu0 0.0
        %1831 = vmatpush1.msra.mxu0 0.0
        %1832 = vmatprep.subr.mxu0 0.0
        %1833 = vmatpush1.msra.mxu0 0.0
        %1834 = vmatprep.subr.mxu0 0.0
        %1835 = vmatpush1.msra.mxu0 0.0
        %1836 = vmatprep.subr.mxu0 0.0
        %1837 = vmatpush1.msra.mxu0 0.0
        %1838 = vmatprep.subr.mxu0 0.0
        %1839 = vmatpush1.msra.mxu0 0.0
        %1840 = vmatprep.subr.mxu0 0.0
        %1841 = vmatpush1.msra.mxu0 0.0
        %1842 = vmatprep.subr.mxu0 0.0
        %1843 = vmatpush1.msra.mxu0 0.0
        %1844 = vmatprep.subr.mxu0 0.0
        %1845 = vmatpush1.msra.mxu0 0.0
        %1846 = vmatprep.subr.mxu0 0.0
        %1847 = vmatpush1.msra.mxu0 0.0
        %1848 = vmatprep.subr.mxu0 0.0
        %1849 = vmatpush1.msra.mxu0 0.0
        %1850 = vmatprep.subr.mxu0 0.0
        %1851 = vmatpush1.msra.mxu0 0.0
        %1852 = vmatprep.subr.mxu0 0.0
        %1853 = vmatpush1.msra.mxu0 0.0
        %1854 = vmatprep.mubr.f32.mxu0 0.0
        %1855 = vmatmul.mubr.f32.gmra.mrb[0].mxu0 %v1695
        %v1856 = vpop.f32.mrb[0].mxu0
        %v1857 = vadd.f32 0.0, %v1856
        %v1858 = vpop.f32.mrb[0].mxu0
        %v1859 = vadd.f32 0.0, %v1858
        %1860 = vmatprep.mubr.f32.mxu0 0.0
        %1861 = vmatmul.mubr.f32.gmra.mrb[0].mxu0 %v1698
        %v1862 = vpop.f32.mrb[0].mxu0
        %v1863 = vadd.f32 0.0, %v1862
        %v1864 = vpop.f32.mrb[0].mxu0
        %v1865 = vadd.f32 0.0, %v1864
        %1866 = vmatprep.mubr.f32.mxu0 0.0
        %1867 = vmatmul.mubr.f32.gmra.mrb[0].mxu0 %v1701
        %v1868 = vpop.f32.mrb[0].mxu0
        %v1869 = vadd.f32 0.0, %v1868
        %v1870 = vpop.f32.mrb[0].mxu0
        %v1871 = vadd.f32 0.0, %v1870
        %1872 = vmatprep.mubr.f32.mxu0 0.0
        %1873 = vmatmul.mubr.f32.gmra.mrb[0].mxu0 %v1704
        %v1874 = vpop.f32.mrb[0].mxu0
        %v1875 = vadd.f32 0.0, %v1874
        %v1876 = vpop.f32.mrb[0].mxu0
        %v1877 = vadd.f32 0.0, %v1876
        %1878 = vmatprep.mubr.f32.mxu0 0.0
        %1879 = vmatmul.mubr.f32.gmra.mrb[0].mxu0 %v1707
        %v1880 = vpop.f32.mrb[0].mxu0
        %v1881 = vadd.f32 0.0, %v1880
        %v1882 = vpop.f32.mrb[0].mxu0
        %v1883 = vadd.f32 0.0, %v1882
        %1884 = vmatprep.mubr.f32.mxu0 0.0
        %1885 = vmatmul.mubr.f32.gmra.mrb[0].mxu0 %v1710
        %v1886 = vpop.f32.mrb[0].mxu0
        %v1887 = vadd.f32 0.0, %v1886
        %v1888 = vpop.f32.mrb[0].mxu0
        %v1889 = vadd.f32 0.0, %v1888
        %1890 = vmatprep.mubr.f32.mxu0 0.0
        %1891 = vmatmul.mubr.f32.gmra.mrb[0].mxu0 %v1713
        %v1892 = vpop.f32.mrb[0].mxu0
        %v1893 = vadd.f32 0.0, %v1892
        %v1894 = vpop.f32.mrb[0].mxu0
        %v1895 = vadd.f32 0.0, %v1894
        %1896 = vmatprep.mubr.f32.mxu0 0.0
        %1897 = vmatmul.mubr.f32.gmra.mrb[0].mxu0 %v1716
        %v1898 = vpop.f32.mrb[0].mxu0
        %v1899 = vadd.f32 0.0, %v1898
        %v1900 = vpop.f32.mrb[0].mxu0
        %v1901 = vadd.f32 0.0, %v1900
        %1902 = vmatprep.mubr.f32.mxu0 0.0
        %1903 = vmatmul.mubr.f32.gmra.mrb[0].mxu0 %v1719
        %v1904 = vpop.f32.mrb[0].mxu0
        %v1905 = vadd.f32 0.0, %v1904
        %v1906 = vpop.f32.mrb[0].mxu0
        %v1907 = vadd.f32 0.0, %v1906
        %1908 = vmatprep.mubr.f32.mxu0 0.0
        %1909 = vmatmul.mubr.f32.gmra.mrb[0].mxu0 %v1722
        %v1910 = vpop.f32.mrb[0].mxu0
        %v1911 = vadd.f32 0.0, %v1910
        %v1912 = vpop.f32.mrb[0].mxu0
        %v1913 = vadd.f32 0.0, %v1912
        %1914 = vmatprep.mubr.f32.mxu0 0.0
        %1915 = vmatmul.mubr.f32.gmra.mrb[0].mxu0 %v1725
        %v1916 = vpop.f32.mrb[0].mxu0
        %v1917 = vadd.f32 0.0, %v1916
        %v1918 = vpop.f32.mrb[0].mxu0
        %v1919 = vadd.f32 0.0, %v1918
        %1920 = vmatprep.mubr.f32.mxu0 0.0
        %1921 = vmatmul.mubr.f32.gmra.mrb[0].mxu0 %v1728
        %v1922 = vpop.f32.mrb[0].mxu0
        %v1923 = vadd.f32 0.0, %v1922
        %v1924 = vpop.f32.mrb[0].mxu0
        %v1925 = vadd.f32 0.0, %v1924
        %1926 = vmatprep.mubr.f32.mxu0 0.0
        %1927 = vmatmul.mubr.f32.gmra.mrb[0].mxu0 %v1731
        %v1928 = vpop.f32.mrb[0].mxu0
        %v1929 = vadd.f32 0.0, %v1928
        %v1930 = vpop.f32.mrb[0].mxu0
        %v1931 = vadd.f32 0.0, %v1930
        %1932 = vmatprep.mubr.f32.mxu0 0.0
        %1933 = vmatmul.mubr.f32.gmra.mrb[0].mxu0 %v1734
        %v1934 = vpop.f32.mrb[0].mxu0
        %v1935 = vadd.f32 0.0, %v1934
        %v1936 = vpop.f32.mrb[0].mxu0
        %v1937 = vadd.f32 0.0, %v1936
        %1938 = vmatprep.mubr.f32.mxu0 0.0
        %1939 = vmatmul.mubr.f32.gmra.mrb[0].mxu0 %v1737
        %v1940 = vpop.f32.mrb[0].mxu0
        %v1941 = vadd.f32 0.0, %v1940
        %v1942 = vpop.f32.mrb[0].mxu0
        %v1943 = vadd.f32 0.0, %v1942
        %1944 = vmatprep.mubr.f32.mxu0 0.0
        %1945 = vmatmul.mubr.f32.gmra.mrb[0].mxu0 %v1740
        %v1946 = vpop.f32.mrb[0].mxu0
        %v1947 = vadd.f32 0.0, %v1946
        %v1948 = vpop.f32.mrb[0].mxu0
        %v1949 = vadd.f32 0.0, %v1948
        %1950 = vmatprep.mubr.f32.mxu0 0.0
        %1951 = vmatmul.mubr.f32.gmra.mrb[0].mxu0 %v1743
        %v1952 = vpop.f32.mrb[0].mxu0
        %v1953 = vadd.f32 0.0, %v1952
        %v1954 = vpop.f32.mrb[0].mxu0
        %v1955 = vadd.f32 0.0, %v1954
        %1956 = vmatprep.mubr.f32.mxu0 0.0
        %1957 = vmatmul.mubr.f32.gmra.mrb[0].mxu0 %v1746
        %v1958 = vpop.f32.mrb[0].mxu0
        %v1959 = vadd.f32 0.0, %v1958
        %v1960 = vpop.f32.mrb[0].mxu0
        %v1961 = vadd.f32 0.0, %v1960
        %1962 = vmatprep.mubr.f32.mxu0 0.0
        %1963 = vmatmul.mubr.f32.gmra.mrb[0].mxu0 %v1749
        %v1964 = vpop.f32.mrb[0].mxu0
        %v1965 = vadd.f32 0.0, %v1964
        %v1966 = vpop.f32.mrb[0].mxu0
        %v1967 = vadd.f32 0.0, %v1966
        %1968 = vmatprep.mubr.f32.mxu0 0.0
        %1969 = vmatmul.mubr.f32.gmra.mrb[0].mxu0 %v1752
        %v1970 = vpop.f32.mrb[0].mxu0
        %v1971 = vadd.f32 0.0, %v1970
        %v1972 = vpop.f32.mrb[0].mxu0
        %v1973 = vadd.f32 0.0, %v1972
        %1974 = vmatprep.mubr.f32.mxu0 0.0
        %1975 = vmatmul.mubr.f32.gmra.mrb[0].mxu0 %v1755
        %v1976 = vpop.f32.mrb[0].mxu0
        %v1977 = vadd.f32 0.0, %v1976
        %v1978 = vpop.f32.mrb[0].mxu0
        %v1979 = vadd.f32 0.0, %v1978
        %1980 = vmatprep.mubr.f32.mxu0 0.0
        %1981 = vmatmul.mubr.f32.gmra.mrb[0].mxu0 %v1758
        %v1982 = vpop.f32.mrb[0].mxu0
        %v1983 = vadd.f32 0.0, %v1982
        %v1984 = vpop.f32.mrb[0].mxu0
        %v1985 = vadd.f32 0.0, %v1984
        %1986 = vmatprep.mubr.f32.mxu0 0.0
        %1987 = vmatmul.mubr.f32.gmra.mrb[0].mxu0 %v1761
        %v1988 = vpop.f32.mrb[0].mxu0
        %v1989 = vadd.f32 0.0, %v1988
        %v1990 = vpop.f32.mrb[0].mxu0
        %v1991 = vadd.f32 0.0, %v1990
        %1992 = vmatprep.mubr.f32.mxu0 0.0
        %1993 = vmatmul.mubr.f32.gmra.mrb[0].mxu0 %v1764
        %v1994 = vpop.f32.mrb[0].mxu0
        %v1995 = vadd.f32 0.0, %v1994
        %v1996 = vpop.f32.mrb[0].mxu0
        %v1997 = vadd.f32 0.0, %v1996
        %1998 = vmatprep.mubr.f32.mxu0 0.0
        %1999 = vmatmul.mubr.f32.gmra.mrb[0].mxu0 %v1767
        %v2000 = vpop.f32.mrb[0].mxu0
        %v2001 = vadd.f32 0.0, %v2000
        %v2002 = vpop.f32.mrb[0].mxu0
        %v2003 = vadd.f32 0.0, %v2002
        %2004 = vmatprep.mubr.f32.mxu0 0.0
        %2005 = vmatmul.mubr.f32.gmra.mrb[0].mxu0 %v1770
        %v2006 = vpop.f32.mrb[0].mxu0
        %v2007 = vadd.f32 0.0, %v2006
        %v2008 = vpop.f32.mrb[0].mxu0
        %v2009 = vadd.f32 0.0, %v2008
        %2010 = vmatprep.mubr.f32.mxu0 0.0
        %2011 = vmatmul.mubr.f32.gmra.mrb[0].mxu0 %v1773
        %v2012 = vpop.f32.mrb[0].mxu0
        %v2013 = vadd.f32 0.0, %v2012
        %v2014 = vpop.f32.mrb[0].mxu0
        %v2015 = vadd.f32 0.0, %v2014
        %2016 = vmatprep.mubr.f32.mxu0 0.0
        %2017 = vmatmul.mubr.f32.gmra.mrb[0].mxu0 %v1776
        %v2018 = vpop.f32.mrb[0].mxu0
        %v2019 = vadd.f32 0.0, %v2018
        %v2020 = vpop.f32.mrb[0].mxu0
        %v2021 = vadd.f32 0.0, %v2020
        %2022 = vmatprep.mubr.f32.mxu0 0.0
        %2023 = vmatmul.mubr.f32.gmra.mrb[0].mxu0 %v1779
        %v2024 = vpop.f32.mrb[0].mxu0
        %v2025 = vadd.f32 0.0, %v2024
        %v2026 = vpop.f32.mrb[0].mxu0
        %v2027 = vadd.f32 0.0, %v2026
        %2028 = vmatprep.mubr.f32.mxu0 0.0
        %2029 = vmatmul.mubr.f32.gmra.mrb[0].mxu0 %v1782
        %v2030 = vpop.f32.mrb[0].mxu0
        %v2031 = vadd.f32 0.0, %v2030
        %v2032 = vpop.f32.mrb[0].mxu0
        %v2033 = vadd.f32 0.0, %v2032
        %2034 = vmatprep.mubr.f32.mxu0 0.0
        %2035 = vmatmul.mubr.f32.gmra.mrb[0].mxu0 %v1785
        %v2036 = vpop.f32.mrb[0].mxu0
        %v2037 = vadd.f32 0.0, %v2036
        %v2038 = vpop.f32.mrb[0].mxu0
        %v2039 = vadd.f32 0.0, %v2038
        %2040 = vmatprep.mubr.f32.mxu0 0.0
        %2041 = vmatmul.mubr.f32.gmra.mrb[0].mxu0 %v1788
        %v2042 = vpop.f32.mrb[0].mxu0
        %v2043 = vadd.f32 0.0, %v2042
        %v2044 = vpop.f32.mrb[0].mxu0
        %v2045 = vadd.f32 0.0, %v2044
        %2046 = vdwg.mxu0
        %v2047 = vadd.f32 %v1556, %v1857
        %v2048 = vadd.f32 %v1557, %v1859
        %v2049 = vadd.f32 %v1558, %v1863
        %v2050 = vadd.f32 %v1559, %v1865
        %v2051 = vadd.f32 %v1560, %v1869
        %v2052 = vadd.f32 %v1561, %v1871
        %v2053 = vadd.f32 %v1562, %v1875
        %v2054 = vadd.f32 %v1563, %v1877
        %v2055 = vadd.f32 %v1564, %v1881
        %v2056 = vadd.f32 %v1565, %v1883
        %v2057 = vadd.f32 %v1566, %v1887
        %v2058 = vadd.f32 %v1567, %v1889
        %v2059 = vadd.f32 %v1568, %v1893
        %v2060 = vadd.f32 %v1569, %v1895
        %v2061 = vadd.f32 %v1570, %v1899
        %v2062 = vadd.f32 %v1571, %v1901
        %v2063 = vadd.f32 %v1572, %v1905
        %v2064 = vadd.f32 %v1573, %v1907
        %v2065 = vadd.f32 %v1574, %v1911
        %v2066 = vadd.f32 %v1575, %v1913
        %v2067 = vadd.f32 %v1576, %v1917
        %v2068 = vadd.f32 %v1577, %v1919
        %v2069 = vadd.f32 %v1578, %v1923
        %v2070 = vadd.f32 %v1579, %v1925
        %v2071 = vadd.f32 %v1580, %v1929
        %v2072 = vadd.f32 %v1581, %v1931
        %v2073 = vadd.f32 %v1582, %v1935
        %v2074 = vadd.f32 %v1583, %v1937
        %v2075 = vadd.f32 %v1584, %v1941
        %v2076 = vadd.f32 %v1585, %v1943
        %v2077 = vadd.f32 %v1586, %v1947
        %v2078 = vadd.f32 %v1587, %v1949
        %v2079 = vadd.f32 %v1588, %v1953
        %v2080 = vadd.f32 %v1589, %v1955
        %v2081 = vadd.f32 %v1590, %v1959
        %v2082 = vadd.f32 %v1591, %v1961
        %v2083 = vadd.f32 %v1592, %v1965
        %v2084 = vadd.f32 %v1593, %v1967
        %v2085 = vadd.f32 %v1594, %v1971
        %v2086 = vadd.f32 %v1595, %v1973
        %v2087 = vadd.f32 %v1596, %v1977
        %v2088 = vadd.f32 %v1597, %v1979
        %v2089 = vadd.f32 %v1598, %v1983
        %v2090 = vadd.f32 %v1599, %v1985
        %v2091 = vadd.f32 %v1600, %v1989
        %v2092 = vadd.f32 %v1601, %v1991
        %v2093 = vadd.f32 %v1602, %v1995
        %v2094 = vadd.f32 %v1603, %v1997
        %v2095 = vadd.f32 %v1604, %v2001
        %v2096 = vadd.f32 %v1605, %v2003
        %v2097 = vadd.f32 %v1606, %v2007
        %v2098 = vadd.f32 %v1607, %v2009
        %v2099 = vadd.f32 %v1608, %v2013
        %v2100 = vadd.f32 %v1609, %v2015
        %v2101 = vadd.f32 %v1610, %v2019
        %v2102 = vadd.f32 %v1611, %v2021
        %v2103 = vadd.f32 %v1612, %v2025
        %v2104 = vadd.f32 %v1613, %v2027
        %v2105 = vadd.f32 %v1614, %v2031
        %v2106 = vadd.f32 %v1615, %v2033
        %v2107 = vadd.f32 %v1616, %v2037
        %v2108 = vadd.f32 %v1617, %v2039
        %v2109 = vadd.f32 %v1618, %v2043
        %v2110 = vadd.f32 %v1619, %v2045
        %v2111 = vrot.slane %v306, 4
        %v2112 = vrot.slane %v307, 4
        %v2113 = vrot.slane %v308, 4
        %v2114 = vrot.slane %v309, 4
        %v2115 = vrot.slane %v310, 4
        %v2116 = vrot.slane %v311, 4
        %v2117 = vrot.slane %v312, 4
        %v2118 = vrot.slane %v313, 4
        %v2119 = vrot.slane %v314, 4
        %v2120 = vrot.slane %v315, 4
        %v2121 = vrot.slane %v316, 4
        %v2122 = vrot.slane %v317, 4
        %v2123 = vrot.slane %v318, 4
        %v2124 = vrot.slane %v319, 4
        %v2125 = vrot.slane %v320, 4
        %v2126 = vrot.slane %v321, 4
        %v2127 = vrot.slane %v322, 4
        %v2128 = vrot.slane %v323, 4
        %v2129 = vrot.slane %v324, 4
        %v2130 = vrot.slane %v325, 4
        %v2131 = vrot.slane %v326, 4
        %v2132 = vrot.slane %v327, 4
        %v2133 = vrot.slane %v328, 4
        %v2134 = vrot.slane %v329, 4
        %v2135 = vrot.slane %v330, 4
        %v2136 = vrot.slane %v331, 4
        %v2137 = vrot.slane %v332, 4
        %v2138 = vrot.slane %v333, 4
        %v2139 = vrot.slane %v334, 4
        %v2140 = vrot.slane %v335, 4
        %v2141 = vrot.slane %v336, 4
        %v2142 = vrot.slane %v337, 4
        %vm2143 = vcmp.lt.s32.totalorder %v379, 4
        %v2144 = vsel %vm2143, %v2141, %v2142
        %v2145 = vsel %vm2143, %v2140, %v2141
        %v2146 = vsel %vm2143, %v2139, %v2140
        %v2147 = vsel %vm2143, %v2138, %v2139
        %v2148 = vsel %vm2143, %v2137, %v2138
        %v2149 = vsel %vm2143, %v2136, %v2137
        %v2150 = vsel %vm2143, %v2135, %v2136
        %v2151 = vsel %vm2143, %v2134, %v2135
        %v2152 = vsel %vm2143, %v2133, %v2134
        %v2153 = vsel %vm2143, %v2132, %v2133
        %v2154 = vsel %vm2143, %v2131, %v2132
        %v2155 = vsel %vm2143, %v2130, %v2131
        %v2156 = vsel %vm2143, %v2129, %v2130
        %v2157 = vsel %vm2143, %v2128, %v2129
        %v2158 = vsel %vm2143, %v2127, %v2128
        %v2159 = vsel %vm2143, %v2126, %v2127
        %v2160 = vsel %vm2143, %v2125, %v2126
        %v2161 = vsel %vm2143, %v2124, %v2125
        %v2162 = vsel %vm2143, %v2123, %v2124
        %v2163 = vsel %vm2143, %v2122, %v2123
        %v2164 = vsel %vm2143, %v2121, %v2122
        %v2165 = vsel %vm2143, %v2120, %v2121
        %v2166 = vsel %vm2143, %v2119, %v2120
        %v2167 = vsel %vm2143, %v2118, %v2119
        %v2168 = vsel %vm2143, %v2117, %v2118
        %v2169 = vsel %vm2143, %v2116, %v2117
        %v2170 = vsel %vm2143, %v2115, %v2116
        %v2171 = vsel %vm2143, %v2114, %v2115
        %v2172 = vsel %vm2143, %v2113, %v2114
        %v2173 = vsel %vm2143, %v2112, %v2113
        %v2174 = vsel %vm2143, %v2111, %v2112
        %v2175 = vsel %vm2143, %v2142, %v2111
        %s2176 = scalar_lea.vmem %s1, 256
        %v2177 = vld [vmem:[%s2176] sm:$0xff]
        %v2178 = vld [vmem:[%s2176 + $0x8] sm:$0xff]
        %v2179 = vld [vmem:[%s2176 + $0x10] sm:$0xff]
        %v2180 = vld [vmem:[%s2176 + $0x18] sm:$0xff]
        %v2181 = vld [vmem:[%s2176 + $0x20] sm:$0xff]
        %v2182 = vld [vmem:[%s2176 + $0x28] sm:$0xff]
        %v2183 = vld [vmem:[%s2176 + $0x30] sm:$0xff]
        %v2184 = vld [vmem:[%s2176 + $0x38] sm:$0xff]
        %v2186 = vsel %vm422, %v2174, 0
        %v2189 = vsel %vm422, %v2173, 0
        %v2192 = vsel %vm422, %v2172, 0
        %v2195 = vsel %vm422, %v2171, 0
        %v2198 = vsel %vm422, %v2170, 0
        %v2201 = vsel %vm422, %v2169, 0
        %v2204 = vsel %vm422, %v2168, 0
        %v2207 = vsel %vm422, %v2167, 0
        %v2210 = vsel %vm422, %v2166, 0
        %v2213 = vsel %vm422, %v2165, 0
        %v2216 = vsel %vm422, %v2164, 0
        %v2219 = vsel %vm422, %v2163, 0
        %v2222 = vsel %vm422, %v2162, 0
        %v2225 = vsel %vm422, %v2161, 0
        %v2228 = vsel %vm422, %v2160, 0
        %v2231 = vsel %vm422, %v2159, 0
        %v2234 = vsel %vm422, %v2158, 0
        %v2237 = vsel %vm422, %v2157, 0
        %v2240 = vsel %vm422, %v2156, 0
        %v2243 = vsel %vm422, %v2155, 0
        %v2246 = vsel %vm422, %v2154, 0
        %v2249 = vsel %vm422, %v2153, 0
        %v2252 = vsel %vm422, %v2152, 0
        %v2255 = vsel %vm422, %v2151, 0
        %v2258 = vsel %vm422, %v2150, 0
        %v2261 = vsel %vm422, %v2149, 0
        %v2264 = vsel %vm422, %v2148, 0
        %v2267 = vsel %vm422, %v2147, 0
        %v2270 = vsel %vm422, %v2146, 0
        %v2273 = vsel %vm422, %v2145, 0
        %v2276 = vsel %vm422, %v2144, 0
        %v2279 = vsel %vm422, %v2175, 0
        %2281 = vmatprep.subr.mxu0 %v2178
        %2282 = vmatpush1.msra.mxu0 %v2177
        %2283 = vmatprep.subr.mxu0 %v2180
        %2284 = vmatpush1.msra.mxu0 %v2179
        %2285 = vmatprep.subr.mxu0 %v2182
        %2286 = vmatpush1.msra.mxu0 %v2181
        %2287 = vmatprep.subr.mxu0 %v2184
        %2288 = vmatpush1.msra.mxu0 %v2183
        %2289 = vmatprep.subr.mxu0 0.0
        %2290 = vmatpush1.msra.mxu0 0.0
        %2291 = vmatprep.subr.mxu0 0.0
        %2292 = vmatpush1.msra.mxu0 0.0
        %2293 = vmatprep.subr.mxu0 0.0
        %2294 = vmatpush1.msra.mxu0 0.0
        %2295 = vmatprep.subr.mxu0 0.0
        %2296 = vmatpush1.msra.mxu0 0.0
        %2297 = vmatprep.subr.mxu0 0.0
        %2298 = vmatpush1.msra.mxu0 0.0
        %2299 = vmatprep.subr.mxu0 0.0
        %2300 = vmatpush1.msra.mxu0 0.0
        %2301 = vmatprep.subr.mxu0 0.0
        %2302 = vmatpush1.msra.mxu0 0.0
        %2303 = vmatprep.subr.mxu0 0.0
        %2304 = vmatpush1.msra.mxu0 0.0
        %2305 = vmatprep.subr.mxu0 0.0
        %2306 = vmatpush1.msra.mxu0 0.0
        %2307 = vmatprep.subr.mxu0 0.0
        %2308 = vmatpush1.msra.mxu0 0.0
        %2309 = vmatprep.subr.mxu0 0.0
        %2310 = vmatpush1.msra.mxu0 0.0
        %2311 = vmatprep.subr.mxu0 0.0
        %2312 = vmatpush1.msra.mxu0 0.0
        %2313 = vmatprep.subr.mxu0 0.0
        %2314 = vmatpush1.msra.mxu0 0.0
        %2315 = vmatprep.subr.mxu0 0.0
        %2316 = vmatpush1.msra.mxu0 0.0
        %2317 = vmatprep.subr.mxu0 0.0
        %2318 = vmatpush1.msra.mxu0 0.0
        %2319 = vmatprep.subr.mxu0 0.0
        %2320 = vmatpush1.msra.mxu0 0.0
        %2321 = vmatprep.subr.mxu0 0.0
        %2322 = vmatpush1.msra.mxu0 0.0
        %2323 = vmatprep.subr.mxu0 0.0
        %2324 = vmatpush1.msra.mxu0 0.0
        %2325 = vmatprep.subr.mxu0 0.0
        %2326 = vmatpush1.msra.mxu0 0.0
        %2327 = vmatprep.subr.mxu0 0.0
        %2328 = vmatpush1.msra.mxu0 0.0
        %2329 = vmatprep.subr.mxu0 0.0
        %2330 = vmatpush1.msra.mxu0 0.0
        %2331 = vmatprep.subr.mxu0 0.0
        %2332 = vmatpush1.msra.mxu0 0.0
        %2333 = vmatprep.subr.mxu0 0.0
        %2334 = vmatpush1.msra.mxu0 0.0
        %2335 = vmatprep.subr.mxu0 0.0
        %2336 = vmatpush1.msra.mxu0 0.0
        %2337 = vmatprep.subr.mxu0 0.0
        %2338 = vmatpush1.msra.mxu0 0.0
        %2339 = vmatprep.subr.mxu0 0.0
        %2340 = vmatpush1.msra.mxu0 0.0
        %2341 = vmatprep.subr.mxu0 0.0
        %2342 = vmatpush1.msra.mxu0 0.0
        %2343 = vmatprep.subr.mxu0 0.0
        %2344 = vmatpush1.msra.mxu0 0.0
        %2345 = vmatprep.mubr.f32.mxu0 0.0
        %2346 = vmatmul.mubr.f32.gmra.mrb[0].mxu0 %v2186
        %v2347 = vpop.f32.mrb[0].mxu0
        %v2348 = vadd.f32 0.0, %v2347
        %v2349 = vpop.f32.mrb[0].mxu0
        %v2350 = vadd.f32 0.0, %v2349
        %2351 = vmatprep.mubr.f32.mxu0 0.0
        %2352 = vmatmul.mubr.f32.gmra.mrb[0].mxu0 %v2189
        %v2353 = vpop.f32.mrb[0].mxu0
        %v2354 = vadd.f32 0.0, %v2353
        %v2355 = vpop.f32.mrb[0].mxu0
        %v2356 = vadd.f32 0.0, %v2355
        %2357 = vmatprep.mubr.f32.mxu0 0.0
        %2358 = vmatmul.mubr.f32.gmra.mrb[0].mxu0 %v2192
        %v2359 = vpop.f32.mrb[0].mxu0
        %v2360 = vadd.f32 0.0, %v2359
        %v2361 = vpop.f32.mrb[0].mxu0
        %v2362 = vadd.f32 0.0, %v2361
        %2363 = vmatprep.mubr.f32.mxu0 0.0
        %2364 = vmatmul.mubr.f32.gmra.mrb[0].mxu0 %v2195
        %v2365 = vpop.f32.mrb[0].mxu0
        %v2366 = vadd.f32 0.0, %v2365
        %v2367 = vpop.f32.mrb[0].mxu0
        %v2368 = vadd.f32 0.0, %v2367
        %2369 = vmatprep.mubr.f32.mxu0 0.0
        %2370 = vmatmul.mubr.f32.gmra.mrb[0].mxu0 %v2198
        %v2371 = vpop.f32.mrb[0].mxu0
        %v2372 = vadd.f32 0.0, %v2371
        %v2373 = vpop.f32.mrb[0].mxu0
        %v2374 = vadd.f32 0.0, %v2373
        %2375 = vmatprep.mubr.f32.mxu0 0.0
        %2376 = vmatmul.mubr.f32.gmra.mrb[0].mxu0 %v2201
        %v2377 = vpop.f32.mrb[0].mxu0
        %v2378 = vadd.f32 0.0, %v2377
        %v2379 = vpop.f32.mrb[0].mxu0
        %v2380 = vadd.f32 0.0, %v2379
        %2381 = vmatprep.mubr.f32.mxu0 0.0
        %2382 = vmatmul.mubr.f32.gmra.mrb[0].mxu0 %v2204
        %v2383 = vpop.f32.mrb[0].mxu0
        %v2384 = vadd.f32 0.0, %v2383
        %v2385 = vpop.f32.mrb[0].mxu0
        %v2386 = vadd.f32 0.0, %v2385
        %2387 = vmatprep.mubr.f32.mxu0 0.0
        %2388 = vmatmul.mubr.f32.gmra.mrb[0].mxu0 %v2207
        %v2389 = vpop.f32.mrb[0].mxu0
        %v2390 = vadd.f32 0.0, %v2389
        %v2391 = vpop.f32.mrb[0].mxu0
        %v2392 = vadd.f32 0.0, %v2391
        %2393 = vmatprep.mubr.f32.mxu0 0.0
        %2394 = vmatmul.mubr.f32.gmra.mrb[0].mxu0 %v2210
        %v2395 = vpop.f32.mrb[0].mxu0
        %v2396 = vadd.f32 0.0, %v2395
        %v2397 = vpop.f32.mrb[0].mxu0
        %v2398 = vadd.f32 0.0, %v2397
        %2399 = vmatprep.mubr.f32.mxu0 0.0
        %2400 = vmatmul.mubr.f32.gmra.mrb[0].mxu0 %v2213
        %v2401 = vpop.f32.mrb[0].mxu0
        %v2402 = vadd.f32 0.0, %v2401
        %v2403 = vpop.f32.mrb[0].mxu0
        %v2404 = vadd.f32 0.0, %v2403
        %2405 = vmatprep.mubr.f32.mxu0 0.0
        %2406 = vmatmul.mubr.f32.gmra.mrb[0].mxu0 %v2216
        %v2407 = vpop.f32.mrb[0].mxu0
        %v2408 = vadd.f32 0.0, %v2407
        %v2409 = vpop.f32.mrb[0].mxu0
        %v2410 = vadd.f32 0.0, %v2409
        %2411 = vmatprep.mubr.f32.mxu0 0.0
        %2412 = vmatmul.mubr.f32.gmra.mrb[0].mxu0 %v2219
        %v2413 = vpop.f32.mrb[0].mxu0
        %v2414 = vadd.f32 0.0, %v2413
        %v2415 = vpop.f32.mrb[0].mxu0
        %v2416 = vadd.f32 0.0, %v2415
        %2417 = vmatprep.mubr.f32.mxu0 0.0
        %2418 = vmatmul.mubr.f32.gmra.mrb[0].mxu0 %v2222
        %v2419 = vpop.f32.mrb[0].mxu0
        %v2420 = vadd.f32 0.0, %v2419
        %v2421 = vpop.f32.mrb[0].mxu0
        %v2422 = vadd.f32 0.0, %v2421
        %2423 = vmatprep.mubr.f32.mxu0 0.0
        %2424 = vmatmul.mubr.f32.gmra.mrb[0].mxu0 %v2225
        %v2425 = vpop.f32.mrb[0].mxu0
        %v2426 = vadd.f32 0.0, %v2425
        %v2427 = vpop.f32.mrb[0].mxu0
        %v2428 = vadd.f32 0.0, %v2427
        %2429 = vmatprep.mubr.f32.mxu0 0.0
        %2430 = vmatmul.mubr.f32.gmra.mrb[0].mxu0 %v2228
        %v2431 = vpop.f32.mrb[0].mxu0
        %v2432 = vadd.f32 0.0, %v2431
        %v2433 = vpop.f32.mrb[0].mxu0
        %v2434 = vadd.f32 0.0, %v2433
        %2435 = vmatprep.mubr.f32.mxu0 0.0
        %2436 = vmatmul.mubr.f32.gmra.mrb[0].mxu0 %v2231
        %v2437 = vpop.f32.mrb[0].mxu0
        %v2438 = vadd.f32 0.0, %v2437
        %v2439 = vpop.f32.mrb[0].mxu0
        %v2440 = vadd.f32 0.0, %v2439
        %2441 = vmatprep.mubr.f32.mxu0 0.0
        %2442 = vmatmul.mubr.f32.gmra.mrb[0].mxu0 %v2234
        %v2443 = vpop.f32.mrb[0].mxu0
        %v2444 = vadd.f32 0.0, %v2443
        %v2445 = vpop.f32.mrb[0].mxu0
        %v2446 = vadd.f32 0.0, %v2445
        %2447 = vmatprep.mubr.f32.mxu0 0.0
        %2448 = vmatmul.mubr.f32.gmra.mrb[0].mxu0 %v2237
        %v2449 = vpop.f32.mrb[0].mxu0
        %v2450 = vadd.f32 0.0, %v2449
        %v2451 = vpop.f32.mrb[0].mxu0
        %v2452 = vadd.f32 0.0, %v2451
        %2453 = vmatprep.mubr.f32.mxu0 0.0
        %2454 = vmatmul.mubr.f32.gmra.mrb[0].mxu0 %v2240
        %v2455 = vpop.f32.mrb[0].mxu0
        %v2456 = vadd.f32 0.0, %v2455
        %v2457 = vpop.f32.mrb[0].mxu0
        %v2458 = vadd.f32 0.0, %v2457
        %2459 = vmatprep.mubr.f32.mxu0 0.0
        %2460 = vmatmul.mubr.f32.gmra.mrb[0].mxu0 %v2243
        %v2461 = vpop.f32.mrb[0].mxu0
        %v2462 = vadd.f32 0.0, %v2461
        %v2463 = vpop.f32.mrb[0].mxu0
        %v2464 = vadd.f32 0.0, %v2463
        %2465 = vmatprep.mubr.f32.mxu0 0.0
        %2466 = vmatmul.mubr.f32.gmra.mrb[0].mxu0 %v2246
        %v2467 = vpop.f32.mrb[0].mxu0
        %v2468 = vadd.f32 0.0, %v2467
        %v2469 = vpop.f32.mrb[0].mxu0
        %v2470 = vadd.f32 0.0, %v2469
        %2471 = vmatprep.mubr.f32.mxu0 0.0
        %2472 = vmatmul.mubr.f32.gmra.mrb[0].mxu0 %v2249
        %v2473 = vpop.f32.mrb[0].mxu0
        %v2474 = vadd.f32 0.0, %v2473
        %v2475 = vpop.f32.mrb[0].mxu0
        %v2476 = vadd.f32 0.0, %v2475
        %2477 = vmatprep.mubr.f32.mxu0 0.0
        %2478 = vmatmul.mubr.f32.gmra.mrb[0].mxu0 %v2252
        %v2479 = vpop.f32.mrb[0].mxu0
        %v2480 = vadd.f32 0.0, %v2479
        %v2481 = vpop.f32.mrb[0].mxu0
        %v2482 = vadd.f32 0.0, %v2481
        %2483 = vmatprep.mubr.f32.mxu0 0.0
        %2484 = vmatmul.mubr.f32.gmra.mrb[0].mxu0 %v2255
        %v2485 = vpop.f32.mrb[0].mxu0
        %v2486 = vadd.f32 0.0, %v2485
        %v2487 = vpop.f32.mrb[0].mxu0
        %v2488 = vadd.f32 0.0, %v2487
        %2489 = vmatprep.mubr.f32.mxu0 0.0
        %2490 = vmatmul.mubr.f32.gmra.mrb[0].mxu0 %v2258
        %v2491 = vpop.f32.mrb[0].mxu0
        %v2492 = vadd.f32 0.0, %v2491
        %v2493 = vpop.f32.mrb[0].mxu0
        %v2494 = vadd.f32 0.0, %v2493
        %2495 = vmatprep.mubr.f32.mxu0 0.0
        %2496 = vmatmul.mubr.f32.gmra.mrb[0].mxu0 %v2261
        %v2497 = vpop.f32.mrb[0].mxu0
        %v2498 = vadd.f32 0.0, %v2497
        %v2499 = vpop.f32.mrb[0].mxu0
        %v2500 = vadd.f32 0.0, %v2499
        %2501 = vmatprep.mubr.f32.mxu0 0.0
        %2502 = vmatmul.mubr.f32.gmra.mrb[0].mxu0 %v2264
        %v2503 = vpop.f32.mrb[0].mxu0
        %v2504 = vadd.f32 0.0, %v2503
        %v2505 = vpop.f32.mrb[0].mxu0
        %v2506 = vadd.f32 0.0, %v2505
        %2507 = vmatprep.mubr.f32.mxu0 0.0
        %2508 = vmatmul.mubr.f32.gmra.mrb[0].mxu0 %v2267
        %v2509 = vpop.f32.mrb[0].mxu0
        %v2510 = vadd.f32 0.0, %v2509
        %v2511 = vpop.f32.mrb[0].mxu0
        %v2512 = vadd.f32 0.0, %v2511
        %2513 = vmatprep.mubr.f32.mxu0 0.0
        %2514 = vmatmul.mubr.f32.gmra.mrb[0].mxu0 %v2270
        %v2515 = vpop.f32.mrb[0].mxu0
        %v2516 = vadd.f32 0.0, %v2515
        %v2517 = vpop.f32.mrb[0].mxu0
        %v2518 = vadd.f32 0.0, %v2517
        %2519 = vmatprep.mubr.f32.mxu0 0.0
        %2520 = vmatmul.mubr.f32.gmra.mrb[0].mxu0 %v2273
        %v2521 = vpop.f32.mrb[0].mxu0
        %v2522 = vadd.f32 0.0, %v2521
        %v2523 = vpop.f32.mrb[0].mxu0
        %v2524 = vadd.f32 0.0, %v2523
        %2525 = vmatprep.mubr.f32.mxu0 0.0
        %2526 = vmatmul.mubr.f32.gmra.mrb[0].mxu0 %v2276
        %v2527 = vpop.f32.mrb[0].mxu0
        %v2528 = vadd.f32 0.0, %v2527
        %v2529 = vpop.f32.mrb[0].mxu0
        %v2530 = vadd.f32 0.0, %v2529
        %2531 = vmatprep.mubr.f32.mxu0 0.0
        %2532 = vmatmul.mubr.f32.gmra.mrb[0].mxu0 %v2279
        %v2533 = vpop.f32.mrb[0].mxu0
        %v2534 = vadd.f32 0.0, %v2533
        %v2535 = vpop.f32.mrb[0].mxu0
        %v2536 = vadd.f32 0.0, %v2535
        %2537 = vdwg.mxu0
        %v2538 = vadd.f32 %v2047, %v2348
        %v2539 = vadd.f32 %v2048, %v2350
        %v2540 = vadd.f32 %v2049, %v2354
        %v2541 = vadd.f32 %v2050, %v2356
        %v2542 = vadd.f32 %v2051, %v2360
        %v2543 = vadd.f32 %v2052, %v2362
        %v2544 = vadd.f32 %v2053, %v2366
        %v2545 = vadd.f32 %v2054, %v2368
        %v2546 = vadd.f32 %v2055, %v2372
        %v2547 = vadd.f32 %v2056, %v2374
        %v2548 = vadd.f32 %v2057, %v2378
        %v2549 = vadd.f32 %v2058, %v2380
        %v2550 = vadd.f32 %v2059, %v2384
        %v2551 = vadd.f32 %v2060, %v2386
        %v2552 = vadd.f32 %v2061, %v2390
        %v2553 = vadd.f32 %v2062, %v2392
        %v2554 = vadd.f32 %v2063, %v2396
        %v2555 = vadd.f32 %v2064, %v2398
        %v2556 = vadd.f32 %v2065, %v2402
        %v2557 = vadd.f32 %v2066, %v2404
        %v2558 = vadd.f32 %v2067, %v2408
        %v2559 = vadd.f32 %v2068, %v2410
        %v2560 = vadd.f32 %v2069, %v2414
        %v2561 = vadd.f32 %v2070, %v2416
        %v2562 = vadd.f32 %v2071, %v2420
        %v2563 = vadd.f32 %v2072, %v2422
        %v2564 = vadd.f32 %v2073, %v2426
        %v2565 = vadd.f32 %v2074, %v2428
        %v2566 = vadd.f32 %v2075, %v2432
        %v2567 = vadd.f32 %v2076, %v2434
        %v2568 = vadd.f32 %v2077, %v2438
        %v2569 = vadd.f32 %v2078, %v2440
        %v2570 = vadd.f32 %v2079, %v2444
        %v2571 = vadd.f32 %v2080, %v2446
        %v2572 = vadd.f32 %v2081, %v2450
        %v2573 = vadd.f32 %v2082, %v2452
        %v2574 = vadd.f32 %v2083, %v2456
        %v2575 = vadd.f32 %v2084, %v2458
        %v2576 = vadd.f32 %v2085, %v2462
        %v2577 = vadd.f32 %v2086, %v2464
        %v2578 = vadd.f32 %v2087, %v2468
        %v2579 = vadd.f32 %v2088, %v2470
        %v2580 = vadd.f32 %v2089, %v2474
        %v2581 = vadd.f32 %v2090, %v2476
        %v2582 = vadd.f32 %v2091, %v2480
        %v2583 = vadd.f32 %v2092, %v2482
        %v2584 = vadd.f32 %v2093, %v2486
        %v2585 = vadd.f32 %v2094, %v2488
        %v2586 = vadd.f32 %v2095, %v2492
        %v2587 = vadd.f32 %v2096, %v2494
        %v2588 = vadd.f32 %v2097, %v2498
        %v2589 = vadd.f32 %v2098, %v2500
        %v2590 = vadd.f32 %v2099, %v2504
        %v2591 = vadd.f32 %v2100, %v2506
        %v2592 = vadd.f32 %v2101, %v2510
        %v2593 = vadd.f32 %v2102, %v2512
        %v2594 = vadd.f32 %v2103, %v2516
        %v2595 = vadd.f32 %v2104, %v2518
        %v2596 = vadd.f32 %v2105, %v2522
        %v2597 = vadd.f32 %v2106, %v2524
        %v2598 = vadd.f32 %v2107, %v2528
        %v2599 = vadd.f32 %v2108, %v2530
        %v2600 = vadd.f32 %v2109, %v2534
        %v2601 = vadd.f32 %v2110, %v2536
        %v2602 = vld [vmem:[%s7] ss:$8 sm:$0x3]
        %v2604 = vlaneseq
        %v2605 = vshrl.u32 %v2604, 7
        %v2606 = vsub.s32 0, %v2605
        %v2607 = vrot.slane %v2602, %v2606
        %v2608 = vlaneseq
        %v2609 = vshrl.u32 %v2608, 7
        %v2610 = vsub.s32 1, %v2609
        %v2611 = vrot.slane %v2602, %v2610
        %v2614 = vadd.f32 %v2538, %v2607
        %v2615 = vadd.f32 %v2539, %v2611
        %v2616 = vadd.f32 %v2540, %v2607
        %v2617 = vadd.f32 %v2541, %v2611
        %v2618 = vadd.f32 %v2542, %v2607
        %v2619 = vadd.f32 %v2543, %v2611
        %v2620 = vadd.f32 %v2544, %v2607
        %v2621 = vadd.f32 %v2545, %v2611
        %v2622 = vadd.f32 %v2546, %v2607
        %v2623 = vadd.f32 %v2547, %v2611
        %v2624 = vadd.f32 %v2548, %v2607
        %v2625 = vadd.f32 %v2549, %v2611
        %v2626 = vadd.f32 %v2550, %v2607
        %v2627 = vadd.f32 %v2551, %v2611
        %v2628 = vadd.f32 %v2552, %v2607
        %v2629 = vadd.f32 %v2553, %v2611
        %v2630 = vadd.f32 %v2554, %v2607
        %v2631 = vadd.f32 %v2555, %v2611
        %v2632 = vadd.f32 %v2556, %v2607
        %v2633 = vadd.f32 %v2557, %v2611
        %v2634 = vadd.f32 %v2558, %v2607
        %v2635 = vadd.f32 %v2559, %v2611
        %v2636 = vadd.f32 %v2560, %v2607
        %v2637 = vadd.f32 %v2561, %v2611
        %v2638 = vadd.f32 %v2562, %v2607
        %v2639 = vadd.f32 %v2563, %v2611
        %v2640 = vadd.f32 %v2564, %v2607
        %v2641 = vadd.f32 %v2565, %v2611
        %v2642 = vadd.f32 %v2566, %v2607
        %v2643 = vadd.f32 %v2567, %v2611
        %v2644 = vadd.f32 %v2568, %v2607
        %v2645 = vadd.f32 %v2569, %v2611
        %v2646 = vadd.f32 %v2570, %v2607
        %v2647 = vadd.f32 %v2571, %v2611
        %v2648 = vadd.f32 %v2572, %v2607
        %v2649 = vadd.f32 %v2573, %v2611
        %v2650 = vadd.f32 %v2574, %v2607
        %v2651 = vadd.f32 %v2575, %v2611
        %v2652 = vadd.f32 %v2576, %v2607
        %v2653 = vadd.f32 %v2577, %v2611
        %v2654 = vadd.f32 %v2578, %v2607
        %v2655 = vadd.f32 %v2579, %v2611
        %v2656 = vadd.f32 %v2580, %v2607
        %v2657 = vadd.f32 %v2581, %v2611
        %v2658 = vadd.f32 %v2582, %v2607
        %v2659 = vadd.f32 %v2583, %v2611
        %v2660 = vadd.f32 %v2584, %v2607
        %v2661 = vadd.f32 %v2585, %v2611
        %v2662 = vadd.f32 %v2586, %v2607
        %v2663 = vadd.f32 %v2587, %v2611
        %v2664 = vadd.f32 %v2588, %v2607
        %v2665 = vadd.f32 %v2589, %v2611
        %v2666 = vadd.f32 %v2590, %v2607
        %v2667 = vadd.f32 %v2591, %v2611
        %v2668 = vadd.f32 %v2592, %v2607
        %v2669 = vadd.f32 %v2593, %v2611
        %v2670 = vadd.f32 %v2594, %v2607
        %v2671 = vadd.f32 %v2595, %v2611
        %v2672 = vadd.f32 %v2596, %v2607
        %v2673 = vadd.f32 %v2597, %v2611
        %v2674 = vadd.f32 %v2598, %v2607
        %v2675 = vadd.f32 %v2599, %v2611
        %v2676 = vadd.f32 %v2600, %v2607
        %v2677 = vadd.f32 %v2601, %v2611
        %v2678 = vmul.f32 %v2614, 0.5
        %v2679 = vmul.f32 %v2615, 0.5
        %v2680 = vmul.f32 %v2616, 0.5
        %v2681 = vmul.f32 %v2617, 0.5
        %v2682 = vmul.f32 %v2618, 0.5
        %v2683 = vmul.f32 %v2619, 0.5
        %v2684 = vmul.f32 %v2620, 0.5
        %v2685 = vmul.f32 %v2621, 0.5
        %v2686 = vmul.f32 %v2622, 0.5
        %v2687 = vmul.f32 %v2623, 0.5
        %v2688 = vmul.f32 %v2624, 0.5
        %v2689 = vmul.f32 %v2625, 0.5
        %v2690 = vmul.f32 %v2626, 0.5
        %v2691 = vmul.f32 %v2627, 0.5
        %v2692 = vmul.f32 %v2628, 0.5
        %v2693 = vmul.f32 %v2629, 0.5
        %v2694 = vmul.f32 %v2630, 0.5
        %v2695 = vmul.f32 %v2631, 0.5
        %v2696 = vmul.f32 %v2632, 0.5
        %v2697 = vmul.f32 %v2633, 0.5
        %v2698 = vmul.f32 %v2634, 0.5
        %v2699 = vmul.f32 %v2635, 0.5
        %v2700 = vmul.f32 %v2636, 0.5
        %v2701 = vmul.f32 %v2637, 0.5
        %v2702 = vmul.f32 %v2638, 0.5
        %v2703 = vmul.f32 %v2639, 0.5
        %v2704 = vmul.f32 %v2640, 0.5
        %v2705 = vmul.f32 %v2641, 0.5
        %v2706 = vmul.f32 %v2642, 0.5
        %v2707 = vmul.f32 %v2643, 0.5
        %v2708 = vmul.f32 %v2644, 0.5
        %v2709 = vmul.f32 %v2645, 0.5
        %v2710 = vmul.f32 %v2646, 0.5
        %v2711 = vmul.f32 %v2647, 0.5
        %v2712 = vmul.f32 %v2648, 0.5
        %v2713 = vmul.f32 %v2649, 0.5
        %v2714 = vmul.f32 %v2650, 0.5
        %v2715 = vmul.f32 %v2651, 0.5
        %v2716 = vmul.f32 %v2652, 0.5
        %v2717 = vmul.f32 %v2653, 0.5
        %v2718 = vmul.f32 %v2654, 0.5
        %v2719 = vmul.f32 %v2655, 0.5
        %v2720 = vmul.f32 %v2656, 0.5
        %v2721 = vmul.f32 %v2657, 0.5
        %v2722 = vmul.f32 %v2658, 0.5
        %v2723 = vmul.f32 %v2659, 0.5
        %v2724 = vmul.f32 %v2660, 0.5
        %v2725 = vmul.f32 %v2661, 0.5
        %v2726 = vmul.f32 %v2662, 0.5
        %v2727 = vmul.f32 %v2663, 0.5
        %v2728 = vmul.f32 %v2664, 0.5
        %v2729 = vmul.f32 %v2665, 0.5
        %v2730 = vmul.f32 %v2666, 0.5
        %v2731 = vmul.f32 %v2667, 0.5
        %v2732 = vmul.f32 %v2668, 0.5
        %v2733 = vmul.f32 %v2669, 0.5
        %v2734 = vmul.f32 %v2670, 0.5
        %v2735 = vmul.f32 %v2671, 0.5
        %v2736 = vmul.f32 %v2672, 0.5
        %v2737 = vmul.f32 %v2673, 0.5
        %v2738 = vmul.f32 %v2674, 0.5
        %v2739 = vmul.f32 %v2675, 0.5
        %v2740 = vmul.f32 %v2676, 0.5
        %v2741 = vmul.f32 %v2677, 0.5
        %v2742 = vtanh.pop %v2678
        %v2743 = vtanh.pop %v2679
        %v2744 = vtanh.pop %v2680
        %v2745 = vtanh.pop %v2681
        %v2746 = vtanh.pop %v2682
        %v2747 = vtanh.pop %v2683
        %v2748 = vtanh.pop %v2684
        %v2749 = vtanh.pop %v2685
        %v2750 = vtanh.pop %v2686
        %v2751 = vtanh.pop %v2687
        %v2752 = vtanh.pop %v2688
        %v2753 = vtanh.pop %v2689
        %v2754 = vtanh.pop %v2690
        %v2755 = vtanh.pop %v2691
        %v2756 = vtanh.pop %v2692
        %v2757 = vtanh.pop %v2693
        %v2758 = vtanh.pop %v2694
        %v2759 = vtanh.pop %v2695
        %v2760 = vtanh.pop %v2696
        %v2761 = vtanh.pop %v2697
        %v2762 = vtanh.pop %v2698
        %v2763 = vtanh.pop %v2699
        %v2764 = vtanh.pop %v2700
        %v2765 = vtanh.pop %v2701
        %v2766 = vtanh.pop %v2702
        %v2767 = vtanh.pop %v2703
        %v2768 = vtanh.pop %v2704
        %v2769 = vtanh.pop %v2705
        %v2770 = vtanh.pop %v2706
        %v2771 = vtanh.pop %v2707
        %v2772 = vtanh.pop %v2708
        %v2773 = vtanh.pop %v2709
        %v2774 = vtanh.pop %v2710
        %v2775 = vtanh.pop %v2711
        %v2776 = vtanh.pop %v2712
        %v2777 = vtanh.pop %v2713
        %v2778 = vtanh.pop %v2714
        %v2779 = vtanh.pop %v2715
        %v2780 = vtanh.pop %v2716
        %v2781 = vtanh.pop %v2717
        %v2782 = vtanh.pop %v2718
        %v2783 = vtanh.pop %v2719
        %v2784 = vtanh.pop %v2720
        %v2785 = vtanh.pop %v2721
        %v2786 = vtanh.pop %v2722
        %v2787 = vtanh.pop %v2723
        %v2788 = vtanh.pop %v2724
        %v2789 = vtanh.pop %v2725
        %v2790 = vtanh.pop %v2726
        %v2791 = vtanh.pop %v2727
        %v2792 = vtanh.pop %v2728
        %v2793 = vtanh.pop %v2729
        %v2794 = vtanh.pop %v2730
        %v2795 = vtanh.pop %v2731
        %v2796 = vtanh.pop %v2732
        %v2797 = vtanh.pop %v2733
        %v2798 = vtanh.pop %v2734
        %v2799 = vtanh.pop %v2735
        %v2800 = vtanh.pop %v2736
        %v2801 = vtanh.pop %v2737
        %v2802 = vtanh.pop %v2738
        %v2803 = vtanh.pop %v2739
        %v2804 = vtanh.pop %v2740
        %v2805 = vtanh.pop %v2741
        %v2806 = vadd.f32 %v2742, 1.0
        %v2807 = vadd.f32 %v2743, 1.0
        %v2808 = vadd.f32 %v2744, 1.0
        %v2809 = vadd.f32 %v2745, 1.0
        %v2810 = vadd.f32 %v2746, 1.0
        %v2811 = vadd.f32 %v2747, 1.0
        %v2812 = vadd.f32 %v2748, 1.0
        %v2813 = vadd.f32 %v2749, 1.0
        %v2814 = vadd.f32 %v2750, 1.0
        %v2815 = vadd.f32 %v2751, 1.0
        %v2816 = vadd.f32 %v2752, 1.0
        %v2817 = vadd.f32 %v2753, 1.0
        %v2818 = vadd.f32 %v2754, 1.0
        %v2819 = vadd.f32 %v2755, 1.0
        %v2820 = vadd.f32 %v2756, 1.0
        %v2821 = vadd.f32 %v2757, 1.0
        %v2822 = vadd.f32 %v2758, 1.0
        %v2823 = vadd.f32 %v2759, 1.0
        %v2824 = vadd.f32 %v2760, 1.0
        %v2825 = vadd.f32 %v2761, 1.0
        %v2826 = vadd.f32 %v2762, 1.0
        %v2827 = vadd.f32 %v2763, 1.0
        %v2828 = vadd.f32 %v2764, 1.0
        %v2829 = vadd.f32 %v2765, 1.0
        %v2830 = vadd.f32 %v2766, 1.0
        %v2831 = vadd.f32 %v2767, 1.0
        %v2832 = vadd.f32 %v2768, 1.0
        %v2833 = vadd.f32 %v2769, 1.0
        %v2834 = vadd.f32 %v2770, 1.0
        %v2835 = vadd.f32 %v2771, 1.0
        %v2836 = vadd.f32 %v2772, 1.0
        %v2837 = vadd.f32 %v2773, 1.0
        %v2838 = vadd.f32 %v2774, 1.0
        %v2839 = vadd.f32 %v2775, 1.0
        %v2840 = vadd.f32 %v2776, 1.0
        %v2841 = vadd.f32 %v2777, 1.0
        %v2842 = vadd.f32 %v2778, 1.0
        %v2843 = vadd.f32 %v2779, 1.0
        %v2844 = vadd.f32 %v2780, 1.0
        %v2845 = vadd.f32 %v2781, 1.0
        %v2846 = vadd.f32 %v2782, 1.0
        %v2847 = vadd.f32 %v2783, 1.0
        %v2848 = vadd.f32 %v2784, 1.0
        %v2849 = vadd.f32 %v2785, 1.0
        %v2850 = vadd.f32 %v2786, 1.0
        %v2851 = vadd.f32 %v2787, 1.0
        %v2852 = vadd.f32 %v2788, 1.0
        %v2853 = vadd.f32 %v2789, 1.0
        %v2854 = vadd.f32 %v2790, 1.0
        %v2855 = vadd.f32 %v2791, 1.0
        %v2856 = vadd.f32 %v2792, 1.0
        %v2857 = vadd.f32 %v2793, 1.0
        %v2858 = vadd.f32 %v2794, 1.0
        %v2859 = vadd.f32 %v2795, 1.0
        %v2860 = vadd.f32 %v2796, 1.0
        %v2861 = vadd.f32 %v2797, 1.0
        %v2862 = vadd.f32 %v2798, 1.0
        %v2863 = vadd.f32 %v2799, 1.0
        %v2864 = vadd.f32 %v2800, 1.0
        %v2865 = vadd.f32 %v2801, 1.0
        %v2866 = vadd.f32 %v2802, 1.0
        %v2867 = vadd.f32 %v2803, 1.0
        %v2868 = vadd.f32 %v2804, 1.0
        %v2869 = vadd.f32 %v2805, 1.0
        %v2870 = vmul.f32 %v2806, 0.5
        %v2871 = vmul.f32 %v2807, 0.5
        %v2872 = vmul.f32 %v2808, 0.5
        %v2873 = vmul.f32 %v2809, 0.5
        %v2874 = vmul.f32 %v2810, 0.5
        %v2875 = vmul.f32 %v2811, 0.5
        %v2876 = vmul.f32 %v2812, 0.5
        %v2877 = vmul.f32 %v2813, 0.5
        %v2878 = vmul.f32 %v2814, 0.5
        %v2879 = vmul.f32 %v2815, 0.5
        %v2880 = vmul.f32 %v2816, 0.5
        %v2881 = vmul.f32 %v2817, 0.5
        %v2882 = vmul.f32 %v2818, 0.5
        %v2883 = vmul.f32 %v2819, 0.5
        %v2884 = vmul.f32 %v2820, 0.5
        %v2885 = vmul.f32 %v2821, 0.5
        %v2886 = vmul.f32 %v2822, 0.5
        %v2887 = vmul.f32 %v2823, 0.5
        %v2888 = vmul.f32 %v2824, 0.5
        %v2889 = vmul.f32 %v2825, 0.5
        %v2890 = vmul.f32 %v2826, 0.5
        %v2891 = vmul.f32 %v2827, 0.5
        %v2892 = vmul.f32 %v2828, 0.5
        %v2893 = vmul.f32 %v2829, 0.5
        %v2894 = vmul.f32 %v2830, 0.5
        %v2895 = vmul.f32 %v2831, 0.5
        %v2896 = vmul.f32 %v2832, 0.5
        %v2897 = vmul.f32 %v2833, 0.5
        %v2898 = vmul.f32 %v2834, 0.5
        %v2899 = vmul.f32 %v2835, 0.5
        %v2900 = vmul.f32 %v2836, 0.5
        %v2901 = vmul.f32 %v2837, 0.5
        %v2902 = vmul.f32 %v2838, 0.5
        %v2903 = vmul.f32 %v2839, 0.5
        %v2904 = vmul.f32 %v2840, 0.5
        %v2905 = vmul.f32 %v2841, 0.5
        %v2906 = vmul.f32 %v2842, 0.5
        %v2907 = vmul.f32 %v2843, 0.5
        %v2908 = vmul.f32 %v2844, 0.5
        %v2909 = vmul.f32 %v2845, 0.5
        %v2910 = vmul.f32 %v2846, 0.5
        %v2911 = vmul.f32 %v2847, 0.5
        %v2912 = vmul.f32 %v2848, 0.5
        %v2913 = vmul.f32 %v2849, 0.5
        %v2914 = vmul.f32 %v2850, 0.5
        %v2915 = vmul.f32 %v2851, 0.5
        %v2916 = vmul.f32 %v2852, 0.5
        %v2917 = vmul.f32 %v2853, 0.5
        %v2918 = vmul.f32 %v2854, 0.5
        %v2919 = vmul.f32 %v2855, 0.5
        %v2920 = vmul.f32 %v2856, 0.5
        %v2921 = vmul.f32 %v2857, 0.5
        %v2922 = vmul.f32 %v2858, 0.5
        %v2923 = vmul.f32 %v2859, 0.5
        %v2924 = vmul.f32 %v2860, 0.5
        %v2925 = vmul.f32 %v2861, 0.5
        %v2926 = vmul.f32 %v2862, 0.5
        %v2927 = vmul.f32 %v2863, 0.5
        %v2928 = vmul.f32 %v2864, 0.5
        %v2929 = vmul.f32 %v2865, 0.5
        %v2930 = vmul.f32 %v2866, 0.5
        %v2931 = vmul.f32 %v2867, 0.5
        %v2932 = vmul.f32 %v2868, 0.5
        %v2933 = vmul.f32 %v2869, 0.5
        %v2934 = vrot.slane %v2870, 1
        %v2935 = vrot.slane %v2871, 1
        %v2936 = vrot.slane %v2872, 1
        %v2937 = vrot.slane %v2873, 1
        %v2938 = vrot.slane %v2874, 1
        %v2939 = vrot.slane %v2875, 1
        %v2940 = vrot.slane %v2876, 1
        %v2941 = vrot.slane %v2877, 1
        %v2942 = vrot.slane %v2878, 1
        %v2943 = vrot.slane %v2879, 1
        %v2944 = vrot.slane %v2880, 1
        %v2945 = vrot.slane %v2881, 1
        %v2946 = vrot.slane %v2882, 1
        %v2947 = vrot.slane %v2883, 1
        %v2948 = vrot.slane %v2884, 1
        %v2949 = vrot.slane %v2885, 1
        %v2950 = vrot.slane %v2886, 1
        %v2951 = vrot.slane %v2887, 1
        %v2952 = vrot.slane %v2888, 1
        %v2953 = vrot.slane %v2889, 1
        %v2954 = vrot.slane %v2890, 1
        %v2955 = vrot.slane %v2891, 1
        %v2956 = vrot.slane %v2892, 1
        %v2957 = vrot.slane %v2893, 1
        %v2958 = vrot.slane %v2894, 1
        %v2959 = vrot.slane %v2895, 1
        %v2960 = vrot.slane %v2896, 1
        %v2961 = vrot.slane %v2897, 1
        %v2962 = vrot.slane %v2898, 1
        %v2963 = vrot.slane %v2899, 1
        %v2964 = vrot.slane %v2900, 1
        %v2965 = vrot.slane %v2901, 1
        %v2966 = vrot.slane %v2902, 1
        %v2967 = vrot.slane %v2903, 1
        %v2968 = vrot.slane %v2904, 1
        %v2969 = vrot.slane %v2905, 1
        %v2970 = vrot.slane %v2906, 1
        %v2971 = vrot.slane %v2907, 1
        %v2972 = vrot.slane %v2908, 1
        %v2973 = vrot.slane %v2909, 1
        %v2974 = vrot.slane %v2910, 1
        %v2975 = vrot.slane %v2911, 1
        %v2976 = vrot.slane %v2912, 1
        %v2977 = vrot.slane %v2913, 1
        %v2978 = vrot.slane %v2914, 1
        %v2979 = vrot.slane %v2915, 1
        %v2980 = vrot.slane %v2916, 1
        %v2981 = vrot.slane %v2917, 1
        %v2982 = vrot.slane %v2918, 1
        %v2983 = vrot.slane %v2919, 1
        %v2984 = vrot.slane %v2920, 1
        %v2985 = vrot.slane %v2921, 1
        %v2986 = vrot.slane %v2922, 1
        %v2987 = vrot.slane %v2923, 1
        %v2988 = vrot.slane %v2924, 1
        %v2989 = vrot.slane %v2925, 1
        %v2990 = vrot.slane %v2926, 1
        %v2991 = vrot.slane %v2927, 1
        %v2992 = vrot.slane %v2928, 1
        %v2993 = vrot.slane %v2929, 1
        %v2994 = vrot.slane %v2930, 1
        %v2995 = vrot.slane %v2931, 1
        %v2996 = vrot.slane %v2932, 1
        %v2997 = vrot.slane %v2933, 1
        %v2998 = vsel %vm380, %v2994, %v2996
        %v2999 = vsel %vm380, %v2995, %v2997
        %v3000 = vsel %vm380, %v2992, %v2994
        %v3001 = vsel %vm380, %v2993, %v2995
        %v3002 = vsel %vm380, %v2990, %v2992
        %v3003 = vsel %vm380, %v2991, %v2993
        %v3004 = vsel %vm380, %v2988, %v2990
        %v3005 = vsel %vm380, %v2989, %v2991
        %v3006 = vsel %vm380, %v2986, %v2988
        %v3007 = vsel %vm380, %v2987, %v2989
        %v3008 = vsel %vm380, %v2984, %v2986
        %v3009 = vsel %vm380, %v2985, %v2987
        %v3010 = vsel %vm380, %v2982, %v2984
        %v3011 = vsel %vm380, %v2983, %v2985
        %v3012 = vsel %vm380, %v2980, %v2982
        %v3013 = vsel %vm380, %v2981, %v2983
        %v3014 = vsel %vm380, %v2978, %v2980
        %v3015 = vsel %vm380, %v2979, %v2981
        %v3016 = vsel %vm380, %v2976, %v2978
        %v3017 = vsel %vm380, %v2977, %v2979
        %v3018 = vsel %vm380, %v2974, %v2976
        %v3019 = vsel %vm380, %v2975, %v2977
        %v3020 = vsel %vm380, %v2972, %v2974
        %v3021 = vsel %vm380, %v2973, %v2975
        %v3022 = vsel %vm380, %v2970, %v2972
        %v3023 = vsel %vm380, %v2971, %v2973
        %v3024 = vsel %vm380, %v2968, %v2970
        %v3025 = vsel %vm380, %v2969, %v2971
        %v3026 = vsel %vm380, %v2966, %v2968
        %v3027 = vsel %vm380, %v2967, %v2969
        %v3028 = vsel %vm380, %v2964, %v2966
        %v3029 = vsel %vm380, %v2965, %v2967
        %v3030 = vsel %vm380, %v2962, %v2964
        %v3031 = vsel %vm380, %v2963, %v2965
        %v3032 = vsel %vm380, %v2960, %v2962
        %v3033 = vsel %vm380, %v2961, %v2963
        %v3034 = vsel %vm380, %v2958, %v2960
        %v3035 = vsel %vm380, %v2959, %v2961
        %v3036 = vsel %vm380, %v2956, %v2958
        %v3037 = vsel %vm380, %v2957, %v2959
        %v3038 = vsel %vm380, %v2954, %v2956
        %v3039 = vsel %vm380, %v2955, %v2957
        %v3040 = vsel %vm380, %v2952, %v2954
        %v3041 = vsel %vm380, %v2953, %v2955
        %v3042 = vsel %vm380, %v2950, %v2952
        %v3043 = vsel %vm380, %v2951, %v2953
        %v3044 = vsel %vm380, %v2948, %v2950
        %v3045 = vsel %vm380, %v2949, %v2951
        %v3046 = vsel %vm380, %v2946, %v2948
        %v3047 = vsel %vm380, %v2947, %v2949
        %v3048 = vsel %vm380, %v2944, %v2946
        %v3049 = vsel %vm380, %v2945, %v2947
        %v3050 = vsel %vm380, %v2942, %v2944
        %v3051 = vsel %vm380, %v2943, %v2945
        %v3052 = vsel %vm380, %v2940, %v2942
        %v3053 = vsel %vm380, %v2941, %v2943
        %v3054 = vsel %vm380, %v2938, %v2940
        %v3055 = vsel %vm380, %v2939, %v2941
        %v3056 = vsel %vm380, %v2936, %v2938
        %v3057 = vsel %vm380, %v2937, %v2939
        %v3058 = vsel %vm380, %v2934, %v2936
        %v3059 = vsel %vm380, %v2935, %v2937
        %v3060 = vsel %vm380, %v2996, %v2934
        %v3061 = vsel %vm380, %v2997, %v2935
        %v3062 = vmax.f32 %v2870, %v3058
        %v3063 = vmax.f32 %v2871, %v3059
        %v3064 = vmax.f32 %v2872, %v3056
        %v3065 = vmax.f32 %v2873, %v3057
        %v3066 = vmax.f32 %v2874, %v3054
        %v3067 = vmax.f32 %v2875, %v3055
        %v3068 = vmax.f32 %v2876, %v3052
        %v3069 = vmax.f32 %v2877, %v3053
        %v3070 = vmax.f32 %v2878, %v3050
        %v3071 = vmax.f32 %v2879, %v3051
        %v3072 = vmax.f32 %v2880, %v3048
        %v3073 = vmax.f32 %v2881, %v3049
        %v3074 = vmax.f32 %v2882, %v3046
        %v3075 = vmax.f32 %v2883, %v3047
        %v3076 = vmax.f32 %v2884, %v3044
        %v3077 = vmax.f32 %v2885, %v3045
        %v3078 = vmax.f32 %v2886, %v3042
        %v3079 = vmax.f32 %v2887, %v3043
        %v3080 = vmax.f32 %v2888, %v3040
        %v3081 = vmax.f32 %v2889, %v3041
        %v3082 = vmax.f32 %v2890, %v3038
        %v3083 = vmax.f32 %v2891, %v3039
        %v3084 = vmax.f32 %v2892, %v3036
        %v3085 = vmax.f32 %v2893, %v3037
        %v3086 = vmax.f32 %v2894, %v3034
        %v3087 = vmax.f32 %v2895, %v3035
        %v3088 = vmax.f32 %v2896, %v3032
        %v3089 = vmax.f32 %v2897, %v3033
        %v3090 = vmax.f32 %v2898, %v3030
        %v3091 = vmax.f32 %v2899, %v3031
        %v3092 = vmax.f32 %v2900, %v3028
        %v3093 = vmax.f32 %v2901, %v3029
        %v3094 = vmax.f32 %v2902, %v3026
        %v3095 = vmax.f32 %v2903, %v3027
        %v3096 = vmax.f32 %v2904, %v3024
        %v3097 = vmax.f32 %v2905, %v3025
        %v3098 = vmax.f32 %v2906, %v3022
        %v3099 = vmax.f32 %v2907, %v3023
        %v3100 = vmax.f32 %v2908, %v3020
        %v3101 = vmax.f32 %v2909, %v3021
        %v3102 = vmax.f32 %v2910, %v3018
        %v3103 = vmax.f32 %v2911, %v3019
        %v3104 = vmax.f32 %v2912, %v3016
        %v3105 = vmax.f32 %v2913, %v3017
        %v3106 = vmax.f32 %v2914, %v3014
        %v3107 = vmax.f32 %v2915, %v3015
        %v3108 = vmax.f32 %v2916, %v3012
        %v3109 = vmax.f32 %v2917, %v3013
        %v3110 = vmax.f32 %v2918, %v3010
        %v3111 = vmax.f32 %v2919, %v3011
        %v3112 = vmax.f32 %v2920, %v3008
        %v3113 = vmax.f32 %v2921, %v3009
        %v3114 = vmax.f32 %v2922, %v3006
        %v3115 = vmax.f32 %v2923, %v3007
        %v3116 = vmax.f32 %v2924, %v3004
        %v3117 = vmax.f32 %v2925, %v3005
        %v3118 = vmax.f32 %v2926, %v3002
        %v3119 = vmax.f32 %v2927, %v3003
        %v3120 = vmax.f32 %v2928, %v3000
        %v3121 = vmax.f32 %v2929, %v3001
        %v3122 = vmax.f32 %v2930, %v2998
        %v3123 = vmax.f32 %v2931, %v2999
        %v3124 = vmax.f32 %v2932, %v3060
        %v3125 = vmax.f32 %v2933, %v3061
        %vm3126 = vcmask 1047872
        %3127 = vrot.lane.b32.xlu0 %v3062, 40
        %v3128 = vpop.permute.xlu0 %3127
        %3129 = vrot.lane.b32.xlu0 %v3064, 40
        %v3130 = vpop.permute.xlu0 %3129
        %3131 = vrot.lane.b32.xlu0 %v3066, 40
        %v3132 = vpop.permute.xlu0 %3131
        %3133 = vrot.lane.b32.xlu0 %v3068, 40
        %v3134 = vpop.permute.xlu0 %3133
        %3135 = vrot.lane.b32.xlu0 %v3070, 40
        %v3136 = vpop.permute.xlu0 %3135
        %3137 = vrot.lane.b32.xlu0 %v3072, 40
        %v3138 = vpop.permute.xlu0 %3137
        %3139 = vrot.lane.b32.xlu0 %v3074, 40
        %v3140 = vpop.permute.xlu0 %3139
        %3141 = vrot.lane.b32.xlu0 %v3076, 40
        %v3142 = vpop.permute.xlu0 %3141
        %3143 = vrot.lane.b32.xlu0 %v3078, 40
        %v3144 = vpop.permute.xlu0 %3143
        %3145 = vrot.lane.b32.xlu0 %v3080, 40
        %v3146 = vpop.permute.xlu0 %3145
        %3147 = vrot.lane.b32.xlu0 %v3082, 40
        %v3148 = vpop.permute.xlu0 %3147
        %3149 = vrot.lane.b32.xlu0 %v3084, 40
        %v3150 = vpop.permute.xlu0 %3149
        %3151 = vrot.lane.b32.xlu0 %v3086, 40
        %v3152 = vpop.permute.xlu0 %3151
        %3153 = vrot.lane.b32.xlu0 %v3088, 40
        %v3154 = vpop.permute.xlu0 %3153
        %3155 = vrot.lane.b32.xlu0 %v3090, 40
        %v3156 = vpop.permute.xlu0 %3155
        %3157 = vrot.lane.b32.xlu0 %v3092, 40
        %v3158 = vpop.permute.xlu0 %3157
        %3159 = vrot.lane.b32.xlu0 %v3094, 40
        %v3160 = vpop.permute.xlu0 %3159
        %3161 = vrot.lane.b32.xlu0 %v3096, 40
        %v3162 = vpop.permute.xlu0 %3161
        %3163 = vrot.lane.b32.xlu0 %v3098, 40
        %v3164 = vpop.permute.xlu0 %3163
        %3165 = vrot.lane.b32.xlu0 %v3100, 40
        %v3166 = vpop.permute.xlu0 %3165
        %3167 = vrot.lane.b32.xlu0 %v3102, 40
        %v3168 = vpop.permute.xlu0 %3167
        %3169 = vrot.lane.b32.xlu0 %v3104, 40
        %v3170 = vpop.permute.xlu0 %3169
        %3171 = vrot.lane.b32.xlu0 %v3106, 40
        %v3172 = vpop.permute.xlu0 %3171
        %3173 = vrot.lane.b32.xlu0 %v3108, 40
        %v3174 = vpop.permute.xlu0 %3173
        %3175 = vrot.lane.b32.xlu0 %v3110, 40
        %v3176 = vpop.permute.xlu0 %3175
        %3177 = vrot.lane.b32.xlu0 %v3112, 40
        %v3178 = vpop.permute.xlu0 %3177
        %3179 = vrot.lane.b32.xlu0 %v3114, 40
        %v3180 = vpop.permute.xlu0 %3179
        %3181 = vrot.lane.b32.xlu0 %v3116, 40
        %v3182 = vpop.permute.xlu0 %3181
        %3183 = vrot.lane.b32.xlu0 %v3118, 40
        %v3184 = vpop.permute.xlu0 %3183
        %3185 = vrot.lane.b32.xlu0 %v3120, 40
        %v3186 = vpop.permute.xlu0 %3185
        %3187 = vrot.lane.b32.xlu0 %v3122, 40
        %v3188 = vpop.permute.xlu0 %3187
        %3189 = vrot.lane.b32.xlu0 %v3124, 40
        %v3190 = vpop.permute.xlu0 %3189
        %v3191 = vsel %vm3126, %v3128, %v3063
        %v3192 = vsel %vm3126, %v3130, %v3065
        %v3193 = vsel %vm3126, %v3132, %v3067
        %v3194 = vsel %vm3126, %v3134, %v3069
        %v3195 = vsel %vm3126, %v3136, %v3071
        %v3196 = vsel %vm3126, %v3138, %v3073
        %v3197 = vsel %vm3126, %v3140, %v3075
        %v3198 = vsel %vm3126, %v3142, %v3077
        %v3199 = vsel %vm3126, %v3144, %v3079
        %v3200 = vsel %vm3126, %v3146, %v3081
        %v3201 = vsel %vm3126, %v3148, %v3083
        %v3202 = vsel %vm3126, %v3150, %v3085
        %v3203 = vsel %vm3126, %v3152, %v3087
        %v3204 = vsel %vm3126, %v3154, %v3089
        %v3205 = vsel %vm3126, %v3156, %v3091
        %v3206 = vsel %vm3126, %v3158, %v3093
        %v3207 = vsel %vm3126, %v3160, %v3095
        %v3208 = vsel %vm3126, %v3162, %v3097
        %v3209 = vsel %vm3126, %v3164, %v3099
        %v3210 = vsel %vm3126, %v3166, %v3101
        %v3211 = vsel %vm3126, %v3168, %v3103
        %v3212 = vsel %vm3126, %v3170, %v3105
        %v3213 = vsel %vm3126, %v3172, %v3107
        %v3214 = vsel %vm3126, %v3174, %v3109
        %v3215 = vsel %vm3126, %v3176, %v3111
        %v3216 = vsel %vm3126, %v3178, %v3113
        %v3217 = vsel %vm3126, %v3180, %v3115
        %v3218 = vsel %vm3126, %v3182, %v3117
        %v3219 = vsel %vm3126, %v3184, %v3119
        %v3220 = vsel %vm3126, %v3186, %v3121
        %v3221 = vsel %vm3126, %v3188, %v3123
        %v3222 = vsel %vm3126, %v3190, %v3125
        %3287 = vrot.lane.b32.xlu0 %v3062, 127
        %v3288 = vpop.permute.xlu0 %3287
        %3289 = vrot.lane.b32.xlu0 %v3191, 127
        %v3290 = vpop.permute.xlu0 %3289
        %3291 = vrot.lane.b32.xlu0 %v3064, 127
        %v3292 = vpop.permute.xlu0 %3291
        %3293 = vrot.lane.b32.xlu0 %v3192, 127
        %v3294 = vpop.permute.xlu0 %3293
        %3295 = vrot.lane.b32.xlu0 %v3066, 127
        %v3296 = vpop.permute.xlu0 %3295
        %3297 = vrot.lane.b32.xlu0 %v3193, 127
        %v3298 = vpop.permute.xlu0 %3297
        %3299 = vrot.lane.b32.xlu0 %v3068, 127
        %v3300 = vpop.permute.xlu0 %3299
        %3301 = vrot.lane.b32.xlu0 %v3194, 127
        %v3302 = vpop.permute.xlu0 %3301
        %3303 = vrot.lane.b32.xlu0 %v3070, 127
        %v3304 = vpop.permute.xlu0 %3303
        %3305 = vrot.lane.b32.xlu0 %v3195, 127
        %v3306 = vpop.permute.xlu0 %3305
        %3307 = vrot.lane.b32.xlu0 %v3072, 127
        %v3308 = vpop.permute.xlu0 %3307
        %3309 = vrot.lane.b32.xlu0 %v3196, 127
        %v3310 = vpop.permute.xlu0 %3309
        %3311 = vrot.lane.b32.xlu0 %v3074, 127
        %v3312 = vpop.permute.xlu0 %3311
        %3313 = vrot.lane.b32.xlu0 %v3197, 127
        %v3314 = vpop.permute.xlu0 %3313
        %3315 = vrot.lane.b32.xlu0 %v3076, 127
        %v3316 = vpop.permute.xlu0 %3315
        %3317 = vrot.lane.b32.xlu0 %v3198, 127
        %v3318 = vpop.permute.xlu0 %3317
        %3319 = vrot.lane.b32.xlu0 %v3078, 127
        %v3320 = vpop.permute.xlu0 %3319
        %3321 = vrot.lane.b32.xlu0 %v3199, 127
        %v3322 = vpop.permute.xlu0 %3321
        %3323 = vrot.lane.b32.xlu0 %v3080, 127
        %v3324 = vpop.permute.xlu0 %3323
        %3325 = vrot.lane.b32.xlu0 %v3200, 127
        %v3326 = vpop.permute.xlu0 %3325
        %3327 = vrot.lane.b32.xlu0 %v3082, 127
        %v3328 = vpop.permute.xlu0 %3327
        %3329 = vrot.lane.b32.xlu0 %v3201, 127
        %v3330 = vpop.permute.xlu0 %3329
        %3331 = vrot.lane.b32.xlu0 %v3084, 127
        %v3332 = vpop.permute.xlu0 %3331
        %3333 = vrot.lane.b32.xlu0 %v3202, 127
        %v3334 = vpop.permute.xlu0 %3333
        %3335 = vrot.lane.b32.xlu0 %v3086, 127
        %v3336 = vpop.permute.xlu0 %3335
        %3337 = vrot.lane.b32.xlu0 %v3203, 127
        %v3338 = vpop.permute.xlu0 %3337
        %3339 = vrot.lane.b32.xlu0 %v3088, 127
        %v3340 = vpop.permute.xlu0 %3339
        %3341 = vrot.lane.b32.xlu0 %v3204, 127
        %v3342 = vpop.permute.xlu0 %3341
        %3343 = vrot.lane.b32.xlu0 %v3090, 127
        %v3344 = vpop.permute.xlu0 %3343
        %3345 = vrot.lane.b32.xlu0 %v3205, 127
        %v3346 = vpop.permute.xlu0 %3345
        %3347 = vrot.lane.b32.xlu0 %v3092, 127
        %v3348 = vpop.permute.xlu0 %3347
        %3349 = vrot.lane.b32.xlu0 %v3206, 127
        %v3350 = vpop.permute.xlu0 %3349
        %3351 = vrot.lane.b32.xlu0 %v3094, 127
        %v3352 = vpop.permute.xlu0 %3351
        %3353 = vrot.lane.b32.xlu0 %v3207, 127
        %v3354 = vpop.permute.xlu0 %3353
        %3355 = vrot.lane.b32.xlu0 %v3096, 127
        %v3356 = vpop.permute.xlu0 %3355
        %3357 = vrot.lane.b32.xlu0 %v3208, 127
        %v3358 = vpop.permute.xlu0 %3357
        %3359 = vrot.lane.b32.xlu0 %v3098, 127
        %v3360 = vpop.permute.xlu0 %3359
        %3361 = vrot.lane.b32.xlu0 %v3209, 127
        %v3362 = vpop.permute.xlu0 %3361
        %3363 = vrot.lane.b32.xlu0 %v3100, 127
        %v3364 = vpop.permute.xlu0 %3363
        %3365 = vrot.lane.b32.xlu0 %v3210, 127
        %v3366 = vpop.permute.xlu0 %3365
        %3367 = vrot.lane.b32.xlu0 %v3102, 127
        %v3368 = vpop.permute.xlu0 %3367
        %3369 = vrot.lane.b32.xlu0 %v3211, 127
        %v3370 = vpop.permute.xlu0 %3369
        %3371 = vrot.lane.b32.xlu0 %v3104, 127
        %v3372 = vpop.permute.xlu0 %3371
        %3373 = vrot.lane.b32.xlu0 %v3212, 127
        %v3374 = vpop.permute.xlu0 %3373
        %3375 = vrot.lane.b32.xlu0 %v3106, 127
        %v3376 = vpop.permute.xlu0 %3375
        %3377 = vrot.lane.b32.xlu0 %v3213, 127
        %v3378 = vpop.permute.xlu0 %3377
        %3379 = vrot.lane.b32.xlu0 %v3108, 127
        %v3380 = vpop.permute.xlu0 %3379
        %3381 = vrot.lane.b32.xlu0 %v3214, 127
        %v3382 = vpop.permute.xlu0 %3381
        %3383 = vrot.lane.b32.xlu0 %v3110, 127
        %v3384 = vpop.permute.xlu0 %3383
        %3385 = vrot.lane.b32.xlu0 %v3215, 127
        %v3386 = vpop.permute.xlu0 %3385
        %3387 = vrot.lane.b32.xlu0 %v3112, 127
        %v3388 = vpop.permute.xlu0 %3387
        %3389 = vrot.lane.b32.xlu0 %v3216, 127
        %v3390 = vpop.permute.xlu0 %3389
        %3391 = vrot.lane.b32.xlu0 %v3114, 127
        %v3392 = vpop.permute.xlu0 %3391
        %3393 = vrot.lane.b32.xlu0 %v3217, 127
        %v3394 = vpop.permute.xlu0 %3393
        %3395 = vrot.lane.b32.xlu0 %v3116, 127
        %v3396 = vpop.permute.xlu0 %3395
        %3397 = vrot.lane.b32.xlu0 %v3218, 127
        %v3398 = vpop.permute.xlu0 %3397
        %3399 = vrot.lane.b32.xlu0 %v3118, 127
        %v3400 = vpop.permute.xlu0 %3399
        %3401 = vrot.lane.b32.xlu0 %v3219, 127
        %v3402 = vpop.permute.xlu0 %3401
        %3403 = vrot.lane.b32.xlu0 %v3120, 127
        %v3404 = vpop.permute.xlu0 %3403
        %3405 = vrot.lane.b32.xlu0 %v3220, 127
        %v3406 = vpop.permute.xlu0 %3405
        %3407 = vrot.lane.b32.xlu0 %v3122, 127
        %v3408 = vpop.permute.xlu0 %3407
        %3409 = vrot.lane.b32.xlu0 %v3221, 127
        %v3410 = vpop.permute.xlu0 %3409
        %3411 = vrot.lane.b32.xlu0 %v3124, 127
        %v3412 = vpop.permute.xlu0 %3411
        %3413 = vrot.lane.b32.xlu0 %v3222, 127
        %v3414 = vpop.permute.xlu0 %3413
        %vm3415 = vcmask 1039360
        %v3416 = vsel %vm3415, %v3288, %v3290
        %v3417 = vsel %vm3415, %v3292, %v3294
        %v3418 = vsel %vm3415, %v3296, %v3298
        %v3419 = vsel %vm3415, %v3300, %v3302
        %v3420 = vsel %vm3415, %v3304, %v3306
        %v3421 = vsel %vm3415, %v3308, %v3310
        %v3422 = vsel %vm3415, %v3312, %v3314
        %v3423 = vsel %vm3415, %v3316, %v3318
        %v3424 = vsel %vm3415, %v3320, %v3322
        %v3425 = vsel %vm3415, %v3324, %v3326
        %v3426 = vsel %vm3415, %v3328, %v3330
        %v3427 = vsel %vm3415, %v3332, %v3334
        %v3428 = vsel %vm3415, %v3336, %v3338
        %v3429 = vsel %vm3415, %v3340, %v3342
        %v3430 = vsel %vm3415, %v3344, %v3346
        %v3431 = vsel %vm3415, %v3348, %v3350
        %v3432 = vsel %vm3415, %v3352, %v3354
        %v3433 = vsel %vm3415, %v3356, %v3358
        %v3434 = vsel %vm3415, %v3360, %v3362
        %v3435 = vsel %vm3415, %v3364, %v3366
        %v3436 = vsel %vm3415, %v3368, %v3370
        %v3437 = vsel %vm3415, %v3372, %v3374
        %v3438 = vsel %vm3415, %v3376, %v3378
        %v3439 = vsel %vm3415, %v3380, %v3382
        %v3440 = vsel %vm3415, %v3384, %v3386
        %v3441 = vsel %vm3415, %v3388, %v3390
        %v3442 = vsel %vm3415, %v3392, %v3394
        %v3443 = vsel %vm3415, %v3396, %v3398
        %v3444 = vsel %vm3415, %v3400, %v3402
        %v3445 = vsel %vm3415, %v3404, %v3406
        %v3446 = vsel %vm3415, %v3408, %v3410
        %v3447 = vsel %vm3415, %v3412, %v3414
        %v3512 = vmax.f32 %v3062, %v3416
        %v3513 = vmax.f32 %v3063, %v3290
        %v3514 = vmax.f32 %v3064, %v3417
        %v3515 = vmax.f32 %v3065, %v3294
        %v3516 = vmax.f32 %v3066, %v3418
        %v3517 = vmax.f32 %v3067, %v3298
        %v3518 = vmax.f32 %v3068, %v3419
        %v3519 = vmax.f32 %v3069, %v3302
        %v3520 = vmax.f32 %v3070, %v3420
        %v3521 = vmax.f32 %v3071, %v3306
        %v3522 = vmax.f32 %v3072, %v3421
        %v3523 = vmax.f32 %v3073, %v3310
        %v3524 = vmax.f32 %v3074, %v3422
        %v3525 = vmax.f32 %v3075, %v3314
        %v3526 = vmax.f32 %v3076, %v3423
        %v3527 = vmax.f32 %v3077, %v3318
        %v3528 = vmax.f32 %v3078, %v3424
        %v3529 = vmax.f32 %v3079, %v3322
        %v3530 = vmax.f32 %v3080, %v3425
        %v3531 = vmax.f32 %v3081, %v3326
        %v3532 = vmax.f32 %v3082, %v3426
        %v3533 = vmax.f32 %v3083, %v3330
        %v3534 = vmax.f32 %v3084, %v3427
        %v3535 = vmax.f32 %v3085, %v3334
        %v3536 = vmax.f32 %v3086, %v3428
        %v3537 = vmax.f32 %v3087, %v3338
        %v3538 = vmax.f32 %v3088, %v3429
        %v3539 = vmax.f32 %v3089, %v3342
        %v3540 = vmax.f32 %v3090, %v3430
        %v3541 = vmax.f32 %v3091, %v3346
        %v3542 = vmax.f32 %v3092, %v3431
        %v3543 = vmax.f32 %v3093, %v3350
        %v3544 = vmax.f32 %v3094, %v3432
        %v3545 = vmax.f32 %v3095, %v3354
        %v3546 = vmax.f32 %v3096, %v3433
        %v3547 = vmax.f32 %v3097, %v3358
        %v3548 = vmax.f32 %v3098, %v3434
        %v3549 = vmax.f32 %v3099, %v3362
        %v3550 = vmax.f32 %v3100, %v3435
        %v3551 = vmax.f32 %v3101, %v3366
        %v3552 = vmax.f32 %v3102, %v3436
        %v3553 = vmax.f32 %v3103, %v3370
        %v3554 = vmax.f32 %v3104, %v3437
        %v3555 = vmax.f32 %v3105, %v3374
        %v3556 = vmax.f32 %v3106, %v3438
        %v3557 = vmax.f32 %v3107, %v3378
        %v3558 = vmax.f32 %v3108, %v3439
        %v3559 = vmax.f32 %v3109, %v3382
        %v3560 = vmax.f32 %v3110, %v3440
        %v3561 = vmax.f32 %v3111, %v3386
        %v3562 = vmax.f32 %v3112, %v3441
        %v3563 = vmax.f32 %v3113, %v3390
        %v3564 = vmax.f32 %v3114, %v3442
        %v3565 = vmax.f32 %v3115, %v3394
        %v3566 = vmax.f32 %v3116, %v3443
        %v3567 = vmax.f32 %v3117, %v3398
        %v3568 = vmax.f32 %v3118, %v3444
        %v3569 = vmax.f32 %v3119, %v3402
        %v3570 = vmax.f32 %v3120, %v3445
        %v3571 = vmax.f32 %v3121, %v3406
        %v3572 = vmax.f32 %v3122, %v3446
        %v3573 = vmax.f32 %v3123, %v3410
        %v3574 = vmax.f32 %v3124, %v3447
        %v3575 = vmax.f32 %v3125, %v3414
        %v3576 = vld [vmem:[%s2] sm:$0xff]
        %v3577 = vld [vmem:[%s2 + $0x8] sm:$0xff]
        %v3578 = vld [vmem:[%s2 + $0x10] sm:$0xff]
        %v3579 = vld [vmem:[%s2 + $0x18] sm:$0xff]
        %v3580 = vld [vmem:[%s2 + $0x20] sm:$0xff]
        %v3581 = vld [vmem:[%s2 + $0x28] sm:$0xff]
        %v3582 = vld [vmem:[%s2 + $0x30] sm:$0xff]
        %v3583 = vld [vmem:[%s2 + $0x38] sm:$0xff]
        %v3584 = vld [vmem:[%s2 + $0x40] sm:$0xff]
        %v3585 = vld [vmem:[%s2 + $0x48] sm:$0xff]
        %v3586 = vld [vmem:[%s2 + $0x50] sm:$0xff]
        %v3587 = vld [vmem:[%s2 + $0x58] sm:$0xff]
        %v3588 = vld [vmem:[%s2 + $0x60] sm:$0xff]
        %v3589 = vld [vmem:[%s2 + $0x68] sm:$0xff]
        %v3590 = vld [vmem:[%s2 + $0x70] sm:$0xff]
        %v3591 = vld [vmem:[%s2 + $0x78] sm:$0xff]
        %v3592 = vld [vmem:[%s2 + $0x80] sm:$0xff]
        %v3593 = vld [vmem:[%s2 + $0x88] sm:$0xff]
        %v3594 = vld [vmem:[%s2 + $0x90] sm:$0xff]
        %v3595 = vld [vmem:[%s2 + $0x98] sm:$0xff]
        %v3596 = vld [vmem:[%s2 + $0xa0] sm:$0xff]
        %v3597 = vld [vmem:[%s2 + $0xa8] sm:$0xff]
        %v3598 = vld [vmem:[%s2 + $0xb0] sm:$0xff]
        %v3599 = vld [vmem:[%s2 + $0xb8] sm:$0xff]
        %v3600 = vld [vmem:[%s2 + $0xc0] sm:$0xff]
        %v3601 = vld [vmem:[%s2 + $0xc8] sm:$0xff]
        %v3602 = vld [vmem:[%s2 + $0xd0] sm:$0xff]
        %v3603 = vld [vmem:[%s2 + $0xd8] sm:$0xff]
        %v3604 = vld [vmem:[%s2 + $0xe0] sm:$0xff]
        %v3605 = vld [vmem:[%s2 + $0xe8] sm:$0xff]
        %v3606 = vld [vmem:[%s2 + $0xf0] sm:$0xff]
        %v3607 = vld [vmem:[%s2 + $0xf8] sm:$0xff]
        %v3608 = vld [vmem:[%s2 + $0x100] sm:$0xff]
        %v3609 = vld [vmem:[%s2 + $0x108] sm:$0xff]
        %v3610 = vld [vmem:[%s2 + $0x110] sm:$0xff]
        %v3611 = vld [vmem:[%s2 + $0x118] sm:$0xff]
        %v3612 = vld [vmem:[%s2 + $0x120] sm:$0xff]
        %v3613 = vld [vmem:[%s2 + $0x128] sm:$0xff]
        %v3614 = vld [vmem:[%s2 + $0x130] sm:$0xff]
        %v3615 = vld [vmem:[%s2 + $0x138] sm:$0xff]
        %v3616 = vld [vmem:[%s2 + $0x140] sm:$0xff]
        %v3617 = vld [vmem:[%s2 + $0x148] sm:$0xff]
        %v3618 = vrot.slane %v3512, 2
        %v3619 = vrot.slane %v3513, 2
        %v3620 = vrot.slane %v3514, 2
        %v3621 = vrot.slane %v3515, 2
        %v3622 = vrot.slane %v3516, 2
        %v3623 = vrot.slane %v3517, 2
        %v3624 = vrot.slane %v3518, 2
        %v3625 = vrot.slane %v3519, 2
        %v3626 = vrot.slane %v3520, 2
        %v3627 = vrot.slane %v3521, 2
        %v3628 = vrot.slane %v3522, 2
        %v3629 = vrot.slane %v3523, 2
        %v3630 = vrot.slane %v3524, 2
        %v3631 = vrot.slane %v3525, 2
        %v3632 = vrot.slane %v3526, 2
        %v3633 = vrot.slane %v3527, 2
        %v3634 = vrot.slane %v3528, 2
        %v3635 = vrot.slane %v3529, 2
        %v3636 = vrot.slane %v3530, 2
        %v3637 = vrot.slane %v3531, 2
        %v3638 = vrot.slane %v3532, 2
        %v3639 = vrot.slane %v3533, 2
        %v3640 = vrot.slane %v3534, 2
        %v3641 = vrot.slane %v3535, 2
        %v3642 = vrot.slane %v3536, 2
        %v3643 = vrot.slane %v3537, 2
        %v3644 = vrot.slane %v3538, 2
        %v3645 = vrot.slane %v3539, 2
        %v3646 = vrot.slane %v3540, 2
        %v3647 = vrot.slane %v3541, 2
        %v3648 = vrot.slane %v3542, 2
        %v3649 = vrot.slane %v3543, 2
        %v3650 = vrot.slane %v3544, 2
        %v3651 = vrot.slane %v3545, 2
        %v3652 = vrot.slane %v3546, 2
        %v3653 = vrot.slane %v3547, 2
        %v3654 = vrot.slane %v3548, 2
        %v3655 = vrot.slane %v3549, 2
        %v3656 = vrot.slane %v3550, 2
        %v3657 = vrot.slane %v3551, 2
        %v3658 = vrot.slane %v3552, 2
        %v3659 = vrot.slane %v3553, 2
        %v3660 = vrot.slane %v3554, 2
        %v3661 = vrot.slane %v3555, 2
        %v3662 = vrot.slane %v3556, 2
        %v3663 = vrot.slane %v3557, 2
        %v3664 = vrot.slane %v3558, 2
        %v3665 = vrot.slane %v3559, 2
        %v3666 = vrot.slane %v3560, 2
        %v3667 = vrot.slane %v3561, 2
        %v3668 = vrot.slane %v3562, 2
        %v3669 = vrot.slane %v3563, 2
        %v3670 = vrot.slane %v3564, 2
        %v3671 = vrot.slane %v3565, 2
        %v3672 = vrot.slane %v3566, 2
        %v3673 = vrot.slane %v3567, 2
        %v3674 = vrot.slane %v3568, 2
        %v3675 = vrot.slane %v3569, 2
        %v3676 = vrot.slane %v3570, 2
        %v3677 = vrot.slane %v3571, 2
        %v3678 = vrot.slane %v3572, 2
        %v3679 = vrot.slane %v3573, 2
        %v3680 = vrot.slane %v3574, 2
        %v3681 = vrot.slane %v3575, 2
        %v3682 = vsel %vm1161, %v3678, %v3680
        %v3683 = vsel %vm1161, %v3679, %v3681
        %v3684 = vsel %vm1161, %v3676, %v3678
        %v3685 = vsel %vm1161, %v3677, %v3679
        %v3686 = vsel %vm1161, %v3674, %v3676
        %v3687 = vsel %vm1161, %v3675, %v3677
        %v3688 = vsel %vm1161, %v3672, %v3674
        %v3689 = vsel %vm1161, %v3673, %v3675
        %v3690 = vsel %vm1161, %v3670, %v3672
        %v3691 = vsel %vm1161, %v3671, %v3673
        %v3692 = vsel %vm1161, %v3668, %v3670
        %v3693 = vsel %vm1161, %v3669, %v3671
        %v3694 = vsel %vm1161, %v3666, %v3668
        %v3695 = vsel %vm1161, %v3667, %v3669
        %v3696 = vsel %vm1161, %v3664, %v3666
        %v3697 = vsel %vm1161, %v3665, %v3667
        %v3698 = vsel %vm1161, %v3662, %v3664
        %v3699 = vsel %vm1161, %v3663, %v3665
        %v3700 = vsel %vm1161, %v3660, %v3662
        %v3701 = vsel %vm1161, %v3661, %v3663
        %v3702 = vsel %vm1161, %v3658, %v3660
        %v3703 = vsel %vm1161, %v3659, %v3661
        %v3704 = vsel %vm1161, %v3656, %v3658
        %v3705 = vsel %vm1161, %v3657, %v3659
        %v3706 = vsel %vm1161, %v3654, %v3656
        %v3707 = vsel %vm1161, %v3655, %v3657
        %v3708 = vsel %vm1161, %v3652, %v3654
        %v3709 = vsel %vm1161, %v3653, %v3655
        %v3710 = vsel %vm1161, %v3650, %v3652
        %v3711 = vsel %vm1161, %v3651, %v3653
        %v3712 = vsel %vm1161, %v3648, %v3650
        %v3713 = vsel %vm1161, %v3649, %v3651
        %v3714 = vsel %vm1161, %v3646, %v3648
        %v3715 = vsel %vm1161, %v3647, %v3649
        %v3716 = vsel %vm1161, %v3644, %v3646
        %v3717 = vsel %vm1161, %v3645, %v3647
        %v3718 = vsel %vm1161, %v3642, %v3644
        %v3719 = vsel %vm1161, %v3643, %v3645
        %v3720 = vsel %vm1161, %v3640, %v3642
        %v3721 = vsel %vm1161, %v3641, %v3643
        %v3722 = vsel %vm1161, %v3638, %v3640
        %v3723 = vsel %vm1161, %v3639, %v3641
        %v3724 = vsel %vm1161, %v3636, %v3638
        %v3725 = vsel %vm1161, %v3637, %v3639
        %v3726 = vsel %vm1161, %v3634, %v3636
        %v3727 = vsel %vm1161, %v3635, %v3637
        %v3728 = vsel %vm1161, %v3632, %v3634
        %v3729 = vsel %vm1161, %v3633, %v3635
        %v3730 = vsel %vm1161, %v3630, %v3632
        %v3731 = vsel %vm1161, %v3631, %v3633
        %v3732 = vsel %vm1161, %v3628, %v3630
        %v3733 = vsel %vm1161, %v3629, %v3631
        %v3734 = vsel %vm1161, %v3626, %v3628
        %v3735 = vsel %vm1161, %v3627, %v3629
        %v3736 = vsel %vm1161, %v3624, %v3626
        %v3737 = vsel %vm1161, %v3625, %v3627
        %v3738 = vsel %vm1161, %v3622, %v3624
        %v3739 = vsel %vm1161, %v3623, %v3625
        %v3740 = vsel %vm1161, %v3620, %v3622
        %v3741 = vsel %vm1161, %v3621, %v3623
        %v3742 = vsel %vm1161, %v3618, %v3620
        %v3743 = vsel %vm1161, %v3619, %v3621
        %v3744 = vsel %vm1161, %v3680, %v3618
        %v3745 = vsel %vm1161, %v3681, %v3619
        %s3746 = scalar_lea.vmem %s2, 336
        %v3747 = vld [vmem:[%s3746] sm:$0xff]
        %v3748 = vld [vmem:[%s3746 + $0x8] sm:$0xff]
        %v3749 = vld [vmem:[%s3746 + $0x10] sm:$0xff]
        %v3750 = vld [vmem:[%s3746 + $0x18] sm:$0xff]
        %v3751 = vld [vmem:[%s3746 + $0x20] sm:$0xff]
        %v3752 = vld [vmem:[%s3746 + $0x28] sm:$0xff]
        %v3753 = vld [vmem:[%s3746 + $0x30] sm:$0xff]
        %v3754 = vld [vmem:[%s3746 + $0x38] sm:$0xff]
        %v3755 = vld [vmem:[%s3746 + $0x40] sm:$0xff]
        %v3756 = vld [vmem:[%s3746 + $0x48] sm:$0xff]
        %v3757 = vld [vmem:[%s3746 + $0x50] sm:$0xff]
        %v3758 = vld [vmem:[%s3746 + $0x58] sm:$0xff]
        %v3759 = vld [vmem:[%s3746 + $0x60] sm:$0xff]
        %v3760 = vld [vmem:[%s3746 + $0x68] sm:$0xff]
        %v3761 = vld [vmem:[%s3746 + $0x70] sm:$0xff]
        %v3762 = vld [vmem:[%s3746 + $0x78] sm:$0xff]
        %v3763 = vld [vmem:[%s3746 + $0x80] sm:$0xff]
        %v3764 = vld [vmem:[%s3746 + $0x88] sm:$0xff]
        %v3765 = vld [vmem:[%s3746 + $0x90] sm:$0xff]
        %v3766 = vld [vmem:[%s3746 + $0x98] sm:$0xff]
        %v3767 = vld [vmem:[%s3746 + $0xa0] sm:$0xff]
        %v3768 = vld [vmem:[%s3746 + $0xa8] sm:$0xff]
        %v3769 = vld [vmem:[%s3746 + $0xb0] sm:$0xff]
        %v3770 = vld [vmem:[%s3746 + $0xb8] sm:$0xff]
        %v3771 = vld [vmem:[%s3746 + $0xc0] sm:$0xff]
        %v3772 = vld [vmem:[%s3746 + $0xc8] sm:$0xff]
        %v3773 = vld [vmem:[%s3746 + $0xd0] sm:$0xff]
        %v3774 = vld [vmem:[%s3746 + $0xd8] sm:$0xff]
        %v3775 = vld [vmem:[%s3746 + $0xe0] sm:$0xff]
        %v3776 = vld [vmem:[%s3746 + $0xe8] sm:$0xff]
        %v3777 = vld [vmem:[%s3746 + $0xf0] sm:$0xff]
        %v3778 = vld [vmem:[%s3746 + $0xf8] sm:$0xff]
        %v3779 = vld [vmem:[%s3746 + $0x100] sm:$0xff]
        %v3780 = vld [vmem:[%s3746 + $0x108] sm:$0xff]
        %v3781 = vld [vmem:[%s3746 + $0x110] sm:$0xff]
        %v3782 = vld [vmem:[%s3746 + $0x118] sm:$0xff]
        %v3783 = vld [vmem:[%s3746 + $0x120] sm:$0xff]
        %v3784 = vld [vmem:[%s3746 + $0x128] sm:$0xff]
        %v3785 = vld [vmem:[%s3746 + $0x130] sm:$0xff]
        %v3786 = vld [vmem:[%s3746 + $0x138] sm:$0xff]
        %v3787 = vld [vmem:[%s3746 + $0x140] sm:$0xff]
        %v3788 = vld [vmem:[%s3746 + $0x148] sm:$0xff]
        %vm3789 = vcmask 326656
        %v3791 = vsel %vm3789, %v3743, 0
        %v3794 = vsel %vm3789, %v3741, 0
        %v3797 = vsel %vm3789, %v3739, 0
        %v3800 = vsel %vm3789, %v3737, 0
        %v3803 = vsel %vm3789, %v3735, 0
        %v3806 = vsel %vm3789, %v3733, 0
        %v3809 = vsel %vm3789, %v3731, 0
        %v3812 = vsel %vm3789, %v3729, 0
        %v3815 = vsel %vm3789, %v3727, 0
        %v3818 = vsel %vm3789, %v3725, 0
        %v3821 = vsel %vm3789, %v3723, 0
        %v3824 = vsel %vm3789, %v3721, 0
        %v3827 = vsel %vm3789, %v3719, 0
        %v3830 = vsel %vm3789, %v3717, 0
        %v3833 = vsel %vm3789, %v3715, 0
        %v3836 = vsel %vm3789, %v3713, 0
        %v3839 = vsel %vm3789, %v3711, 0
        %v3842 = vsel %vm3789, %v3709, 0
        %v3845 = vsel %vm3789, %v3707, 0
        %v3848 = vsel %vm3789, %v3705, 0
        %v3851 = vsel %vm3789, %v3703, 0
        %v3854 = vsel %vm3789, %v3701, 0
        %v3857 = vsel %vm3789, %v3699, 0
        %v3860 = vsel %vm3789, %v3697, 0
        %v3863 = vsel %vm3789, %v3695, 0
        %v3866 = vsel %vm3789, %v3693, 0
        %v3869 = vsel %vm3789, %v3691, 0
        %v3872 = vsel %vm3789, %v3689, 0
        %v3875 = vsel %vm3789, %v3687, 0
        %v3878 = vsel %vm3789, %v3685, 0
        %v3881 = vsel %vm3789, %v3683, 0
        %v3884 = vsel %vm3789, %v3745, 0
        %3886 = vmatprep.subr.mxu0 %v3748
        %3887 = vmatpush1.msra.mxu0 %v3747
        %3888 = vmatprep.subr.mxu0 %v3750
        %3889 = vmatpush1.msra.mxu0 %v3749
        %3890 = vmatprep.subr.mxu0 %v3752
        %3891 = vmatpush1.msra.mxu0 %v3751
        %3892 = vmatprep.subr.mxu0 %v3754
        %3893 = vmatpush1.msra.mxu0 %v3753
        %3894 = vmatprep.subr.mxu0 %v3756
        %3895 = vmatpush1.msra.mxu0 %v3755
        %3896 = vmatprep.subr.mxu0 %v3758
        %3897 = vmatpush1.msra.mxu0 %v3757
        %3898 = vmatprep.subr.mxu0 %v3760
        %3899 = vmatpush1.msra.mxu0 %v3759
        %3900 = vmatprep.subr.mxu0 %v3762
        %3901 = vmatpush1.msra.mxu0 %v3761
        %3902 = vmatprep.subr.mxu0 %v3764
        %3903 = vmatpush1.msra.mxu0 %v3763
        %3904 = vmatprep.subr.mxu0 %v3766
        %3905 = vmatpush1.msra.mxu0 %v3765
        %3906 = vmatprep.subr.mxu0 %v3768
        %3907 = vmatpush1.msra.mxu0 %v3767
        %3908 = vmatprep.subr.mxu0 %v3770
        %3909 = vmatpush1.msra.mxu0 %v3769
        %3910 = vmatprep.subr.mxu0 %v3772
        %3911 = vmatpush1.msra.mxu0 %v3771
        %3912 = vmatprep.subr.mxu0 %v3774
        %3913 = vmatpush1.msra.mxu0 %v3773
        %3914 = vmatprep.subr.mxu0 %v3776
        %3915 = vmatpush1.msra.mxu0 %v3775
        %3916 = vmatprep.subr.mxu0 %v3778
        %3917 = vmatpush1.msra.mxu0 %v3777
        %3918 = vmatprep.subr.mxu0 %v3780
        %3919 = vmatpush1.msra.mxu0 %v3779
        %3920 = vmatprep.subr.mxu0 %v3782
        %3921 = vmatpush1.msra.mxu0 %v3781
        %3922 = vmatprep.subr.mxu0 %v3784
        %3923 = vmatpush1.msra.mxu0 %v3783
        %3924 = vmatprep.subr.mxu0 %v3786
        %3925 = vmatpush1.msra.mxu0 %v3785
        %3926 = vmatprep.subr.mxu0 %v3788
        %3927 = vmatpush1.msra.mxu0 %v3787
        %3928 = vmatprep.subr.mxu0 0.0
        %3929 = vmatpush1.msra.mxu0 0.0
        %3930 = vmatprep.subr.mxu0 0.0
        %3931 = vmatpush1.msra.mxu0 0.0
        %3932 = vmatprep.subr.mxu0 0.0
        %3933 = vmatpush1.msra.mxu0 0.0
        %3934 = vmatprep.subr.mxu0 0.0
        %3935 = vmatpush1.msra.mxu0 0.0
        %3936 = vmatprep.subr.mxu0 0.0
        %3937 = vmatpush1.msra.mxu0 0.0
        %3938 = vmatprep.subr.mxu0 0.0
        %3939 = vmatpush1.msra.mxu0 0.0
        %3940 = vmatprep.subr.mxu0 0.0
        %3941 = vmatpush1.msra.mxu0 0.0
        %3942 = vmatprep.subr.mxu0 0.0
        %3943 = vmatpush1.msra.mxu0 0.0
        %3944 = vmatprep.subr.mxu0 0.0
        %3945 = vmatpush1.msra.mxu0 0.0
        %3946 = vmatprep.subr.mxu0 0.0
        %3947 = vmatpush1.msra.mxu0 0.0
        %3948 = vmatprep.subr.mxu0 0.0
        %3949 = vmatpush1.msra.mxu0 0.0
        %3950 = vmatprep.mubr.f32.mxu0 %v3791
        %3951 = vmatmul.mubr.f32.gmra.mrb[0].mxu0 %v3742
        %v3952 = vpop.f32.mrb[0].mxu0
        %v3953 = vadd.f32 0.0, %v3952
        %v3954 = vpop.f32.mrb[0].mxu0
        %v3955 = vadd.f32 0.0, %v3954
        %3956 = vmatprep.mubr.f32.mxu0 %v3794
        %3957 = vmatmul.mubr.f32.gmra.mrb[0].mxu0 %v3740
        %v3958 = vpop.f32.mrb[0].mxu0
        %v3959 = vadd.f32 0.0, %v3958
        %v3960 = vpop.f32.mrb[0].mxu0
        %v3961 = vadd.f32 0.0, %v3960
        %3962 = vmatprep.mubr.f32.mxu0 %v3797
        %3963 = vmatmul.mubr.f32.gmra.mrb[0].mxu0 %v3738
        %v3964 = vpop.f32.mrb[0].mxu0
        %v3965 = vadd.f32 0.0, %v3964
        %v3966 = vpop.f32.mrb[0].mxu0
        %v3967 = vadd.f32 0.0, %v3966
        %3968 = vmatprep.mubr.f32.mxu0 %v3800
        %3969 = vmatmul.mubr.f32.gmra.mrb[0].mxu0 %v3736
        %v3970 = vpop.f32.mrb[0].mxu0
        %v3971 = vadd.f32 0.0, %v3970
        %v3972 = vpop.f32.mrb[0].mxu0
        %v3973 = vadd.f32 0.0, %v3972
        %3974 = vmatprep.mubr.f32.mxu0 %v3803
        %3975 = vmatmul.mubr.f32.gmra.mrb[0].mxu0 %v3734
        %v3976 = vpop.f32.mrb[0].mxu0
        %v3977 = vadd.f32 0.0, %v3976
        %v3978 = vpop.f32.mrb[0].mxu0
        %v3979 = vadd.f32 0.0, %v3978
        %3980 = vmatprep.mubr.f32.mxu0 %v3806
        %3981 = vmatmul.mubr.f32.gmra.mrb[0].mxu0 %v3732
        %v3982 = vpop.f32.mrb[0].mxu0
        %v3983 = vadd.f32 0.0, %v3982
        %v3984 = vpop.f32.mrb[0].mxu0
        %v3985 = vadd.f32 0.0, %v3984
        %3986 = vmatprep.mubr.f32.mxu0 %v3809
        %3987 = vmatmul.mubr.f32.gmra.mrb[0].mxu0 %v3730
        %v3988 = vpop.f32.mrb[0].mxu0
        %v3989 = vadd.f32 0.0, %v3988
        %v3990 = vpop.f32.mrb[0].mxu0
        %v3991 = vadd.f32 0.0, %v3990
        %3992 = vmatprep.mubr.f32.mxu0 %v3812
        %3993 = vmatmul.mubr.f32.gmra.mrb[0].mxu0 %v3728
        %v3994 = vpop.f32.mrb[0].mxu0
        %v3995 = vadd.f32 0.0, %v3994
        %v3996 = vpop.f32.mrb[0].mxu0
        %v3997 = vadd.f32 0.0, %v3996
        %3998 = vmatprep.mubr.f32.mxu0 %v3815
        %3999 = vmatmul.mubr.f32.gmra.mrb[0].mxu0 %v3726
        %v4000 = vpop.f32.mrb[0].mxu0
        %v4001 = vadd.f32 0.0, %v4000
        %v4002 = vpop.f32.mrb[0].mxu0
        %v4003 = vadd.f32 0.0, %v4002
        %4004 = vmatprep.mubr.f32.mxu0 %v3818
        %4005 = vmatmul.mubr.f32.gmra.mrb[0].mxu0 %v3724
        %v4006 = vpop.f32.mrb[0].mxu0
        %v4007 = vadd.f32 0.0, %v4006
        %v4008 = vpop.f32.mrb[0].mxu0
        %v4009 = vadd.f32 0.0, %v4008
        %4010 = vmatprep.mubr.f32.mxu0 %v3821
        %4011 = vmatmul.mubr.f32.gmra.mrb[0].mxu0 %v3722
        %v4012 = vpop.f32.mrb[0].mxu0
        %v4013 = vadd.f32 0.0, %v4012
        %v4014 = vpop.f32.mrb[0].mxu0
        %v4015 = vadd.f32 0.0, %v4014
        %4016 = vmatprep.mubr.f32.mxu0 %v3824
        %4017 = vmatmul.mubr.f32.gmra.mrb[0].mxu0 %v3720
        %v4018 = vpop.f32.mrb[0].mxu0
        %v4019 = vadd.f32 0.0, %v4018
        %v4020 = vpop.f32.mrb[0].mxu0
        %v4021 = vadd.f32 0.0, %v4020
        %4022 = vmatprep.mubr.f32.mxu0 %v3827
        %4023 = vmatmul.mubr.f32.gmra.mrb[0].mxu0 %v3718
        %v4024 = vpop.f32.mrb[0].mxu0
        %v4025 = vadd.f32 0.0, %v4024
        %v4026 = vpop.f32.mrb[0].mxu0
        %v4027 = vadd.f32 0.0, %v4026
        %4028 = vmatprep.mubr.f32.mxu0 %v3830
        %4029 = vmatmul.mubr.f32.gmra.mrb[0].mxu0 %v3716
        %v4030 = vpop.f32.mrb[0].mxu0
        %v4031 = vadd.f32 0.0, %v4030
        %v4032 = vpop.f32.mrb[0].mxu0
        %v4033 = vadd.f32 0.0, %v4032
        %4034 = vmatprep.mubr.f32.mxu0 %v3833
        %4035 = vmatmul.mubr.f32.gmra.mrb[0].mxu0 %v3714
        %v4036 = vpop.f32.mrb[0].mxu0
        %v4037 = vadd.f32 0.0, %v4036
        %v4038 = vpop.f32.mrb[0].mxu0
        %v4039 = vadd.f32 0.0, %v4038
        %4040 = vmatprep.mubr.f32.mxu0 %v3836
        %4041 = vmatmul.mubr.f32.gmra.mrb[0].mxu0 %v3712
        %v4042 = vpop.f32.mrb[0].mxu0
        %v4043 = vadd.f32 0.0, %v4042
        %v4044 = vpop.f32.mrb[0].mxu0
        %v4045 = vadd.f32 0.0, %v4044
        %4046 = vmatprep.mubr.f32.mxu0 %v3839
        %4047 = vmatmul.mubr.f32.gmra.mrb[0].mxu0 %v3710
        %v4048 = vpop.f32.mrb[0].mxu0
        %v4049 = vadd.f32 0.0, %v4048
        %v4050 = vpop.f32.mrb[0].mxu0
        %v4051 = vadd.f32 0.0, %v4050
        %4052 = vmatprep.mubr.f32.mxu0 %v3842
        %4053 = vmatmul.mubr.f32.gmra.mrb[0].mxu0 %v3708
        %v4054 = vpop.f32.mrb[0].mxu0
        %v4055 = vadd.f32 0.0, %v4054
        %v4056 = vpop.f32.mrb[0].mxu0
        %v4057 = vadd.f32 0.0, %v4056
        %4058 = vmatprep.mubr.f32.mxu0 %v3845
        %4059 = vmatmul.mubr.f32.gmra.mrb[0].mxu0 %v3706
        %v4060 = vpop.f32.mrb[0].mxu0
        %v4061 = vadd.f32 0.0, %v4060
        %v4062 = vpop.f32.mrb[0].mxu0
        %v4063 = vadd.f32 0.0, %v4062
        %4064 = vmatprep.mubr.f32.mxu0 %v3848
        %4065 = vmatmul.mubr.f32.gmra.mrb[0].mxu0 %v3704
        %v4066 = vpop.f32.mrb[0].mxu0
        %v4067 = vadd.f32 0.0, %v4066
        %v4068 = vpop.f32.mrb[0].mxu0
        %v4069 = vadd.f32 0.0, %v4068
        %4070 = vmatprep.mubr.f32.mxu0 %v3851
        %4071 = vmatmul.mubr.f32.gmra.mrb[0].mxu0 %v3702
        %v4072 = vpop.f32.mrb[0].mxu0
        %v4073 = vadd.f32 0.0, %v4072
        %v4074 = vpop.f32.mrb[0].mxu0
        %v4075 = vadd.f32 0.0, %v4074
        %4076 = vmatprep.mubr.f32.mxu0 %v3854
        %4077 = vmatmul.mubr.f32.gmra.mrb[0].mxu0 %v3700
        %v4078 = vpop.f32.mrb[0].mxu0
        %v4079 = vadd.f32 0.0, %v4078
        %v4080 = vpop.f32.mrb[0].mxu0
        %v4081 = vadd.f32 0.0, %v4080
        %4082 = vmatprep.mubr.f32.mxu0 %v3857
        %4083 = vmatmul.mubr.f32.gmra.mrb[0].mxu0 %v3698
        %v4084 = vpop.f32.mrb[0].mxu0
        %v4085 = vadd.f32 0.0, %v4084
        %v4086 = vpop.f32.mrb[0].mxu0
        %v4087 = vadd.f32 0.0, %v4086
        %4088 = vmatprep.mubr.f32.mxu0 %v3860
        %4089 = vmatmul.mubr.f32.gmra.mrb[0].mxu0 %v3696
        %v4090 = vpop.f32.mrb[0].mxu0
        %v4091 = vadd.f32 0.0, %v4090
        %v4092 = vpop.f32.mrb[0].mxu0
        %v4093 = vadd.f32 0.0, %v4092
        %4094 = vmatprep.mubr.f32.mxu0 %v3863
        %4095 = vmatmul.mubr.f32.gmra.mrb[0].mxu0 %v3694
        %v4096 = vpop.f32.mrb[0].mxu0
        %v4097 = vadd.f32 0.0, %v4096
        %v4098 = vpop.f32.mrb[0].mxu0
        %v4099 = vadd.f32 0.0, %v4098
        %4100 = vmatprep.mubr.f32.mxu0 %v3866
        %4101 = vmatmul.mubr.f32.gmra.mrb[0].mxu0 %v3692
        %v4102 = vpop.f32.mrb[0].mxu0
        %v4103 = vadd.f32 0.0, %v4102
        %v4104 = vpop.f32.mrb[0].mxu0
        %v4105 = vadd.f32 0.0, %v4104
        %4106 = vmatprep.mubr.f32.mxu0 %v3869
        %4107 = vmatmul.mubr.f32.gmra.mrb[0].mxu0 %v3690
        %v4108 = vpop.f32.mrb[0].mxu0
        %v4109 = vadd.f32 0.0, %v4108
        %v4110 = vpop.f32.mrb[0].mxu0
        %v4111 = vadd.f32 0.0, %v4110
        %4112 = vmatprep.mubr.f32.mxu0 %v3872
        %4113 = vmatmul.mubr.f32.gmra.mrb[0].mxu0 %v3688
        %v4114 = vpop.f32.mrb[0].mxu0
        %v4115 = vadd.f32 0.0, %v4114
        %v4116 = vpop.f32.mrb[0].mxu0
        %v4117 = vadd.f32 0.0, %v4116
        %4118 = vmatprep.mubr.f32.mxu0 %v3875
        %4119 = vmatmul.mubr.f32.gmra.mrb[0].mxu0 %v3686
        %v4120 = vpop.f32.mrb[0].mxu0
        %v4121 = vadd.f32 0.0, %v4120
        %v4122 = vpop.f32.mrb[0].mxu0
        %v4123 = vadd.f32 0.0, %v4122
        %4124 = vmatprep.mubr.f32.mxu0 %v3878
        %4125 = vmatmul.mubr.f32.gmra.mrb[0].mxu0 %v3684
        %v4126 = vpop.f32.mrb[0].mxu0
        %v4127 = vadd.f32 0.0, %v4126
        %v4128 = vpop.f32.mrb[0].mxu0
        %v4129 = vadd.f32 0.0, %v4128
        %4130 = vmatprep.mubr.f32.mxu0 %v3881
        %4131 = vmatmul.mubr.f32.gmra.mrb[0].mxu0 %v3682
        %v4132 = vpop.f32.mrb[0].mxu0
        %v4133 = vadd.f32 0.0, %v4132
        %v4134 = vpop.f32.mrb[0].mxu0
        %v4135 = vadd.f32 0.0, %v4134
        %4136 = vmatprep.mubr.f32.mxu0 %v3884
        %4137 = vmatmul.mubr.f32.gmra.mrb[0].mxu0 %v3744
        %v4138 = vpop.f32.mrb[0].mxu0
        %v4139 = vadd.f32 0.0, %v4138
        %v4140 = vpop.f32.mrb[0].mxu0
        %v4141 = vadd.f32 0.0, %v4140
        %4142 = vdwg.mxu0
        %v4144 = vsel %vm3789, %v3513, 0
        %v4147 = vsel %vm3789, %v3515, 0
        %v4150 = vsel %vm3789, %v3517, 0
        %v4153 = vsel %vm3789, %v3519, 0
        %v4156 = vsel %vm3789, %v3521, 0
        %v4159 = vsel %vm3789, %v3523, 0
        %v4162 = vsel %vm3789, %v3525, 0
        %v4165 = vsel %vm3789, %v3527, 0
        %v4168 = vsel %vm3789, %v3529, 0
        %v4171 = vsel %vm3789, %v3531, 0
        %v4174 = vsel %vm3789, %v3533, 0
        %v4177 = vsel %vm3789, %v3535, 0
        %v4180 = vsel %vm3789, %v3537, 0
        %v4183 = vsel %vm3789, %v3539, 0
        %v4186 = vsel %vm3789, %v3541, 0
        %v4189 = vsel %vm3789, %v3543, 0
        %v4192 = vsel %vm3789, %v3545, 0
        %v4195 = vsel %vm3789, %v3547, 0
        %v4198 = vsel %vm3789, %v3549, 0
        %v4201 = vsel %vm3789, %v3551, 0
        %v4204 = vsel %vm3789, %v3553, 0
        %v4207 = vsel %vm3789, %v3555, 0
        %v4210 = vsel %vm3789, %v3557, 0
        %v4213 = vsel %vm3789, %v3559, 0
        %v4216 = vsel %vm3789, %v3561, 0
        %v4219 = vsel %vm3789, %v3563, 0
        %v4222 = vsel %vm3789, %v3565, 0
        %v4225 = vsel %vm3789, %v3567, 0
        %v4228 = vsel %vm3789, %v3569, 0
        %v4231 = vsel %vm3789, %v3571, 0
        %v4234 = vsel %vm3789, %v3573, 0
        %v4237 = vsel %vm3789, %v3575, 0
        %4239 = vmatprep.subr.mxu0 %v3577
        %4240 = vmatpush1.msra.mxu0 %v3576
        %4241 = vmatprep.subr.mxu0 %v3579
        %4242 = vmatpush1.msra.mxu0 %v3578
        %4243 = vmatprep.subr.mxu0 %v3581
        %4244 = vmatpush1.msra.mxu0 %v3580
        %4245 = vmatprep.subr.mxu0 %v3583
        %4246 = vmatpush1.msra.mxu0 %v3582
        %4247 = vmatprep.subr.mxu0 %v3585
        %4248 = vmatpush1.msra.mxu0 %v3584
        %4249 = vmatprep.subr.mxu0 %v3587
        %4250 = vmatpush1.msra.mxu0 %v3586
        %4251 = vmatprep.subr.mxu0 %v3589
        %4252 = vmatpush1.msra.mxu0 %v3588
        %4253 = vmatprep.subr.mxu0 %v3591
        %4254 = vmatpush1.msra.mxu0 %v3590
        %4255 = vmatprep.subr.mxu0 %v3593
        %4256 = vmatpush1.msra.mxu0 %v3592
        %4257 = vmatprep.subr.mxu0 %v3595
        %4258 = vmatpush1.msra.mxu0 %v3594
        %4259 = vmatprep.subr.mxu0 %v3597
        %4260 = vmatpush1.msra.mxu0 %v3596
        %4261 = vmatprep.subr.mxu0 %v3599
        %4262 = vmatpush1.msra.mxu0 %v3598
        %4263 = vmatprep.subr.mxu0 %v3601
        %4264 = vmatpush1.msra.mxu0 %v3600
        %4265 = vmatprep.subr.mxu0 %v3603
        %4266 = vmatpush1.msra.mxu0 %v3602
        %4267 = vmatprep.subr.mxu0 %v3605
        %4268 = vmatpush1.msra.mxu0 %v3604
        %4269 = vmatprep.subr.mxu0 %v3607
        %4270 = vmatpush1.msra.mxu0 %v3606
        %4271 = vmatprep.subr.mxu0 %v3609
        %4272 = vmatpush1.msra.mxu0 %v3608
        %4273 = vmatprep.subr.mxu0 %v3611
        %4274 = vmatpush1.msra.mxu0 %v3610
        %4275 = vmatprep.subr.mxu0 %v3613
        %4276 = vmatpush1.msra.mxu0 %v3612
        %4277 = vmatprep.subr.mxu0 %v3615
        %4278 = vmatpush1.msra.mxu0 %v3614
        %4279 = vmatprep.subr.mxu0 %v3617
        %4280 = vmatpush1.msra.mxu0 %v3616
        %4281 = vmatprep.subr.mxu0 0.0
        %4282 = vmatpush1.msra.mxu0 0.0
        %4283 = vmatprep.subr.mxu0 0.0
        %4284 = vmatpush1.msra.mxu0 0.0
        %4285 = vmatprep.subr.mxu0 0.0
        %4286 = vmatpush1.msra.mxu0 0.0
        %4287 = vmatprep.subr.mxu0 0.0
        %4288 = vmatpush1.msra.mxu0 0.0
        %4289 = vmatprep.subr.mxu0 0.0
        %4290 = vmatpush1.msra.mxu0 0.0
        %4291 = vmatprep.subr.mxu0 0.0
        %4292 = vmatpush1.msra.mxu0 0.0
        %4293 = vmatprep.subr.mxu0 0.0
        %4294 = vmatpush1.msra.mxu0 0.0
        %4295 = vmatprep.subr.mxu0 0.0
        %4296 = vmatpush1.msra.mxu0 0.0
        %4297 = vmatprep.subr.mxu0 0.0
        %4298 = vmatpush1.msra.mxu0 0.0
        %4299 = vmatprep.subr.mxu0 0.0
        %4300 = vmatpush1.msra.mxu0 0.0
        %4301 = vmatprep.subr.mxu0 0.0
        %4302 = vmatpush1.msra.mxu0 0.0
        %4303 = vmatprep.mubr.f32.mxu0 %v4144
        %4304 = vmatmul.mubr.f32.gmra.mrb[0].mxu0 %v3512
        %v4305 = vpop.f32.mrb[0].mxu0
        %v4306 = vadd.f32 %v3953, %v4305
        %v4307 = vpop.f32.mrb[0].mxu0
        %v4308 = vadd.f32 %v3955, %v4307
        %4309 = vmatprep.mubr.f32.mxu0 %v4147
        %4310 = vmatmul.mubr.f32.gmra.mrb[0].mxu0 %v3514
        %v4311 = vpop.f32.mrb[0].mxu0
        %v4312 = vadd.f32 %v3959, %v4311
        %v4313 = vpop.f32.mrb[0].mxu0
        %v4314 = vadd.f32 %v3961, %v4313
        %4315 = vmatprep.mubr.f32.mxu0 %v4150
        %4316 = vmatmul.mubr.f32.gmra.mrb[0].mxu0 %v3516
        %v4317 = vpop.f32.mrb[0].mxu0
        %v4318 = vadd.f32 %v3965, %v4317
        %v4319 = vpop.f32.mrb[0].mxu0
        %v4320 = vadd.f32 %v3967, %v4319
        %4321 = vmatprep.mubr.f32.mxu0 %v4153
        %4322 = vmatmul.mubr.f32.gmra.mrb[0].mxu0 %v3518
        %v4323 = vpop.f32.mrb[0].mxu0
        %v4324 = vadd.f32 %v3971, %v4323
        %v4325 = vpop.f32.mrb[0].mxu0
        %v4326 = vadd.f32 %v3973, %v4325
        %4327 = vmatprep.mubr.f32.mxu0 %v4156
        %4328 = vmatmul.mubr.f32.gmra.mrb[0].mxu0 %v3520
        %v4329 = vpop.f32.mrb[0].mxu0
        %v4330 = vadd.f32 %v3977, %v4329
        %v4331 = vpop.f32.mrb[0].mxu0
        %v4332 = vadd.f32 %v3979, %v4331
        %4333 = vmatprep.mubr.f32.mxu0 %v4159
        %4334 = vmatmul.mubr.f32.gmra.mrb[0].mxu0 %v3522
        %v4335 = vpop.f32.mrb[0].mxu0
        %v4336 = vadd.f32 %v3983, %v4335
        %v4337 = vpop.f32.mrb[0].mxu0
        %v4338 = vadd.f32 %v3985, %v4337
        %4339 = vmatprep.mubr.f32.mxu0 %v4162
        %4340 = vmatmul.mubr.f32.gmra.mrb[0].mxu0 %v3524
        %v4341 = vpop.f32.mrb[0].mxu0
        %v4342 = vadd.f32 %v3989, %v4341
        %v4343 = vpop.f32.mrb[0].mxu0
        %v4344 = vadd.f32 %v3991, %v4343
        %4345 = vmatprep.mubr.f32.mxu0 %v4165
        %4346 = vmatmul.mubr.f32.gmra.mrb[0].mxu0 %v3526
        %v4347 = vpop.f32.mrb[0].mxu0
        %v4348 = vadd.f32 %v3995, %v4347
        %v4349 = vpop.f32.mrb[0].mxu0
        %v4350 = vadd.f32 %v3997, %v4349
        %4351 = vmatprep.mubr.f32.mxu0 %v4168
        %4352 = vmatmul.mubr.f32.gmra.mrb[0].mxu0 %v3528
        %v4353 = vpop.f32.mrb[0].mxu0
        %v4354 = vadd.f32 %v4001, %v4353
        %v4355 = vpop.f32.mrb[0].mxu0
        %v4356 = vadd.f32 %v4003, %v4355
        %4357 = vmatprep.mubr.f32.mxu0 %v4171
        %4358 = vmatmul.mubr.f32.gmra.mrb[0].mxu0 %v3530
        %v4359 = vpop.f32.mrb[0].mxu0
        %v4360 = vadd.f32 %v4007, %v4359
        %v4361 = vpop.f32.mrb[0].mxu0
        %v4362 = vadd.f32 %v4009, %v4361
        %4363 = vmatprep.mubr.f32.mxu0 %v4174
        %4364 = vmatmul.mubr.f32.gmra.mrb[0].mxu0 %v3532
        %v4365 = vpop.f32.mrb[0].mxu0
        %v4366 = vadd.f32 %v4013, %v4365
        %v4367 = vpop.f32.mrb[0].mxu0
        %v4368 = vadd.f32 %v4015, %v4367
        %4369 = vmatprep.mubr.f32.mxu0 %v4177
        %4370 = vmatmul.mubr.f32.gmra.mrb[0].mxu0 %v3534
        %v4371 = vpop.f32.mrb[0].mxu0
        %v4372 = vadd.f32 %v4019, %v4371
        %v4373 = vpop.f32.mrb[0].mxu0
        %v4374 = vadd.f32 %v4021, %v4373
        %4375 = vmatprep.mubr.f32.mxu0 %v4180
        %4376 = vmatmul.mubr.f32.gmra.mrb[0].mxu0 %v3536
        %v4377 = vpop.f32.mrb[0].mxu0
        %v4378 = vadd.f32 %v4025, %v4377
        %v4379 = vpop.f32.mrb[0].mxu0
        %v4380 = vadd.f32 %v4027, %v4379
        %4381 = vmatprep.mubr.f32.mxu0 %v4183
        %4382 = vmatmul.mubr.f32.gmra.mrb[0].mxu0 %v3538
        %v4383 = vpop.f32.mrb[0].mxu0
        %v4384 = vadd.f32 %v4031, %v4383
        %v4385 = vpop.f32.mrb[0].mxu0
        %v4386 = vadd.f32 %v4033, %v4385
        %4387 = vmatprep.mubr.f32.mxu0 %v4186
        %4388 = vmatmul.mubr.f32.gmra.mrb[0].mxu0 %v3540
        %v4389 = vpop.f32.mrb[0].mxu0
        %v4390 = vadd.f32 %v4037, %v4389
        %v4391 = vpop.f32.mrb[0].mxu0
        %v4392 = vadd.f32 %v4039, %v4391
        %4393 = vmatprep.mubr.f32.mxu0 %v4189
        %4394 = vmatmul.mubr.f32.gmra.mrb[0].mxu0 %v3542
        %v4395 = vpop.f32.mrb[0].mxu0
        %v4396 = vadd.f32 %v4043, %v4395
        %v4397 = vpop.f32.mrb[0].mxu0
        %v4398 = vadd.f32 %v4045, %v4397
        %4399 = vmatprep.mubr.f32.mxu0 %v4192
        %4400 = vmatmul.mubr.f32.gmra.mrb[0].mxu0 %v3544
        %v4401 = vpop.f32.mrb[0].mxu0
        %v4402 = vadd.f32 %v4049, %v4401
        %v4403 = vpop.f32.mrb[0].mxu0
        %v4404 = vadd.f32 %v4051, %v4403
        %4405 = vmatprep.mubr.f32.mxu0 %v4195
        %4406 = vmatmul.mubr.f32.gmra.mrb[0].mxu0 %v3546
        %v4407 = vpop.f32.mrb[0].mxu0
        %v4408 = vadd.f32 %v4055, %v4407
        %v4409 = vpop.f32.mrb[0].mxu0
        %v4410 = vadd.f32 %v4057, %v4409
        %4411 = vmatprep.mubr.f32.mxu0 %v4198
        %4412 = vmatmul.mubr.f32.gmra.mrb[0].mxu0 %v3548
        %v4413 = vpop.f32.mrb[0].mxu0
        %v4414 = vadd.f32 %v4061, %v4413
        %v4415 = vpop.f32.mrb[0].mxu0
        %v4416 = vadd.f32 %v4063, %v4415
        %4417 = vmatprep.mubr.f32.mxu0 %v4201
        %4418 = vmatmul.mubr.f32.gmra.mrb[0].mxu0 %v3550
        %v4419 = vpop.f32.mrb[0].mxu0
        %v4420 = vadd.f32 %v4067, %v4419
        %v4421 = vpop.f32.mrb[0].mxu0
        %v4422 = vadd.f32 %v4069, %v4421
        %4423 = vmatprep.mubr.f32.mxu0 %v4204
        %4424 = vmatmul.mubr.f32.gmra.mrb[0].mxu0 %v3552
        %v4425 = vpop.f32.mrb[0].mxu0
        %v4426 = vadd.f32 %v4073, %v4425
        %v4427 = vpop.f32.mrb[0].mxu0
        %v4428 = vadd.f32 %v4075, %v4427
        %4429 = vmatprep.mubr.f32.mxu0 %v4207
        %4430 = vmatmul.mubr.f32.gmra.mrb[0].mxu0 %v3554
        %v4431 = vpop.f32.mrb[0].mxu0
        %v4432 = vadd.f32 %v4079, %v4431
        %v4433 = vpop.f32.mrb[0].mxu0
        %v4434 = vadd.f32 %v4081, %v4433
        %4435 = vmatprep.mubr.f32.mxu0 %v4210
        %4436 = vmatmul.mubr.f32.gmra.mrb[0].mxu0 %v3556
        %v4437 = vpop.f32.mrb[0].mxu0
        %v4438 = vadd.f32 %v4085, %v4437
        %v4439 = vpop.f32.mrb[0].mxu0
        %v4440 = vadd.f32 %v4087, %v4439
        %4441 = vmatprep.mubr.f32.mxu0 %v4213
        %4442 = vmatmul.mubr.f32.gmra.mrb[0].mxu0 %v3558
        %v4443 = vpop.f32.mrb[0].mxu0
        %v4444 = vadd.f32 %v4091, %v4443
        %v4445 = vpop.f32.mrb[0].mxu0
        %v4446 = vadd.f32 %v4093, %v4445
        %4447 = vmatprep.mubr.f32.mxu0 %v4216
        %4448 = vmatmul.mubr.f32.gmra.mrb[0].mxu0 %v3560
        %v4449 = vpop.f32.mrb[0].mxu0
        %v4450 = vadd.f32 %v4097, %v4449
        %v4451 = vpop.f32.mrb[0].mxu0
        %v4452 = vadd.f32 %v4099, %v4451
        %4453 = vmatprep.mubr.f32.mxu0 %v4219
        %4454 = vmatmul.mubr.f32.gmra.mrb[0].mxu0 %v3562
        %v4455 = vpop.f32.mrb[0].mxu0
        %v4456 = vadd.f32 %v4103, %v4455
        %v4457 = vpop.f32.mrb[0].mxu0
        %v4458 = vadd.f32 %v4105, %v4457
        %4459 = vmatprep.mubr.f32.mxu0 %v4222
        %4460 = vmatmul.mubr.f32.gmra.mrb[0].mxu0 %v3564
        %v4461 = vpop.f32.mrb[0].mxu0
        %v4462 = vadd.f32 %v4109, %v4461
        %v4463 = vpop.f32.mrb[0].mxu0
        %v4464 = vadd.f32 %v4111, %v4463
        %4465 = vmatprep.mubr.f32.mxu0 %v4225
        %4466 = vmatmul.mubr.f32.gmra.mrb[0].mxu0 %v3566
        %v4467 = vpop.f32.mrb[0].mxu0
        %v4468 = vadd.f32 %v4115, %v4467
        %v4469 = vpop.f32.mrb[0].mxu0
        %v4470 = vadd.f32 %v4117, %v4469
        %4471 = vmatprep.mubr.f32.mxu0 %v4228
        %4472 = vmatmul.mubr.f32.gmra.mrb[0].mxu0 %v3568
        %v4473 = vpop.f32.mrb[0].mxu0
        %v4474 = vadd.f32 %v4121, %v4473
        %v4475 = vpop.f32.mrb[0].mxu0
        %v4476 = vadd.f32 %v4123, %v4475
        %4477 = vmatprep.mubr.f32.mxu0 %v4231
        %4478 = vmatmul.mubr.f32.gmra.mrb[0].mxu0 %v3570
        %v4479 = vpop.f32.mrb[0].mxu0
        %v4480 = vadd.f32 %v4127, %v4479
        %v4481 = vpop.f32.mrb[0].mxu0
        %v4482 = vadd.f32 %v4129, %v4481
        %4483 = vmatprep.mubr.f32.mxu0 %v4234
        %4484 = vmatmul.mubr.f32.gmra.mrb[0].mxu0 %v3572
        %v4485 = vpop.f32.mrb[0].mxu0
        %v4486 = vadd.f32 %v4133, %v4485
        %v4487 = vpop.f32.mrb[0].mxu0
        %v4488 = vadd.f32 %v4135, %v4487
        %4489 = vmatprep.mubr.f32.mxu0 %v4237
        %4490 = vmatmul.mubr.f32.gmra.mrb[0].mxu0 %v3574
        %v4491 = vpop.f32.mrb[0].mxu0
        %v4492 = vadd.f32 %v4139, %v4491
        %v4493 = vpop.f32.mrb[0].mxu0
        %v4494 = vadd.f32 %v4141, %v4493
        %4495 = vdwg.mxu0
        %v4496 = vrot.slane %v3512, 4
        %v4497 = vrot.slane %v3513, 4
        %v4498 = vrot.slane %v3514, 4
        %v4499 = vrot.slane %v3515, 4
        %v4500 = vrot.slane %v3516, 4
        %v4501 = vrot.slane %v3517, 4
        %v4502 = vrot.slane %v3518, 4
        %v4503 = vrot.slane %v3519, 4
        %v4504 = vrot.slane %v3520, 4
        %v4505 = vrot.slane %v3521, 4
        %v4506 = vrot.slane %v3522, 4
        %v4507 = vrot.slane %v3523, 4
        %v4508 = vrot.slane %v3524, 4
        %v4509 = vrot.slane %v3525, 4
        %v4510 = vrot.slane %v3526, 4
        %v4511 = vrot.slane %v3527, 4
        %v4512 = vrot.slane %v3528, 4
        %v4513 = vrot.slane %v3529, 4
        %v4514 = vrot.slane %v3530, 4
        %v4515 = vrot.slane %v3531, 4
        %v4516 = vrot.slane %v3532, 4
        %v4517 = vrot.slane %v3533, 4
        %v4518 = vrot.slane %v3534, 4
        %v4519 = vrot.slane %v3535, 4
        %v4520 = vrot.slane %v3536, 4
        %v4521 = vrot.slane %v3537, 4
        %v4522 = vrot.slane %v3538, 4
        %v4523 = vrot.slane %v3539, 4
        %v4524 = vrot.slane %v3540, 4
        %v4525 = vrot.slane %v3541, 4
        %v4526 = vrot.slane %v3542, 4
        %v4527 = vrot.slane %v3543, 4
        %v4528 = vrot.slane %v3544, 4
        %v4529 = vrot.slane %v3545, 4
        %v4530 = vrot.slane %v3546, 4
        %v4531 = vrot.slane %v3547, 4
        %v4532 = vrot.slane %v3548, 4
        %v4533 = vrot.slane %v3549, 4
        %v4534 = vrot.slane %v3550, 4
        %v4535 = vrot.slane %v3551, 4
        %v4536 = vrot.slane %v3552, 4
        %v4537 = vrot.slane %v3553, 4
        %v4538 = vrot.slane %v3554, 4
        %v4539 = vrot.slane %v3555, 4
        %v4540 = vrot.slane %v3556, 4
        %v4541 = vrot.slane %v3557, 4
        %v4542 = vrot.slane %v3558, 4
        %v4543 = vrot.slane %v3559, 4
        %v4544 = vrot.slane %v3560, 4
        %v4545 = vrot.slane %v3561, 4
        %v4546 = vrot.slane %v3562, 4
        %v4547 = vrot.slane %v3563, 4
        %v4548 = vrot.slane %v3564, 4
        %v4549 = vrot.slane %v3565, 4
        %v4550 = vrot.slane %v3566, 4
        %v4551 = vrot.slane %v3567, 4
        %v4552 = vrot.slane %v3568, 4
        %v4553 = vrot.slane %v3569, 4
        %v4554 = vrot.slane %v3570, 4
        %v4555 = vrot.slane %v3571, 4
        %v4556 = vrot.slane %v3572, 4
        %v4557 = vrot.slane %v3573, 4
        %v4558 = vrot.slane %v3574, 4
        %v4559 = vrot.slane %v3575, 4
        %v4560 = vsel %vm2143, %v4556, %v4558
        %v4561 = vsel %vm2143, %v4557, %v4559
        %v4562 = vsel %vm2143, %v4554, %v4556
        %v4563 = vsel %vm2143, %v4555, %v4557
        %v4564 = vsel %vm2143, %v4552, %v4554
        %v4565 = vsel %vm2143, %v4553, %v4555
        %v4566 = vsel %vm2143, %v4550, %v4552
        %v4567 = vsel %vm2143, %v4551, %v4553
        %v4568 = vsel %vm2143, %v4548, %v4550
        %v4569 = vsel %vm2143, %v4549, %v4551
        %v4570 = vsel %vm2143, %v4546, %v4548
        %v4571 = vsel %vm2143, %v4547, %v4549
        %v4572 = vsel %vm2143, %v4544, %v4546
        %v4573 = vsel %vm2143, %v4545, %v4547
        %v4574 = vsel %vm2143, %v4542, %v4544
        %v4575 = vsel %vm2143, %v4543, %v4545
        %v4576 = vsel %vm2143, %v4540, %v4542
        %v4577 = vsel %vm2143, %v4541, %v4543
        %v4578 = vsel %vm2143, %v4538, %v4540
        %v4579 = vsel %vm2143, %v4539, %v4541
        %v4580 = vsel %vm2143, %v4536, %v4538
        %v4581 = vsel %vm2143, %v4537, %v4539
        %v4582 = vsel %vm2143, %v4534, %v4536
        %v4583 = vsel %vm2143, %v4535, %v4537
        %v4584 = vsel %vm2143, %v4532, %v4534
        %v4585 = vsel %vm2143, %v4533, %v4535
        %v4586 = vsel %vm2143, %v4530, %v4532
        %v4587 = vsel %vm2143, %v4531, %v4533
        %v4588 = vsel %vm2143, %v4528, %v4530
        %v4589 = vsel %vm2143, %v4529, %v4531
        %v4590 = vsel %vm2143, %v4526, %v4528
        %v4591 = vsel %vm2143, %v4527, %v4529
        %v4592 = vsel %vm2143, %v4524, %v4526
        %v4593 = vsel %vm2143, %v4525, %v4527
        %v4594 = vsel %vm2143, %v4522, %v4524
        %v4595 = vsel %vm2143, %v4523, %v4525
        %v4596 = vsel %vm2143, %v4520, %v4522
        %v4597 = vsel %vm2143, %v4521, %v4523
        %v4598 = vsel %vm2143, %v4518, %v4520
        %v4599 = vsel %vm2143, %v4519, %v4521
        %v4600 = vsel %vm2143, %v4516, %v4518
        %v4601 = vsel %vm2143, %v4517, %v4519
        %v4602 = vsel %vm2143, %v4514, %v4516
        %v4603 = vsel %vm2143, %v4515, %v4517
        %v4604 = vsel %vm2143, %v4512, %v4514
        %v4605 = vsel %vm2143, %v4513, %v4515
        %v4606 = vsel %vm2143, %v4510, %v4512
        %v4607 = vsel %vm2143, %v4511, %v4513
        %v4608 = vsel %vm2143, %v4508, %v4510
        %v4609 = vsel %vm2143, %v4509, %v4511
        %v4610 = vsel %vm2143, %v4506, %v4508
        %v4611 = vsel %vm2143, %v4507, %v4509
        %v4612 = vsel %vm2143, %v4504, %v4506
        %v4613 = vsel %vm2143, %v4505, %v4507
        %v4614 = vsel %vm2143, %v4502, %v4504
        %v4615 = vsel %vm2143, %v4503, %v4505
        %v4616 = vsel %vm2143, %v4500, %v4502
        %v4617 = vsel %vm2143, %v4501, %v4503
        %v4618 = vsel %vm2143, %v4498, %v4500
        %v4619 = vsel %vm2143, %v4499, %v4501
        %v4620 = vsel %vm2143, %v4496, %v4498
        %v4621 = vsel %vm2143, %v4497, %v4499
        %v4622 = vsel %vm2143, %v4558, %v4496
        %v4623 = vsel %vm2143, %v4559, %v4497
        %s4624 = scalar_lea.vmem %s2, 672
        %v4625 = vld [vmem:[%s4624] sm:$0xff]
        %v4626 = vld [vmem:[%s4624 + $0x8] sm:$0xff]
        %v4627 = vld [vmem:[%s4624 + $0x10] sm:$0xff]
        %v4628 = vld [vmem:[%s4624 + $0x18] sm:$0xff]
        %v4629 = vld [vmem:[%s4624 + $0x20] sm:$0xff]
        %v4630 = vld [vmem:[%s4624 + $0x28] sm:$0xff]
        %v4631 = vld [vmem:[%s4624 + $0x30] sm:$0xff]
        %v4632 = vld [vmem:[%s4624 + $0x38] sm:$0xff]
        %v4633 = vld [vmem:[%s4624 + $0x40] sm:$0xff]
        %v4634 = vld [vmem:[%s4624 + $0x48] sm:$0xff]
        %v4635 = vld [vmem:[%s4624 + $0x50] sm:$0xff]
        %v4636 = vld [vmem:[%s4624 + $0x58] sm:$0xff]
        %v4637 = vld [vmem:[%s4624 + $0x60] sm:$0xff]
        %v4638 = vld [vmem:[%s4624 + $0x68] sm:$0xff]
        %v4639 = vld [vmem:[%s4624 + $0x70] sm:$0xff]
        %v4640 = vld [vmem:[%s4624 + $0x78] sm:$0xff]
        %v4641 = vld [vmem:[%s4624 + $0x80] sm:$0xff]
        %v4642 = vld [vmem:[%s4624 + $0x88] sm:$0xff]
        %v4643 = vld [vmem:[%s4624 + $0x90] sm:$0xff]
        %v4644 = vld [vmem:[%s4624 + $0x98] sm:$0xff]
        %v4645 = vld [vmem:[%s4624 + $0xa0] sm:$0xff]
        %v4646 = vld [vmem:[%s4624 + $0xa8] sm:$0xff]
        %v4647 = vld [vmem:[%s4624 + $0xb0] sm:$0xff]
        %v4648 = vld [vmem:[%s4624 + $0xb8] sm:$0xff]
        %v4649 = vld [vmem:[%s4624 + $0xc0] sm:$0xff]
        %v4650 = vld [vmem:[%s4624 + $0xc8] sm:$0xff]
        %v4651 = vld [vmem:[%s4624 + $0xd0] sm:$0xff]
        %v4652 = vld [vmem:[%s4624 + $0xd8] sm:$0xff]
        %v4653 = vld [vmem:[%s4624 + $0xe0] sm:$0xff]
        %v4654 = vld [vmem:[%s4624 + $0xe8] sm:$0xff]
        %v4655 = vld [vmem:[%s4624 + $0xf0] sm:$0xff]
        %v4656 = vld [vmem:[%s4624 + $0xf8] sm:$0xff]
        %v4657 = vld [vmem:[%s4624 + $0x100] sm:$0xff]
        %v4658 = vld [vmem:[%s4624 + $0x108] sm:$0xff]
        %v4659 = vld [vmem:[%s4624 + $0x110] sm:$0xff]
        %v4660 = vld [vmem:[%s4624 + $0x118] sm:$0xff]
        %v4661 = vld [vmem:[%s4624 + $0x120] sm:$0xff]
        %v4662 = vld [vmem:[%s4624 + $0x128] sm:$0xff]
        %v4663 = vld [vmem:[%s4624 + $0x130] sm:$0xff]
        %v4664 = vld [vmem:[%s4624 + $0x138] sm:$0xff]
        %v4665 = vld [vmem:[%s4624 + $0x140] sm:$0xff]
        %v4666 = vld [vmem:[%s4624 + $0x148] sm:$0xff]
        %v4668 = vsel %vm3789, %v4621, 0
        %v4671 = vsel %vm3789, %v4619, 0
        %v4674 = vsel %vm3789, %v4617, 0
        %v4677 = vsel %vm3789, %v4615, 0
        %v4680 = vsel %vm3789, %v4613, 0
        %v4683 = vsel %vm3789, %v4611, 0
        %v4686 = vsel %vm3789, %v4609, 0
        %v4689 = vsel %vm3789, %v4607, 0
        %v4692 = vsel %vm3789, %v4605, 0
        %v4695 = vsel %vm3789, %v4603, 0
        %v4698 = vsel %vm3789, %v4601, 0
        %v4701 = vsel %vm3789, %v4599, 0
        %v4704 = vsel %vm3789, %v4597, 0
        %v4707 = vsel %vm3789, %v4595, 0
        %v4710 = vsel %vm3789, %v4593, 0
        %v4713 = vsel %vm3789, %v4591, 0
        %v4716 = vsel %vm3789, %v4589, 0
        %v4719 = vsel %vm3789, %v4587, 0
        %v4722 = vsel %vm3789, %v4585, 0
        %v4725 = vsel %vm3789, %v4583, 0
        %v4728 = vsel %vm3789, %v4581, 0
        %v4731 = vsel %vm3789, %v4579, 0
        %v4734 = vsel %vm3789, %v4577, 0
        %v4737 = vsel %vm3789, %v4575, 0
        %v4740 = vsel %vm3789, %v4573, 0
        %v4743 = vsel %vm3789, %v4571, 0
        %v4746 = vsel %vm3789, %v4569, 0
        %v4749 = vsel %vm3789, %v4567, 0
        %v4752 = vsel %vm3789, %v4565, 0
        %v4755 = vsel %vm3789, %v4563, 0
        %v4758 = vsel %vm3789, %v4561, 0
        %v4761 = vsel %vm3789, %v4623, 0
        %4763 = vmatprep.subr.mxu0 %v4626
        %4764 = vmatpush1.msra.mxu0 %v4625
        %4765 = vmatprep.subr.mxu0 %v4628
        %4766 = vmatpush1.msra.mxu0 %v4627
        %4767 = vmatprep.subr.mxu0 %v4630
        %4768 = vmatpush1.msra.mxu0 %v4629
        %4769 = vmatprep.subr.mxu0 %v4632
        %4770 = vmatpush1.msra.mxu0 %v4631
        %4771 = vmatprep.subr.mxu0 %v4634
        %4772 = vmatpush1.msra.mxu0 %v4633
        %4773 = vmatprep.subr.mxu0 %v4636
        %4774 = vmatpush1.msra.mxu0 %v4635
        %4775 = vmatprep.subr.mxu0 %v4638
        %4776 = vmatpush1.msra.mxu0 %v4637
        %4777 = vmatprep.subr.mxu0 %v4640
        %4778 = vmatpush1.msra.mxu0 %v4639
        %4779 = vmatprep.subr.mxu0 %v4642
        %4780 = vmatpush1.msra.mxu0 %v4641
        %4781 = vmatprep.subr.mxu0 %v4644
        %4782 = vmatpush1.msra.mxu0 %v4643
        %4783 = vmatprep.subr.mxu0 %v4646
        %4784 = vmatpush1.msra.mxu0 %v4645
        %4785 = vmatprep.subr.mxu0 %v4648
        %4786 = vmatpush1.msra.mxu0 %v4647
        %4787 = vmatprep.subr.mxu0 %v4650
        %4788 = vmatpush1.msra.mxu0 %v4649
        %4789 = vmatprep.subr.mxu0 %v4652
        %4790 = vmatpush1.msra.mxu0 %v4651
        %4791 = vmatprep.subr.mxu0 %v4654
        %4792 = vmatpush1.msra.mxu0 %v4653
        %4793 = vmatprep.subr.mxu0 %v4656
        %4794 = vmatpush1.msra.mxu0 %v4655
        %4795 = vmatprep.subr.mxu0 %v4658
        %4796 = vmatpush1.msra.mxu0 %v4657
        %4797 = vmatprep.subr.mxu0 %v4660
        %4798 = vmatpush1.msra.mxu0 %v4659
        %4799 = vmatprep.subr.mxu0 %v4662
        %4800 = vmatpush1.msra.mxu0 %v4661
        %4801 = vmatprep.subr.mxu0 %v4664
        %4802 = vmatpush1.msra.mxu0 %v4663
        %4803 = vmatprep.subr.mxu0 %v4666
        %4804 = vmatpush1.msra.mxu0 %v4665
        %4805 = vmatprep.subr.mxu0 0.0
        %4806 = vmatpush1.msra.mxu0 0.0
        %4807 = vmatprep.subr.mxu0 0.0
        %4808 = vmatpush1.msra.mxu0 0.0
        %4809 = vmatprep.subr.mxu0 0.0
        %4810 = vmatpush1.msra.mxu0 0.0
        %4811 = vmatprep.subr.mxu0 0.0
        %4812 = vmatpush1.msra.mxu0 0.0
        %4813 = vmatprep.subr.mxu0 0.0
        %4814 = vmatpush1.msra.mxu0 0.0
        %4815 = vmatprep.subr.mxu0 0.0
        %4816 = vmatpush1.msra.mxu0 0.0
        %4817 = vmatprep.subr.mxu0 0.0
        %4818 = vmatpush1.msra.mxu0 0.0
        %4819 = vmatprep.subr.mxu0 0.0
        %4820 = vmatpush1.msra.mxu0 0.0
        %4821 = vmatprep.subr.mxu0 0.0
        %4822 = vmatpush1.msra.mxu0 0.0
        %4823 = vmatprep.subr.mxu0 0.0
        %4824 = vmatpush1.msra.mxu0 0.0
        %4825 = vmatprep.subr.mxu0 0.0
        %4826 = vmatpush1.msra.mxu0 0.0
        %4827 = vmatprep.mubr.f32.mxu0 %v4668
        %4828 = vmatmul.mubr.f32.gmra.mrb[0].mxu0 %v4620
        %v4829 = vpop.f32.mrb[0].mxu0
        %v4830 = vadd.f32 0.0, %v4829
        %v4831 = vpop.f32.mrb[0].mxu0
        %v4832 = vadd.f32 0.0, %v4831
        %4833 = vmatprep.mubr.f32.mxu0 %v4671
        %4834 = vmatmul.mubr.f32.gmra.mrb[0].mxu0 %v4618
        %v4835 = vpop.f32.mrb[0].mxu0
        %v4836 = vadd.f32 0.0, %v4835
        %v4837 = vpop.f32.mrb[0].mxu0
        %v4838 = vadd.f32 0.0, %v4837
        %4839 = vmatprep.mubr.f32.mxu0 %v4674
        %4840 = vmatmul.mubr.f32.gmra.mrb[0].mxu0 %v4616
        %v4841 = vpop.f32.mrb[0].mxu0
        %v4842 = vadd.f32 0.0, %v4841
        %v4843 = vpop.f32.mrb[0].mxu0
        %v4844 = vadd.f32 0.0, %v4843
        %4845 = vmatprep.mubr.f32.mxu0 %v4677
        %4846 = vmatmul.mubr.f32.gmra.mrb[0].mxu0 %v4614
        %v4847 = vpop.f32.mrb[0].mxu0
        %v4848 = vadd.f32 0.0, %v4847
        %v4849 = vpop.f32.mrb[0].mxu0
        %v4850 = vadd.f32 0.0, %v4849
        %4851 = vmatprep.mubr.f32.mxu0 %v4680
        %4852 = vmatmul.mubr.f32.gmra.mrb[0].mxu0 %v4612
        %v4853 = vpop.f32.mrb[0].mxu0
        %v4854 = vadd.f32 0.0, %v4853
        %v4855 = vpop.f32.mrb[0].mxu0
        %v4856 = vadd.f32 0.0, %v4855
        %4857 = vmatprep.mubr.f32.mxu0 %v4683
        %4858 = vmatmul.mubr.f32.gmra.mrb[0].mxu0 %v4610
        %v4859 = vpop.f32.mrb[0].mxu0
        %v4860 = vadd.f32 0.0, %v4859
        %v4861 = vpop.f32.mrb[0].mxu0
        %v4862 = vadd.f32 0.0, %v4861
        %4863 = vmatprep.mubr.f32.mxu0 %v4686
        %4864 = vmatmul.mubr.f32.gmra.mrb[0].mxu0 %v4608
        %v4865 = vpop.f32.mrb[0].mxu0
        %v4866 = vadd.f32 0.0, %v4865
        %v4867 = vpop.f32.mrb[0].mxu0
        %v4868 = vadd.f32 0.0, %v4867
        %4869 = vmatprep.mubr.f32.mxu0 %v4689
        %4870 = vmatmul.mubr.f32.gmra.mrb[0].mxu0 %v4606
        %v4871 = vpop.f32.mrb[0].mxu0
        %v4872 = vadd.f32 0.0, %v4871
        %v4873 = vpop.f32.mrb[0].mxu0
        %v4874 = vadd.f32 0.0, %v4873
        %4875 = vmatprep.mubr.f32.mxu0 %v4692
        %4876 = vmatmul.mubr.f32.gmra.mrb[0].mxu0 %v4604
        %v4877 = vpop.f32.mrb[0].mxu0
        %v4878 = vadd.f32 0.0, %v4877
        %v4879 = vpop.f32.mrb[0].mxu0
        %v4880 = vadd.f32 0.0, %v4879
        %4881 = vmatprep.mubr.f32.mxu0 %v4695
        %4882 = vmatmul.mubr.f32.gmra.mrb[0].mxu0 %v4602
        %v4883 = vpop.f32.mrb[0].mxu0
        %v4884 = vadd.f32 0.0, %v4883
        %v4885 = vpop.f32.mrb[0].mxu0
        %v4886 = vadd.f32 0.0, %v4885
        %4887 = vmatprep.mubr.f32.mxu0 %v4698
        %4888 = vmatmul.mubr.f32.gmra.mrb[0].mxu0 %v4600
        %v4889 = vpop.f32.mrb[0].mxu0
        %v4890 = vadd.f32 0.0, %v4889
        %v4891 = vpop.f32.mrb[0].mxu0
        %v4892 = vadd.f32 0.0, %v4891
        %4893 = vmatprep.mubr.f32.mxu0 %v4701
        %4894 = vmatmul.mubr.f32.gmra.mrb[0].mxu0 %v4598
        %v4895 = vpop.f32.mrb[0].mxu0
        %v4896 = vadd.f32 0.0, %v4895
        %v4897 = vpop.f32.mrb[0].mxu0
        %v4898 = vadd.f32 0.0, %v4897
        %4899 = vmatprep.mubr.f32.mxu0 %v4704
        %4900 = vmatmul.mubr.f32.gmra.mrb[0].mxu0 %v4596
        %v4901 = vpop.f32.mrb[0].mxu0
        %v4902 = vadd.f32 0.0, %v4901
        %v4903 = vpop.f32.mrb[0].mxu0
        %v4904 = vadd.f32 0.0, %v4903
        %4905 = vmatprep.mubr.f32.mxu0 %v4707
        %4906 = vmatmul.mubr.f32.gmra.mrb[0].mxu0 %v4594
        %v4907 = vpop.f32.mrb[0].mxu0
        %v4908 = vadd.f32 0.0, %v4907
        %v4909 = vpop.f32.mrb[0].mxu0
        %v4910 = vadd.f32 0.0, %v4909
        %4911 = vmatprep.mubr.f32.mxu0 %v4710
        %4912 = vmatmul.mubr.f32.gmra.mrb[0].mxu0 %v4592
        %v4913 = vpop.f32.mrb[0].mxu0
        %v4914 = vadd.f32 0.0, %v4913
        %v4915 = vpop.f32.mrb[0].mxu0
        %v4916 = vadd.f32 0.0, %v4915
        %4917 = vmatprep.mubr.f32.mxu0 %v4713
        %4918 = vmatmul.mubr.f32.gmra.mrb[0].mxu0 %v4590
        %v4919 = vpop.f32.mrb[0].mxu0
        %v4920 = vadd.f32 0.0, %v4919
        %v4921 = vpop.f32.mrb[0].mxu0
        %v4922 = vadd.f32 0.0, %v4921
        %4923 = vmatprep.mubr.f32.mxu0 %v4716
        %4924 = vmatmul.mubr.f32.gmra.mrb[0].mxu0 %v4588
        %v4925 = vpop.f32.mrb[0].mxu0
        %v4926 = vadd.f32 0.0, %v4925
        %v4927 = vpop.f32.mrb[0].mxu0
        %v4928 = vadd.f32 0.0, %v4927
        %4929 = vmatprep.mubr.f32.mxu0 %v4719
        %4930 = vmatmul.mubr.f32.gmra.mrb[0].mxu0 %v4586
        %v4931 = vpop.f32.mrb[0].mxu0
        %v4932 = vadd.f32 0.0, %v4931
        %v4933 = vpop.f32.mrb[0].mxu0
        %v4934 = vadd.f32 0.0, %v4933
        %4935 = vmatprep.mubr.f32.mxu0 %v4722
        %4936 = vmatmul.mubr.f32.gmra.mrb[0].mxu0 %v4584
        %v4937 = vpop.f32.mrb[0].mxu0
        %v4938 = vadd.f32 0.0, %v4937
        %v4939 = vpop.f32.mrb[0].mxu0
        %v4940 = vadd.f32 0.0, %v4939
        %4941 = vmatprep.mubr.f32.mxu0 %v4725
        %4942 = vmatmul.mubr.f32.gmra.mrb[0].mxu0 %v4582
        %v4943 = vpop.f32.mrb[0].mxu0
        %v4944 = vadd.f32 0.0, %v4943
        %v4945 = vpop.f32.mrb[0].mxu0
        %v4946 = vadd.f32 0.0, %v4945
        %4947 = vmatprep.mubr.f32.mxu0 %v4728
        %4948 = vmatmul.mubr.f32.gmra.mrb[0].mxu0 %v4580
        %v4949 = vpop.f32.mrb[0].mxu0
        %v4950 = vadd.f32 0.0, %v4949
        %v4951 = vpop.f32.mrb[0].mxu0
        %v4952 = vadd.f32 0.0, %v4951
        %4953 = vmatprep.mubr.f32.mxu0 %v4731
        %4954 = vmatmul.mubr.f32.gmra.mrb[0].mxu0 %v4578
        %v4955 = vpop.f32.mrb[0].mxu0
        %v4956 = vadd.f32 0.0, %v4955
        %v4957 = vpop.f32.mrb[0].mxu0
        %v4958 = vadd.f32 0.0, %v4957
        %4959 = vmatprep.mubr.f32.mxu0 %v4734
        %4960 = vmatmul.mubr.f32.gmra.mrb[0].mxu0 %v4576
        %v4961 = vpop.f32.mrb[0].mxu0
        %v4962 = vadd.f32 0.0, %v4961
        %v4963 = vpop.f32.mrb[0].mxu0
        %v4964 = vadd.f32 0.0, %v4963
        %4965 = vmatprep.mubr.f32.mxu0 %v4737
        %4966 = vmatmul.mubr.f32.gmra.mrb[0].mxu0 %v4574
        %v4967 = vpop.f32.mrb[0].mxu0
        %v4968 = vadd.f32 0.0, %v4967
        %v4969 = vpop.f32.mrb[0].mxu0
        %v4970 = vadd.f32 0.0, %v4969
        %4971 = vmatprep.mubr.f32.mxu0 %v4740
        %4972 = vmatmul.mubr.f32.gmra.mrb[0].mxu0 %v4572
        %v4973 = vpop.f32.mrb[0].mxu0
        %v4974 = vadd.f32 0.0, %v4973
        %v4975 = vpop.f32.mrb[0].mxu0
        %v4976 = vadd.f32 0.0, %v4975
        %4977 = vmatprep.mubr.f32.mxu0 %v4743
        %4978 = vmatmul.mubr.f32.gmra.mrb[0].mxu0 %v4570
        %v4979 = vpop.f32.mrb[0].mxu0
        %v4980 = vadd.f32 0.0, %v4979
        %v4981 = vpop.f32.mrb[0].mxu0
        %v4982 = vadd.f32 0.0, %v4981
        %4983 = vmatprep.mubr.f32.mxu0 %v4746
        %4984 = vmatmul.mubr.f32.gmra.mrb[0].mxu0 %v4568
        %v4985 = vpop.f32.mrb[0].mxu0
        %v4986 = vadd.f32 0.0, %v4985
        %v4987 = vpop.f32.mrb[0].mxu0
        %v4988 = vadd.f32 0.0, %v4987
        %4989 = vmatprep.mubr.f32.mxu0 %v4749
        %4990 = vmatmul.mubr.f32.gmra.mrb[0].mxu0 %v4566
        %v4991 = vpop.f32.mrb[0].mxu0
        %v4992 = vadd.f32 0.0, %v4991
        %v4993 = vpop.f32.mrb[0].mxu0
        %v4994 = vadd.f32 0.0, %v4993
        %4995 = vmatprep.mubr.f32.mxu0 %v4752
        %4996 = vmatmul.mubr.f32.gmra.mrb[0].mxu0 %v4564
        %v4997 = vpop.f32.mrb[0].mxu0
        %v4998 = vadd.f32 0.0, %v4997
        %v4999 = vpop.f32.mrb[0].mxu0
        %v5000 = vadd.f32 0.0, %v4999
        %5001 = vmatprep.mubr.f32.mxu0 %v4755
        %5002 = vmatmul.mubr.f32.gmra.mrb[0].mxu0 %v4562
        %v5003 = vpop.f32.mrb[0].mxu0
        %v5004 = vadd.f32 0.0, %v5003
        %v5005 = vpop.f32.mrb[0].mxu0
        %v5006 = vadd.f32 0.0, %v5005
        %5007 = vmatprep.mubr.f32.mxu0 %v4758
        %5008 = vmatmul.mubr.f32.gmra.mrb[0].mxu0 %v4560
        %v5009 = vpop.f32.mrb[0].mxu0
        %v5010 = vadd.f32 0.0, %v5009
        %v5011 = vpop.f32.mrb[0].mxu0
        %v5012 = vadd.f32 0.0, %v5011
        %5013 = vmatprep.mubr.f32.mxu0 %v4761
        %5014 = vmatmul.mubr.f32.gmra.mrb[0].mxu0 %v4622
        %v5015 = vpop.f32.mrb[0].mxu0
        %v5016 = vadd.f32 0.0, %v5015
        %v5017 = vpop.f32.mrb[0].mxu0
        %v5018 = vadd.f32 0.0, %v5017
        %5019 = vdwg.mxu0
        %v5020 = vadd.f32 %v4306, %v4830
        %v5021 = vadd.f32 %v4308, %v4832
        %v5022 = vadd.f32 %v4312, %v4836
        %v5023 = vadd.f32 %v4314, %v4838
        %v5024 = vadd.f32 %v4318, %v4842
        %v5025 = vadd.f32 %v4320, %v4844
        %v5026 = vadd.f32 %v4324, %v4848
        %v5027 = vadd.f32 %v4326, %v4850
        %v5028 = vadd.f32 %v4330, %v4854
        %v5029 = vadd.f32 %v4332, %v4856
        %v5030 = vadd.f32 %v4336, %v4860
        %v5031 = vadd.f32 %v4338, %v4862
        %v5032 = vadd.f32 %v4342, %v4866
        %v5033 = vadd.f32 %v4344, %v4868
        %v5034 = vadd.f32 %v4348, %v4872
        %v5035 = vadd.f32 %v4350, %v4874
        %v5036 = vadd.f32 %v4354, %v4878
        %v5037 = vadd.f32 %v4356, %v4880
        %v5038 = vadd.f32 %v4360, %v4884
        %v5039 = vadd.f32 %v4362, %v4886
        %v5040 = vadd.f32 %v4366, %v4890
        %v5041 = vadd.f32 %v4368, %v4892
        %v5042 = vadd.f32 %v4372, %v4896
        %v5043 = vadd.f32 %v4374, %v4898
        %v5044 = vadd.f32 %v4378, %v4902
        %v5045 = vadd.f32 %v4380, %v4904
        %v5046 = vadd.f32 %v4384, %v4908
        %v5047 = vadd.f32 %v4386, %v4910
        %v5048 = vadd.f32 %v4390, %v4914
        %v5049 = vadd.f32 %v4392, %v4916
        %v5050 = vadd.f32 %v4396, %v4920
        %v5051 = vadd.f32 %v4398, %v4922
        %v5052 = vadd.f32 %v4402, %v4926
        %v5053 = vadd.f32 %v4404, %v4928
        %v5054 = vadd.f32 %v4408, %v4932
        %v5055 = vadd.f32 %v4410, %v4934
        %v5056 = vadd.f32 %v4414, %v4938
        %v5057 = vadd.f32 %v4416, %v4940
        %v5058 = vadd.f32 %v4420, %v4944
        %v5059 = vadd.f32 %v4422, %v4946
        %v5060 = vadd.f32 %v4426, %v4950
        %v5061 = vadd.f32 %v4428, %v4952
        %v5062 = vadd.f32 %v4432, %v4956
        %v5063 = vadd.f32 %v4434, %v4958
        %v5064 = vadd.f32 %v4438, %v4962
        %v5065 = vadd.f32 %v4440, %v4964
        %v5066 = vadd.f32 %v4444, %v4968
        %v5067 = vadd.f32 %v4446, %v4970
        %v5068 = vadd.f32 %v4450, %v4974
        %v5069 = vadd.f32 %v4452, %v4976
        %v5070 = vadd.f32 %v4456, %v4980
        %v5071 = vadd.f32 %v4458, %v4982
        %v5072 = vadd.f32 %v4462, %v4986
        %v5073 = vadd.f32 %v4464, %v4988
        %v5074 = vadd.f32 %v4468, %v4992
        %v5075 = vadd.f32 %v4470, %v4994
        %v5076 = vadd.f32 %v4474, %v4998
        %v5077 = vadd.f32 %v4476, %v5000
        %v5078 = vadd.f32 %v4480, %v5004
        %v5079 = vadd.f32 %v4482, %v5006
        %v5080 = vadd.f32 %v4486, %v5010
        %v5081 = vadd.f32 %v4488, %v5012
        %v5082 = vadd.f32 %v4492, %v5016
        %v5083 = vadd.f32 %v4494, %v5018
        %v5084 = vrot.slane %v3512, 6
        %v5085 = vrot.slane %v3513, 6
        %v5086 = vrot.slane %v3514, 6
        %v5087 = vrot.slane %v3515, 6
        %v5088 = vrot.slane %v3516, 6
        %v5089 = vrot.slane %v3517, 6
        %v5090 = vrot.slane %v3518, 6
        %v5091 = vrot.slane %v3519, 6
        %v5092 = vrot.slane %v3520, 6
        %v5093 = vrot.slane %v3521, 6
        %v5094 = vrot.slane %v3522, 6
        %v5095 = vrot.slane %v3523, 6
        %v5096 = vrot.slane %v3524, 6
        %v5097 = vrot.slane %v3525, 6
        %v5098 = vrot.slane %v3526, 6
        %v5099 = vrot.slane %v3527, 6
        %v5100 = vrot.slane %v3528, 6
        %v5101 = vrot.slane %v3529, 6
        %v5102 = vrot.slane %v3530, 6
        %v5103 = vrot.slane %v3531, 6
        %v5104 = vrot.slane %v3532, 6
        %v5105 = vrot.slane %v3533, 6
        %v5106 = vrot.slane %v3534, 6
        %v5107 = vrot.slane %v3535, 6
        %v5108 = vrot.slane %v3536, 6
        %v5109 = vrot.slane %v3537, 6
        %v5110 = vrot.slane %v3538, 6
        %v5111 = vrot.slane %v3539, 6
        %v5112 = vrot.slane %v3540, 6
        %v5113 = vrot.slane %v3541, 6
        %v5114 = vrot.slane %v3542, 6
        %v5115 = vrot.slane %v3543, 6
        %v5116 = vrot.slane %v3544, 6
        %v5117 = vrot.slane %v3545, 6
        %v5118 = vrot.slane %v3546, 6
        %v5119 = vrot.slane %v3547, 6
        %v5120 = vrot.slane %v3548, 6
        %v5121 = vrot.slane %v3549, 6
        %v5122 = vrot.slane %v3550, 6
        %v5123 = vrot.slane %v3551, 6
        %v5124 = vrot.slane %v3552, 6
        %v5125 = vrot.slane %v3553, 6
        %v5126 = vrot.slane %v3554, 6
        %v5127 = vrot.slane %v3555, 6
        %v5128 = vrot.slane %v3556, 6
        %v5129 = vrot.slane %v3557, 6
        %v5130 = vrot.slane %v3558, 6
        %v5131 = vrot.slane %v3559, 6
        %v5132 = vrot.slane %v3560, 6
        %v5133 = vrot.slane %v3561, 6
        %v5134 = vrot.slane %v3562, 6
        %v5135 = vrot.slane %v3563, 6
        %v5136 = vrot.slane %v3564, 6
        %v5137 = vrot.slane %v3565, 6
        %v5138 = vrot.slane %v3566, 6
        %v5139 = vrot.slane %v3567, 6
        %v5140 = vrot.slane %v3568, 6
        %v5141 = vrot.slane %v3569, 6
        %v5142 = vrot.slane %v3570, 6
        %v5143 = vrot.slane %v3571, 6
        %v5144 = vrot.slane %v3572, 6
        %v5145 = vrot.slane %v3573, 6
        %v5146 = vrot.slane %v3574, 6
        %v5147 = vrot.slane %v3575, 6
        %vm5148 = vcmp.lt.s32.totalorder %v379, 2
        %v5149 = vsel %vm5148, %v5144, %v5146
        %v5150 = vsel %vm5148, %v5145, %v5147
        %v5151 = vsel %vm5148, %v5142, %v5144
        %v5152 = vsel %vm5148, %v5143, %v5145
        %v5153 = vsel %vm5148, %v5140, %v5142
        %v5154 = vsel %vm5148, %v5141, %v5143
        %v5155 = vsel %vm5148, %v5138, %v5140
        %v5156 = vsel %vm5148, %v5139, %v5141
        %v5157 = vsel %vm5148, %v5136, %v5138
        %v5158 = vsel %vm5148, %v5137, %v5139
        %v5159 = vsel %vm5148, %v5134, %v5136
        %v5160 = vsel %vm5148, %v5135, %v5137
        %v5161 = vsel %vm5148, %v5132, %v5134
        %v5162 = vsel %vm5148, %v5133, %v5135
        %v5163 = vsel %vm5148, %v5130, %v5132
        %v5164 = vsel %vm5148, %v5131, %v5133
        %v5165 = vsel %vm5148, %v5128, %v5130
        %v5166 = vsel %vm5148, %v5129, %v5131
        %v5167 = vsel %vm5148, %v5126, %v5128
        %v5168 = vsel %vm5148, %v5127, %v5129
        %v5169 = vsel %vm5148, %v5124, %v5126
        %v5170 = vsel %vm5148, %v5125, %v5127
        %v5171 = vsel %vm5148, %v5122, %v5124
        %v5172 = vsel %vm5148, %v5123, %v5125
        %v5173 = vsel %vm5148, %v5120, %v5122
        %v5174 = vsel %vm5148, %v5121, %v5123
        %v5175 = vsel %vm5148, %v5118, %v5120
        %v5176 = vsel %vm5148, %v5119, %v5121
        %v5177 = vsel %vm5148, %v5116, %v5118
        %v5178 = vsel %vm5148, %v5117, %v5119
        %v5179 = vsel %vm5148, %v5114, %v5116
        %v5180 = vsel %vm5148, %v5115, %v5117
        %v5181 = vsel %vm5148, %v5112, %v5114
        %v5182 = vsel %vm5148, %v5113, %v5115
        %v5183 = vsel %vm5148, %v5110, %v5112
        %v5184 = vsel %vm5148, %v5111, %v5113
        %v5185 = vsel %vm5148, %v5108, %v5110
        %v5186 = vsel %vm5148, %v5109, %v5111
        %v5187 = vsel %vm5148, %v5106, %v5108
        %v5188 = vsel %vm5148, %v5107, %v5109
        %v5189 = vsel %vm5148, %v5104, %v5106
        %v5190 = vsel %vm5148, %v5105, %v5107
        %v5191 = vsel %vm5148, %v5102, %v5104
        %v5192 = vsel %vm5148, %v5103, %v5105
        %v5193 = vsel %vm5148, %v5100, %v5102
        %v5194 = vsel %vm5148, %v5101, %v5103
        %v5195 = vsel %vm5148, %v5098, %v5100
        %v5196 = vsel %vm5148, %v5099, %v5101
        %v5197 = vsel %vm5148, %v5096, %v5098
        %v5198 = vsel %vm5148, %v5097, %v5099
        %v5199 = vsel %vm5148, %v5094, %v5096
        %v5200 = vsel %vm5148, %v5095, %v5097
        %v5201 = vsel %vm5148, %v5092, %v5094
        %v5202 = vsel %vm5148, %v5093, %v5095
        %v5203 = vsel %vm5148, %v5090, %v5092
        %v5204 = vsel %vm5148, %v5091, %v5093
        %v5205 = vsel %vm5148, %v5088, %v5090
        %v5206 = vsel %vm5148, %v5089, %v5091
        %v5207 = vsel %vm5148, %v5086, %v5088
        %v5208 = vsel %vm5148, %v5087, %v5089
        %v5209 = vsel %vm5148, %v5084, %v5086
        %v5210 = vsel %vm5148, %v5085, %v5087
        %v5211 = vsel %vm5148, %v5146, %v5084
        %v5212 = vsel %vm5148, %v5147, %v5085
        %s5213 = scalar_lea.vmem %s2, 1008
        %v5214 = vld [vmem:[%s5213] sm:$0xff]
        %v5215 = vld [vmem:[%s5213 + $0x8] sm:$0xff]
        %v5216 = vld [vmem:[%s5213 + $0x10] sm:$0xff]
        %v5217 = vld [vmem:[%s5213 + $0x18] sm:$0xff]
        %v5218 = vld [vmem:[%s5213 + $0x20] sm:$0xff]
        %v5219 = vld [vmem:[%s5213 + $0x28] sm:$0xff]
        %v5220 = vld [vmem:[%s5213 + $0x30] sm:$0xff]
        %v5221 = vld [vmem:[%s5213 + $0x38] sm:$0xff]
        %v5222 = vld [vmem:[%s5213 + $0x40] sm:$0xff]
        %v5223 = vld [vmem:[%s5213 + $0x48] sm:$0xff]
        %v5224 = vld [vmem:[%s5213 + $0x50] sm:$0xff]
        %v5225 = vld [vmem:[%s5213 + $0x58] sm:$0xff]
        %v5226 = vld [vmem:[%s5213 + $0x60] sm:$0xff]
        %v5227 = vld [vmem:[%s5213 + $0x68] sm:$0xff]
        %v5228 = vld [vmem:[%s5213 + $0x70] sm:$0xff]
        %v5229 = vld [vmem:[%s5213 + $0x78] sm:$0xff]
        %v5230 = vld [vmem:[%s5213 + $0x80] sm:$0xff]
        %v5231 = vld [vmem:[%s5213 + $0x88] sm:$0xff]
        %v5232 = vld [vmem:[%s5213 + $0x90] sm:$0xff]
        %v5233 = vld [vmem:[%s5213 + $0x98] sm:$0xff]
        %v5234 = vld [vmem:[%s5213 + $0xa0] sm:$0xff]
        %v5235 = vld [vmem:[%s5213 + $0xa8] sm:$0xff]
        %v5236 = vld [vmem:[%s5213 + $0xb0] sm:$0xff]
        %v5237 = vld [vmem:[%s5213 + $0xb8] sm:$0xff]
        %v5238 = vld [vmem:[%s5213 + $0xc0] sm:$0xff]
        %v5239 = vld [vmem:[%s5213 + $0xc8] sm:$0xff]
        %v5240 = vld [vmem:[%s5213 + $0xd0] sm:$0xff]
        %v5241 = vld [vmem:[%s5213 + $0xd8] sm:$0xff]
        %v5242 = vld [vmem:[%s5213 + $0xe0] sm:$0xff]
        %v5243 = vld [vmem:[%s5213 + $0xe8] sm:$0xff]
        %v5244 = vld [vmem:[%s5213 + $0xf0] sm:$0xff]
        %v5245 = vld [vmem:[%s5213 + $0xf8] sm:$0xff]
        %v5246 = vld [vmem:[%s5213 + $0x100] sm:$0xff]
        %v5247 = vld [vmem:[%s5213 + $0x108] sm:$0xff]
        %v5248 = vld [vmem:[%s5213 + $0x110] sm:$0xff]
        %v5249 = vld [vmem:[%s5213 + $0x118] sm:$0xff]
        %v5250 = vld [vmem:[%s5213 + $0x120] sm:$0xff]
        %v5251 = vld [vmem:[%s5213 + $0x128] sm:$0xff]
        %v5252 = vld [vmem:[%s5213 + $0x130] sm:$0xff]
        %v5253 = vld [vmem:[%s5213 + $0x138] sm:$0xff]
        %v5254 = vld [vmem:[%s5213 + $0x140] sm:$0xff]
        %v5255 = vld [vmem:[%s5213 + $0x148] sm:$0xff]
        %v5257 = vsel %vm3789, %v5210, 0
        %v5260 = vsel %vm3789, %v5208, 0
        %v5263 = vsel %vm3789, %v5206, 0
        %v5266 = vsel %vm3789, %v5204, 0
        %v5269 = vsel %vm3789, %v5202, 0
        %v5272 = vsel %vm3789, %v5200, 0
        %v5275 = vsel %vm3789, %v5198, 0
        %v5278 = vsel %vm3789, %v5196, 0
        %v5281 = vsel %vm3789, %v5194, 0
        %v5284 = vsel %vm3789, %v5192, 0
        %v5287 = vsel %vm3789, %v5190, 0
        %v5290 = vsel %vm3789, %v5188, 0
        %v5293 = vsel %vm3789, %v5186, 0
        %v5296 = vsel %vm3789, %v5184, 0
        %v5299 = vsel %vm3789, %v5182, 0
        %v5302 = vsel %vm3789, %v5180, 0
        %v5305 = vsel %vm3789, %v5178, 0
        %v5308 = vsel %vm3789, %v5176, 0
        %v5311 = vsel %vm3789, %v5174, 0
        %v5314 = vsel %vm3789, %v5172, 0
        %v5317 = vsel %vm3789, %v5170, 0
        %v5320 = vsel %vm3789, %v5168, 0
        %v5323 = vsel %vm3789, %v5166, 0
        %v5326 = vsel %vm3789, %v5164, 0
        %v5329 = vsel %vm3789, %v5162, 0
        %v5332 = vsel %vm3789, %v5160, 0
        %v5335 = vsel %vm3789, %v5158, 0
        %v5338 = vsel %vm3789, %v5156, 0
        %v5341 = vsel %vm3789, %v5154, 0
        %v5344 = vsel %vm3789, %v5152, 0
        %v5347 = vsel %vm3789, %v5150, 0
        %v5350 = vsel %vm3789, %v5212, 0
        %5352 = vmatprep.subr.mxu0 %v5215
        %5353 = vmatpush1.msra.mxu0 %v5214
        %5354 = vmatprep.subr.mxu0 %v5217
        %5355 = vmatpush1.msra.mxu0 %v5216
        %5356 = vmatprep.subr.mxu0 %v5219
        %5357 = vmatpush1.msra.mxu0 %v5218
        %5358 = vmatprep.subr.mxu0 %v5221
        %5359 = vmatpush1.msra.mxu0 %v5220
        %5360 = vmatprep.subr.mxu0 %v5223
        %5361 = vmatpush1.msra.mxu0 %v5222
        %5362 = vmatprep.subr.mxu0 %v5225
        %5363 = vmatpush1.msra.mxu0 %v5224
        %5364 = vmatprep.subr.mxu0 %v5227
        %5365 = vmatpush1.msra.mxu0 %v5226
        %5366 = vmatprep.subr.mxu0 %v5229
        %5367 = vmatpush1.msra.mxu0 %v5228
        %5368 = vmatprep.subr.mxu0 %v5231
        %5369 = vmatpush1.msra.mxu0 %v5230
        %5370 = vmatprep.subr.mxu0 %v5233
        %5371 = vmatpush1.msra.mxu0 %v5232
        %5372 = vmatprep.subr.mxu0 %v5235
        %5373 = vmatpush1.msra.mxu0 %v5234
        %5374 = vmatprep.subr.mxu0 %v5237
        %5375 = vmatpush1.msra.mxu0 %v5236
        %5376 = vmatprep.subr.mxu0 %v5239
        %5377 = vmatpush1.msra.mxu0 %v5238
        %5378 = vmatprep.subr.mxu0 %v5241
        %5379 = vmatpush1.msra.mxu0 %v5240
        %5380 = vmatprep.subr.mxu0 %v5243
        %5381 = vmatpush1.msra.mxu0 %v5242
        %5382 = vmatprep.subr.mxu0 %v5245
        %5383 = vmatpush1.msra.mxu0 %v5244
        %5384 = vmatprep.subr.mxu0 %v5247
        %5385 = vmatpush1.msra.mxu0 %v5246
        %5386 = vmatprep.subr.mxu0 %v5249
        %5387 = vmatpush1.msra.mxu0 %v5248
        %5388 = vmatprep.subr.mxu0 %v5251
        %5389 = vmatpush1.msra.mxu0 %v5250
        %5390 = vmatprep.subr.mxu0 %v5253
        %5391 = vmatpush1.msra.mxu0 %v5252
        %5392 = vmatprep.subr.mxu0 %v5255
        %5393 = vmatpush1.msra.mxu0 %v5254
        %5394 = vmatprep.subr.mxu0 0.0
        %5395 = vmatpush1.msra.mxu0 0.0
        %5396 = vmatprep.subr.mxu0 0.0
        %5397 = vmatpush1.msra.mxu0 0.0
        %5398 = vmatprep.subr.mxu0 0.0
        %5399 = vmatpush1.msra.mxu0 0.0
        %5400 = vmatprep.subr.mxu0 0.0
        %5401 = vmatpush1.msra.mxu0 0.0
        %5402 = vmatprep.subr.mxu0 0.0
        %5403 = vmatpush1.msra.mxu0 0.0
        %5404 = vmatprep.subr.mxu0 0.0
        %5405 = vmatpush1.msra.mxu0 0.0
        %5406 = vmatprep.subr.mxu0 0.0
        %5407 = vmatpush1.msra.mxu0 0.0
        %5408 = vmatprep.subr.mxu0 0.0
        %5409 = vmatpush1.msra.mxu0 0.0
        %5410 = vmatprep.subr.mxu0 0.0
        %5411 = vmatpush1.msra.mxu0 0.0
        %5412 = vmatprep.subr.mxu0 0.0
        %5413 = vmatpush1.msra.mxu0 0.0
        %5414 = vmatprep.subr.mxu0 0.0
        %5415 = vmatpush1.msra.mxu0 0.0
        %5416 = vmatprep.mubr.f32.mxu0 %v5257
        %5417 = vmatmul.mubr.f32.gmra.mrb[0].mxu0 %v5209
        %v5418 = vpop.f32.mrb[0].mxu0
        %v5419 = vadd.f32 0.0, %v5418
        %v5420 = vpop.f32.mrb[0].mxu0
        %v5421 = vadd.f32 0.0, %v5420
        %5422 = vmatprep.mubr.f32.mxu0 %v5260
        %5423 = vmatmul.mubr.f32.gmra.mrb[0].mxu0 %v5207
        %v5424 = vpop.f32.mrb[0].mxu0
        %v5425 = vadd.f32 0.0, %v5424
        %v5426 = vpop.f32.mrb[0].mxu0
        %v5427 = vadd.f32 0.0, %v5426
        %5428 = vmatprep.mubr.f32.mxu0 %v5263
        %5429 = vmatmul.mubr.f32.gmra.mrb[0].mxu0 %v5205
        %v5430 = vpop.f32.mrb[0].mxu0
        %v5431 = vadd.f32 0.0, %v5430
        %v5432 = vpop.f32.mrb[0].mxu0
        %v5433 = vadd.f32 0.0, %v5432
        %5434 = vmatprep.mubr.f32.mxu0 %v5266
        %5435 = vmatmul.mubr.f32.gmra.mrb[0].mxu0 %v5203
        %v5436 = vpop.f32.mrb[0].mxu0
        %v5437 = vadd.f32 0.0, %v5436
        %v5438 = vpop.f32.mrb[0].mxu0
        %v5439 = vadd.f32 0.0, %v5438
        %5440 = vmatprep.mubr.f32.mxu0 %v5269
        %5441 = vmatmul.mubr.f32.gmra.mrb[0].mxu0 %v5201
        %v5442 = vpop.f32.mrb[0].mxu0
        %v5443 = vadd.f32 0.0, %v5442
        %v5444 = vpop.f32.mrb[0].mxu0
        %v5445 = vadd.f32 0.0, %v5444
        %5446 = vmatprep.mubr.f32.mxu0 %v5272
        %5447 = vmatmul.mubr.f32.gmra.mrb[0].mxu0 %v5199
        %v5448 = vpop.f32.mrb[0].mxu0
        %v5449 = vadd.f32 0.0, %v5448
        %v5450 = vpop.f32.mrb[0].mxu0
        %v5451 = vadd.f32 0.0, %v5450
        %5452 = vmatprep.mubr.f32.mxu0 %v5275
        %5453 = vmatmul.mubr.f32.gmra.mrb[0].mxu0 %v5197
        %v5454 = vpop.f32.mrb[0].mxu0
        %v5455 = vadd.f32 0.0, %v5454
        %v5456 = vpop.f32.mrb[0].mxu0
        %v5457 = vadd.f32 0.0, %v5456
        %5458 = vmatprep.mubr.f32.mxu0 %v5278
        %5459 = vmatmul.mubr.f32.gmra.mrb[0].mxu0 %v5195
        %v5460 = vpop.f32.mrb[0].mxu0
        %v5461 = vadd.f32 0.0, %v5460
        %v5462 = vpop.f32.mrb[0].mxu0
        %v5463 = vadd.f32 0.0, %v5462
        %5464 = vmatprep.mubr.f32.mxu0 %v5281
        %5465 = vmatmul.mubr.f32.gmra.mrb[0].mxu0 %v5193
        %v5466 = vpop.f32.mrb[0].mxu0
        %v5467 = vadd.f32 0.0, %v5466
        %v5468 = vpop.f32.mrb[0].mxu0
        %v5469 = vadd.f32 0.0, %v5468
        %5470 = vmatprep.mubr.f32.mxu0 %v5284
        %5471 = vmatmul.mubr.f32.gmra.mrb[0].mxu0 %v5191
        %v5472 = vpop.f32.mrb[0].mxu0
        %v5473 = vadd.f32 0.0, %v5472
        %v5474 = vpop.f32.mrb[0].mxu0
        %v5475 = vadd.f32 0.0, %v5474
        %5476 = vmatprep.mubr.f32.mxu0 %v5287
        %5477 = vmatmul.mubr.f32.gmra.mrb[0].mxu0 %v5189
        %v5478 = vpop.f32.mrb[0].mxu0
        %v5479 = vadd.f32 0.0, %v5478
        %v5480 = vpop.f32.mrb[0].mxu0
        %v5481 = vadd.f32 0.0, %v5480
        %5482 = vmatprep.mubr.f32.mxu0 %v5290
        %5483 = vmatmul.mubr.f32.gmra.mrb[0].mxu0 %v5187
        %v5484 = vpop.f32.mrb[0].mxu0
        %v5485 = vadd.f32 0.0, %v5484
        %v5486 = vpop.f32.mrb[0].mxu0
        %v5487 = vadd.f32 0.0, %v5486
        %5488 = vmatprep.mubr.f32.mxu0 %v5293
        %5489 = vmatmul.mubr.f32.gmra.mrb[0].mxu0 %v5185
        %v5490 = vpop.f32.mrb[0].mxu0
        %v5491 = vadd.f32 0.0, %v5490
        %v5492 = vpop.f32.mrb[0].mxu0
        %v5493 = vadd.f32 0.0, %v5492
        %5494 = vmatprep.mubr.f32.mxu0 %v5296
        %5495 = vmatmul.mubr.f32.gmra.mrb[0].mxu0 %v5183
        %v5496 = vpop.f32.mrb[0].mxu0
        %v5497 = vadd.f32 0.0, %v5496
        %v5498 = vpop.f32.mrb[0].mxu0
        %v5499 = vadd.f32 0.0, %v5498
        %5500 = vmatprep.mubr.f32.mxu0 %v5299
        %5501 = vmatmul.mubr.f32.gmra.mrb[0].mxu0 %v5181
        %v5502 = vpop.f32.mrb[0].mxu0
        %v5503 = vadd.f32 0.0, %v5502
        %v5504 = vpop.f32.mrb[0].mxu0
        %v5505 = vadd.f32 0.0, %v5504
        %5506 = vmatprep.mubr.f32.mxu0 %v5302
        %5507 = vmatmul.mubr.f32.gmra.mrb[0].mxu0 %v5179
        %v5508 = vpop.f32.mrb[0].mxu0
        %v5509 = vadd.f32 0.0, %v5508
        %v5510 = vpop.f32.mrb[0].mxu0
        %v5511 = vadd.f32 0.0, %v5510
        %5512 = vmatprep.mubr.f32.mxu0 %v5305
        %5513 = vmatmul.mubr.f32.gmra.mrb[0].mxu0 %v5177
        %v5514 = vpop.f32.mrb[0].mxu0
        %v5515 = vadd.f32 0.0, %v5514
        %v5516 = vpop.f32.mrb[0].mxu0
        %v5517 = vadd.f32 0.0, %v5516
        %5518 = vmatprep.mubr.f32.mxu0 %v5308
        %5519 = vmatmul.mubr.f32.gmra.mrb[0].mxu0 %v5175
        %v5520 = vpop.f32.mrb[0].mxu0
        %v5521 = vadd.f32 0.0, %v5520
        %v5522 = vpop.f32.mrb[0].mxu0
        %v5523 = vadd.f32 0.0, %v5522
        %5524 = vmatprep.mubr.f32.mxu0 %v5311
        %5525 = vmatmul.mubr.f32.gmra.mrb[0].mxu0 %v5173
        %v5526 = vpop.f32.mrb[0].mxu0
        %v5527 = vadd.f32 0.0, %v5526
        %v5528 = vpop.f32.mrb[0].mxu0
        %v5529 = vadd.f32 0.0, %v5528
        %5530 = vmatprep.mubr.f32.mxu0 %v5314
        %5531 = vmatmul.mubr.f32.gmra.mrb[0].mxu0 %v5171
        %v5532 = vpop.f32.mrb[0].mxu0
        %v5533 = vadd.f32 0.0, %v5532
        %v5534 = vpop.f32.mrb[0].mxu0
        %v5535 = vadd.f32 0.0, %v5534
        %5536 = vmatprep.mubr.f32.mxu0 %v5317
        %5537 = vmatmul.mubr.f32.gmra.mrb[0].mxu0 %v5169
        %v5538 = vpop.f32.mrb[0].mxu0
        %v5539 = vadd.f32 0.0, %v5538
        %v5540 = vpop.f32.mrb[0].mxu0
        %v5541 = vadd.f32 0.0, %v5540
        %5542 = vmatprep.mubr.f32.mxu0 %v5320
        %5543 = vmatmul.mubr.f32.gmra.mrb[0].mxu0 %v5167
        %v5544 = vpop.f32.mrb[0].mxu0
        %v5545 = vadd.f32 0.0, %v5544
        %v5546 = vpop.f32.mrb[0].mxu0
        %v5547 = vadd.f32 0.0, %v5546
        %5548 = vmatprep.mubr.f32.mxu0 %v5323
        %5549 = vmatmul.mubr.f32.gmra.mrb[0].mxu0 %v5165
        %v5550 = vpop.f32.mrb[0].mxu0
        %v5551 = vadd.f32 0.0, %v5550
        %v5552 = vpop.f32.mrb[0].mxu0
        %v5553 = vadd.f32 0.0, %v5552
        %5554 = vmatprep.mubr.f32.mxu0 %v5326
        %5555 = vmatmul.mubr.f32.gmra.mrb[0].mxu0 %v5163
        %v5556 = vpop.f32.mrb[0].mxu0
        %v5557 = vadd.f32 0.0, %v5556
        %v5558 = vpop.f32.mrb[0].mxu0
        %v5559 = vadd.f32 0.0, %v5558
        %5560 = vmatprep.mubr.f32.mxu0 %v5329
        %5561 = vmatmul.mubr.f32.gmra.mrb[0].mxu0 %v5161
        %v5562 = vpop.f32.mrb[0].mxu0
        %v5563 = vadd.f32 0.0, %v5562
        %v5564 = vpop.f32.mrb[0].mxu0
        %v5565 = vadd.f32 0.0, %v5564
        %5566 = vmatprep.mubr.f32.mxu0 %v5332
        %5567 = vmatmul.mubr.f32.gmra.mrb[0].mxu0 %v5159
        %v5568 = vpop.f32.mrb[0].mxu0
        %v5569 = vadd.f32 0.0, %v5568
        %v5570 = vpop.f32.mrb[0].mxu0
        %v5571 = vadd.f32 0.0, %v5570
        %5572 = vmatprep.mubr.f32.mxu0 %v5335
        %5573 = vmatmul.mubr.f32.gmra.mrb[0].mxu0 %v5157
        %v5574 = vpop.f32.mrb[0].mxu0
        %v5575 = vadd.f32 0.0, %v5574
        %v5576 = vpop.f32.mrb[0].mxu0
        %v5577 = vadd.f32 0.0, %v5576
        %5578 = vmatprep.mubr.f32.mxu0 %v5338
        %5579 = vmatmul.mubr.f32.gmra.mrb[0].mxu0 %v5155
        %v5580 = vpop.f32.mrb[0].mxu0
        %v5581 = vadd.f32 0.0, %v5580
        %v5582 = vpop.f32.mrb[0].mxu0
        %v5583 = vadd.f32 0.0, %v5582
        %5584 = vmatprep.mubr.f32.mxu0 %v5341
        %5585 = vmatmul.mubr.f32.gmra.mrb[0].mxu0 %v5153
        %v5586 = vpop.f32.mrb[0].mxu0
        %v5587 = vadd.f32 0.0, %v5586
        %v5588 = vpop.f32.mrb[0].mxu0
        %v5589 = vadd.f32 0.0, %v5588
        %5590 = vmatprep.mubr.f32.mxu0 %v5344
        %5591 = vmatmul.mubr.f32.gmra.mrb[0].mxu0 %v5151
        %v5592 = vpop.f32.mrb[0].mxu0
        %v5593 = vadd.f32 0.0, %v5592
        %v5594 = vpop.f32.mrb[0].mxu0
        %v5595 = vadd.f32 0.0, %v5594
        %5596 = vmatprep.mubr.f32.mxu0 %v5347
        %5597 = vmatmul.mubr.f32.gmra.mrb[0].mxu0 %v5149
        %v5598 = vpop.f32.mrb[0].mxu0
        %v5599 = vadd.f32 0.0, %v5598
        %v5600 = vpop.f32.mrb[0].mxu0
        %v5601 = vadd.f32 0.0, %v5600
        %5602 = vmatprep.mubr.f32.mxu0 %v5350
        %5603 = vmatmul.mubr.f32.gmra.mrb[0].mxu0 %v5211
        %v5604 = vpop.f32.mrb[0].mxu0
        %v5605 = vadd.f32 0.0, %v5604
        %v5606 = vpop.f32.mrb[0].mxu0
        %v5607 = vadd.f32 0.0, %v5606
        %5608 = vdwg.mxu0
        %v5609 = vadd.f32 %v5020, %v5419
        %v5610 = vadd.f32 %v5021, %v5421
        %v5611 = vadd.f32 %v5022, %v5425
        %v5612 = vadd.f32 %v5023, %v5427
        %v5613 = vadd.f32 %v5024, %v5431
        %v5614 = vadd.f32 %v5025, %v5433
        %v5615 = vadd.f32 %v5026, %v5437
        %v5616 = vadd.f32 %v5027, %v5439
        %v5617 = vadd.f32 %v5028, %v5443
        %v5618 = vadd.f32 %v5029, %v5445
        %v5619 = vadd.f32 %v5030, %v5449
        %v5620 = vadd.f32 %v5031, %v5451
        %v5621 = vadd.f32 %v5032, %v5455
        %v5622 = vadd.f32 %v5033, %v5457
        %v5623 = vadd.f32 %v5034, %v5461
        %v5624 = vadd.f32 %v5035, %v5463
        %v5625 = vadd.f32 %v5036, %v5467
        %v5626 = vadd.f32 %v5037, %v5469
        %v5627 = vadd.f32 %v5038, %v5473
        %v5628 = vadd.f32 %v5039, %v5475
        %v5629 = vadd.f32 %v5040, %v5479
        %v5630 = vadd.f32 %v5041, %v5481
        %v5631 = vadd.f32 %v5042, %v5485
        %v5632 = vadd.f32 %v5043, %v5487
        %v5633 = vadd.f32 %v5044, %v5491
        %v5634 = vadd.f32 %v5045, %v5493
        %v5635 = vadd.f32 %v5046, %v5497
        %v5636 = vadd.f32 %v5047, %v5499
        %v5637 = vadd.f32 %v5048, %v5503
        %v5638 = vadd.f32 %v5049, %v5505
        %v5639 = vadd.f32 %v5050, %v5509
        %v5640 = vadd.f32 %v5051, %v5511
        %v5641 = vadd.f32 %v5052, %v5515
        %v5642 = vadd.f32 %v5053, %v5517
        %v5643 = vadd.f32 %v5054, %v5521
        %v5644 = vadd.f32 %v5055, %v5523
        %v5645 = vadd.f32 %v5056, %v5527
        %v5646 = vadd.f32 %v5057, %v5529
        %v5647 = vadd.f32 %v5058, %v5533
        %v5648 = vadd.f32 %v5059, %v5535
        %v5649 = vadd.f32 %v5060, %v5539
        %v5650 = vadd.f32 %v5061, %v5541
        %v5651 = vadd.f32 %v5062, %v5545
        %v5652 = vadd.f32 %v5063, %v5547
        %v5653 = vadd.f32 %v5064, %v5551
        %v5654 = vadd.f32 %v5065, %v5553
        %v5655 = vadd.f32 %v5066, %v5557
        %v5656 = vadd.f32 %v5067, %v5559
        %v5657 = vadd.f32 %v5068, %v5563
        %v5658 = vadd.f32 %v5069, %v5565
        %v5659 = vadd.f32 %v5070, %v5569
        %v5660 = vadd.f32 %v5071, %v5571
        %v5661 = vadd.f32 %v5072, %v5575
        %v5662 = vadd.f32 %v5073, %v5577
        %v5663 = vadd.f32 %v5074, %v5581
        %v5664 = vadd.f32 %v5075, %v5583
        %v5665 = vadd.f32 %v5076, %v5587
        %v5666 = vadd.f32 %v5077, %v5589
        %v5667 = vadd.f32 %v5078, %v5593
        %v5668 = vadd.f32 %v5079, %v5595
        %v5669 = vadd.f32 %v5080, %v5599
        %v5670 = vadd.f32 %v5081, %v5601
        %v5671 = vadd.f32 %v5082, %v5605
        %v5672 = vadd.f32 %v5083, %v5607
        %s5673 = scalar_lea.vmem %s2, 1344
        %v5674 = vld [vmem:[%s5673] sm:$0xff]
        %v5675 = vld [vmem:[%s5673 + $0x8] sm:$0xff]
        %v5676 = vld [vmem:[%s5673 + $0x10] sm:$0xff]
        %v5677 = vld [vmem:[%s5673 + $0x18] sm:$0xff]
        %v5678 = vld [vmem:[%s5673 + $0x20] sm:$0xff]
        %v5679 = vld [vmem:[%s5673 + $0x28] sm:$0xff]
        %v5680 = vld [vmem:[%s5673 + $0x30] sm:$0xff]
        %v5681 = vld [vmem:[%s5673 + $0x38] sm:$0xff]
        %v5682 = vld [vmem:[%s5673 + $0x40] sm:$0xff]
        %v5683 = vld [vmem:[%s5673 + $0x48] sm:$0xff]
        %v5684 = vld [vmem:[%s5673 + $0x50] sm:$0xff]
        %v5685 = vld [vmem:[%s5673 + $0x58] sm:$0xff]
        %v5686 = vld [vmem:[%s5673 + $0x60] sm:$0xff]
        %v5687 = vld [vmem:[%s5673 + $0x68] sm:$0xff]
        %v5688 = vld [vmem:[%s5673 + $0x70] sm:$0xff]
        %v5689 = vld [vmem:[%s5673 + $0x78] sm:$0xff]
        %v5690 = vld [vmem:[%s5673 + $0x80] sm:$0xff]
        %v5691 = vld [vmem:[%s5673 + $0x88] sm:$0xff]
        %v5692 = vld [vmem:[%s5673 + $0x90] sm:$0xff]
        %v5693 = vld [vmem:[%s5673 + $0x98] sm:$0xff]
        %v5694 = vld [vmem:[%s5673 + $0xa0] sm:$0xff]
        %v5695 = vld [vmem:[%s5673 + $0xa8] sm:$0xff]
        %v5696 = vld [vmem:[%s5673 + $0xb0] sm:$0xff]
        %v5697 = vld [vmem:[%s5673 + $0xb8] sm:$0xff]
        %v5698 = vld [vmem:[%s5673 + $0xc0] sm:$0xff]
        %v5699 = vld [vmem:[%s5673 + $0xc8] sm:$0xff]
        %v5700 = vld [vmem:[%s5673 + $0xd0] sm:$0xff]
        %v5701 = vld [vmem:[%s5673 + $0xd8] sm:$0xff]
        %v5702 = vld [vmem:[%s5673 + $0xe0] sm:$0xff]
        %v5703 = vld [vmem:[%s5673 + $0xe8] sm:$0xff]
        %v5704 = vld [vmem:[%s5673 + $0xf0] sm:$0xff]
        %v5705 = vld [vmem:[%s5673 + $0xf8] sm:$0xff]
        %v5706 = vld [vmem:[%s5673 + $0x100] sm:$0xff]
        %v5707 = vld [vmem:[%s5673 + $0x108] sm:$0xff]
        %v5708 = vld [vmem:[%s5673 + $0x110] sm:$0xff]
        %v5709 = vld [vmem:[%s5673 + $0x118] sm:$0xff]
        %v5710 = vld [vmem:[%s5673 + $0x120] sm:$0xff]
        %v5711 = vld [vmem:[%s5673 + $0x128] sm:$0xff]
        %v5712 = vld [vmem:[%s5673 + $0x130] sm:$0xff]
        %v5713 = vld [vmem:[%s5673 + $0x138] sm:$0xff]
        %v5714 = vld [vmem:[%s5673 + $0x140] sm:$0xff]
        %v5715 = vld [vmem:[%s5673 + $0x148] sm:$0xff]
        %5716 = vmatprep.subr.mxu0 %v5675
        %5717 = vmatpush1.msra.mxu0 %v5674
        %5718 = vmatprep.subr.mxu0 %v5677
        %5719 = vmatpush1.msra.mxu0 %v5676
        %5720 = vmatprep.subr.mxu0 %v5679
        %5721 = vmatpush1.msra.mxu0 %v5678
        %5722 = vmatprep.subr.mxu0 %v5681
        %5723 = vmatpush1.msra.mxu0 %v5680
        %5724 = vmatprep.subr.mxu0 %v5683
        %5725 = vmatpush1.msra.mxu0 %v5682
        %5726 = vmatprep.subr.mxu0 %v5685
        %5727 = vmatpush1.msra.mxu0 %v5684
        %5728 = vmatprep.subr.mxu0 %v5687
        %5729 = vmatpush1.msra.mxu0 %v5686
        %5730 = vmatprep.subr.mxu0 %v5689
        %5731 = vmatpush1.msra.mxu0 %v5688
        %5732 = vmatprep.subr.mxu0 %v5691
        %5733 = vmatpush1.msra.mxu0 %v5690
        %5734 = vmatprep.subr.mxu0 %v5693
        %5735 = vmatpush1.msra.mxu0 %v5692
        %5736 = vmatprep.subr.mxu0 %v5695
        %5737 = vmatpush1.msra.mxu0 %v5694
        %5738 = vmatprep.subr.mxu0 %v5697
        %5739 = vmatpush1.msra.mxu0 %v5696
        %5740 = vmatprep.subr.mxu0 %v5699
        %5741 = vmatpush1.msra.mxu0 %v5698
        %5742 = vmatprep.subr.mxu0 %v5701
        %5743 = vmatpush1.msra.mxu0 %v5700
        %5744 = vmatprep.subr.mxu0 %v5703
        %5745 = vmatpush1.msra.mxu0 %v5702
        %5746 = vmatprep.subr.mxu0 %v5705
        %5747 = vmatpush1.msra.mxu0 %v5704
        %5748 = vmatprep.subr.mxu0 %v5707
        %5749 = vmatpush1.msra.mxu0 %v5706
        %5750 = vmatprep.subr.mxu0 %v5709
        %5751 = vmatpush1.msra.mxu0 %v5708
        %5752 = vmatprep.subr.mxu0 %v5711
        %5753 = vmatpush1.msra.mxu0 %v5710
        %5754 = vmatprep.subr.mxu0 %v5713
        %5755 = vmatpush1.msra.mxu0 %v5712
        %5756 = vmatprep.subr.mxu0 %v5715
        %5757 = vmatpush1.msra.mxu0 %v5714
        %5758 = vmatprep.subr.mxu0 0.0
        %5759 = vmatpush1.msra.mxu0 0.0
        %5760 = vmatprep.subr.mxu0 0.0
        %5761 = vmatpush1.msra.mxu0 0.0
        %5762 = vmatprep.subr.mxu0 0.0
        %5763 = vmatpush1.msra.mxu0 0.0
        %5764 = vmatprep.subr.mxu0 0.0
        %5765 = vmatpush1.msra.mxu0 0.0
        %5766 = vmatprep.subr.mxu0 0.0
        %5767 = vmatpush1.msra.mxu0 0.0
        %5768 = vmatprep.subr.mxu0 0.0
        %5769 = vmatpush1.msra.mxu0 0.0
        %5770 = vmatprep.subr.mxu0 0.0
        %5771 = vmatpush1.msra.mxu0 0.0
        %5772 = vmatprep.subr.mxu0 0.0
        %5773 = vmatpush1.msra.mxu0 0.0
        %5774 = vmatprep.subr.mxu0 0.0
        %5775 = vmatpush1.msra.mxu0 0.0
        %5776 = vmatprep.subr.mxu0 0.0
        %5777 = vmatpush1.msra.mxu0 0.0
        %5778 = vmatprep.subr.mxu0 0.0
        %5779 = vmatpush1.msra.mxu0 0.0
        %5780 = vmatprep.mubr.f32.mxu0 %v4147
        %5781 = vmatmul.mubr.f32.gmra.mrb[0].mxu0 %v3514
        %v5782 = vpop.f32.mrb[0].mxu0
        %v5783 = vadd.f32 0.0, %v5782
        %v5784 = vpop.f32.mrb[0].mxu0
        %v5785 = vadd.f32 0.0, %v5784
        %5786 = vmatprep.mubr.f32.mxu0 %v4150
        %5787 = vmatmul.mubr.f32.gmra.mrb[0].mxu0 %v3516
        %v5788 = vpop.f32.mrb[0].mxu0
        %v5789 = vadd.f32 0.0, %v5788
        %v5790 = vpop.f32.mrb[0].mxu0
        %v5791 = vadd.f32 0.0, %v5790
        %5792 = vmatprep.mubr.f32.mxu0 %v4153
        %5793 = vmatmul.mubr.f32.gmra.mrb[0].mxu0 %v3518
        %v5794 = vpop.f32.mrb[0].mxu0
        %v5795 = vadd.f32 0.0, %v5794
        %v5796 = vpop.f32.mrb[0].mxu0
        %v5797 = vadd.f32 0.0, %v5796
        %5798 = vmatprep.mubr.f32.mxu0 %v4156
        %5799 = vmatmul.mubr.f32.gmra.mrb[0].mxu0 %v3520
        %v5800 = vpop.f32.mrb[0].mxu0
        %v5801 = vadd.f32 0.0, %v5800
        %v5802 = vpop.f32.mrb[0].mxu0
        %v5803 = vadd.f32 0.0, %v5802
        %5804 = vmatprep.mubr.f32.mxu0 %v4159
        %5805 = vmatmul.mubr.f32.gmra.mrb[0].mxu0 %v3522
        %v5806 = vpop.f32.mrb[0].mxu0
        %v5807 = vadd.f32 0.0, %v5806
        %v5808 = vpop.f32.mrb[0].mxu0
        %v5809 = vadd.f32 0.0, %v5808
        %5810 = vmatprep.mubr.f32.mxu0 %v4162
        %5811 = vmatmul.mubr.f32.gmra.mrb[0].mxu0 %v3524
        %v5812 = vpop.f32.mrb[0].mxu0
        %v5813 = vadd.f32 0.0, %v5812
        %v5814 = vpop.f32.mrb[0].mxu0
        %v5815 = vadd.f32 0.0, %v5814
        %5816 = vmatprep.mubr.f32.mxu0 %v4165
        %5817 = vmatmul.mubr.f32.gmra.mrb[0].mxu0 %v3526
        %v5818 = vpop.f32.mrb[0].mxu0
        %v5819 = vadd.f32 0.0, %v5818
        %v5820 = vpop.f32.mrb[0].mxu0
        %v5821 = vadd.f32 0.0, %v5820
        %5822 = vmatprep.mubr.f32.mxu0 %v4168
        %5823 = vmatmul.mubr.f32.gmra.mrb[0].mxu0 %v3528
        %v5824 = vpop.f32.mrb[0].mxu0
        %v5825 = vadd.f32 0.0, %v5824
        %v5826 = vpop.f32.mrb[0].mxu0
        %v5827 = vadd.f32 0.0, %v5826
        %5828 = vmatprep.mubr.f32.mxu0 %v4171
        %5829 = vmatmul.mubr.f32.gmra.mrb[0].mxu0 %v3530
        %v5830 = vpop.f32.mrb[0].mxu0
        %v5831 = vadd.f32 0.0, %v5830
        %v5832 = vpop.f32.mrb[0].mxu0
        %v5833 = vadd.f32 0.0, %v5832
        %5834 = vmatprep.mubr.f32.mxu0 %v4174
        %5835 = vmatmul.mubr.f32.gmra.mrb[0].mxu0 %v3532
        %v5836 = vpop.f32.mrb[0].mxu0
        %v5837 = vadd.f32 0.0, %v5836
        %v5838 = vpop.f32.mrb[0].mxu0
        %v5839 = vadd.f32 0.0, %v5838
        %5840 = vmatprep.mubr.f32.mxu0 %v4177
        %5841 = vmatmul.mubr.f32.gmra.mrb[0].mxu0 %v3534
        %v5842 = vpop.f32.mrb[0].mxu0
        %v5843 = vadd.f32 0.0, %v5842
        %v5844 = vpop.f32.mrb[0].mxu0
        %v5845 = vadd.f32 0.0, %v5844
        %5846 = vmatprep.mubr.f32.mxu0 %v4180
        %5847 = vmatmul.mubr.f32.gmra.mrb[0].mxu0 %v3536
        %v5848 = vpop.f32.mrb[0].mxu0
        %v5849 = vadd.f32 0.0, %v5848
        %v5850 = vpop.f32.mrb[0].mxu0
        %v5851 = vadd.f32 0.0, %v5850
        %5852 = vmatprep.mubr.f32.mxu0 %v4183
        %5853 = vmatmul.mubr.f32.gmra.mrb[0].mxu0 %v3538
        %v5854 = vpop.f32.mrb[0].mxu0
        %v5855 = vadd.f32 0.0, %v5854
        %v5856 = vpop.f32.mrb[0].mxu0
        %v5857 = vadd.f32 0.0, %v5856
        %5858 = vmatprep.mubr.f32.mxu0 %v4186
        %5859 = vmatmul.mubr.f32.gmra.mrb[0].mxu0 %v3540
        %v5860 = vpop.f32.mrb[0].mxu0
        %v5861 = vadd.f32 0.0, %v5860
        %v5862 = vpop.f32.mrb[0].mxu0
        %v5863 = vadd.f32 0.0, %v5862
        %5864 = vmatprep.mubr.f32.mxu0 %v4189
        %5865 = vmatmul.mubr.f32.gmra.mrb[0].mxu0 %v3542
        %v5866 = vpop.f32.mrb[0].mxu0
        %v5867 = vadd.f32 0.0, %v5866
        %v5868 = vpop.f32.mrb[0].mxu0
        %v5869 = vadd.f32 0.0, %v5868
        %5870 = vmatprep.mubr.f32.mxu0 %v4192
        %5871 = vmatmul.mubr.f32.gmra.mrb[0].mxu0 %v3544
        %v5872 = vpop.f32.mrb[0].mxu0
        %v5873 = vadd.f32 0.0, %v5872
        %v5874 = vpop.f32.mrb[0].mxu0
        %v5875 = vadd.f32 0.0, %v5874
        %5876 = vmatprep.mubr.f32.mxu0 %v4195
        %5877 = vmatmul.mubr.f32.gmra.mrb[0].mxu0 %v3546
        %v5878 = vpop.f32.mrb[0].mxu0
        %v5879 = vadd.f32 0.0, %v5878
        %v5880 = vpop.f32.mrb[0].mxu0
        %v5881 = vadd.f32 0.0, %v5880
        %5882 = vmatprep.mubr.f32.mxu0 %v4198
        %5883 = vmatmul.mubr.f32.gmra.mrb[0].mxu0 %v3548
        %v5884 = vpop.f32.mrb[0].mxu0
        %v5885 = vadd.f32 0.0, %v5884
        %v5886 = vpop.f32.mrb[0].mxu0
        %v5887 = vadd.f32 0.0, %v5886
        %5888 = vmatprep.mubr.f32.mxu0 %v4201
        %5889 = vmatmul.mubr.f32.gmra.mrb[0].mxu0 %v3550
        %v5890 = vpop.f32.mrb[0].mxu0
        %v5891 = vadd.f32 0.0, %v5890
        %v5892 = vpop.f32.mrb[0].mxu0
        %v5893 = vadd.f32 0.0, %v5892
        %5894 = vmatprep.mubr.f32.mxu0 %v4204
        %5895 = vmatmul.mubr.f32.gmra.mrb[0].mxu0 %v3552
        %v5896 = vpop.f32.mrb[0].mxu0
        %v5897 = vadd.f32 0.0, %v5896
        %v5898 = vpop.f32.mrb[0].mxu0
        %v5899 = vadd.f32 0.0, %v5898
        %5900 = vmatprep.mubr.f32.mxu0 %v4207
        %5901 = vmatmul.mubr.f32.gmra.mrb[0].mxu0 %v3554
        %v5902 = vpop.f32.mrb[0].mxu0
        %v5903 = vadd.f32 0.0, %v5902
        %v5904 = vpop.f32.mrb[0].mxu0
        %v5905 = vadd.f32 0.0, %v5904
        %5906 = vmatprep.mubr.f32.mxu0 %v4210
        %5907 = vmatmul.mubr.f32.gmra.mrb[0].mxu0 %v3556
        %v5908 = vpop.f32.mrb[0].mxu0
        %v5909 = vadd.f32 0.0, %v5908
        %v5910 = vpop.f32.mrb[0].mxu0
        %v5911 = vadd.f32 0.0, %v5910
        %5912 = vmatprep.mubr.f32.mxu0 %v4213
        %5913 = vmatmul.mubr.f32.gmra.mrb[0].mxu0 %v3558
        %v5914 = vpop.f32.mrb[0].mxu0
        %v5915 = vadd.f32 0.0, %v5914
        %v5916 = vpop.f32.mrb[0].mxu0
        %v5917 = vadd.f32 0.0, %v5916
        %5918 = vmatprep.mubr.f32.mxu0 %v4216
        %5919 = vmatmul.mubr.f32.gmra.mrb[0].mxu0 %v3560
        %v5920 = vpop.f32.mrb[0].mxu0
        %v5921 = vadd.f32 0.0, %v5920
        %v5922 = vpop.f32.mrb[0].mxu0
        %v5923 = vadd.f32 0.0, %v5922
        %5924 = vmatprep.mubr.f32.mxu0 %v4219
        %5925 = vmatmul.mubr.f32.gmra.mrb[0].mxu0 %v3562
        %v5926 = vpop.f32.mrb[0].mxu0
        %v5927 = vadd.f32 0.0, %v5926
        %v5928 = vpop.f32.mrb[0].mxu0
        %v5929 = vadd.f32 0.0, %v5928
        %5930 = vmatprep.mubr.f32.mxu0 %v4222
        %5931 = vmatmul.mubr.f32.gmra.mrb[0].mxu0 %v3564
        %v5932 = vpop.f32.mrb[0].mxu0
        %v5933 = vadd.f32 0.0, %v5932
        %v5934 = vpop.f32.mrb[0].mxu0
        %v5935 = vadd.f32 0.0, %v5934
        %5936 = vmatprep.mubr.f32.mxu0 %v4225
        %5937 = vmatmul.mubr.f32.gmra.mrb[0].mxu0 %v3566
        %v5938 = vpop.f32.mrb[0].mxu0
        %v5939 = vadd.f32 0.0, %v5938
        %v5940 = vpop.f32.mrb[0].mxu0
        %v5941 = vadd.f32 0.0, %v5940
        %5942 = vmatprep.mubr.f32.mxu0 %v4228
        %5943 = vmatmul.mubr.f32.gmra.mrb[0].mxu0 %v3568
        %v5944 = vpop.f32.mrb[0].mxu0
        %v5945 = vadd.f32 0.0, %v5944
        %v5946 = vpop.f32.mrb[0].mxu0
        %v5947 = vadd.f32 0.0, %v5946
        %5948 = vmatprep.mubr.f32.mxu0 %v4231
        %5949 = vmatmul.mubr.f32.gmra.mrb[0].mxu0 %v3570
        %v5950 = vpop.f32.mrb[0].mxu0
        %v5951 = vadd.f32 0.0, %v5950
        %v5952 = vpop.f32.mrb[0].mxu0
        %v5953 = vadd.f32 0.0, %v5952
        %5954 = vmatprep.mubr.f32.mxu0 %v4234
        %5955 = vmatmul.mubr.f32.gmra.mrb[0].mxu0 %v3572
        %v5956 = vpop.f32.mrb[0].mxu0
        %v5957 = vadd.f32 0.0, %v5956
        %v5958 = vpop.f32.mrb[0].mxu0
        %v5959 = vadd.f32 0.0, %v5958
        %5960 = vmatprep.mubr.f32.mxu0 %v4237
        %5961 = vmatmul.mubr.f32.gmra.mrb[0].mxu0 %v3574
        %v5962 = vpop.f32.mrb[0].mxu0
        %v5963 = vadd.f32 0.0, %v5962
        %v5964 = vpop.f32.mrb[0].mxu0
        %v5965 = vadd.f32 0.0, %v5964
        %5966 = vmatprep.mubr.f32.mxu0 %v4144
        %5967 = vmatmul.mubr.f32.gmra.mrb[0].mxu0 %v3512
        %v5968 = vpop.f32.mrb[0].mxu0
        %v5969 = vadd.f32 0.0, %v5968
        %v5970 = vpop.f32.mrb[0].mxu0
        %v5971 = vadd.f32 0.0, %v5970
        %5972 = vdwg.mxu0
        %v5973 = vadd.f32 %v5609, %v5783
        %v5974 = vadd.f32 %v5610, %v5785
        %v5975 = vadd.f32 %v5611, %v5789
        %v5976 = vadd.f32 %v5612, %v5791
        %v5977 = vadd.f32 %v5613, %v5795
        %v5978 = vadd.f32 %v5614, %v5797
        %v5979 = vadd.f32 %v5615, %v5801
        %v5980 = vadd.f32 %v5616, %v5803
        %v5981 = vadd.f32 %v5617, %v5807
        %v5982 = vadd.f32 %v5618, %v5809
        %v5983 = vadd.f32 %v5619, %v5813
        %v5984 = vadd.f32 %v5620, %v5815
        %v5985 = vadd.f32 %v5621, %v5819
        %v5986 = vadd.f32 %v5622, %v5821
        %v5987 = vadd.f32 %v5623, %v5825
        %v5988 = vadd.f32 %v5624, %v5827
        %v5989 = vadd.f32 %v5625, %v5831
        %v5990 = vadd.f32 %v5626, %v5833
        %v5991 = vadd.f32 %v5627, %v5837
        %v5992 = vadd.f32 %v5628, %v5839
        %v5993 = vadd.f32 %v5629, %v5843
        %v5994 = vadd.f32 %v5630, %v5845
        %v5995 = vadd.f32 %v5631, %v5849
        %v5996 = vadd.f32 %v5632, %v5851
        %v5997 = vadd.f32 %v5633, %v5855
        %v5998 = vadd.f32 %v5634, %v5857
        %v5999 = vadd.f32 %v5635, %v5861
        %v6000 = vadd.f32 %v5636, %v5863
        %v6001 = vadd.f32 %v5637, %v5867
        %v6002 = vadd.f32 %v5638, %v5869
        %v6003 = vadd.f32 %v5639, %v5873
        %v6004 = vadd.f32 %v5640, %v5875
        %v6005 = vadd.f32 %v5641, %v5879
        %v6006 = vadd.f32 %v5642, %v5881
        %v6007 = vadd.f32 %v5643, %v5885
        %v6008 = vadd.f32 %v5644, %v5887
        %v6009 = vadd.f32 %v5645, %v5891
        %v6010 = vadd.f32 %v5646, %v5893
        %v6011 = vadd.f32 %v5647, %v5897
        %v6012 = vadd.f32 %v5648, %v5899
        %v6013 = vadd.f32 %v5649, %v5903
        %v6014 = vadd.f32 %v5650, %v5905
        %v6015 = vadd.f32 %v5651, %v5909
        %v6016 = vadd.f32 %v5652, %v5911
        %v6017 = vadd.f32 %v5653, %v5915
        %v6018 = vadd.f32 %v5654, %v5917
        %v6019 = vadd.f32 %v5655, %v5921
        %v6020 = vadd.f32 %v5656, %v5923
        %v6021 = vadd.f32 %v5657, %v5927
        %v6022 = vadd.f32 %v5658, %v5929
        %v6023 = vadd.f32 %v5659, %v5933
        %v6024 = vadd.f32 %v5660, %v5935
        %v6025 = vadd.f32 %v5661, %v5939
        %v6026 = vadd.f32 %v5662, %v5941
        %v6027 = vadd.f32 %v5663, %v5945
        %v6028 = vadd.f32 %v5664, %v5947
        %v6029 = vadd.f32 %v5665, %v5951
        %v6030 = vadd.f32 %v5666, %v5953
        %v6031 = vadd.f32 %v5667, %v5957
        %v6032 = vadd.f32 %v5668, %v5959
        %v6033 = vadd.f32 %v5669, %v5963
        %v6034 = vadd.f32 %v5670, %v5965
        %v6035 = vadd.f32 %v5671, %v5969
        %v6036 = vadd.f32 %v5672, %v5971
        %s6037 = scalar_lea.vmem %s7, 1
        %v6038 = vld [vmem:[%s6037] ss:$8 sm:$0x3]
        %v6040 = vlaneseq
        %v6041 = vshrl.u32 %v6040, 7
        %v6042 = vsub.s32 0, %v6041
        %v6043 = vrot.slane %v6038, %v6042
        %v6044 = vlaneseq
        %v6045 = vshrl.u32 %v6044, 7
        %v6046 = vsub.s32 1, %v6045
        %v6047 = vrot.slane %v6038, %v6046
        %v6050 = vadd.f32 %v5973, %v6043
        %v6051 = vadd.f32 %v5974, %v6047
        %v6052 = vadd.f32 %v5975, %v6043
        %v6053 = vadd.f32 %v5976, %v6047
        %v6054 = vadd.f32 %v5977, %v6043
        %v6055 = vadd.f32 %v5978, %v6047
        %v6056 = vadd.f32 %v5979, %v6043
        %v6057 = vadd.f32 %v5980, %v6047
        %v6058 = vadd.f32 %v5981, %v6043
        %v6059 = vadd.f32 %v5982, %v6047
        %v6060 = vadd.f32 %v5983, %v6043
        %v6061 = vadd.f32 %v5984, %v6047
        %v6062 = vadd.f32 %v5985, %v6043
        %v6063 = vadd.f32 %v5986, %v6047
        %v6064 = vadd.f32 %v5987, %v6043
        %v6065 = vadd.f32 %v5988, %v6047
        %v6066 = vadd.f32 %v5989, %v6043
        %v6067 = vadd.f32 %v5990, %v6047
        %v6068 = vadd.f32 %v5991, %v6043
        %v6069 = vadd.f32 %v5992, %v6047
        %v6070 = vadd.f32 %v5993, %v6043
        %v6071 = vadd.f32 %v5994, %v6047
        %v6072 = vadd.f32 %v5995, %v6043
        %v6073 = vadd.f32 %v5996, %v6047
        %v6074 = vadd.f32 %v5997, %v6043
        %v6075 = vadd.f32 %v5998, %v6047
        %v6076 = vadd.f32 %v5999, %v6043
        %v6077 = vadd.f32 %v6000, %v6047
        %v6078 = vadd.f32 %v6001, %v6043
        %v6079 = vadd.f32 %v6002, %v6047
        %v6080 = vadd.f32 %v6003, %v6043
        %v6081 = vadd.f32 %v6004, %v6047
        %v6082 = vadd.f32 %v6005, %v6043
        %v6083 = vadd.f32 %v6006, %v6047
        %v6084 = vadd.f32 %v6007, %v6043
        %v6085 = vadd.f32 %v6008, %v6047
        %v6086 = vadd.f32 %v6009, %v6043
        %v6087 = vadd.f32 %v6010, %v6047
        %v6088 = vadd.f32 %v6011, %v6043
        %v6089 = vadd.f32 %v6012, %v6047
        %v6090 = vadd.f32 %v6013, %v6043
        %v6091 = vadd.f32 %v6014, %v6047
        %v6092 = vadd.f32 %v6015, %v6043
        %v6093 = vadd.f32 %v6016, %v6047
        %v6094 = vadd.f32 %v6017, %v6043
        %v6095 = vadd.f32 %v6018, %v6047
        %v6096 = vadd.f32 %v6019, %v6043
        %v6097 = vadd.f32 %v6020, %v6047
        %v6098 = vadd.f32 %v6021, %v6043
        %v6099 = vadd.f32 %v6022, %v6047
        %v6100 = vadd.f32 %v6023, %v6043
        %v6101 = vadd.f32 %v6024, %v6047
        %v6102 = vadd.f32 %v6025, %v6043
        %v6103 = vadd.f32 %v6026, %v6047
        %v6104 = vadd.f32 %v6027, %v6043
        %v6105 = vadd.f32 %v6028, %v6047
        %v6106 = vadd.f32 %v6029, %v6043
        %v6107 = vadd.f32 %v6030, %v6047
        %v6108 = vadd.f32 %v6031, %v6043
        %v6109 = vadd.f32 %v6032, %v6047
        %v6110 = vadd.f32 %v6033, %v6043
        %v6111 = vadd.f32 %v6034, %v6047
        %v6112 = vadd.f32 %v6035, %v6043
        %v6113 = vadd.f32 %v6036, %v6047
        %v6114 = vmul.f32 %v6050, 0.5
        %v6115 = vmul.f32 %v6051, 0.5
        %v6116 = vmul.f32 %v6052, 0.5
        %v6117 = vmul.f32 %v6053, 0.5
        %v6118 = vmul.f32 %v6054, 0.5
        %v6119 = vmul.f32 %v6055, 0.5
        %v6120 = vmul.f32 %v6056, 0.5
        %v6121 = vmul.f32 %v6057, 0.5
        %v6122 = vmul.f32 %v6058, 0.5
        %v6123 = vmul.f32 %v6059, 0.5
        %v6124 = vmul.f32 %v6060, 0.5
        %v6125 = vmul.f32 %v6061, 0.5
        %v6126 = vmul.f32 %v6062, 0.5
        %v6127 = vmul.f32 %v6063, 0.5
        %v6128 = vmul.f32 %v6064, 0.5
        %v6129 = vmul.f32 %v6065, 0.5
        %v6130 = vmul.f32 %v6066, 0.5
        %v6131 = vmul.f32 %v6067, 0.5
        %v6132 = vmul.f32 %v6068, 0.5
        %v6133 = vmul.f32 %v6069, 0.5
        %v6134 = vmul.f32 %v6070, 0.5
        %v6135 = vmul.f32 %v6071, 0.5
        %v6136 = vmul.f32 %v6072, 0.5
        %v6137 = vmul.f32 %v6073, 0.5
        %v6138 = vmul.f32 %v6074, 0.5
        %v6139 = vmul.f32 %v6075, 0.5
        %v6140 = vmul.f32 %v6076, 0.5
        %v6141 = vmul.f32 %v6077, 0.5
        %v6142 = vmul.f32 %v6078, 0.5
        %v6143 = vmul.f32 %v6079, 0.5
        %v6144 = vmul.f32 %v6080, 0.5
        %v6145 = vmul.f32 %v6081, 0.5
        %v6146 = vmul.f32 %v6082, 0.5
        %v6147 = vmul.f32 %v6083, 0.5
        %v6148 = vmul.f32 %v6084, 0.5
        %v6149 = vmul.f32 %v6085, 0.5
        %v6150 = vmul.f32 %v6086, 0.5
        %v6151 = vmul.f32 %v6087, 0.5
        %v6152 = vmul.f32 %v6088, 0.5
        %v6153 = vmul.f32 %v6089, 0.5
        %v6154 = vmul.f32 %v6090, 0.5
        %v6155 = vmul.f32 %v6091, 0.5
        %v6156 = vmul.f32 %v6092, 0.5
        %v6157 = vmul.f32 %v6093, 0.5
        %v6158 = vmul.f32 %v6094, 0.5
        %v6159 = vmul.f32 %v6095, 0.5
        %v6160 = vmul.f32 %v6096, 0.5
        %v6161 = vmul.f32 %v6097, 0.5
        %v6162 = vmul.f32 %v6098, 0.5
        %v6163 = vmul.f32 %v6099, 0.5
        %v6164 = vmul.f32 %v6100, 0.5
        %v6165 = vmul.f32 %v6101, 0.5
        %v6166 = vmul.f32 %v6102, 0.5
        %v6167 = vmul.f32 %v6103, 0.5
        %v6168 = vmul.f32 %v6104, 0.5
        %v6169 = vmul.f32 %v6105, 0.5
        %v6170 = vmul.f32 %v6106, 0.5
        %v6171 = vmul.f32 %v6107, 0.5
        %v6172 = vmul.f32 %v6108, 0.5
        %v6173 = vmul.f32 %v6109, 0.5
        %v6174 = vmul.f32 %v6110, 0.5
        %v6175 = vmul.f32 %v6111, 0.5
        %v6176 = vmul.f32 %v6112, 0.5
        %v6177 = vmul.f32 %v6113, 0.5
        %v6178 = vtanh.pop %v6114
        %v6179 = vtanh.pop %v6115
        %v6180 = vtanh.pop %v6116
        %v6181 = vtanh.pop %v6117
        %v6182 = vtanh.pop %v6118
        %v6183 = vtanh.pop %v6119
        %v6184 = vtanh.pop %v6120
        %v6185 = vtanh.pop %v6121
        %v6186 = vtanh.pop %v6122
        %v6187 = vtanh.pop %v6123
        %v6188 = vtanh.pop %v6124
        %v6189 = vtanh.pop %v6125
        %v6190 = vtanh.pop %v6126
        %v6191 = vtanh.pop %v6127
        %v6192 = vtanh.pop %v6128
        %v6193 = vtanh.pop %v6129
        %v6194 = vtanh.pop %v6130
        %v6195 = vtanh.pop %v6131
        %v6196 = vtanh.pop %v6132
        %v6197 = vtanh.pop %v6133
        %v6198 = vtanh.pop %v6134
        %v6199 = vtanh.pop %v6135
        %v6200 = vtanh.pop %v6136
        %v6201 = vtanh.pop %v6137
        %v6202 = vtanh.pop %v6138
        %v6203 = vtanh.pop %v6139
        %v6204 = vtanh.pop %v6140
        %v6205 = vtanh.pop %v6141
        %v6206 = vtanh.pop %v6142
        %v6207 = vtanh.pop %v6143
        %v6208 = vtanh.pop %v6144
        %v6209 = vtanh.pop %v6145
        %v6210 = vtanh.pop %v6146
        %v6211 = vtanh.pop %v6147
        %v6212 = vtanh.pop %v6148
        %v6213 = vtanh.pop %v6149
        %v6214 = vtanh.pop %v6150
        %v6215 = vtanh.pop %v6151
        %v6216 = vtanh.pop %v6152
        %v6217 = vtanh.pop %v6153
        %v6218 = vtanh.pop %v6154
        %v6219 = vtanh.pop %v6155
        %v6220 = vtanh.pop %v6156
        %v6221 = vtanh.pop %v6157
        %v6222 = vtanh.pop %v6158
        %v6223 = vtanh.pop %v6159
        %v6224 = vtanh.pop %v6160
        %v6225 = vtanh.pop %v6161
        %v6226 = vtanh.pop %v6162
        %v6227 = vtanh.pop %v6163
        %v6228 = vtanh.pop %v6164
        %v6229 = vtanh.pop %v6165
        %v6230 = vtanh.pop %v6166
        %v6231 = vtanh.pop %v6167
        %v6232 = vtanh.pop %v6168
        %v6233 = vtanh.pop %v6169
        %v6234 = vtanh.pop %v6170
        %v6235 = vtanh.pop %v6171
        %v6236 = vtanh.pop %v6172
        %v6237 = vtanh.pop %v6173
        %v6238 = vtanh.pop %v6174
        %v6239 = vtanh.pop %v6175
        %v6240 = vtanh.pop %v6176
        %v6241 = vtanh.pop %v6177
        %v6242 = vadd.f32 %v6178, 1.0
        %v6243 = vadd.f32 %v6179, 1.0
        %v6244 = vadd.f32 %v6180, 1.0
        %v6245 = vadd.f32 %v6181, 1.0
        %v6246 = vadd.f32 %v6182, 1.0
        %v6247 = vadd.f32 %v6183, 1.0
        %v6248 = vadd.f32 %v6184, 1.0
        %v6249 = vadd.f32 %v6185, 1.0
        %v6250 = vadd.f32 %v6186, 1.0
        %v6251 = vadd.f32 %v6187, 1.0
        %v6252 = vadd.f32 %v6188, 1.0
        %v6253 = vadd.f32 %v6189, 1.0
        %v6254 = vadd.f32 %v6190, 1.0
        %v6255 = vadd.f32 %v6191, 1.0
        %v6256 = vadd.f32 %v6192, 1.0
        %v6257 = vadd.f32 %v6193, 1.0
        %v6258 = vadd.f32 %v6194, 1.0
        %v6259 = vadd.f32 %v6195, 1.0
        %v6260 = vadd.f32 %v6196, 1.0
        %v6261 = vadd.f32 %v6197, 1.0
        %v6262 = vadd.f32 %v6198, 1.0
        %v6263 = vadd.f32 %v6199, 1.0
        %v6264 = vadd.f32 %v6200, 1.0
        %v6265 = vadd.f32 %v6201, 1.0
        %v6266 = vadd.f32 %v6202, 1.0
        %v6267 = vadd.f32 %v6203, 1.0
        %v6268 = vadd.f32 %v6204, 1.0
        %v6269 = vadd.f32 %v6205, 1.0
        %v6270 = vadd.f32 %v6206, 1.0
        %v6271 = vadd.f32 %v6207, 1.0
        %v6272 = vadd.f32 %v6208, 1.0
        %v6273 = vadd.f32 %v6209, 1.0
        %v6274 = vadd.f32 %v6210, 1.0
        %v6275 = vadd.f32 %v6211, 1.0
        %v6276 = vadd.f32 %v6212, 1.0
        %v6277 = vadd.f32 %v6213, 1.0
        %v6278 = vadd.f32 %v6214, 1.0
        %v6279 = vadd.f32 %v6215, 1.0
        %v6280 = vadd.f32 %v6216, 1.0
        %v6281 = vadd.f32 %v6217, 1.0
        %v6282 = vadd.f32 %v6218, 1.0
        %v6283 = vadd.f32 %v6219, 1.0
        %v6284 = vadd.f32 %v6220, 1.0
        %v6285 = vadd.f32 %v6221, 1.0
        %v6286 = vadd.f32 %v6222, 1.0
        %v6287 = vadd.f32 %v6223, 1.0
        %v6288 = vadd.f32 %v6224, 1.0
        %v6289 = vadd.f32 %v6225, 1.0
        %v6290 = vadd.f32 %v6226, 1.0
        %v6291 = vadd.f32 %v6227, 1.0
        %v6292 = vadd.f32 %v6228, 1.0
        %v6293 = vadd.f32 %v6229, 1.0
        %v6294 = vadd.f32 %v6230, 1.0
        %v6295 = vadd.f32 %v6231, 1.0
        %v6296 = vadd.f32 %v6232, 1.0
        %v6297 = vadd.f32 %v6233, 1.0
        %v6298 = vadd.f32 %v6234, 1.0
        %v6299 = vadd.f32 %v6235, 1.0
        %v6300 = vadd.f32 %v6236, 1.0
        %v6301 = vadd.f32 %v6237, 1.0
        %v6302 = vadd.f32 %v6238, 1.0
        %v6303 = vadd.f32 %v6239, 1.0
        %v6304 = vadd.f32 %v6240, 1.0
        %v6305 = vadd.f32 %v6241, 1.0
        %v6306 = vmul.f32 %v6242, 0.5
        %v6307 = vmul.f32 %v6243, 0.5
        %v6308 = vmul.f32 %v6244, 0.5
        %v6309 = vmul.f32 %v6245, 0.5
        %v6310 = vmul.f32 %v6246, 0.5
        %v6311 = vmul.f32 %v6247, 0.5
        %v6312 = vmul.f32 %v6248, 0.5
        %v6313 = vmul.f32 %v6249, 0.5
        %v6314 = vmul.f32 %v6250, 0.5
        %v6315 = vmul.f32 %v6251, 0.5
        %v6316 = vmul.f32 %v6252, 0.5
        %v6317 = vmul.f32 %v6253, 0.5
        %v6318 = vmul.f32 %v6254, 0.5
        %v6319 = vmul.f32 %v6255, 0.5
        %v6320 = vmul.f32 %v6256, 0.5
        %v6321 = vmul.f32 %v6257, 0.5
        %v6322 = vmul.f32 %v6258, 0.5
        %v6323 = vmul.f32 %v6259, 0.5
        %v6324 = vmul.f32 %v6260, 0.5
        %v6325 = vmul.f32 %v6261, 0.5
        %v6326 = vmul.f32 %v6262, 0.5
        %v6327 = vmul.f32 %v6263, 0.5
        %v6328 = vmul.f32 %v6264, 0.5
        %v6329 = vmul.f32 %v6265, 0.5
        %v6330 = vmul.f32 %v6266, 0.5
        %v6331 = vmul.f32 %v6267, 0.5
        %v6332 = vmul.f32 %v6268, 0.5
        %v6333 = vmul.f32 %v6269, 0.5
        %v6334 = vmul.f32 %v6270, 0.5
        %v6335 = vmul.f32 %v6271, 0.5
        %v6336 = vmul.f32 %v6272, 0.5
        %v6337 = vmul.f32 %v6273, 0.5
        %v6338 = vmul.f32 %v6274, 0.5
        %v6339 = vmul.f32 %v6275, 0.5
        %v6340 = vmul.f32 %v6276, 0.5
        %v6341 = vmul.f32 %v6277, 0.5
        %v6342 = vmul.f32 %v6278, 0.5
        %v6343 = vmul.f32 %v6279, 0.5
        %v6344 = vmul.f32 %v6280, 0.5
        %v6345 = vmul.f32 %v6281, 0.5
        %v6346 = vmul.f32 %v6282, 0.5
        %v6347 = vmul.f32 %v6283, 0.5
        %v6348 = vmul.f32 %v6284, 0.5
        %v6349 = vmul.f32 %v6285, 0.5
        %v6350 = vmul.f32 %v6286, 0.5
        %v6351 = vmul.f32 %v6287, 0.5
        %v6352 = vmul.f32 %v6288, 0.5
        %v6353 = vmul.f32 %v6289, 0.5
        %v6354 = vmul.f32 %v6290, 0.5
        %v6355 = vmul.f32 %v6291, 0.5
        %v6356 = vmul.f32 %v6292, 0.5
        %v6357 = vmul.f32 %v6293, 0.5
        %v6358 = vmul.f32 %v6294, 0.5
        %v6359 = vmul.f32 %v6295, 0.5
        %v6360 = vmul.f32 %v6296, 0.5
        %v6361 = vmul.f32 %v6297, 0.5
        %v6362 = vmul.f32 %v6298, 0.5
        %v6363 = vmul.f32 %v6299, 0.5
        %v6364 = vmul.f32 %v6300, 0.5
        %v6365 = vmul.f32 %v6301, 0.5
        %v6366 = vmul.f32 %v6302, 0.5
        %v6367 = vmul.f32 %v6303, 0.5
        %v6368 = vmul.f32 %v6304, 0.5
        %v6369 = vmul.f32 %v6305, 0.5
        %v6370 = vrot.slane %v6306, 2
        %v6371 = vrot.slane %v6307, 2
        %v6372 = vrot.slane %v6308, 2
        %v6373 = vrot.slane %v6309, 2
        %v6374 = vrot.slane %v6310, 2
        %v6375 = vrot.slane %v6311, 2
        %v6376 = vrot.slane %v6312, 2
        %v6377 = vrot.slane %v6313, 2
        %v6378 = vrot.slane %v6314, 2
        %v6379 = vrot.slane %v6315, 2
        %v6380 = vrot.slane %v6316, 2
        %v6381 = vrot.slane %v6317, 2
        %v6382 = vrot.slane %v6318, 2
        %v6383 = vrot.slane %v6319, 2
        %v6384 = vrot.slane %v6320, 2
        %v6385 = vrot.slane %v6321, 2
        %v6386 = vrot.slane %v6322, 2
        %v6387 = vrot.slane %v6323, 2
        %v6388 = vrot.slane %v6324, 2
        %v6389 = vrot.slane %v6325, 2
        %v6390 = vrot.slane %v6326, 2
        %v6391 = vrot.slane %v6327, 2
        %v6392 = vrot.slane %v6328, 2
        %v6393 = vrot.slane %v6329, 2
        %v6394 = vrot.slane %v6330, 2
        %v6395 = vrot.slane %v6331, 2
        %v6396 = vrot.slane %v6332, 2
        %v6397 = vrot.slane %v6333, 2
        %v6398 = vrot.slane %v6334, 2
        %v6399 = vrot.slane %v6335, 2
        %v6400 = vrot.slane %v6336, 2
        %v6401 = vrot.slane %v6337, 2
        %v6402 = vrot.slane %v6338, 2
        %v6403 = vrot.slane %v6339, 2
        %v6404 = vrot.slane %v6340, 2
        %v6405 = vrot.slane %v6341, 2
        %v6406 = vrot.slane %v6342, 2
        %v6407 = vrot.slane %v6343, 2
        %v6408 = vrot.slane %v6344, 2
        %v6409 = vrot.slane %v6345, 2
        %v6410 = vrot.slane %v6346, 2
        %v6411 = vrot.slane %v6347, 2
        %v6412 = vrot.slane %v6348, 2
        %v6413 = vrot.slane %v6349, 2
        %v6414 = vrot.slane %v6350, 2
        %v6415 = vrot.slane %v6351, 2
        %v6416 = vrot.slane %v6352, 2
        %v6417 = vrot.slane %v6353, 2
        %v6418 = vrot.slane %v6354, 2
        %v6419 = vrot.slane %v6355, 2
        %v6420 = vrot.slane %v6356, 2
        %v6421 = vrot.slane %v6357, 2
        %v6422 = vrot.slane %v6358, 2
        %v6423 = vrot.slane %v6359, 2
        %v6424 = vrot.slane %v6360, 2
        %v6425 = vrot.slane %v6361, 2
        %v6426 = vrot.slane %v6362, 2
        %v6427 = vrot.slane %v6363, 2
        %v6428 = vrot.slane %v6364, 2
        %v6429 = vrot.slane %v6365, 2
        %v6430 = vrot.slane %v6366, 2
        %v6431 = vrot.slane %v6367, 2
        %v6432 = vrot.slane %v6368, 2
        %v6433 = vrot.slane %v6369, 2
        %v6434 = vsel %vm1161, %v6430, %v6432
        %v6435 = vsel %vm1161, %v6431, %v6433
        %v6436 = vsel %vm1161, %v6428, %v6430
        %v6437 = vsel %vm1161, %v6429, %v6431
        %v6438 = vsel %vm1161, %v6426, %v6428
        %v6439 = vsel %vm1161, %v6427, %v6429
        %v6440 = vsel %vm1161, %v6424, %v6426
        %v6441 = vsel %vm1161, %v6425, %v6427
        %v6442 = vsel %vm1161, %v6422, %v6424
        %v6443 = vsel %vm1161, %v6423, %v6425
        %v6444 = vsel %vm1161, %v6420, %v6422
        %v6445 = vsel %vm1161, %v6421, %v6423
        %v6446 = vsel %vm1161, %v6418, %v6420
        %v6447 = vsel %vm1161, %v6419, %v6421
        %v6448 = vsel %vm1161, %v6416, %v6418
        %v6449 = vsel %vm1161, %v6417, %v6419
        %v6450 = vsel %vm1161, %v6414, %v6416
        %v6451 = vsel %vm1161, %v6415, %v6417
        %v6452 = vsel %vm1161, %v6412, %v6414
        %v6453 = vsel %vm1161, %v6413, %v6415
        %v6454 = vsel %vm1161, %v6410, %v6412
        %v6455 = vsel %vm1161, %v6411, %v6413
        %v6456 = vsel %vm1161, %v6408, %v6410
        %v6457 = vsel %vm1161, %v6409, %v6411
        %v6458 = vsel %vm1161, %v6406, %v6408
        %v6459 = vsel %vm1161, %v6407, %v6409
        %v6460 = vsel %vm1161, %v6404, %v6406
        %v6461 = vsel %vm1161, %v6405, %v6407
        %v6462 = vsel %vm1161, %v6402, %v6404
        %v6463 = vsel %vm1161, %v6403, %v6405
        %v6464 = vsel %vm1161, %v6400, %v6402
        %v6465 = vsel %vm1161, %v6401, %v6403
        %v6466 = vsel %vm1161, %v6398, %v6400
        %v6467 = vsel %vm1161, %v6399, %v6401
        %v6468 = vsel %vm1161, %v6396, %v6398
        %v6469 = vsel %vm1161, %v6397, %v6399
        %v6470 = vsel %vm1161, %v6394, %v6396
        %v6471 = vsel %vm1161, %v6395, %v6397
        %v6472 = vsel %vm1161, %v6392, %v6394
        %v6473 = vsel %vm1161, %v6393, %v6395
        %v6474 = vsel %vm1161, %v6390, %v6392
        %v6475 = vsel %vm1161, %v6391, %v6393
        %v6476 = vsel %vm1161, %v6388, %v6390
        %v6477 = vsel %vm1161, %v6389, %v6391
        %v6478 = vsel %vm1161, %v6386, %v6388
        %v6479 = vsel %vm1161, %v6387, %v6389
        %v6480 = vsel %vm1161, %v6384, %v6386
        %v6481 = vsel %vm1161, %v6385, %v6387
        %v6482 = vsel %vm1161, %v6382, %v6384
        %v6483 = vsel %vm1161, %v6383, %v6385
        %v6484 = vsel %vm1161, %v6380, %v6382
        %v6485 = vsel %vm1161, %v6381, %v6383
        %v6486 = vsel %vm1161, %v6378, %v6380
        %v6487 = vsel %vm1161, %v6379, %v6381
        %v6488 = vsel %vm1161, %v6376, %v6378
        %v6489 = vsel %vm1161, %v6377, %v6379
        %v6490 = vsel %vm1161, %v6374, %v6376
        %v6491 = vsel %vm1161, %v6375, %v6377
        %v6492 = vsel %vm1161, %v6372, %v6374
        %v6493 = vsel %vm1161, %v6373, %v6375
        %v6494 = vsel %vm1161, %v6370, %v6372
        %v6495 = vsel %vm1161, %v6371, %v6373
        %v6496 = vsel %vm1161, %v6432, %v6370
        %v6497 = vsel %vm1161, %v6433, %v6371
        %v6498 = vmax.f32 %v6306, %v6494
        %v6499 = vmax.f32 %v6307, %v6495
        %v6500 = vmax.f32 %v6308, %v6492
        %v6501 = vmax.f32 %v6309, %v6493
        %v6502 = vmax.f32 %v6310, %v6490
        %v6503 = vmax.f32 %v6311, %v6491
        %v6504 = vmax.f32 %v6312, %v6488
        %v6505 = vmax.f32 %v6313, %v6489
        %v6506 = vmax.f32 %v6314, %v6486
        %v6507 = vmax.f32 %v6315, %v6487
        %v6508 = vmax.f32 %v6316, %v6484
        %v6509 = vmax.f32 %v6317, %v6485
        %v6510 = vmax.f32 %v6318, %v6482
        %v6511 = vmax.f32 %v6319, %v6483
        %v6512 = vmax.f32 %v6320, %v6480
        %v6513 = vmax.f32 %v6321, %v6481
        %v6514 = vmax.f32 %v6322, %v6478
        %v6515 = vmax.f32 %v6323, %v6479
        %v6516 = vmax.f32 %v6324, %v6476
        %v6517 = vmax.f32 %v6325, %v6477
        %v6518 = vmax.f32 %v6326, %v6474
        %v6519 = vmax.f32 %v6327, %v6475
        %v6520 = vmax.f32 %v6328, %v6472
        %v6521 = vmax.f32 %v6329, %v6473
        %v6522 = vmax.f32 %v6330, %v6470
        %v6523 = vmax.f32 %v6331, %v6471
        %v6524 = vmax.f32 %v6332, %v6468
        %v6525 = vmax.f32 %v6333, %v6469
        %v6526 = vmax.f32 %v6334, %v6466
        %v6527 = vmax.f32 %v6335, %v6467
        %v6528 = vmax.f32 %v6336, %v6464
        %v6529 = vmax.f32 %v6337, %v6465
        %v6530 = vmax.f32 %v6338, %v6462
        %v6531 = vmax.f32 %v6339, %v6463
        %v6532 = vmax.f32 %v6340, %v6460
        %v6533 = vmax.f32 %v6341, %v6461
        %v6534 = vmax.f32 %v6342, %v6458
        %v6535 = vmax.f32 %v6343, %v6459
        %v6536 = vmax.f32 %v6344, %v6456
        %v6537 = vmax.f32 %v6345, %v6457
        %v6538 = vmax.f32 %v6346, %v6454
        %v6539 = vmax.f32 %v6347, %v6455
        %v6540 = vmax.f32 %v6348, %v6452
        %v6541 = vmax.f32 %v6349, %v6453
        %v6542 = vmax.f32 %v6350, %v6450
        %v6543 = vmax.f32 %v6351, %v6451
        %v6544 = vmax.f32 %v6352, %v6448
        %v6545 = vmax.f32 %v6353, %v6449
        %v6546 = vmax.f32 %v6354, %v6446
        %v6547 = vmax.f32 %v6355, %v6447
        %v6548 = vmax.f32 %v6356, %v6444
        %v6549 = vmax.f32 %v6357, %v6445
        %v6550 = vmax.f32 %v6358, %v6442
        %v6551 = vmax.f32 %v6359, %v6443
        %v6552 = vmax.f32 %v6360, %v6440
        %v6553 = vmax.f32 %v6361, %v6441
        %v6554 = vmax.f32 %v6362, %v6438
        %v6555 = vmax.f32 %v6363, %v6439
        %v6556 = vmax.f32 %v6364, %v6436
        %v6557 = vmax.f32 %v6365, %v6437
        %v6558 = vmax.f32 %v6366, %v6434
        %v6559 = vmax.f32 %v6367, %v6435
        %v6560 = vmax.f32 %v6368, %v6496
        %v6561 = vmax.f32 %v6369, %v6497
        %vm6562 = vcmask 1047808
        %6563 = vrot.lane.b32.xlu0 %v6498, 32
        %v6564 = vpop.permute.xlu0 %6563
        %6565 = vrot.lane.b32.xlu0 %v6500, 32
        %v6566 = vpop.permute.xlu0 %6565
        %6567 = vrot.lane.b32.xlu0 %v6502, 32
        %v6568 = vpop.permute.xlu0 %6567
        %6569 = vrot.lane.b32.xlu0 %v6504, 32
        %v6570 = vpop.permute.xlu0 %6569
        %6571 = vrot.lane.b32.xlu0 %v6506, 32
        %v6572 = vpop.permute.xlu0 %6571
        %6573 = vrot.lane.b32.xlu0 %v6508, 32
        %v6574 = vpop.permute.xlu0 %6573
        %6575 = vrot.lane.b32.xlu0 %v6510, 32
        %v6576 = vpop.permute.xlu0 %6575
        %6577 = vrot.lane.b32.xlu0 %v6512, 32
        %v6578 = vpop.permute.xlu0 %6577
        %6579 = vrot.lane.b32.xlu0 %v6514, 32
        %v6580 = vpop.permute.xlu0 %6579
        %6581 = vrot.lane.b32.xlu0 %v6516, 32
        %v6582 = vpop.permute.xlu0 %6581
        %6583 = vrot.lane.b32.xlu0 %v6518, 32
        %v6584 = vpop.permute.xlu0 %6583
        %6585 = vrot.lane.b32.xlu0 %v6520, 32
        %v6586 = vpop.permute.xlu0 %6585
        %6587 = vrot.lane.b32.xlu0 %v6522, 32
        %v6588 = vpop.permute.xlu0 %6587
        %6589 = vrot.lane.b32.xlu0 %v6524, 32
        %v6590 = vpop.permute.xlu0 %6589
        %6591 = vrot.lane.b32.xlu0 %v6526, 32
        %v6592 = vpop.permute.xlu0 %6591
        %6593 = vrot.lane.b32.xlu0 %v6528, 32
        %v6594 = vpop.permute.xlu0 %6593
        %6595 = vrot.lane.b32.xlu0 %v6530, 32
        %v6596 = vpop.permute.xlu0 %6595
        %6597 = vrot.lane.b32.xlu0 %v6532, 32
        %v6598 = vpop.permute.xlu0 %6597
        %6599 = vrot.lane.b32.xlu0 %v6534, 32
        %v6600 = vpop.permute.xlu0 %6599
        %6601 = vrot.lane.b32.xlu0 %v6536, 32
        %v6602 = vpop.permute.xlu0 %6601
        %6603 = vrot.lane.b32.xlu0 %v6538, 32
        %v6604 = vpop.permute.xlu0 %6603
        %6605 = vrot.lane.b32.xlu0 %v6540, 32
        %v6606 = vpop.permute.xlu0 %6605
        %6607 = vrot.lane.b32.xlu0 %v6542, 32
        %v6608 = vpop.permute.xlu0 %6607
        %6609 = vrot.lane.b32.xlu0 %v6544, 32
        %v6610 = vpop.permute.xlu0 %6609
        %6611 = vrot.lane.b32.xlu0 %v6546, 32
        %v6612 = vpop.permute.xlu0 %6611
        %6613 = vrot.lane.b32.xlu0 %v6548, 32
        %v6614 = vpop.permute.xlu0 %6613
        %6615 = vrot.lane.b32.xlu0 %v6550, 32
        %v6616 = vpop.permute.xlu0 %6615
        %6617 = vrot.lane.b32.xlu0 %v6552, 32
        %v6618 = vpop.permute.xlu0 %6617
        %6619 = vrot.lane.b32.xlu0 %v6554, 32
        %v6620 = vpop.permute.xlu0 %6619
        %6621 = vrot.lane.b32.xlu0 %v6556, 32
        %v6622 = vpop.permute.xlu0 %6621
        %6623 = vrot.lane.b32.xlu0 %v6558, 32
        %v6624 = vpop.permute.xlu0 %6623
        %6625 = vrot.lane.b32.xlu0 %v6560, 32
        %v6626 = vpop.permute.xlu0 %6625
        %v6627 = vsel %vm6562, %v6564, %v6499
        %v6628 = vsel %vm6562, %v6566, %v6501
        %v6629 = vsel %vm6562, %v6568, %v6503
        %v6630 = vsel %vm6562, %v6570, %v6505
        %v6631 = vsel %vm6562, %v6572, %v6507
        %v6632 = vsel %vm6562, %v6574, %v6509
        %v6633 = vsel %vm6562, %v6576, %v6511
        %v6634 = vsel %vm6562, %v6578, %v6513
        %v6635 = vsel %vm6562, %v6580, %v6515
        %v6636 = vsel %vm6562, %v6582, %v6517
        %v6637 = vsel %vm6562, %v6584, %v6519
        %v6638 = vsel %vm6562, %v6586, %v6521
        %v6639 = vsel %vm6562, %v6588, %v6523
        %v6640 = vsel %vm6562, %v6590, %v6525
        %v6641 = vsel %vm6562, %v6592, %v6527
        %v6642 = vsel %vm6562, %v6594, %v6529
        %v6643 = vsel %vm6562, %v6596, %v6531
        %v6644 = vsel %vm6562, %v6598, %v6533
        %v6645 = vsel %vm6562, %v6600, %v6535
        %v6646 = vsel %vm6562, %v6602, %v6537
        %v6647 = vsel %vm6562, %v6604, %v6539
        %v6648 = vsel %vm6562, %v6606, %v6541
        %v6649 = vsel %vm6562, %v6608, %v6543
        %v6650 = vsel %vm6562, %v6610, %v6545
        %v6651 = vsel %vm6562, %v6612, %v6547
        %v6652 = vsel %vm6562, %v6614, %v6549
        %v6653 = vsel %vm6562, %v6616, %v6551
        %v6654 = vsel %vm6562, %v6618, %v6553
        %v6655 = vsel %vm6562, %v6620, %v6555
        %v6656 = vsel %vm6562, %v6622, %v6557
        %v6657 = vsel %vm6562, %v6624, %v6559
        %v6658 = vsel %vm6562, %v6626, %v6561
        %6723 = vrot.lane.b32.xlu0 %v6498, 127
        %v6724 = vpop.permute.xlu0 %6723
        %6725 = vrot.lane.b32.xlu0 %v6627, 127
        %v6726 = vpop.permute.xlu0 %6725
        %6727 = vrot.lane.b32.xlu0 %v6500, 127
        %v6728 = vpop.permute.xlu0 %6727
        %6729 = vrot.lane.b32.xlu0 %v6628, 127
        %v6730 = vpop.permute.xlu0 %6729
        %6731 = vrot.lane.b32.xlu0 %v6502, 127
        %v6732 = vpop.permute.xlu0 %6731
        %6733 = vrot.lane.b32.xlu0 %v6629, 127
        %v6734 = vpop.permute.xlu0 %6733
        %6735 = vrot.lane.b32.xlu0 %v6504, 127
        %v6736 = vpop.permute.xlu0 %6735
        %6737 = vrot.lane.b32.xlu0 %v6630, 127
        %v6738 = vpop.permute.xlu0 %6737
        %6739 = vrot.lane.b32.xlu0 %v6506, 127
        %v6740 = vpop.permute.xlu0 %6739
        %6741 = vrot.lane.b32.xlu0 %v6631, 127
        %v6742 = vpop.permute.xlu0 %6741
        %6743 = vrot.lane.b32.xlu0 %v6508, 127
        %v6744 = vpop.permute.xlu0 %6743
        %6745 = vrot.lane.b32.xlu0 %v6632, 127
        %v6746 = vpop.permute.xlu0 %6745
        %6747 = vrot.lane.b32.xlu0 %v6510, 127
        %v6748 = vpop.permute.xlu0 %6747
        %6749 = vrot.lane.b32.xlu0 %v6633, 127
        %v6750 = vpop.permute.xlu0 %6749
        %6751 = vrot.lane.b32.xlu0 %v6512, 127
        %v6752 = vpop.permute.xlu0 %6751
        %6753 = vrot.lane.b32.xlu0 %v6634, 127
        %v6754 = vpop.permute.xlu0 %6753
        %6755 = vrot.lane.b32.xlu0 %v6514, 127
        %v6756 = vpop.permute.xlu0 %6755
        %6757 = vrot.lane.b32.xlu0 %v6635, 127
        %v6758 = vpop.permute.xlu0 %6757
        %6759 = vrot.lane.b32.xlu0 %v6516, 127
        %v6760 = vpop.permute.xlu0 %6759
        %6761 = vrot.lane.b32.xlu0 %v6636, 127
        %v6762 = vpop.permute.xlu0 %6761
        %6763 = vrot.lane.b32.xlu0 %v6518, 127
        %v6764 = vpop.permute.xlu0 %6763
        %6765 = vrot.lane.b32.xlu0 %v6637, 127
        %v6766 = vpop.permute.xlu0 %6765
        %6767 = vrot.lane.b32.xlu0 %v6520, 127
        %v6768 = vpop.permute.xlu0 %6767
        %6769 = vrot.lane.b32.xlu0 %v6638, 127
        %v6770 = vpop.permute.xlu0 %6769
        %6771 = vrot.lane.b32.xlu0 %v6522, 127
        %v6772 = vpop.permute.xlu0 %6771
        %6773 = vrot.lane.b32.xlu0 %v6639, 127
        %v6774 = vpop.permute.xlu0 %6773
        %6775 = vrot.lane.b32.xlu0 %v6524, 127
        %v6776 = vpop.permute.xlu0 %6775
        %6777 = vrot.lane.b32.xlu0 %v6640, 127
        %v6778 = vpop.permute.xlu0 %6777
        %6779 = vrot.lane.b32.xlu0 %v6526, 127
        %v6780 = vpop.permute.xlu0 %6779
        %6781 = vrot.lane.b32.xlu0 %v6641, 127
        %v6782 = vpop.permute.xlu0 %6781
        %6783 = vrot.lane.b32.xlu0 %v6528, 127
        %v6784 = vpop.permute.xlu0 %6783
        %6785 = vrot.lane.b32.xlu0 %v6642, 127
        %v6786 = vpop.permute.xlu0 %6785
        %6787 = vrot.lane.b32.xlu0 %v6530, 127
        %v6788 = vpop.permute.xlu0 %6787
        %6789 = vrot.lane.b32.xlu0 %v6643, 127
        %v6790 = vpop.permute.xlu0 %6789
        %6791 = vrot.lane.b32.xlu0 %v6532, 127
        %v6792 = vpop.permute.xlu0 %6791
        %6793 = vrot.lane.b32.xlu0 %v6644, 127
        %v6794 = vpop.permute.xlu0 %6793
        %6795 = vrot.lane.b32.xlu0 %v6534, 127
        %v6796 = vpop.permute.xlu0 %6795
        %6797 = vrot.lane.b32.xlu0 %v6645, 127
        %v6798 = vpop.permute.xlu0 %6797
        %6799 = vrot.lane.b32.xlu0 %v6536, 127
        %v6800 = vpop.permute.xlu0 %6799
        %6801 = vrot.lane.b32.xlu0 %v6646, 127
        %v6802 = vpop.permute.xlu0 %6801
        %6803 = vrot.lane.b32.xlu0 %v6538, 127
        %v6804 = vpop.permute.xlu0 %6803
        %6805 = vrot.lane.b32.xlu0 %v6647, 127
        %v6806 = vpop.permute.xlu0 %6805
        %6807 = vrot.lane.b32.xlu0 %v6540, 127
        %v6808 = vpop.permute.xlu0 %6807
        %6809 = vrot.lane.b32.xlu0 %v6648, 127
        %v6810 = vpop.permute.xlu0 %6809
        %6811 = vrot.lane.b32.xlu0 %v6542, 127
        %v6812 = vpop.permute.xlu0 %6811
        %6813 = vrot.lane.b32.xlu0 %v6649, 127
        %v6814 = vpop.permute.xlu0 %6813
        %6815 = vrot.lane.b32.xlu0 %v6544, 127
        %v6816 = vpop.permute.xlu0 %6815
        %6817 = vrot.lane.b32.xlu0 %v6650, 127
        %v6818 = vpop.permute.xlu0 %6817
        %6819 = vrot.lane.b32.xlu0 %v6546, 127
        %v6820 = vpop.permute.xlu0 %6819
        %6821 = vrot.lane.b32.xlu0 %v6651, 127
        %v6822 = vpop.permute.xlu0 %6821
        %6823 = vrot.lane.b32.xlu0 %v6548, 127
        %v6824 = vpop.permute.xlu0 %6823
        %6825 = vrot.lane.b32.xlu0 %v6652, 127
        %v6826 = vpop.permute.xlu0 %6825
        %6827 = vrot.lane.b32.xlu0 %v6550, 127
        %v6828 = vpop.permute.xlu0 %6827
        %6829 = vrot.lane.b32.xlu0 %v6653, 127
        %v6830 = vpop.permute.xlu0 %6829
        %6831 = vrot.lane.b32.xlu0 %v6552, 127
        %v6832 = vpop.permute.xlu0 %6831
        %6833 = vrot.lane.b32.xlu0 %v6654, 127
        %v6834 = vpop.permute.xlu0 %6833
        %6835 = vrot.lane.b32.xlu0 %v6554, 127
        %v6836 = vpop.permute.xlu0 %6835
        %6837 = vrot.lane.b32.xlu0 %v6655, 127
        %v6838 = vpop.permute.xlu0 %6837
        %6839 = vrot.lane.b32.xlu0 %v6556, 127
        %v6840 = vpop.permute.xlu0 %6839
        %6841 = vrot.lane.b32.xlu0 %v6656, 127
        %v6842 = vpop.permute.xlu0 %6841
        %6843 = vrot.lane.b32.xlu0 %v6558, 127
        %v6844 = vpop.permute.xlu0 %6843
        %6845 = vrot.lane.b32.xlu0 %v6657, 127
        %v6846 = vpop.permute.xlu0 %6845
        %6847 = vrot.lane.b32.xlu0 %v6560, 127
        %v6848 = vpop.permute.xlu0 %6847
        %6849 = vrot.lane.b32.xlu0 %v6658, 127
        %v6850 = vpop.permute.xlu0 %6849
        %v6851 = vsel %vm3415, %v6724, %v6726
        %v6852 = vsel %vm3415, %v6728, %v6730
        %v6853 = vsel %vm3415, %v6732, %v6734
        %v6854 = vsel %vm3415, %v6736, %v6738
        %v6855 = vsel %vm3415, %v6740, %v6742
        %v6856 = vsel %vm3415, %v6744, %v6746
        %v6857 = vsel %vm3415, %v6748, %v6750
        %v6858 = vsel %vm3415, %v6752, %v6754
        %v6859 = vsel %vm3415, %v6756, %v6758
        %v6860 = vsel %vm3415, %v6760, %v6762
        %v6861 = vsel %vm3415, %v6764, %v6766
        %v6862 = vsel %vm3415, %v6768, %v6770
        %v6863 = vsel %vm3415, %v6772, %v6774
        %v6864 = vsel %vm3415, %v6776, %v6778
        %v6865 = vsel %vm3415, %v6780, %v6782
        %v6866 = vsel %vm3415, %v6784, %v6786
        %v6867 = vsel %vm3415, %v6788, %v6790
        %v6868 = vsel %vm3415, %v6792, %v6794
        %v6869 = vsel %vm3415, %v6796, %v6798
        %v6870 = vsel %vm3415, %v6800, %v6802
        %v6871 = vsel %vm3415, %v6804, %v6806
        %v6872 = vsel %vm3415, %v6808, %v6810
        %v6873 = vsel %vm3415, %v6812, %v6814
        %v6874 = vsel %vm3415, %v6816, %v6818
        %v6875 = vsel %vm3415, %v6820, %v6822
        %v6876 = vsel %vm3415, %v6824, %v6826
        %v6877 = vsel %vm3415, %v6828, %v6830
        %v6878 = vsel %vm3415, %v6832, %v6834
        %v6879 = vsel %vm3415, %v6836, %v6838
        %v6880 = vsel %vm3415, %v6840, %v6842
        %v6881 = vsel %vm3415, %v6844, %v6846
        %v6882 = vsel %vm3415, %v6848, %v6850
        %v6947 = vmax.f32 %v6498, %v6851
        %v6948 = vmax.f32 %v6499, %v6726
        %v6949 = vmax.f32 %v6500, %v6852
        %v6950 = vmax.f32 %v6501, %v6730
        %v6951 = vmax.f32 %v6502, %v6853
        %v6952 = vmax.f32 %v6503, %v6734
        %v6953 = vmax.f32 %v6504, %v6854
        %v6954 = vmax.f32 %v6505, %v6738
        %v6955 = vmax.f32 %v6506, %v6855
        %v6956 = vmax.f32 %v6507, %v6742
        %v6957 = vmax.f32 %v6508, %v6856
        %v6958 = vmax.f32 %v6509, %v6746
        %v6959 = vmax.f32 %v6510, %v6857
        %v6960 = vmax.f32 %v6511, %v6750
        %v6961 = vmax.f32 %v6512, %v6858
        %v6962 = vmax.f32 %v6513, %v6754
        %v6963 = vmax.f32 %v6514, %v6859
        %v6964 = vmax.f32 %v6515, %v6758
        %v6965 = vmax.f32 %v6516, %v6860
        %v6966 = vmax.f32 %v6517, %v6762
        %v6967 = vmax.f32 %v6518, %v6861
        %v6968 = vmax.f32 %v6519, %v6766
        %v6969 = vmax.f32 %v6520, %v6862
        %v6970 = vmax.f32 %v6521, %v6770
        %v6971 = vmax.f32 %v6522, %v6863
        %v6972 = vmax.f32 %v6523, %v6774
        %v6973 = vmax.f32 %v6524, %v6864
        %v6974 = vmax.f32 %v6525, %v6778
        %v6975 = vmax.f32 %v6526, %v6865
        %v6976 = vmax.f32 %v6527, %v6782
        %v6977 = vmax.f32 %v6528, %v6866
        %v6978 = vmax.f32 %v6529, %v6786
        %v6979 = vmax.f32 %v6530, %v6867
        %v6980 = vmax.f32 %v6531, %v6790
        %v6981 = vmax.f32 %v6532, %v6868
        %v6982 = vmax.f32 %v6533, %v6794
        %v6983 = vmax.f32 %v6534, %v6869
        %v6984 = vmax.f32 %v6535, %v6798
        %v6985 = vmax.f32 %v6536, %v6870
        %v6986 = vmax.f32 %v6537, %v6802
        %v6987 = vmax.f32 %v6538, %v6871
        %v6988 = vmax.f32 %v6539, %v6806
        %v6989 = vmax.f32 %v6540, %v6872
        %v6990 = vmax.f32 %v6541, %v6810
        %v6991 = vmax.f32 %v6542, %v6873
        %v6992 = vmax.f32 %v6543, %v6814
        %v6993 = vmax.f32 %v6544, %v6874
        %v6994 = vmax.f32 %v6545, %v6818
        %v6995 = vmax.f32 %v6546, %v6875
        %v6996 = vmax.f32 %v6547, %v6822
        %v6997 = vmax.f32 %v6548, %v6876
        %v6998 = vmax.f32 %v6549, %v6826
        %v6999 = vmax.f32 %v6550, %v6877
        %v7000 = vmax.f32 %v6551, %v6830
        %v7001 = vmax.f32 %v6552, %v6878
        %v7002 = vmax.f32 %v6553, %v6834
        %v7003 = vmax.f32 %v6554, %v6879
        %v7004 = vmax.f32 %v6555, %v6838
        %v7005 = vmax.f32 %v6556, %v6880
        %v7006 = vmax.f32 %v6557, %v6842
        %v7007 = vmax.f32 %v6558, %v6881
        %v7008 = vmax.f32 %v6559, %v6846
        %v7009 = vmax.f32 %v6560, %v6882
        %v7010 = vmax.f32 %v6561, %v6850
        %v7011 = vld [vmem:[%s3] sm:$0xff]
        %v7012 = vld [vmem:[%s3 + $0x8] sm:$0xff]
        %7013 = vmatprep.subr.mxu0 %v6948
        %7014 = vmatpush1.msra.mxu0 %v6947
        %7015 = vmatprep.subr.mxu0 %v6950
        %7016 = vmatpush1.msra.mxu0 %v6949
        %7017 = vmatprep.subr.mxu0 %v6952
        %7018 = vmatpush1.msra.mxu0 %v6951
        %7019 = vmatprep.subr.mxu0 %v6954
        %7020 = vmatpush1.msra.mxu0 %v6953
        %7021 = vmatprep.subr.mxu0 %v6956
        %7022 = vmatpush1.msra.mxu0 %v6955
        %7023 = vmatprep.subr.mxu0 %v6958
        %7024 = vmatpush1.msra.mxu0 %v6957
        %7025 = vmatprep.subr.mxu0 %v6960
        %7026 = vmatpush1.msra.mxu0 %v6959
        %7027 = vmatprep.subr.mxu0 %v6962
        %7028 = vmatpush1.msra.mxu0 %v6961
        %7029 = vmatprep.subr.mxu0 %v6964
        %7030 = vmatpush1.msra.mxu0 %v6963
        %7031 = vmatprep.subr.mxu0 %v6966
        %7032 = vmatpush1.msra.mxu0 %v6965
        %7033 = vmatprep.subr.mxu0 %v6968
        %7034 = vmatpush1.msra.mxu0 %v6967
        %7035 = vmatprep.subr.mxu0 %v6970
        %7036 = vmatpush1.msra.mxu0 %v6969
        %7037 = vmatprep.subr.mxu0 %v6972
        %7038 = vmatpush1.msra.mxu0 %v6971
        %7039 = vmatprep.subr.mxu0 %v6974
        %7040 = vmatpush1.msra.mxu0 %v6973
        %7041 = vmatprep.subr.mxu0 %v6976
        %7042 = vmatpush1.msra.mxu0 %v6975
        %7043 = vmatprep.subr.mxu0 %v6978
        %7044 = vmatpush1.msra.mxu0 %v6977
        %7045 = vmatprep.subr.mxu0 %v6980
        %7046 = vmatpush1.msra.mxu0 %v6979
        %7047 = vmatprep.subr.mxu0 %v6982
        %7048 = vmatpush1.msra.mxu0 %v6981
        %7049 = vmatprep.subr.mxu0 %v6984
        %7050 = vmatpush1.msra.mxu0 %v6983
        %7051 = vmatprep.subr.mxu0 %v6986
        %7052 = vmatpush1.msra.mxu0 %v6985
        %7053 = vmatprep.subr.mxu0 %v6988
        %7054 = vmatpush1.msra.mxu0 %v6987
        %7055 = vmatprep.subr.mxu0 %v6990
        %7056 = vmatpush1.msra.mxu0 %v6989
        %7057 = vmatprep.subr.mxu0 %v6992
        %7058 = vmatpush1.msra.mxu0 %v6991
        %7059 = vmatprep.subr.mxu0 %v6994
        %7060 = vmatpush1.msra.mxu0 %v6993
        %7061 = vmatprep.subr.mxu0 %v6996
        %7062 = vmatpush1.msra.mxu0 %v6995
        %7063 = vmatprep.subr.mxu0 %v6998
        %7064 = vmatpush1.msra.mxu0 %v6997
        %7065 = vmatprep.subr.mxu0 %v7000
        %7066 = vmatpush1.msra.mxu0 %v6999
        %7067 = vmatprep.subr.mxu0 %v7002
        %7068 = vmatpush1.msra.mxu0 %v7001
        %7069 = vmatprep.subr.mxu0 %v7004
        %7070 = vmatpush1.msra.mxu0 %v7003
        %7071 = vmatprep.subr.mxu0 %v7006
        %7072 = vmatpush1.msra.mxu0 %v7005
        %7073 = vmatprep.subr.mxu0 %v7008
        %7074 = vmatpush1.msra.mxu0 %v7007
        %7075 = vmatprep.subr.mxu0 %v7010
        %7076 = vmatpush1.msra.mxu0 %v7009
        %7077 = vmatprep.mubr.f32.mxu0 %v7012
        %7078 = vmatmul.mubr.f32.gmra.mrb[0].mxu0 %v7011
        %v7079 = vpop.f32.mrb[0].mxu0
        %v7080 = vadd.f32 0.0, %v7079
        %v7081 = vpop.f32.mrb[0].mxu0
        %v7082 = vadd.f32 0.0, %v7081
        %7083 = vdwg.mxu0
        %v7084 = vld [vmem:[%s4] sm:$0xff]
        %v7085 = vld [vmem:[%s4 + $0x8] sm:$0xff]
        %v7086 = vld [vmem:[%s4 + $0x10] sm:$0xff]
        %v7087 = vld [vmem:[%s4 + $0x18] sm:$0xff]
        %v7088 = vld [vmem:[%s4 + $0x20] sm:$0xff]
        %v7089 = vld [vmem:[%s4 + $0x28] sm:$0xff]
        %v7090 = vld [vmem:[%s4 + $0x30] sm:$0xff]
        %v7091 = vld [vmem:[%s4 + $0x38] sm:$0xff]
        %v7092 = vld [vmem:[%s4 + $0x40] sm:$0xff]
        %v7093 = vld [vmem:[%s4 + $0x48] sm:$0xff]
        %v7094 = vld [vmem:[%s4 + $0x50] sm:$0xff]
        %v7095 = vld [vmem:[%s4 + $0x58] sm:$0xff]
        %v7096 = vld [vmem:[%s4 + $0x60] sm:$0xff]
        %v7097 = vld [vmem:[%s4 + $0x68] sm:$0xff]
        %v7098 = vld [vmem:[%s4 + $0x70] sm:$0xff]
        %v7099 = vld [vmem:[%s4 + $0x78] sm:$0xff]
        %v7100 = vld [vmem:[%s4 + $0x80] sm:$0xff]
        %v7101 = vld [vmem:[%s4 + $0x88] sm:$0xff]
        %v7102 = vld [vmem:[%s4 + $0x90] sm:$0xff]
        %v7103 = vld [vmem:[%s4 + $0x98] sm:$0xff]
        %s7104 = scalar_lea.vmem %s3, 16
        %v7105 = vld [vmem:[%s7104] sm:$0xff]
        %v7106 = vld [vmem:[%s7104 + $0x8] sm:$0xff]
        %7107 = vmatprep.subr.mxu0 %v6948
        %7108 = vmatpush1.msra.mxu0 %v6947
        %7109 = vmatprep.subr.mxu0 %v6950
        %7110 = vmatpush1.msra.mxu0 %v6949
        %7111 = vmatprep.subr.mxu0 %v6952
        %7112 = vmatpush1.msra.mxu0 %v6951
        %7113 = vmatprep.subr.mxu0 %v6954
        %7114 = vmatpush1.msra.mxu0 %v6953
        %7115 = vmatprep.subr.mxu0 %v6956
        %7116 = vmatpush1.msra.mxu0 %v6955
        %7117 = vmatprep.subr.mxu0 %v6958
        %7118 = vmatpush1.msra.mxu0 %v6957
        %7119 = vmatprep.subr.mxu0 %v6960
        %7120 = vmatpush1.msra.mxu0 %v6959
        %7121 = vmatprep.subr.mxu0 %v6962
        %7122 = vmatpush1.msra.mxu0 %v6961
        %7123 = vmatprep.subr.mxu0 %v6964
        %7124 = vmatpush1.msra.mxu0 %v6963
        %7125 = vmatprep.subr.mxu0 %v6966
        %7126 = vmatpush1.msra.mxu0 %v6965
        %7127 = vmatprep.subr.mxu0 %v6968
        %7128 = vmatpush1.msra.mxu0 %v6967
        %7129 = vmatprep.subr.mxu0 %v6970
        %7130 = vmatpush1.msra.mxu0 %v6969
        %7131 = vmatprep.subr.mxu0 %v6972
        %7132 = vmatpush1.msra.mxu0 %v6971
        %7133 = vmatprep.subr.mxu0 %v6974
        %7134 = vmatpush1.msra.mxu0 %v6973
        %7135 = vmatprep.subr.mxu0 %v6976
        %7136 = vmatpush1.msra.mxu0 %v6975
        %7137 = vmatprep.subr.mxu0 %v6978
        %7138 = vmatpush1.msra.mxu0 %v6977
        %7139 = vmatprep.subr.mxu0 %v6980
        %7140 = vmatpush1.msra.mxu0 %v6979
        %7141 = vmatprep.subr.mxu0 %v6982
        %7142 = vmatpush1.msra.mxu0 %v6981
        %7143 = vmatprep.subr.mxu0 %v6984
        %7144 = vmatpush1.msra.mxu0 %v6983
        %7145 = vmatprep.subr.mxu0 %v6986
        %7146 = vmatpush1.msra.mxu0 %v6985
        %7147 = vmatprep.subr.mxu0 %v6988
        %7148 = vmatpush1.msra.mxu0 %v6987
        %7149 = vmatprep.subr.mxu0 %v6990
        %7150 = vmatpush1.msra.mxu0 %v6989
        %7151 = vmatprep.subr.mxu0 %v6992
        %7152 = vmatpush1.msra.mxu0 %v6991
        %7153 = vmatprep.subr.mxu0 %v6994
        %7154 = vmatpush1.msra.mxu0 %v6993
        %7155 = vmatprep.subr.mxu0 %v6996
        %7156 = vmatpush1.msra.mxu0 %v6995
        %7157 = vmatprep.subr.mxu0 %v6998
        %7158 = vmatpush1.msra.mxu0 %v6997
        %7159 = vmatprep.subr.mxu0 %v7000
        %7160 = vmatpush1.msra.mxu0 %v6999
        %7161 = vmatprep.subr.mxu0 %v7002
        %7162 = vmatpush1.msra.mxu0 %v7001
        %7163 = vmatprep.subr.mxu0 %v7004
        %7164 = vmatpush1.msra.mxu0 %v7003
        %7165 = vmatprep.subr.mxu0 %v7006
        %7166 = vmatpush1.msra.mxu0 %v7005
        %7167 = vmatprep.subr.mxu0 %v7008
        %7168 = vmatpush1.msra.mxu0 %v7007
        %7169 = vmatprep.subr.mxu0 %v7010
        %7170 = vmatpush1.msra.mxu0 %v7009
        %7171 = vmatprep.mubr.f32.mxu0 %v7106
        %7172 = vmatmul.mubr.f32.gmra.mrb[0].mxu0 %v7105
        %v7173 = vpop.f32.mrb[0].mxu0
        %v7174 = vadd.f32 0.0, %v7173
        %v7175 = vpop.f32.mrb[0].mxu0
        %v7176 = vadd.f32 0.0, %v7175
        %7177 = vdwg.mxu0
        %s7178 = scalar_lea.vmem %s4, 160
        %v7179 = vld [vmem:[%s7178] sm:$0xff]
        %v7180 = vld [vmem:[%s7178 + $0x8] sm:$0xff]
        %v7181 = vld [vmem:[%s7178 + $0x10] sm:$0xff]
        %v7182 = vld [vmem:[%s7178 + $0x18] sm:$0xff]
        %v7183 = vld [vmem:[%s7178 + $0x20] sm:$0xff]
        %v7184 = vld [vmem:[%s7178 + $0x28] sm:$0xff]
        %v7185 = vld [vmem:[%s7178 + $0x30] sm:$0xff]
        %v7186 = vld [vmem:[%s7178 + $0x38] sm:$0xff]
        %v7187 = vld [vmem:[%s7178 + $0x40] sm:$0xff]
        %v7188 = vld [vmem:[%s7178 + $0x48] sm:$0xff]
        %v7189 = vld [vmem:[%s7178 + $0x50] sm:$0xff]
        %v7190 = vld [vmem:[%s7178 + $0x58] sm:$0xff]
        %v7191 = vld [vmem:[%s7178 + $0x60] sm:$0xff]
        %v7192 = vld [vmem:[%s7178 + $0x68] sm:$0xff]
        %v7193 = vld [vmem:[%s7178 + $0x70] sm:$0xff]
        %v7194 = vld [vmem:[%s7178 + $0x78] sm:$0xff]
        %v7195 = vld [vmem:[%s7178 + $0x80] sm:$0xff]
        %v7196 = vld [vmem:[%s7178 + $0x88] sm:$0xff]
        %v7197 = vld [vmem:[%s7178 + $0x90] sm:$0xff]
        %v7198 = vld [vmem:[%s7178 + $0x98] sm:$0xff]
        %v7200 = vsel %vm422, %v7176, 0
        %7202 = vmatprep.subr.mxu0 0.0
        %7203 = vmatpush1.msra.mxu0 %v7179
        %7204 = vmatprep.subr.mxu0 0.0
        %7205 = vmatpush1.msra.mxu0 %v7180
        %7206 = vmatprep.subr.mxu0 0.0
        %7207 = vmatpush1.msra.mxu0 %v7181
        %7208 = vmatprep.subr.mxu0 0.0
        %7209 = vmatpush1.msra.mxu0 %v7182
        %7210 = vmatprep.subr.mxu0 0.0
        %7211 = vmatpush1.msra.mxu0 %v7183
        %7212 = vmatprep.subr.mxu0 0.0
        %7213 = vmatpush1.msra.mxu0 %v7184
        %7214 = vmatprep.subr.mxu0 0.0
        %7215 = vmatpush1.msra.mxu0 %v7185
        %7216 = vmatprep.subr.mxu0 0.0
        %7217 = vmatpush1.msra.mxu0 %v7186
        %7218 = vmatprep.subr.mxu0 0.0
        %7219 = vmatpush1.msra.mxu0 %v7187
        %7220 = vmatprep.subr.mxu0 0.0
        %7221 = vmatpush1.msra.mxu0 %v7188
        %7222 = vmatprep.subr.mxu0 0.0
        %7223 = vmatpush1.msra.mxu0 %v7189
        %7224 = vmatprep.subr.mxu0 0.0
        %7225 = vmatpush1.msra.mxu0 %v7190
        %7226 = vmatprep.subr.mxu0 0.0
        %7227 = vmatpush1.msra.mxu0 %v7191
        %7228 = vmatprep.subr.mxu0 0.0
        %7229 = vmatpush1.msra.mxu0 %v7192
        %7230 = vmatprep.subr.mxu0 0.0
        %7231 = vmatpush1.msra.mxu0 %v7193
        %7232 = vmatprep.subr.mxu0 0.0
        %7233 = vmatpush1.msra.mxu0 %v7194
        %7234 = vmatprep.subr.mxu0 0.0
        %7235 = vmatpush1.msra.mxu0 %v7195
        %7236 = vmatprep.subr.mxu0 0.0
        %7237 = vmatpush1.msra.mxu0 %v7196
        %7238 = vmatprep.subr.mxu0 0.0
        %7239 = vmatpush1.msra.mxu0 %v7197
        %7240 = vmatprep.subr.mxu0 0.0
        %7241 = vmatpush1.msra.mxu0 %v7198
        %7242 = vmatprep.subr.mxu0 0.0
        %7243 = vmatpush1.msra.mxu0 0.0
        %7244 = vmatprep.subr.mxu0 0.0
        %7245 = vmatpush1.msra.mxu0 0.0
        %7246 = vmatprep.subr.mxu0 0.0
        %7247 = vmatpush1.msra.mxu0 0.0
        %7248 = vmatprep.subr.mxu0 0.0
        %7249 = vmatpush1.msra.mxu0 0.0
        %7250 = vmatprep.subr.mxu0 0.0
        %7251 = vmatpush1.msra.mxu0 0.0
        %7252 = vmatprep.subr.mxu0 0.0
        %7253 = vmatpush1.msra.mxu0 0.0
        %7254 = vmatprep.subr.mxu0 0.0
        %7255 = vmatpush1.msra.mxu0 0.0
        %7256 = vmatprep.subr.mxu0 0.0
        %7257 = vmatpush1.msra.mxu0 0.0
        %7258 = vmatprep.subr.mxu0 0.0
        %7259 = vmatpush1.msra.mxu0 0.0
        %7260 = vmatprep.subr.mxu0 0.0
        %7261 = vmatpush1.msra.mxu0 0.0
        %7262 = vmatprep.subr.mxu0 0.0
        %7263 = vmatpush1.msra.mxu0 0.0
        %7264 = vmatprep.subr.mxu0 0.0
        %7265 = vmatpush1.msra.mxu0 0.0
        %7266 = vmatprep.mubr.f32.mxu0 %v7200
        %7267 = vmatmul.mubr.f32.gmra.mrb[0].mxu0 %v7174
        %v7268 = vpop.f32.mrb[0].mxu0
        %v7269 = vadd.f32 0.0, %v7268
        %v7270 = vpop.f32.mrb[0].mxu0
        %7271 = vdwg.mxu0
        %v7273 = vsel %vm422, %v7082, 0
        %7275 = vmatprep.subr.mxu0 0.0
        %7276 = vmatpush1.msra.mxu0 %v7084
        %7277 = vmatprep.subr.mxu0 0.0
        %7278 = vmatpush1.msra.mxu0 %v7085
        %7279 = vmatprep.subr.mxu0 0.0
        %7280 = vmatpush1.msra.mxu0 %v7086
        %7281 = vmatprep.subr.mxu0 0.0
        %7282 = vmatpush1.msra.mxu0 %v7087
        %7283 = vmatprep.subr.mxu0 0.0
        %7284 = vmatpush1.msra.mxu0 %v7088
        %7285 = vmatprep.subr.mxu0 0.0
        %7286 = vmatpush1.msra.mxu0 %v7089
        %7287 = vmatprep.subr.mxu0 0.0
        %7288 = vmatpush1.msra.mxu0 %v7090
        %7289 = vmatprep.subr.mxu0 0.0
        %7290 = vmatpush1.msra.mxu0 %v7091
        %7291 = vmatprep.subr.mxu0 0.0
        %7292 = vmatpush1.msra.mxu0 %v7092
        %7293 = vmatprep.subr.mxu0 0.0
        %7294 = vmatpush1.msra.mxu0 %v7093
        %7295 = vmatprep.subr.mxu0 0.0
        %7296 = vmatpush1.msra.mxu0 %v7094
        %7297 = vmatprep.subr.mxu0 0.0
        %7298 = vmatpush1.msra.mxu0 %v7095
        %7299 = vmatprep.subr.mxu0 0.0
        %7300 = vmatpush1.msra.mxu0 %v7096
        %7301 = vmatprep.subr.mxu0 0.0
        %7302 = vmatpush1.msra.mxu0 %v7097
        %7303 = vmatprep.subr.mxu0 0.0
        %7304 = vmatpush1.msra.mxu0 %v7098
        %7305 = vmatprep.subr.mxu0 0.0
        %7306 = vmatpush1.msra.mxu0 %v7099
        %7307 = vmatprep.subr.mxu0 0.0
        %7308 = vmatpush1.msra.mxu0 %v7100
        %7309 = vmatprep.subr.mxu0 0.0
        %7310 = vmatpush1.msra.mxu0 %v7101
        %7311 = vmatprep.subr.mxu0 0.0
        %7312 = vmatpush1.msra.mxu0 %v7102
        %7313 = vmatprep.subr.mxu0 0.0
        %7314 = vmatpush1.msra.mxu0 %v7103
        %7315 = vmatprep.subr.mxu0 0.0
        %7316 = vmatpush1.msra.mxu0 0.0
        %7317 = vmatprep.subr.mxu0 0.0
        %7318 = vmatpush1.msra.mxu0 0.0
        %7319 = vmatprep.subr.mxu0 0.0
        %7320 = vmatpush1.msra.mxu0 0.0
        %7321 = vmatprep.subr.mxu0 0.0
        %7322 = vmatpush1.msra.mxu0 0.0
        %7323 = vmatprep.subr.mxu0 0.0
        %7324 = vmatpush1.msra.mxu0 0.0
        %7325 = vmatprep.subr.mxu0 0.0
        %7326 = vmatpush1.msra.mxu0 0.0
        %7327 = vmatprep.subr.mxu0 0.0
        %7328 = vmatpush1.msra.mxu0 0.0
        %7329 = vmatprep.subr.mxu0 0.0
        %7330 = vmatpush1.msra.mxu0 0.0
        %7331 = vmatprep.subr.mxu0 0.0
        %7332 = vmatpush1.msra.mxu0 0.0
        %7333 = vmatprep.subr.mxu0 0.0
        %7334 = vmatpush1.msra.mxu0 0.0
        %7335 = vmatprep.subr.mxu0 0.0
        %7336 = vmatpush1.msra.mxu0 0.0
        %7337 = vmatprep.subr.mxu0 0.0
        %7338 = vmatpush1.msra.mxu0 0.0
        %7339 = vmatprep.mubr.f32.mxu0 %v7273
        %7340 = vmatmul.mubr.f32.gmra.mrb[0].mxu0 %v7080
        %v7341 = vpop.f32.mrb[0].mxu0
        %v7342 = vadd.f32 %v7269, %v7341
        %v7343 = vpop.f32.mrb[0].mxu0
        %7344 = vdwg.mxu0
        %s7345 = scalar_lea.vmem %s3, 32
        %v7346 = vld [vmem:[%s7345] sm:$0xff]
        %v7347 = vld [vmem:[%s7345 + $0x8] sm:$0xff]
        %7348 = vmatprep.subr.mxu0 %v6948
        %7349 = vmatpush1.msra.mxu0 %v6947
        %7350 = vmatprep.subr.mxu0 %v6950
        %7351 = vmatpush1.msra.mxu0 %v6949
        %7352 = vmatprep.subr.mxu0 %v6952
        %7353 = vmatpush1.msra.mxu0 %v6951
        %7354 = vmatprep.subr.mxu0 %v6954
        %7355 = vmatpush1.msra.mxu0 %v6953
        %7356 = vmatprep.subr.mxu0 %v6956
        %7357 = vmatpush1.msra.mxu0 %v6955
        %7358 = vmatprep.subr.mxu0 %v6958
        %7359 = vmatpush1.msra.mxu0 %v6957
        %7360 = vmatprep.subr.mxu0 %v6960
        %7361 = vmatpush1.msra.mxu0 %v6959
        %7362 = vmatprep.subr.mxu0 %v6962
        %7363 = vmatpush1.msra.mxu0 %v6961
        %7364 = vmatprep.subr.mxu0 %v6964
        %7365 = vmatpush1.msra.mxu0 %v6963
        %7366 = vmatprep.subr.mxu0 %v6966
        %7367 = vmatpush1.msra.mxu0 %v6965
        %7368 = vmatprep.subr.mxu0 %v6968
        %7369 = vmatpush1.msra.mxu0 %v6967
        %7370 = vmatprep.subr.mxu0 %v6970
        %7371 = vmatpush1.msra.mxu0 %v6969
        %7372 = vmatprep.subr.mxu0 %v6972
        %7373 = vmatpush1.msra.mxu0 %v6971
        %7374 = vmatprep.subr.mxu0 %v6974
        %7375 = vmatpush1.msra.mxu0 %v6973
        %7376 = vmatprep.subr.mxu0 %v6976
        %7377 = vmatpush1.msra.mxu0 %v6975
        %7378 = vmatprep.subr.mxu0 %v6978
        %7379 = vmatpush1.msra.mxu0 %v6977
        %7380 = vmatprep.subr.mxu0 %v6980
        %7381 = vmatpush1.msra.mxu0 %v6979
        %7382 = vmatprep.subr.mxu0 %v6982
        %7383 = vmatpush1.msra.mxu0 %v6981
        %7384 = vmatprep.subr.mxu0 %v6984
        %7385 = vmatpush1.msra.mxu0 %v6983
        %7386 = vmatprep.subr.mxu0 %v6986
        %7387 = vmatpush1.msra.mxu0 %v6985
        %7388 = vmatprep.subr.mxu0 %v6988
        %7389 = vmatpush1.msra.mxu0 %v6987
        %7390 = vmatprep.subr.mxu0 %v6990
        %7391 = vmatpush1.msra.mxu0 %v6989
        %7392 = vmatprep.subr.mxu0 %v6992
        %7393 = vmatpush1.msra.mxu0 %v6991
        %7394 = vmatprep.subr.mxu0 %v6994
        %7395 = vmatpush1.msra.mxu0 %v6993
        %7396 = vmatprep.subr.mxu0 %v6996
        %7397 = vmatpush1.msra.mxu0 %v6995
        %7398 = vmatprep.subr.mxu0 %v6998
        %7399 = vmatpush1.msra.mxu0 %v6997
        %7400 = vmatprep.subr.mxu0 %v7000
        %7401 = vmatpush1.msra.mxu0 %v6999
        %7402 = vmatprep.subr.mxu0 %v7002
        %7403 = vmatpush1.msra.mxu0 %v7001
        %7404 = vmatprep.subr.mxu0 %v7004
        %7405 = vmatpush1.msra.mxu0 %v7003
        %7406 = vmatprep.subr.mxu0 %v7006
        %7407 = vmatpush1.msra.mxu0 %v7005
        %7408 = vmatprep.subr.mxu0 %v7008
        %7409 = vmatpush1.msra.mxu0 %v7007
        %7410 = vmatprep.subr.mxu0 %v7010
        %7411 = vmatpush1.msra.mxu0 %v7009
        %7412 = vmatprep.mubr.f32.mxu0 %v7347
        %7413 = vmatmul.mubr.f32.gmra.mrb[0].mxu0 %v7346
        %v7414 = vpop.f32.mrb[0].mxu0
        %v7415 = vadd.f32 0.0, %v7414
        %v7416 = vpop.f32.mrb[0].mxu0
        %v7417 = vadd.f32 0.0, %v7416
        %7418 = vdwg.mxu0
        %s7419 = scalar_lea.vmem %s4, 320
        %v7420 = vld [vmem:[%s7419] sm:$0xff]
        %v7421 = vld [vmem:[%s7419 + $0x8] sm:$0xff]
        %v7422 = vld [vmem:[%s7419 + $0x10] sm:$0xff]
        %v7423 = vld [vmem:[%s7419 + $0x18] sm:$0xff]
        %v7424 = vld [vmem:[%s7419 + $0x20] sm:$0xff]
        %v7425 = vld [vmem:[%s7419 + $0x28] sm:$0xff]
        %v7426 = vld [vmem:[%s7419 + $0x30] sm:$0xff]
        %v7427 = vld [vmem:[%s7419 + $0x38] sm:$0xff]
        %v7428 = vld [vmem:[%s7419 + $0x40] sm:$0xff]
        %v7429 = vld [vmem:[%s7419 + $0x48] sm:$0xff]
        %v7430 = vld [vmem:[%s7419 + $0x50] sm:$0xff]
        %v7431 = vld [vmem:[%s7419 + $0x58] sm:$0xff]
        %v7432 = vld [vmem:[%s7419 + $0x60] sm:$0xff]
        %v7433 = vld [vmem:[%s7419 + $0x68] sm:$0xff]
        %v7434 = vld [vmem:[%s7419 + $0x70] sm:$0xff]
        %v7435 = vld [vmem:[%s7419 + $0x78] sm:$0xff]
        %v7436 = vld [vmem:[%s7419 + $0x80] sm:$0xff]
        %v7437 = vld [vmem:[%s7419 + $0x88] sm:$0xff]
        %v7438 = vld [vmem:[%s7419 + $0x90] sm:$0xff]
        %v7439 = vld [vmem:[%s7419 + $0x98] sm:$0xff]
        %v7441 = vsel %vm422, %v7417, 0
        %7443 = vmatprep.subr.mxu0 0.0
        %7444 = vmatpush1.msra.mxu0 %v7420
        %7445 = vmatprep.subr.mxu0 0.0
        %7446 = vmatpush1.msra.mxu0 %v7421
        %7447 = vmatprep.subr.mxu0 0.0
        %7448 = vmatpush1.msra.mxu0 %v7422
        %7449 = vmatprep.subr.mxu0 0.0
        %7450 = vmatpush1.msra.mxu0 %v7423
        %7451 = vmatprep.subr.mxu0 0.0
        %7452 = vmatpush1.msra.mxu0 %v7424
        %7453 = vmatprep.subr.mxu0 0.0
        %7454 = vmatpush1.msra.mxu0 %v7425
        %7455 = vmatprep.subr.mxu0 0.0
        %7456 = vmatpush1.msra.mxu0 %v7426
        %7457 = vmatprep.subr.mxu0 0.0
        %7458 = vmatpush1.msra.mxu0 %v7427
        %7459 = vmatprep.subr.mxu0 0.0
        %7460 = vmatpush1.msra.mxu0 %v7428
        %7461 = vmatprep.subr.mxu0 0.0
        %7462 = vmatpush1.msra.mxu0 %v7429
        %7463 = vmatprep.subr.mxu0 0.0
        %7464 = vmatpush1.msra.mxu0 %v7430
        %7465 = vmatprep.subr.mxu0 0.0
        %7466 = vmatpush1.msra.mxu0 %v7431
        %7467 = vmatprep.subr.mxu0 0.0
        %7468 = vmatpush1.msra.mxu0 %v7432
        %7469 = vmatprep.subr.mxu0 0.0
        %7470 = vmatpush1.msra.mxu0 %v7433
        %7471 = vmatprep.subr.mxu0 0.0
        %7472 = vmatpush1.msra.mxu0 %v7434
        %7473 = vmatprep.subr.mxu0 0.0
        %7474 = vmatpush1.msra.mxu0 %v7435
        %7475 = vmatprep.subr.mxu0 0.0
        %7476 = vmatpush1.msra.mxu0 %v7436
        %7477 = vmatprep.subr.mxu0 0.0
        %7478 = vmatpush1.msra.mxu0 %v7437
        %7479 = vmatprep.subr.mxu0 0.0
        %7480 = vmatpush1.msra.mxu0 %v7438
        %7481 = vmatprep.subr.mxu0 0.0
        %7482 = vmatpush1.msra.mxu0 %v7439
        %7483 = vmatprep.subr.mxu0 0.0
        %7484 = vmatpush1.msra.mxu0 0.0
        %7485 = vmatprep.subr.mxu0 0.0
        %7486 = vmatpush1.msra.mxu0 0.0
        %7487 = vmatprep.subr.mxu0 0.0
        %7488 = vmatpush1.msra.mxu0 0.0
        %7489 = vmatprep.subr.mxu0 0.0
        %7490 = vmatpush1.msra.mxu0 0.0
        %7491 = vmatprep.subr.mxu0 0.0
        %7492 = vmatpush1.msra.mxu0 0.0
        %7493 = vmatprep.subr.mxu0 0.0
        %7494 = vmatpush1.msra.mxu0 0.0
        %7495 = vmatprep.subr.mxu0 0.0
        %7496 = vmatpush1.msra.mxu0 0.0
        %7497 = vmatprep.subr.mxu0 0.0
        %7498 = vmatpush1.msra.mxu0 0.0
        %7499 = vmatprep.subr.mxu0 0.0
        %7500 = vmatpush1.msra.mxu0 0.0
        %7501 = vmatprep.subr.mxu0 0.0
        %7502 = vmatpush1.msra.mxu0 0.0
        %7503 = vmatprep.subr.mxu0 0.0
        %7504 = vmatpush1.msra.mxu0 0.0
        %7505 = vmatprep.subr.mxu0 0.0
        %7506 = vmatpush1.msra.mxu0 0.0
        %7507 = vmatprep.mubr.f32.mxu0 %v7441
        %7508 = vmatmul.mubr.f32.gmra.mrb[0].mxu0 %v7415
        %v7509 = vpop.f32.mrb[0].mxu0
        %v7510 = vadd.f32 0.0, %v7509
        %v7511 = vpop.f32.mrb[0].mxu0
        %7512 = vdwg.mxu0
        %v7513 = vadd.f32 %v7342, %v7510
        %s7514 = scalar_lea.vmem %s3, 48
        %v7515 = vld [vmem:[%s7514] sm:$0xff]
        %v7516 = vld [vmem:[%s7514 + $0x8] sm:$0xff]
        %7517 = vmatprep.subr.mxu0 %v6948
        %7518 = vmatpush1.msra.mxu0 %v6947
        %7519 = vmatprep.subr.mxu0 %v6950
        %7520 = vmatpush1.msra.mxu0 %v6949
        %7521 = vmatprep.subr.mxu0 %v6952
        %7522 = vmatpush1.msra.mxu0 %v6951
        %7523 = vmatprep.subr.mxu0 %v6954
        %7524 = vmatpush1.msra.mxu0 %v6953
        %7525 = vmatprep.subr.mxu0 %v6956
        %7526 = vmatpush1.msra.mxu0 %v6955
        %7527 = vmatprep.subr.mxu0 %v6958
        %7528 = vmatpush1.msra.mxu0 %v6957
        %7529 = vmatprep.subr.mxu0 %v6960
        %7530 = vmatpush1.msra.mxu0 %v6959
        %7531 = vmatprep.subr.mxu0 %v6962
        %7532 = vmatpush1.msra.mxu0 %v6961
        %7533 = vmatprep.subr.mxu0 %v6964
        %7534 = vmatpush1.msra.mxu0 %v6963
        %7535 = vmatprep.subr.mxu0 %v6966
        %7536 = vmatpush1.msra.mxu0 %v6965
        %7537 = vmatprep.subr.mxu0 %v6968
        %7538 = vmatpush1.msra.mxu0 %v6967
        %7539 = vmatprep.subr.mxu0 %v6970
        %7540 = vmatpush1.msra.mxu0 %v6969
        %7541 = vmatprep.subr.mxu0 %v6972
        %7542 = vmatpush1.msra.mxu0 %v6971
        %7543 = vmatprep.subr.mxu0 %v6974
        %7544 = vmatpush1.msra.mxu0 %v6973
        %7545 = vmatprep.subr.mxu0 %v6976
        %7546 = vmatpush1.msra.mxu0 %v6975
        %7547 = vmatprep.subr.mxu0 %v6978
        %7548 = vmatpush1.msra.mxu0 %v6977
        %7549 = vmatprep.subr.mxu0 %v6980
        %7550 = vmatpush1.msra.mxu0 %v6979
        %7551 = vmatprep.subr.mxu0 %v6982
        %7552 = vmatpush1.msra.mxu0 %v6981
        %7553 = vmatprep.subr.mxu0 %v6984
        %7554 = vmatpush1.msra.mxu0 %v6983
        %7555 = vmatprep.subr.mxu0 %v6986
        %7556 = vmatpush1.msra.mxu0 %v6985
        %7557 = vmatprep.subr.mxu0 %v6988
        %7558 = vmatpush1.msra.mxu0 %v6987
        %7559 = vmatprep.subr.mxu0 %v6990
        %7560 = vmatpush1.msra.mxu0 %v6989
        %7561 = vmatprep.subr.mxu0 %v6992
        %7562 = vmatpush1.msra.mxu0 %v6991
        %7563 = vmatprep.subr.mxu0 %v6994
        %7564 = vmatpush1.msra.mxu0 %v6993
        %7565 = vmatprep.subr.mxu0 %v6996
        %7566 = vmatpush1.msra.mxu0 %v6995
        %7567 = vmatprep.subr.mxu0 %v6998
        %7568 = vmatpush1.msra.mxu0 %v6997
        %7569 = vmatprep.subr.mxu0 %v7000
        %7570 = vmatpush1.msra.mxu0 %v6999
        %7571 = vmatprep.subr.mxu0 %v7002
        %7572 = vmatpush1.msra.mxu0 %v7001
        %7573 = vmatprep.subr.mxu0 %v7004
        %7574 = vmatpush1.msra.mxu0 %v7003
        %7575 = vmatprep.subr.mxu0 %v7006
        %7576 = vmatpush1.msra.mxu0 %v7005
        %7577 = vmatprep.subr.mxu0 %v7008
        %7578 = vmatpush1.msra.mxu0 %v7007
        %7579 = vmatprep.subr.mxu0 %v7010
        %7580 = vmatpush1.msra.mxu0 %v7009
        %7581 = vmatprep.mubr.f32.mxu0 %v7516
        %7582 = vmatmul.mubr.f32.gmra.mrb[0].mxu0 %v7515
        %v7583 = vpop.f32.mrb[0].mxu0
        %v7584 = vadd.f32 0.0, %v7583
        %v7585 = vpop.f32.mrb[0].mxu0
        %v7586 = vadd.f32 0.0, %v7585
        %7587 = vdwg.mxu0
        %s7588 = scalar_lea.vmem %s4, 480
        %v7589 = vld [vmem:[%s7588] sm:$0xff]
        %v7590 = vld [vmem:[%s7588 + $0x8] sm:$0xff]
        %v7591 = vld [vmem:[%s7588 + $0x10] sm:$0xff]
        %v7592 = vld [vmem:[%s7588 + $0x18] sm:$0xff]
        %v7593 = vld [vmem:[%s7588 + $0x20] sm:$0xff]
        %v7594 = vld [vmem:[%s7588 + $0x28] sm:$0xff]
        %v7595 = vld [vmem:[%s7588 + $0x30] sm:$0xff]
        %v7596 = vld [vmem:[%s7588 + $0x38] sm:$0xff]
        %v7597 = vld [vmem:[%s7588 + $0x40] sm:$0xff]
        %v7598 = vld [vmem:[%s7588 + $0x48] sm:$0xff]
        %v7599 = vld [vmem:[%s7588 + $0x50] sm:$0xff]
        %v7600 = vld [vmem:[%s7588 + $0x58] sm:$0xff]
        %v7601 = vld [vmem:[%s7588 + $0x60] sm:$0xff]
        %v7602 = vld [vmem:[%s7588 + $0x68] sm:$0xff]
        %v7603 = vld [vmem:[%s7588 + $0x70] sm:$0xff]
        %v7604 = vld [vmem:[%s7588 + $0x78] sm:$0xff]
        %v7605 = vld [vmem:[%s7588 + $0x80] sm:$0xff]
        %v7606 = vld [vmem:[%s7588 + $0x88] sm:$0xff]
        %v7607 = vld [vmem:[%s7588 + $0x90] sm:$0xff]
        %v7608 = vld [vmem:[%s7588 + $0x98] sm:$0xff]
        %v7610 = vsel %vm422, %v7586, 0
        %7612 = vmatprep.subr.mxu0 0.0
        %7613 = vmatpush1.msra.mxu0 %v7589
        %7614 = vmatprep.subr.mxu0 0.0
        %7615 = vmatpush1.msra.mxu0 %v7590
        %7616 = vmatprep.subr.mxu0 0.0
        %7617 = vmatpush1.msra.mxu0 %v7591
        %7618 = vmatprep.subr.mxu0 0.0
        %7619 = vmatpush1.msra.mxu0 %v7592
        %7620 = vmatprep.subr.mxu0 0.0
        %7621 = vmatpush1.msra.mxu0 %v7593
        %7622 = vmatprep.subr.mxu0 0.0
        %7623 = vmatpush1.msra.mxu0 %v7594
        %7624 = vmatprep.subr.mxu0 0.0
        %7625 = vmatpush1.msra.mxu0 %v7595
        %7626 = vmatprep.subr.mxu0 0.0
        %7627 = vmatpush1.msra.mxu0 %v7596
        %7628 = vmatprep.subr.mxu0 0.0
        %7629 = vmatpush1.msra.mxu0 %v7597
        %7630 = vmatprep.subr.mxu0 0.0
        %7631 = vmatpush1.msra.mxu0 %v7598
        %7632 = vmatprep.subr.mxu0 0.0
        %7633 = vmatpush1.msra.mxu0 %v7599
        %7634 = vmatprep.subr.mxu0 0.0
        %7635 = vmatpush1.msra.mxu0 %v7600
        %7636 = vmatprep.subr.mxu0 0.0
        %7637 = vmatpush1.msra.mxu0 %v7601
        %7638 = vmatprep.subr.mxu0 0.0
        %7639 = vmatpush1.msra.mxu0 %v7602
        %7640 = vmatprep.subr.mxu0 0.0
        %7641 = vmatpush1.msra.mxu0 %v7603
        %7642 = vmatprep.subr.mxu0 0.0
        %7643 = vmatpush1.msra.mxu0 %v7604
        %7644 = vmatprep.subr.mxu0 0.0
        %7645 = vmatpush1.msra.mxu0 %v7605
        %7646 = vmatprep.subr.mxu0 0.0
        %7647 = vmatpush1.msra.mxu0 %v7606
        %7648 = vmatprep.subr.mxu0 0.0
        %7649 = vmatpush1.msra.mxu0 %v7607
        %7650 = vmatprep.subr.mxu0 0.0
        %7651 = vmatpush1.msra.mxu0 %v7608
        %7652 = vmatprep.subr.mxu0 0.0
        %7653 = vmatpush1.msra.mxu0 0.0
        %7654 = vmatprep.subr.mxu0 0.0
        %7655 = vmatpush1.msra.mxu0 0.0
        %7656 = vmatprep.subr.mxu0 0.0
        %7657 = vmatpush1.msra.mxu0 0.0
        %7658 = vmatprep.subr.mxu0 0.0
        %7659 = vmatpush1.msra.mxu0 0.0
        %7660 = vmatprep.subr.mxu0 0.0
        %7661 = vmatpush1.msra.mxu0 0.0
        %7662 = vmatprep.subr.mxu0 0.0
        %7663 = vmatpush1.msra.mxu0 0.0
        %7664 = vmatprep.subr.mxu0 0.0
        %7665 = vmatpush1.msra.mxu0 0.0
        %7666 = vmatprep.subr.mxu0 0.0
        %7667 = vmatpush1.msra.mxu0 0.0
        %7668 = vmatprep.subr.mxu0 0.0
        %7669 = vmatpush1.msra.mxu0 0.0
        %7670 = vmatprep.subr.mxu0 0.0
        %7671 = vmatpush1.msra.mxu0 0.0
        %7672 = vmatprep.subr.mxu0 0.0
        %7673 = vmatpush1.msra.mxu0 0.0
        %7674 = vmatprep.subr.mxu0 0.0
        %7675 = vmatpush1.msra.mxu0 0.0
        %7676 = vmatprep.mubr.f32.mxu0 %v7610
        %7677 = vmatmul.mubr.f32.gmra.mrb[0].mxu0 %v7584
        %v7678 = vpop.f32.mrb[0].mxu0
        %v7679 = vadd.f32 0.0, %v7678
        %v7680 = vpop.f32.mrb[0].mxu0
        %7681 = vdwg.mxu0
        %v7682 = vadd.f32 %v7513, %v7679
        %s7683 = scalar_lea.vmem %s3, 64
        %v7684 = vld [vmem:[%s7683] sm:$0xff]
        %v7685 = vld [vmem:[%s7683 + $0x8] sm:$0xff]
        %7686 = vmatprep.subr.mxu0 %v6948
        %7687 = vmatpush1.msra.mxu0 %v6947
        %7688 = vmatprep.subr.mxu0 %v6950
        %7689 = vmatpush1.msra.mxu0 %v6949
        %7690 = vmatprep.subr.mxu0 %v6952
        %7691 = vmatpush1.msra.mxu0 %v6951
        %7692 = vmatprep.subr.mxu0 %v6954
        %7693 = vmatpush1.msra.mxu0 %v6953
        %7694 = vmatprep.subr.mxu0 %v6956
        %7695 = vmatpush1.msra.mxu0 %v6955
        %7696 = vmatprep.subr.mxu0 %v6958
        %7697 = vmatpush1.msra.mxu0 %v6957
        %7698 = vmatprep.subr.mxu0 %v6960
        %7699 = vmatpush1.msra.mxu0 %v6959
        %7700 = vmatprep.subr.mxu0 %v6962
        %7701 = vmatpush1.msra.mxu0 %v6961
        %7702 = vmatprep.subr.mxu0 %v6964
        %7703 = vmatpush1.msra.mxu0 %v6963
        %7704 = vmatprep.subr.mxu0 %v6966
        %7705 = vmatpush1.msra.mxu0 %v6965
        %7706 = vmatprep.subr.mxu0 %v6968
        %7707 = vmatpush1.msra.mxu0 %v6967
        %7708 = vmatprep.subr.mxu0 %v6970
        %7709 = vmatpush1.msra.mxu0 %v6969
        %7710 = vmatprep.subr.mxu0 %v6972
        %7711 = vmatpush1.msra.mxu0 %v6971
        %7712 = vmatprep.subr.mxu0 %v6974
        %7713 = vmatpush1.msra.mxu0 %v6973
        %7714 = vmatprep.subr.mxu0 %v6976
        %7715 = vmatpush1.msra.mxu0 %v6975
        %7716 = vmatprep.subr.mxu0 %v6978
        %7717 = vmatpush1.msra.mxu0 %v6977
        %7718 = vmatprep.subr.mxu0 %v6980
        %7719 = vmatpush1.msra.mxu0 %v6979
        %7720 = vmatprep.subr.mxu0 %v6982
        %7721 = vmatpush1.msra.mxu0 %v6981
        %7722 = vmatprep.subr.mxu0 %v6984
        %7723 = vmatpush1.msra.mxu0 %v6983
        %7724 = vmatprep.subr.mxu0 %v6986
        %7725 = vmatpush1.msra.mxu0 %v6985
        %7726 = vmatprep.subr.mxu0 %v6988
        %7727 = vmatpush1.msra.mxu0 %v6987
        %7728 = vmatprep.subr.mxu0 %v6990
        %7729 = vmatpush1.msra.mxu0 %v6989
        %7730 = vmatprep.subr.mxu0 %v6992
        %7731 = vmatpush1.msra.mxu0 %v6991
        %7732 = vmatprep.subr.mxu0 %v6994
        %7733 = vmatpush1.msra.mxu0 %v6993
        %7734 = vmatprep.subr.mxu0 %v6996
        %7735 = vmatpush1.msra.mxu0 %v6995
        %7736 = vmatprep.subr.mxu0 %v6998
        %7737 = vmatpush1.msra.mxu0 %v6997
        %7738 = vmatprep.subr.mxu0 %v7000
        %7739 = vmatpush1.msra.mxu0 %v6999
        %7740 = vmatprep.subr.mxu0 %v7002
        %7741 = vmatpush1.msra.mxu0 %v7001
        %7742 = vmatprep.subr.mxu0 %v7004
        %7743 = vmatpush1.msra.mxu0 %v7003
        %7744 = vmatprep.subr.mxu0 %v7006
        %7745 = vmatpush1.msra.mxu0 %v7005
        %7746 = vmatprep.subr.mxu0 %v7008
        %7747 = vmatpush1.msra.mxu0 %v7007
        %7748 = vmatprep.subr.mxu0 %v7010
        %7749 = vmatpush1.msra.mxu0 %v7009
        %7750 = vmatprep.mubr.f32.mxu0 %v7685
        %7751 = vmatmul.mubr.f32.gmra.mrb[0].mxu0 %v7684
        %v7752 = vpop.f32.mrb[0].mxu0
        %v7753 = vadd.f32 0.0, %v7752
        %v7754 = vpop.f32.mrb[0].mxu0
        %v7755 = vadd.f32 0.0, %v7754
        %7756 = vdwg.mxu0
        %s7757 = scalar_lea.vmem %s4, 640
        %v7758 = vld [vmem:[%s7757] sm:$0xff]
        %v7759 = vld [vmem:[%s7757 + $0x8] sm:$0xff]
        %v7760 = vld [vmem:[%s7757 + $0x10] sm:$0xff]
        %v7761 = vld [vmem:[%s7757 + $0x18] sm:$0xff]
        %v7762 = vld [vmem:[%s7757 + $0x20] sm:$0xff]
        %v7763 = vld [vmem:[%s7757 + $0x28] sm:$0xff]
        %v7764 = vld [vmem:[%s7757 + $0x30] sm:$0xff]
        %v7765 = vld [vmem:[%s7757 + $0x38] sm:$0xff]
        %v7766 = vld [vmem:[%s7757 + $0x40] sm:$0xff]
        %v7767 = vld [vmem:[%s7757 + $0x48] sm:$0xff]
        %v7768 = vld [vmem:[%s7757 + $0x50] sm:$0xff]
        %v7769 = vld [vmem:[%s7757 + $0x58] sm:$0xff]
        %v7770 = vld [vmem:[%s7757 + $0x60] sm:$0xff]
        %v7771 = vld [vmem:[%s7757 + $0x68] sm:$0xff]
        %v7772 = vld [vmem:[%s7757 + $0x70] sm:$0xff]
        %v7773 = vld [vmem:[%s7757 + $0x78] sm:$0xff]
        %v7774 = vld [vmem:[%s7757 + $0x80] sm:$0xff]
        %v7775 = vld [vmem:[%s7757 + $0x88] sm:$0xff]
        %v7776 = vld [vmem:[%s7757 + $0x90] sm:$0xff]
        %v7777 = vld [vmem:[%s7757 + $0x98] sm:$0xff]
        %v7779 = vsel %vm422, %v7755, 0
        %7781 = vmatprep.subr.mxu0 0.0
        %7782 = vmatpush1.msra.mxu0 %v7758
        %7783 = vmatprep.subr.mxu0 0.0
        %7784 = vmatpush1.msra.mxu0 %v7759
        %7785 = vmatprep.subr.mxu0 0.0
        %7786 = vmatpush1.msra.mxu0 %v7760
        %7787 = vmatprep.subr.mxu0 0.0
        %7788 = vmatpush1.msra.mxu0 %v7761
        %7789 = vmatprep.subr.mxu0 0.0
        %7790 = vmatpush1.msra.mxu0 %v7762
        %7791 = vmatprep.subr.mxu0 0.0
        %7792 = vmatpush1.msra.mxu0 %v7763
        %7793 = vmatprep.subr.mxu0 0.0
        %7794 = vmatpush1.msra.mxu0 %v7764
        %7795 = vmatprep.subr.mxu0 0.0
        %7796 = vmatpush1.msra.mxu0 %v7765
        %7797 = vmatprep.subr.mxu0 0.0
        %7798 = vmatpush1.msra.mxu0 %v7766
        %7799 = vmatprep.subr.mxu0 0.0
        %7800 = vmatpush1.msra.mxu0 %v7767
        %7801 = vmatprep.subr.mxu0 0.0
        %7802 = vmatpush1.msra.mxu0 %v7768
        %7803 = vmatprep.subr.mxu0 0.0
        %7804 = vmatpush1.msra.mxu0 %v7769
        %7805 = vmatprep.subr.mxu0 0.0
        %7806 = vmatpush1.msra.mxu0 %v7770
        %7807 = vmatprep.subr.mxu0 0.0
        %7808 = vmatpush1.msra.mxu0 %v7771
        %7809 = vmatprep.subr.mxu0 0.0
        %7810 = vmatpush1.msra.mxu0 %v7772
        %7811 = vmatprep.subr.mxu0 0.0
        %7812 = vmatpush1.msra.mxu0 %v7773
        %7813 = vmatprep.subr.mxu0 0.0
        %7814 = vmatpush1.msra.mxu0 %v7774
        %7815 = vmatprep.subr.mxu0 0.0
        %7816 = vmatpush1.msra.mxu0 %v7775
        %7817 = vmatprep.subr.mxu0 0.0
        %7818 = vmatpush1.msra.mxu0 %v7776
        %7819 = vmatprep.subr.mxu0 0.0
        %7820 = vmatpush1.msra.mxu0 %v7777
        %7821 = vmatprep.subr.mxu0 0.0
        %7822 = vmatpush1.msra.mxu0 0.0
        %7823 = vmatprep.subr.mxu0 0.0
        %7824 = vmatpush1.msra.mxu0 0.0
        %7825 = vmatprep.subr.mxu0 0.0
        %7826 = vmatpush1.msra.mxu0 0.0
        %7827 = vmatprep.subr.mxu0 0.0
        %7828 = vmatpush1.msra.mxu0 0.0
        %7829 = vmatprep.subr.mxu0 0.0
        %7830 = vmatpush1.msra.mxu0 0.0
        %7831 = vmatprep.subr.mxu0 0.0
        %7832 = vmatpush1.msra.mxu0 0.0
        %7833 = vmatprep.subr.mxu0 0.0
        %7834 = vmatpush1.msra.mxu0 0.0
        %7835 = vmatprep.subr.mxu0 0.0
        %7836 = vmatpush1.msra.mxu0 0.0
        %7837 = vmatprep.subr.mxu0 0.0
        %7838 = vmatpush1.msra.mxu0 0.0
        %7839 = vmatprep.subr.mxu0 0.0
        %7840 = vmatpush1.msra.mxu0 0.0
        %7841 = vmatprep.subr.mxu0 0.0
        %7842 = vmatpush1.msra.mxu0 0.0
        %7843 = vmatprep.subr.mxu0 0.0
        %7844 = vmatpush1.msra.mxu0 0.0
        %7845 = vmatprep.mubr.f32.mxu0 %v7779
        %7846 = vmatmul.mubr.f32.gmra.mrb[0].mxu0 %v7753
        %v7847 = vpop.f32.mrb[0].mxu0
        %v7848 = vadd.f32 0.0, %v7847
        %v7849 = vpop.f32.mrb[0].mxu0
        %7850 = vdwg.mxu0
        %v7851 = vadd.f32 %v7682, %v7848
        %v7852 = vld [vmem:[%s7 + $0x2] ss:$0 sm:$0xff]
        %v7853 = vadd.f32 %v7851, %v7852
        %v7854 = vmul.f32 %v7853, 0.5
        %v7855 = vtanh.pop %v7854
        %v7856 = vadd.f32 %v7855, 1.0
        %v7857 = vmul.f32 %v7856, 0.5
        %v7858 = vld [vmem:[%s5] sm:$0xff]
        %v7859 = vld [vmem:[%s5 + $0x8] sm:$0xff]
        %v7860 = vld [vmem:[%s5 + $0x10] sm:$0xff]
        %v7861 = vld [vmem:[%s5 + $0x18] sm:$0xff]
        %v7862 = vld [vmem:[%s5 + $0x20] sm:$0xff]
        %v7863 = vld [vmem:[%s5 + $0x28] sm:$0xff]
        %v7864 = vld [vmem:[%s5 + $0x30] sm:$0xff]
        %v7865 = vld [vmem:[%s5 + $0x38] sm:$0xff]
        %v7866 = vld [vmem:[%s5 + $0x40] sm:$0xff]
        %v7867 = vld [vmem:[%s5 + $0x48] sm:$0xff]
        %v7868 = vld [vmem:[%s5 + $0x50] sm:$0xff]
        %v7869 = vld [vmem:[%s5 + $0x58] sm:$0xff]
        %v7870 = vld [vmem:[%s5 + $0x60] sm:$0xff]
        %v7871 = vld [vmem:[%s5 + $0x68] sm:$0xff]
        %v7872 = vld [vmem:[%s5 + $0x70] sm:$0xff]
        %v7873 = vld [vmem:[%s7 + $0x3] ss:$0 sm:$0xff]
        %vm7874 = vcmask 982016
        %v7876 = vsel %vm7874, %v7857, 0
        %7878 = vmatprep.subr.mxu0 0.0
        %7879 = vmatpush1.msra.mxu0 %v7858
        %7880 = vmatprep.subr.mxu0 0.0
        %7881 = vmatpush1.msra.mxu0 %v7859
        %7882 = vmatprep.subr.mxu0 0.0
        %7883 = vmatpush1.msra.mxu0 %v7860
        %7884 = vmatprep.subr.mxu0 0.0
        %7885 = vmatpush1.msra.mxu0 %v7861
        %7886 = vmatprep.subr.mxu0 0.0
        %7887 = vmatpush1.msra.mxu0 %v7862
        %7888 = vmatprep.subr.mxu0 0.0
        %7889 = vmatpush1.msra.mxu0 %v7863
        %7890 = vmatprep.subr.mxu0 0.0
        %7891 = vmatpush1.msra.mxu0 %v7864
        %7892 = vmatprep.subr.mxu0 0.0
        %7893 = vmatpush1.msra.mxu0 %v7865
        %7894 = vmatprep.subr.mxu0 0.0
        %7895 = vmatpush1.msra.mxu0 %v7866
        %7896 = vmatprep.subr.mxu0 0.0
        %7897 = vmatpush1.msra.mxu0 %v7867
        %7898 = vmatprep.subr.mxu0 0.0
        %7899 = vmatpush1.msra.mxu0 %v7868
        %7900 = vmatprep.subr.mxu0 0.0
        %7901 = vmatpush1.msra.mxu0 %v7869
        %7902 = vmatprep.subr.mxu0 0.0
        %7903 = vmatpush1.msra.mxu0 %v7870
        %7904 = vmatprep.subr.mxu0 0.0
        %7905 = vmatpush1.msra.mxu0 %v7871
        %7906 = vmatprep.subr.mxu0 0.0
        %7907 = vmatpush1.msra.mxu0 %v7872
        %7908 = vmatprep.subr.mxu0 0.0
        %7909 = vmatpush1.msra.mxu0 0.0
        %7910 = vmatprep.subr.mxu0 0.0
        %7911 = vmatpush1.msra.mxu0 0.0
        %7912 = vmatprep.subr.mxu0 0.0
        %7913 = vmatpush1.msra.mxu0 0.0
        %7914 = vmatprep.subr.mxu0 0.0
        %7915 = vmatpush1.msra.mxu0 0.0
        %7916 = vmatprep.subr.mxu0 0.0
        %7917 = vmatpush1.msra.mxu0 0.0
        %7918 = vmatprep.subr.mxu0 0.0
        %7919 = vmatpush1.msra.mxu0 0.0
        %7920 = vmatprep.subr.mxu0 0.0
        %7921 = vmatpush1.msra.mxu0 0.0
        %7922 = vmatprep.subr.mxu0 0.0
        %7923 = vmatpush1.msra.mxu0 0.0
        %7924 = vmatprep.subr.mxu0 0.0
        %7925 = vmatpush1.msra.mxu0 0.0
        %7926 = vmatprep.subr.mxu0 0.0
        %7927 = vmatpush1.msra.mxu0 0.0
        %7928 = vmatprep.subr.mxu0 0.0
        %7929 = vmatpush1.msra.mxu0 0.0
        %7930 = vmatprep.subr.mxu0 0.0
        %7931 = vmatpush1.msra.mxu0 0.0
        %7932 = vmatprep.subr.mxu0 0.0
        %7933 = vmatpush1.msra.mxu0 0.0
        %7934 = vmatprep.subr.mxu0 0.0
        %7935 = vmatpush1.msra.mxu0 0.0
        %7936 = vmatprep.subr.mxu0 0.0
        %7937 = vmatpush1.msra.mxu0 0.0
        %7938 = vmatprep.subr.mxu0 0.0
        %7939 = vmatpush1.msra.mxu0 0.0
        %7940 = vmatprep.subr.mxu0 0.0
        %7941 = vmatpush1.msra.mxu0 0.0
        %7942 = vmatprep.mubr.f32.mxu0 0.0
        %7943 = vmatmul.mubr.f32.gmra.mrb[0].mxu0 %v7876
        %v7944 = vpop.f32.mrb[0].mxu0
        %v7945 = vadd.f32 %v7873, %v7944
        %v7946 = vpop.f32.mrb[0].mxu0
        %7947 = vdwg.mxu0
        %v7948 = vmul.f32 %v7945, 0.5
        %v7949 = vtanh.pop %v7948
        %v7950 = vadd.f32 %v7949, 1.0
        %v7951 = vmul.f32 %v7950, 0.5
        %v7952 = vld [vmem:[%s6] sm:$0xff]
        %v7953 = vld [vmem:[%s6 + $0x8] sm:$0xff]
        %v7954 = vld [vmem:[%s6 + $0x10] sm:$0xff]
        %v7955 = vld [vmem:[%s6 + $0x18] sm:$0xff]
        %v7956 = vld [vmem:[%s6 + $0x20] sm:$0xff]
        %v7957 = vld [vmem:[%s6 + $0x28] sm:$0xff]
        %v7958 = vld [vmem:[%s6 + $0x30] sm:$0xff]
        %v7959 = vld [vmem:[%s6 + $0x38] sm:$0xff]
        %v7960 = vld [vmem:[%s6 + $0x40] sm:$0xff]
        %v7961 = vld [vmem:[%s6 + $0x48] sm:$0xff]
        %v7962 = vld [vmem:[%s6 + $0x50] sm:$0xf]
        %v7963 = vld [vmem:[%s7 + $0x4] ss:$0 sm:$0xff]
        %vm7964 = vcmask 687104
        %v7966 = vsel %vm7964, %v7951, 0
        %vm7968 = vcmask 1043456
        %v7970 = vsel %vm7968, %v7962, 0
        %7972 = vmatprep.subr.mxu0 0.0
        %7973 = vmatpush1.msra.mxu0 %v7952
        %7974 = vmatprep.subr.mxu0 0.0
        %7975 = vmatpush1.msra.mxu0 %v7953
        %7976 = vmatprep.subr.mxu0 0.0
        %7977 = vmatpush1.msra.mxu0 %v7954
        %7978 = vmatprep.subr.mxu0 0.0
        %7979 = vmatpush1.msra.mxu0 %v7955
        %7980 = vmatprep.subr.mxu0 0.0
        %7981 = vmatpush1.msra.mxu0 %v7956
        %7982 = vmatprep.subr.mxu0 0.0
        %7983 = vmatpush1.msra.mxu0 %v7957
        %7984 = vmatprep.subr.mxu0 0.0
        %7985 = vmatpush1.msra.mxu0 %v7958
        %7986 = vmatprep.subr.mxu0 0.0
        %7987 = vmatpush1.msra.mxu0 %v7959
        %7988 = vmatprep.subr.mxu0 0.0
        %7989 = vmatpush1.msra.mxu0 %v7960
        %7990 = vmatprep.subr.mxu0 0.0
        %7991 = vmatpush1.msra.mxu0 %v7961
        %7992 = vmatprep.subr.mxu0 0.0
        %7993 = vmatpush1.msra.mxu0 %v7970
        %7994 = vmatprep.subr.mxu0 0.0
        %7995 = vmatpush1.msra.mxu0 0.0
        %7996 = vmatprep.subr.mxu0 0.0
        %7997 = vmatpush1.msra.mxu0 0.0
        %7998 = vmatprep.subr.mxu0 0.0
        %7999 = vmatpush1.msra.mxu0 0.0
        %8000 = vmatprep.subr.mxu0 0.0
        %8001 = vmatpush1.msra.mxu0 0.0
        %8002 = vmatprep.subr.mxu0 0.0
        %8003 = vmatpush1.msra.mxu0 0.0
        %8004 = vmatprep.subr.mxu0 0.0
        %8005 = vmatpush1.msra.mxu0 0.0
        %8006 = vmatprep.subr.mxu0 0.0
        %8007 = vmatpush1.msra.mxu0 0.0
        %8008 = vmatprep.subr.mxu0 0.0
        %8009 = vmatpush1.msra.mxu0 0.0
        %8010 = vmatprep.subr.mxu0 0.0
        %8011 = vmatpush1.msra.mxu0 0.0
        %8012 = vmatprep.subr.mxu0 0.0
        %8013 = vmatpush1.msra.mxu0 0.0
        %8014 = vmatprep.subr.mxu0 0.0
        %8015 = vmatpush1.msra.mxu0 0.0
        %8016 = vmatprep.subr.mxu0 0.0
        %8017 = vmatpush1.msra.mxu0 0.0
        %8018 = vmatprep.subr.mxu0 0.0
        %8019 = vmatpush1.msra.mxu0 0.0
        %8020 = vmatprep.subr.mxu0 0.0
        %8021 = vmatpush1.msra.mxu0 0.0
        %8022 = vmatprep.subr.mxu0 0.0
        %8023 = vmatpush1.msra.mxu0 0.0
        %8024 = vmatprep.subr.mxu0 0.0
        %8025 = vmatpush1.msra.mxu0 0.0
        %8026 = vmatprep.subr.mxu0 0.0
        %8027 = vmatpush1.msra.mxu0 0.0
        %8028 = vmatprep.subr.mxu0 0.0
        %8029 = vmatpush1.msra.mxu0 0.0
        %8030 = vmatprep.subr.mxu0 0.0
        %8031 = vmatpush1.msra.mxu0 0.0
        %8032 = vmatprep.subr.mxu0 0.0
        %8033 = vmatpush1.msra.mxu0 0.0
        %8034 = vmatprep.subr.mxu0 0.0
        %8035 = vmatpush1.msra.mxu0 0.0
        %8036 = vmatprep.mubr.f32.mxu0 0.0
        %8037 = vmatmul.mubr.f32.gmra.mrb[0].mxu0 %v7966
        %v8038 = vpop.f32.mrb[0].mxu0
        %v8039 = vadd.f32 %v7963, %v8038
        %v8040 = vpop.f32.mrb[0].mxu0
        %8041 = vdwg.mxu0
        %v8042 = vmul.f32 %v8039, 0.5
        %v8043 = vtanh.pop %v8042
        %v8044 = vadd.f32 %v8043, 1.0
        %v8045 = vmul.f32 %v8044, 0.5
        %vm8046 = vcmask 80896
        %8047 = vst.msk [vmem:[%s299] sm:$0xff] %vm8046, %v8045
        %s8048 = sand.u32 %s203, 1
        %s8049 = scalar_lea.sflag [#allocation3], %s8048
        %s8050 = sand.u32 %s203, 1
        %s8051 = smul.addr %s8050, 8
        %s8052 = scalar_lea.vmem [#allocation2], %s8051
        // Predicated region
        $region53: #{lenet_forward.1} parent=51 // pred_check
          %p8053 = pneg %p213
        $region54: #{lenet_forward.1} parent=51 // pred_check_branch
          %8055 = sbr.rel (%p8053) target = $region56
        $region55: #{lenet_forward.1} parent=51 // pred_region
          %s8057 = ssub.s32 128, 128
          %8058 = vsyncadd %s8049, %s8057
          %s8059 = smul.addr %s22, 128
          %s8060 = scalar_lea.hbm %s8, %s8059
          %s8062 = sshll.u32 %s8052, 4
          %s8063 = int_to_ptr.vmem [resolvable:$true] %s8062
          %8065 = dma.vmem_to_hbm [thread:$0]  %s8063, 128, %s8060, %s8049
        $region56: #{lenet_forward.1} parent=51 // pred_fallthru
          _
      $region52: #{lenet_forward.1} parent=5 // pred_fallthru
        _
      %p8066 = scmp.le.s32.totalorder 2, %s17
      // Predicated region
      $region57: #{lenet_forward.1} parent=5 // pred_check
        %p8067 = pneg %p8066
      $region58: #{lenet_forward.1} parent=5 // pred_check_branch
        %8069 = sbr.rel (%p8067) target = $region60
      $region59: #{lenet_forward.1} parent=5 // pred_region
        %s8070 = ssub.s32 %s17, 2
        // Predicated region
        $region61: #{lenet_forward.1} parent=59 // pred_check
          %p8071 = pneg %p219
        $region62: #{lenet_forward.1} parent=59 // pred_check_branch
          %8073 = sbr.rel (%p8071) target = $region64
        $region63: #{lenet_forward.1} parent=59 // pred_region
          %s8074 = sand.u32 %s204, 1
          %s8075 = scalar_lea.sflag [#allocation3], %s8074
          %s8076 = sand.u32 %s204, 1
          %s8077 = smul.addr %s8076, 8
          %s8078 = scalar_lea.vmem [#allocation2], %s8077
          %8079 = dma.done %s8075, 128
        $region64: #{lenet_forward.1} parent=59 // pred_fallthru
          _
      $region60: #{lenet_forward.1} parent=5 // pred_fallthru
        _
    $region6: #{lenet_forward.1} parent=1 // loop_footer
      %s21 = sadd.s32 1, %s17
    $region7: #{lenet_forward.1} parent=1 // loop_footer_branch
      %16 = sbr.rel target = $region3
    $region8: #{lenet_forward.1} parent=1 // loop_exit
      _
    %8080 = vsyncpa [#allocation3], 1
    %s8081 = scalar_lea.sflag [#allocation3], 1
    %8082 = vsyncpa %s8081, 1

</llo_original>
